<compile_context>
chip_gen: v5e
topology: v5e:2x2
jax: 0.10.0
libtpu: 0.0.40
codegen_flags: <defaults>
</compile_context>

<pallas_src>
import functools

import jax
import jax.numpy as jnp
from jax.experimental import pallas as pl
from jax.experimental.pallas import tpu as pltpu

N_WIRES = 3606                 # fixed by the module
LEAKY_SLOPE = 0.01             # nn.LeakyReLU default negative_slope


def _leaky_relu(v):
    return jnp.where(v > 0, v, LEAKY_SLOPE * v)


def _round_up(a, b):
    return ((a + b - 1) // b) * b


def ae_kernel(x_ref,                       # (N_WIRES, tile_l) f32
              w1_ref,                      # (4e, N_WIRES) bf16   enc conv1 (no bias)
              w2_ref, b2_ref,              # (2e, 4e), (2e, 1)    enc conv2
              w3_ref, b3_ref,              # (e, 2e), (e, 1)      enc conv3 (-> tanh)
              w4_ref, b4_ref,              # (2e, e), (2e, 1)     dec conv1
              w5_ref, b5_ref,              # (4e, 2e), (4e, 1)    dec conv2
              w6_ref,                      # (N_WIRES, 4e) bf16   dec conv3 (no bias)
              y_ref):                      # (N_WIRES, tile_l) out dtype (bf16)
    # In-kernel VPU cast: x streams from HBM as f32, MXU runs native bf16.
    x = x_ref[...].astype(jnp.bfloat16)

    # ---- encoder ----
    h = _leaky_relu(jnp.dot(w1_ref[...], x, preferred_element_type=jnp.float32))
    h = _leaky_relu(jnp.dot(w2_ref[...], h, preferred_element_type=jnp.float32)
                    + b2_ref[...])
    z = jnp.tanh(jnp.dot(w3_ref[...], h, preferred_element_type=jnp.float32)
                 + b3_ref[...])

    # ---- decoder ----
    h = _leaky_relu(jnp.dot(w4_ref[...], z, preferred_element_type=jnp.float32)
                    + b4_ref[...])
    h = _leaky_relu(jnp.dot(w5_ref[...], h, preferred_element_type=jnp.float32)
                    + b5_ref[...])
    # Final matmul: bf16 operands, f32 accumulation, cast only at the store.
    y = jnp.dot(w6_ref[...], h.astype(jnp.bfloat16),
                preferred_element_type=jnp.float32)
    y_ref[...] = y.astype(y_ref.dtype)


def _full_spec(shape):
    # Whole-array block with a constant index_map -> resident across the grid.
    zeros = (0,) * len(shape)
    return pl.BlockSpec(shape, lambda n, li, _z=zeros: _z)


@functools.partial(jax.jit, static_argnames=("tile_l", "out_dtype"))
def ae_forward(x_ncl, params, tile_l=512, out_dtype=jnp.bfloat16):
    """x_ncl: (N, n_wires, L) float32 -> (N, n_wires, L) out_dtype."""
    n, c, l = x_ncl.shape
    assert c == N_WIRES

    # Lane-dense tile along L (multiple of 128); cap at L for tiny inputs.
    tile = min(_round_up(tile_l, 128), _round_up(l, 128))
    l_pad = _round_up(l, tile)
    if l_pad != l:
        x_ncl = jnp.pad(x_ncl, ((0, 0), (0, 0), (0, l_pad - l)))

    (w1, w2, b2, w3, b3, w4, b4, w5, b5, w6) = params
    w1b = w1.astype(jnp.bfloat16)          # (4e, 3606)
    w6b = w6.astype(jnp.bfloat16)          # (3606, 4e)

    grid = (n, l_pad // tile)
    in_specs = [
        pl.BlockSpec((None, N_WIRES, tile), lambda ni, li: (ni, 0, li)),  # x block
        _full_spec(w1b.shape),
        _full_spec(w2.shape), _full_spec(b2.shape),
        _full_spec(w3.shape), _full_spec(b3.shape),
        _full_spec(w4.shape), _full_spec(b4.shape),
        _full_spec(w5.shape), _full_spec(b5.shape),
        _full_spec(w6b.shape),
    ]
    out_spec = pl.BlockSpec((None, N_WIRES, tile), lambda ni, li: (ni, 0, li))

    # VMEM budget: double-buffered f32 x block + out-dtype y block, plus
    # in-kernel temps (bf16 x copy + f32 final-matmul accumulator) + weights.
    x_bytes = N_WIRES * tile * 4
    y_bytes = N_WIRES * tile * jnp.dtype(out_dtype).itemsize
    vmem_limit = int(min(2 * x_bytes + 2 * y_bytes + 2 * x_bytes + (8 << 20),
                         112 << 20))

    y = pl.pallas_call(
        ae_kernel,
        out_shape=jax.ShapeDtypeStruct((n, N_WIRES, l_pad), out_dtype),
        grid_spec=pltpu.PrefetchScalarGridSpec(
            num_scalar_prefetch=0,
            grid=grid,
            in_specs=in_specs,
            out_specs=out_spec,
        ),
        compiler_params=pltpu.CompilerParams(
            dimension_semantics=("parallel", "parallel"),
            vmem_limit_bytes=vmem_limit,
        ),
    )(x_ncl, w1b, w2, b2, w3, b3, w4, b4, w5, b5, w6b)

    if l_pad != l:
        y = y[:, :, :l]
    return y


def init_params(key, encoded_dim):
    """Deterministic synthetic weights shaped like the PyTorch module.

    PyTorch Conv1d weight is (out, in, 1); we keep (out, in) so the kernel
    computes W @ x directly in the channel-major (NCL) layout.  Biases are
    stored (out, 1) so they broadcast along the lane (L) axis.  All f32; the
    wrapper handles the bf16 casts of the boundary weights.
    """
    e = encoded_dim
    dims = [
        (N_WIRES, 4 * e, False),   # enc conv1, bias=False
        (4 * e, 2 * e, True),      # enc conv2
        (2 * e, e, True),          # enc conv3
        (e, 2 * e, True),          # dec conv1
        (2 * e, 4 * e, True),      # dec conv2
        (4 * e, N_WIRES, False),   # dec conv3, bias=False
    ]
    params = []
    for (cin, cout, has_bias) in dims:
        key, kw, kb = jax.random.split(key, 3)
        bound = float(cin) ** -0.5          # matches PyTorch conv default init
        w = jax.random.uniform(kw, (cout, cin), jnp.float32, -bound, bound)
        params.append(w)
        if has_bias:
            b = jax.random.uniform(kb, (cout, 1), jnp.float32, -bound, bound)
            params.append(b)
    return tuple(params)


def ae_reference(x_ncl, params):
    """Plain-JAX reference mirroring the kernel's dtypes (bf16 boundaries)."""
    (w1, w2, b2, w3, b3, w4, b4, w5, b5, w6) = params

    def mm(w, h):  # (out,in) x (N,in,L) -> (N,out,L) with f32 accumulation
        return jnp.einsum("oc,ncl->nol", w, h,
                          preferred_element_type=jnp.float32)

    x = x_ncl.astype(jnp.bfloat16)
    h = _leaky_relu(mm(w1.astype(jnp.bfloat16), x))
    h = _leaky_relu(mm(w2, h) + b2[None])
    z = jnp.tanh(mm(w3, h) + b3[None])
    h = _leaky_relu(mm(w4, z) + b4[None])
    h = _leaky_relu(mm(w5, h) + b5[None])
    y = mm(w6.astype(jnp.bfloat16), h.astype(jnp.bfloat16))
    return y.astype(jnp.bfloat16)


if __name__ == "__main__":
    encoded_dim = 8          # 3606 -> 32 -> 16 -> 8 -> 16 -> 32 -> 3606
    batch, seq = 2, 256      # grid = (2, 1): both v7x TensorCores get a batch

    key = jax.random.PRNGKey(0)
    key, kx = jax.random.split(key)
    x = jax.random.normal(kx, (batch, N_WIRES, seq), jnp.float32)

    params = init_params(key, encoded_dim)

    y = ae_forward(x, params)              # default tile_l=512 (capped to 256 here)
    y = jax.block_until_ready(y)

    y_ref = ae_reference(x, params)
    assert y.shape == (batch, N_WIRES, seq)
    assert jnp.allclose(y.astype(jnp.float32), y_ref.astype(jnp.float32),
                        atol=1e-2, rtol=1e-2), "mismatch vs reference"

    print("KERNEL_OK")
</pallas_src>

<mosaic_0001>
module attributes {stable_mosaic.version = 11 : i64} {
  func.func @ae_kernel(%arg0: i32, %arg1: i32, %arg2: memref<1x3606x256xf32, #tpu.memory_space<vmem>>, %arg3: memref<32x3606xbf16, #tpu.memory_space<vmem>>, %arg4: memref<16x32xf32, #tpu.memory_space<vmem>>, %arg5: memref<16x1xf32, #tpu.memory_space<vmem>>, %arg6: memref<8x16xf32, #tpu.memory_space<vmem>>, %arg7: memref<8x1xf32, #tpu.memory_space<vmem>>, %arg8: memref<16x8xf32, #tpu.memory_space<vmem>>, %arg9: memref<16x1xf32, #tpu.memory_space<vmem>>, %arg10: memref<32x16xf32, #tpu.memory_space<vmem>>, %arg11: memref<32x1xf32, #tpu.memory_space<vmem>>, %arg12: memref<3606x32xbf16, #tpu.memory_space<vmem>>, %arg13: memref<1x3606x256xbf16, #tpu.memory_space<vmem>>) attributes {dimension_semantics = [#tpu.dimension_semantics<parallel>, #tpu.dimension_semantics<parallel>], iteration_bounds = array<i64: 2, 1>, scalar_prefetch = 0 : i64, scratch_operands = 0 : i64, tpu.core_type = #tpu.core_type<tc>, window_params = [{transform_indices = @transform_0, window_bounds = array<i64: 1, 3606, 256>}, {pipeline_mode = #tpu.pipeline_mode<synchronous>, transform_indices = @transform_1, window_bounds = array<i64: 32, 3606>}, {pipeline_mode = #tpu.pipeline_mode<synchronous>, transform_indices = @transform_2, window_bounds = array<i64: 16, 32>}, {pipeline_mode = #tpu.pipeline_mode<synchronous>, transform_indices = @transform_3, window_bounds = array<i64: 16, 1>}, {pipeline_mode = #tpu.pipeline_mode<synchronous>, transform_indices = @transform_4, window_bounds = array<i64: 8, 16>}, {pipeline_mode = #tpu.pipeline_mode<synchronous>, transform_indices = @transform_5, window_bounds = array<i64: 8, 1>}, {pipeline_mode = #tpu.pipeline_mode<synchronous>, transform_indices = @transform_6, window_bounds = array<i64: 16, 8>}, {pipeline_mode = #tpu.pipeline_mode<synchronous>, transform_indices = @transform_7, window_bounds = array<i64: 16, 1>}, {pipeline_mode = #tpu.pipeline_mode<synchronous>, transform_indices = @transform_8, window_bounds = array<i64: 32, 16>}, {pipeline_mode = #tpu.pipeline_mode<synchronous>, transform_indices = @transform_9, window_bounds = array<i64: 32, 1>}, {pipeline_mode = #tpu.pipeline_mode<synchronous>, transform_indices = @transform_10, window_bounds = array<i64: 3606, 32>}, {transform_indices = @transform_11, window_bounds = array<i64: 1, 3606, 256>}]} {
    %c0 = arith.constant 0 : index
    %c0_0 = arith.constant 0 : index
    %c0_1 = arith.constant 0 : index
    %0 = vector.load %arg2[%c0, %c0_0, %c0_1] : memref<1x3606x256xf32, #tpu.memory_space<vmem>>, vector<1x3606x256xf32>
    %1 = vector.shape_cast %0 : vector<1x3606x256xf32> to vector<3606x256xf32>
    %2 = arith.truncf %1 : vector<3606x256xf32> to vector<3606x256xbf16>
    %c0_2 = arith.constant 0 : index
    %c0_3 = arith.constant 0 : index
    %3 = vector.load %arg3[%c0_2, %c0_3] : memref<32x3606xbf16, #tpu.memory_space<vmem>>, vector<32x3606xbf16>
    %cst = arith.constant dense<0.000000e+00> : vector<32x256xf32>
    %4 = tpu.matmul %3, %2, %cst {dimension_numbers = #tpu.dot_dimension_numbers<[1], [0], [0], [1], [0, 0, 1, 1], [], []>} : vector<32x3606xbf16>, vector<3606x256xbf16>, vector<32x256xf32> -> vector<32x256xf32>
    %cst_4 = arith.constant 0.000000e+00 : f32
    %5 = vector.broadcast %cst_4 : f32 to vector<32x256xf32>
    %6 = arith.cmpf ogt, %4, %5 : vector<32x256xf32>
    %cst_5 = arith.constant 0.00999999977 : f32
    %7 = vector.broadcast %cst_5 : f32 to vector<32x256xf32>
    %8 = arith.mulf %7, %4 : vector<32x256xf32>
    %9 = arith.select %6, %4, %8 : vector<32x256xi1>, vector<32x256xf32>
    %c0_6 = arith.constant 0 : index
    %c0_7 = arith.constant 0 : index
    %10 = vector.load %arg4[%c0_6, %c0_7] : memref<16x32xf32, #tpu.memory_space<vmem>>, vector<16x32xf32>
    %cst_8 = arith.constant dense<0.000000e+00> : vector<16x256xf32>
    %11 = tpu.matmul %10, %9, %cst_8 {dimension_numbers = #tpu.dot_dimension_numbers<[1], [0], [0], [1], [0, 0, 1, 1], [], []>} : vector<16x32xf32>, vector<32x256xf32>, vector<16x256xf32> -> vector<16x256xf32>
    %c0_9 = arith.constant 0 : index
    %c0_10 = arith.constant 0 : index
    %12 = vector.load %arg5[%c0_9, %c0_10] : memref<16x1xf32, #tpu.memory_space<vmem>>, vector<16x1xf32>
    %13 = vector.broadcast %12 : vector<16x1xf32> to vector<16x256xf32>
    %14 = arith.addf %11, %13 : vector<16x256xf32>
    %cst_11 = arith.constant 0.000000e+00 : f32
    %15 = vector.broadcast %cst_11 : f32 to vector<16x256xf32>
    %16 = arith.cmpf ogt, %14, %15 : vector<16x256xf32>
    %cst_12 = arith.constant 0.00999999977 : f32
    %17 = vector.broadcast %cst_12 : f32 to vector<16x256xf32>
    %18 = arith.mulf %17, %14 : vector<16x256xf32>
    %19 = arith.select %16, %14, %18 : vector<16x256xi1>, vector<16x256xf32>
    %c0_13 = arith.constant 0 : index
    %c0_14 = arith.constant 0 : index
    %20 = vector.load %arg6[%c0_13, %c0_14] : memref<8x16xf32, #tpu.memory_space<vmem>>, vector<8x16xf32>
    %cst_15 = arith.constant dense<0.000000e+00> : vector<8x256xf32>
    %21 = tpu.matmul %20, %19, %cst_15 {dimension_numbers = #tpu.dot_dimension_numbers<[1], [0], [0], [1], [0, 0, 1, 1], [], []>} : vector<8x16xf32>, vector<16x256xf32>, vector<8x256xf32> -> vector<8x256xf32>
    %c0_16 = arith.constant 0 : index
    %c0_17 = arith.constant 0 : index
    %22 = vector.load %arg7[%c0_16, %c0_17] : memref<8x1xf32, #tpu.memory_space<vmem>>, vector<8x1xf32>
    %23 = vector.broadcast %22 : vector<8x1xf32> to vector<8x256xf32>
    %24 = arith.addf %21, %23 : vector<8x256xf32>
    %25 = math.tanh %24 : vector<8x256xf32>
    %c0_18 = arith.constant 0 : index
    %c0_19 = arith.constant 0 : index
    %26 = vector.load %arg8[%c0_18, %c0_19] : memref<16x8xf32, #tpu.memory_space<vmem>>, vector<16x8xf32>
    %cst_20 = arith.constant dense<0.000000e+00> : vector<16x256xf32>
    %27 = tpu.matmul %26, %25, %cst_20 {dimension_numbers = #tpu.dot_dimension_numbers<[1], [0], [0], [1], [0, 0, 1, 1], [], []>} : vector<16x8xf32>, vector<8x256xf32>, vector<16x256xf32> -> vector<16x256xf32>
    %c0_21 = arith.constant 0 : index
    %c0_22 = arith.constant 0 : index
    %28 = vector.load %arg9[%c0_21, %c0_22] : memref<16x1xf32, #tpu.memory_space<vmem>>, vector<16x1xf32>
    %29 = vector.broadcast %28 : vector<16x1xf32> to vector<16x256xf32>
    %30 = arith.addf %27, %29 : vector<16x256xf32>
    %cst_23 = arith.constant 0.000000e+00 : f32
    %31 = vector.broadcast %cst_23 : f32 to vector<16x256xf32>
    %32 = arith.cmpf ogt, %30, %31 : vector<16x256xf32>
    %cst_24 = arith.constant 0.00999999977 : f32
    %33 = vector.broadcast %cst_24 : f32 to vector<16x256xf32>
    %34 = arith.mulf %33, %30 : vector<16x256xf32>
    %35 = arith.select %32, %30, %34 : vector<16x256xi1>, vector<16x256xf32>
    %c0_25 = arith.constant 0 : index
    %c0_26 = arith.constant 0 : index
    %36 = vector.load %arg10[%c0_25, %c0_26] : memref<32x16xf32, #tpu.memory_space<vmem>>, vector<32x16xf32>
    %cst_27 = arith.constant dense<0.000000e+00> : vector<32x256xf32>
    %37 = tpu.matmul %36, %35, %cst_27 {dimension_numbers = #tpu.dot_dimension_numbers<[1], [0], [0], [1], [0, 0, 1, 1], [], []>} : vector<32x16xf32>, vector<16x256xf32>, vector<32x256xf32> -> vector<32x256xf32>
    %c0_28 = arith.constant 0 : index
    %c0_29 = arith.constant 0 : index
    %38 = vector.load %arg11[%c0_28, %c0_29] : memref<32x1xf32, #tpu.memory_space<vmem>>, vector<32x1xf32>
    %39 = vector.broadcast %38 : vector<32x1xf32> to vector<32x256xf32>
    %40 = arith.addf %37, %39 : vector<32x256xf32>
    %cst_30 = arith.constant 0.000000e+00 : f32
    %41 = vector.broadcast %cst_30 : f32 to vector<32x256xf32>
    %42 = arith.cmpf ogt, %40, %41 : vector<32x256xf32>
    %cst_31 = arith.constant 0.00999999977 : f32
    %43 = vector.broadcast %cst_31 : f32 to vector<32x256xf32>
    %44 = arith.mulf %43, %40 : vector<32x256xf32>
    %45 = arith.select %42, %40, %44 : vector<32x256xi1>, vector<32x256xf32>
    %c0_32 = arith.constant 0 : index
    %c0_33 = arith.constant 0 : index
    %46 = vector.load %arg12[%c0_32, %c0_33] : memref<3606x32xbf16, #tpu.memory_space<vmem>>, vector<3606x32xbf16>
    %47 = arith.truncf %45 : vector<32x256xf32> to vector<32x256xbf16>
    %cst_34 = arith.constant dense<0.000000e+00> : vector<3606x256xf32>
    %48 = tpu.matmul %46, %47, %cst_34 {dimension_numbers = #tpu.dot_dimension_numbers<[1], [0], [0], [1], [0, 0, 1, 1], [], []>} : vector<3606x32xbf16>, vector<32x256xbf16>, vector<3606x256xf32> -> vector<3606x256xf32>
    %49 = arith.truncf %48 : vector<3606x256xf32> to vector<3606x256xbf16>
    %c0_35 = arith.constant 0 : index
    %c0_36 = arith.constant 0 : index
    %c0_37 = arith.constant 0 : index
    %50 = vector.load %arg13[%c0_35, %c0_36, %c0_37] : memref<1x3606x256xbf16, #tpu.memory_space<vmem>>, vector<1x3606x256xbf16>
    %51 = vector.shape_cast %50 : vector<1x3606x256xbf16> to vector<3606x256xbf16>
    %52 = vector.shape_cast %49 : vector<3606x256xbf16> to vector<1x3606x256xbf16>
    tpu.vector_store %arg13[%c0_35, %c0_36, %c0_37], %52 {strides = array<i32>} : memref<1x3606x256xbf16, #tpu.memory_space<vmem>>, vector<1x3606x256xbf16>,
    return
  }
  func.func @transform_0(%arg0: i32, %arg1: i32) -> (i32, i32, i32) {
    %c0_i32 = arith.constant 0 : i32
    %c0_i32_0 = arith.constant 0 : i32
    return %arg0, %c0_i32, %arg1 : i32, i32, i32
  }
  func.func @transform_1(%arg0: i32, %arg1: i32) -> (i32, i32) {
    %c0_i32 = arith.constant 0 : i32
    %c0_i32_0 = arith.constant 0 : i32
    %c0_i32_1 = arith.constant 0 : i32
    return %c0_i32, %c0_i32_0 : i32, i32
  }
  func.func @transform_2(%arg0: i32, %arg1: i32) -> (i32, i32) {
    %c0_i32 = arith.constant 0 : i32
    %c0_i32_0 = arith.constant 0 : i32
    %c0_i32_1 = arith.constant 0 : i32
    return %c0_i32, %c0_i32_0 : i32, i32
  }
  func.func @transform_3(%arg0: i32, %arg1: i32) -> (i32, i32) {
    %c0_i32 = arith.constant 0 : i32
    %c0_i32_0 = arith.constant 0 : i32
    %c0_i32_1 = arith.constant 0 : i32
    return %c0_i32, %c0_i32_0 : i32, i32
  }
  func.func @transform_4(%arg0: i32, %arg1: i32) -> (i32, i32) {
    %c0_i32 = arith.constant 0 : i32
    %c0_i32_0 = arith.constant 0 : i32
    %c0_i32_1 = arith.constant 0 : i32
    return %c0_i32, %c0_i32_0 : i32, i32
  }
  func.func @transform_5(%arg0: i32, %arg1: i32) -> (i32, i32) {
    %c0_i32 = arith.constant 0 : i32
    %c0_i32_0 = arith.constant 0 : i32
    %c0_i32_1 = arith.constant 0 : i32
    return %c0_i32, %c0_i32_0 : i32, i32
  }
  func.func @transform_6(%arg0: i32, %arg1: i32) -> (i32, i32) {
    %c0_i32 = arith.constant 0 : i32
    %c0_i32_0 = arith.constant 0 : i32
    %c0_i32_1 = arith.constant 0 : i32
    return %c0_i32, %c0_i32_0 : i32, i32
  }
  func.func @transform_7(%arg0: i32, %arg1: i32) -> (i32, i32) {
    %c0_i32 = arith.constant 0 : i32
    %c0_i32_0 = arith.constant 0 : i32
    %c0_i32_1 = arith.constant 0 : i32
    return %c0_i32, %c0_i32_0 : i32, i32
  }
  func.func @transform_8(%arg0: i32, %arg1: i32) -> (i32, i32) {
    %c0_i32 = arith.constant 0 : i32
    %c0_i32_0 = arith.constant 0 : i32
    %c0_i32_1 = arith.constant 0 : i32
    return %c0_i32, %c0_i32_0 : i32, i32
  }
  func.func @transform_9(%arg0: i32, %arg1: i32) -> (i32, i32) {
    %c0_i32 = arith.constant 0 : i32
    %c0_i32_0 = arith.constant 0 : i32
    %c0_i32_1 = arith.constant 0 : i32
    return %c0_i32, %c0_i32_0 : i32, i32
  }
  func.func @transform_10(%arg0: i32, %arg1: i32) -> (i32, i32) {
    %c0_i32 = arith.constant 0 : i32
    %c0_i32_0 = arith.constant 0 : i32
    %c0_i32_1 = arith.constant 0 : i32
    return %c0_i32, %c0_i32_0 : i32, i32
  }
  func.func @transform_11(%arg0: i32, %arg1: i32) -> (i32, i32, i32) {
    %c0_i32 = arith.constant 0 : i32
    %c0_i32_0 = arith.constant 0 : i32
    return %arg0, %c0_i32, %arg1 : i32, i32, i32
  }
}

</mosaic_0001>

<llo_original>
// kernel: ae_forward.1
$region0: #{ae_forward.1}
  #allocation0 [shape = 'u32[]', space=smem, size = 0x4, offset = 0x4, fixed_abs, tag = 'smem constant byte address 0x4 - core index']
  #allocation1 [shape = 'u32[72,128]{1,0:T(1,128)}', space=vmem, size = 0x9000, scoped, tag = 'internal scratch']
  %s0 = inlined_call_operand.vmem [shape: f32[2,3606,256], index: 0, kind: input, shape index: {}]
  %s1 = inlined_call_operand.vmem [shape: bf16[32,3606], index: 1, kind: input, shape index: {}]
  %s2 = inlined_call_operand.vmem [shape: f32[16,32], index: 2, kind: input, shape index: {}]
  %s3 = inlined_call_operand.vmem [shape: f32[16,1], index: 3, kind: input, shape index: {}]
  %s4 = inlined_call_operand.vmem [shape: f32[8,16], index: 4, kind: input, shape index: {}]
  %s5 = inlined_call_operand.vmem [shape: f32[8,1], index: 5, kind: input, shape index: {}]
  %s6 = inlined_call_operand.vmem [shape: f32[16,8], index: 6, kind: input, shape index: {}]
  %s7 = inlined_call_operand.vmem [shape: f32[16,1], index: 7, kind: input, shape index: {}]
  %s8 = inlined_call_operand.vmem [shape: f32[32,16], index: 8, kind: input, shape index: {}]
  %s9 = inlined_call_operand.vmem [shape: f32[32,1], index: 9, kind: input, shape index: {}]
  %s10 = inlined_call_operand.vmem [shape: bf16[3606,32], index: 10, kind: input, shape index: {}]
  %s11 = inlined_call_operand.vmem [shape: bf16[2,3606,256], index: 11, kind: output, shape index: {}]
  %s12 = sld [smem:[#allocation0]]
  $region77: #{ae_forward.1} parent=0
    _
  %s14 = ssub.s32 1, %s12
  %s15 = scalar_select 0, %s14, %s12
  loop: start=0, step=1, limit=4
  $region2: #{ae_forward.1} parent=0 // loop_pre_header
    _
  $region3: #{ae_forward.1} parent=0 // loop_header
    %s17 = sphi 0, %s21
    %p18 = scmp.ge.s32.totalorder %s17, 4
    %s24 = sphi 0, %s36
    %s25 = sphi 0, %s32
    %s26 = sphi 0, %s24
    %s27 = sphi 0, %s25
    %s28 = sphi 0, %s26
    %s29 = sphi 0, %s27
    %s41 = sphi 0, %s43
    %s44 = sphi 0, %s41
    %s45 = sphi 0, %s44
    %s61 = sphi 0, %s45
    %s65 = sphi 0, %s65
    %s67 = sphi 0, %s65
    %s68 = sphi 0, %s67
    %s82 = sphi 0, %s68
    %s86 = sphi 0, %s86
    %s88 = sphi 0, %s86
    %s89 = sphi 0, %s88
    %s103 = sphi 0, %s89
    %s107 = sphi 0, %s107
    %s109 = sphi 0, %s107
    %s110 = sphi 0, %s109
    %s124 = sphi 0, %s110
    %s128 = sphi 0, %s128
    %s130 = sphi 0, %s128
    %s131 = sphi 0, %s130
    %s145 = sphi 0, %s131
    %s149 = sphi 0, %s149
    %s151 = sphi 0, %s149
    %s152 = sphi 0, %s151
    %s166 = sphi 0, %s152
    %s170 = sphi 0, %s170
    %s172 = sphi 0, %s170
    %s173 = sphi 0, %s172
    %s187 = sphi 0, %s173
    %s191 = sphi 0, %s191
    %s193 = sphi 0, %s191
    %s194 = sphi 0, %s193
    %s208 = sphi 0, %s194
    %s212 = sphi 0, %s212
    %s214 = sphi 0, %s212
    %s215 = sphi 0, %s214
    %s229 = sphi 0, %s215
    %s233 = sphi 0, %s233
    %s235 = sphi 0, %s233
    %s236 = sphi 0, %s235
    %s250 = sphi 0, %s236
    %s254 = sphi 0, %s254
    %s256 = sphi 0, %s254
    %s257 = sphi 0, %s256
    %s271 = sphi 0, %s257
    %s279 = sphi 0, %s281
    %s282 = sphi 0, %s279
    %s283 = sphi 0, %s282
    %s299 = sphi 0, %s283
  $region4: #{ae_forward.1} parent=0 // loop_header_branch
    %20 = sbr.rel (%p18) target = $region8
  $region5: #{ae_forward.1} parent=0 // loop_body
    %s22 = ssub.s32 %s17, 1
    %s23 = ssub.s32 %s17, 2
    %s30 = sadd.s32 1, %s25
    %p31 = scmp.ge.s32.totalorder %s30, 1
    %s32 = scalar_select %p31, 0, %s30
    %s33 = sadd.s32 1, %s24
    %s34 = scalar_select %p31, %s33, %s24
    %p35 = scmp.ge.s32.totalorder %s34, 2
    %s36 = scalar_select %p35, 0, %s34
    %s37 = ssub.s32 %s24, %s36
    %s38 = ssub.s32 %s25, %s32
    %s39 = sor.u32 %s37, %s38
    %p40 = scmp.eq.s32.totalorder %s39, 0
    %s42 = sadd.s32 %s41, 1
    %s43 = scalar_select %p40, %s41, %s42
    %p46 = pneg %p40
    %p47 = scmp.eq.s32.totalorder %s17, 1
    %p48 = por %p46, %p47
    %p49 = scmp.ne.s32.totalorder %s41, %s44
    %p50 = scmp.eq.s32.totalorder %s17, 0
    %p51 = por %p49, %p50
    %p52 = scmp.ne.s32.totalorder %s41, %s44
    %p53 = scmp.eq.s32.totalorder %s22, 1
    %p54 = por %p52, %p53
    %p55 = scmp.ne.s32.totalorder %s44, %s45
    %p56 = scmp.eq.s32.totalorder %s22, 0
    %p57 = por %p55, %p56
    %p58 = scmp.ne.s32.totalorder %s44, %s45
    %p59 = scmp.eq.s32.totalorder %s23, 1
    %p60 = por %p58, %p59
    %p62 = scmp.ne.s32.totalorder %s45, %s61
    %p63 = scmp.eq.s32.totalorder %s23, 0
    %p64 = por %p62, %p63
    %s66 = sadd.s32 %s65, 1
    %p69 = scmp.eq.s32.totalorder %s17, 1
    %p70 = scmp.ne.s32.totalorder %s65, %s67
    %p71 = scmp.eq.s32.totalorder %s17, 0
    %p72 = por %p70, %p71
    %p73 = scmp.ne.s32.totalorder %s65, %s67
    %p74 = scmp.eq.s32.totalorder %s22, 1
    %p75 = por %p73, %p74
    %p76 = scmp.ne.s32.totalorder %s67, %s68
    %p77 = scmp.eq.s32.totalorder %s22, 0
    %p78 = por %p76, %p77
    %p79 = scmp.ne.s32.totalorder %s67, %s68
    %p80 = scmp.eq.s32.totalorder %s23, 1
    %p81 = por %p79, %p80
    %p83 = scmp.ne.s32.totalorder %s68, %s82
    %p84 = scmp.eq.s32.totalorder %s23, 0
    %p85 = por %p83, %p84
    %s87 = sadd.s32 %s86, 1
    %p90 = scmp.eq.s32.totalorder %s17, 1
    %p91 = scmp.ne.s32.totalorder %s86, %s88
    %p92 = scmp.eq.s32.totalorder %s17, 0
    %p93 = por %p91, %p92
    %p94 = scmp.ne.s32.totalorder %s86, %s88
    %p95 = scmp.eq.s32.totalorder %s22, 1
    %p96 = por %p94, %p95
    %p97 = scmp.ne.s32.totalorder %s88, %s89
    %p98 = scmp.eq.s32.totalorder %s22, 0
    %p99 = por %p97, %p98
    %p100 = scmp.ne.s32.totalorder %s88, %s89
    %p101 = scmp.eq.s32.totalorder %s23, 1
    %p102 = por %p100, %p101
    %p104 = scmp.ne.s32.totalorder %s89, %s103
    %p105 = scmp.eq.s32.totalorder %s23, 0
    %p106 = por %p104, %p105
    %s108 = sadd.s32 %s107, 1
    %p111 = scmp.eq.s32.totalorder %s17, 1
    %p112 = scmp.ne.s32.totalorder %s107, %s109
    %p113 = scmp.eq.s32.totalorder %s17, 0
    %p114 = por %p112, %p113
    %p115 = scmp.ne.s32.totalorder %s107, %s109
    %p116 = scmp.eq.s32.totalorder %s22, 1
    %p117 = por %p115, %p116
    %p118 = scmp.ne.s32.totalorder %s109, %s110
    %p119 = scmp.eq.s32.totalorder %s22, 0
    %p120 = por %p118, %p119
    %p121 = scmp.ne.s32.totalorder %s109, %s110
    %p122 = scmp.eq.s32.totalorder %s23, 1
    %p123 = por %p121, %p122
    %p125 = scmp.ne.s32.totalorder %s110, %s124
    %p126 = scmp.eq.s32.totalorder %s23, 0
    %p127 = por %p125, %p126
    %s129 = sadd.s32 %s128, 1
    %p132 = scmp.eq.s32.totalorder %s17, 1
    %p133 = scmp.ne.s32.totalorder %s128, %s130
    %p134 = scmp.eq.s32.totalorder %s17, 0
    %p135 = por %p133, %p134
    %p136 = scmp.ne.s32.totalorder %s128, %s130
    %p137 = scmp.eq.s32.totalorder %s22, 1
    %p138 = por %p136, %p137
    %p139 = scmp.ne.s32.totalorder %s130, %s131
    %p140 = scmp.eq.s32.totalorder %s22, 0
    %p141 = por %p139, %p140
    %p142 = scmp.ne.s32.totalorder %s130, %s131
    %p143 = scmp.eq.s32.totalorder %s23, 1
    %p144 = por %p142, %p143
    %p146 = scmp.ne.s32.totalorder %s131, %s145
    %p147 = scmp.eq.s32.totalorder %s23, 0
    %p148 = por %p146, %p147
    %s150 = sadd.s32 %s149, 1
    %p153 = scmp.eq.s32.totalorder %s17, 1
    %p154 = scmp.ne.s32.totalorder %s149, %s151
    %p155 = scmp.eq.s32.totalorder %s17, 0
    %p156 = por %p154, %p155
    %p157 = scmp.ne.s32.totalorder %s149, %s151
    %p158 = scmp.eq.s32.totalorder %s22, 1
    %p159 = por %p157, %p158
    %p160 = scmp.ne.s32.totalorder %s151, %s152
    %p161 = scmp.eq.s32.totalorder %s22, 0
    %p162 = por %p160, %p161
    %p163 = scmp.ne.s32.totalorder %s151, %s152
    %p164 = scmp.eq.s32.totalorder %s23, 1
    %p165 = por %p163, %p164
    %p167 = scmp.ne.s32.totalorder %s152, %s166
    %p168 = scmp.eq.s32.totalorder %s23, 0
    %p169 = por %p167, %p168
    %s171 = sadd.s32 %s170, 1
    %p174 = scmp.eq.s32.totalorder %s17, 1
    %p175 = scmp.ne.s32.totalorder %s170, %s172
    %p176 = scmp.eq.s32.totalorder %s17, 0
    %p177 = por %p175, %p176
    %p178 = scmp.ne.s32.totalorder %s170, %s172
    %p179 = scmp.eq.s32.totalorder %s22, 1
    %p180 = por %p178, %p179
    %p181 = scmp.ne.s32.totalorder %s172, %s173
    %p182 = scmp.eq.s32.totalorder %s22, 0
    %p183 = por %p181, %p182
    %p184 = scmp.ne.s32.totalorder %s172, %s173
    %p185 = scmp.eq.s32.totalorder %s23, 1
    %p186 = por %p184, %p185
    %p188 = scmp.ne.s32.totalorder %s173, %s187
    %p189 = scmp.eq.s32.totalorder %s23, 0
    %p190 = por %p188, %p189
    %s192 = sadd.s32 %s191, 1
    %p195 = scmp.eq.s32.totalorder %s17, 1
    %p196 = scmp.ne.s32.totalorder %s191, %s193
    %p197 = scmp.eq.s32.totalorder %s17, 0
    %p198 = por %p196, %p197
    %p199 = scmp.ne.s32.totalorder %s191, %s193
    %p200 = scmp.eq.s32.totalorder %s22, 1
    %p201 = por %p199, %p200
    %p202 = scmp.ne.s32.totalorder %s193, %s194
    %p203 = scmp.eq.s32.totalorder %s22, 0
    %p204 = por %p202, %p203
    %p205 = scmp.ne.s32.totalorder %s193, %s194
    %p206 = scmp.eq.s32.totalorder %s23, 1
    %p207 = por %p205, %p206
    %p209 = scmp.ne.s32.totalorder %s194, %s208
    %p210 = scmp.eq.s32.totalorder %s23, 0
    %p211 = por %p209, %p210
    %s213 = sadd.s32 %s212, 1
    %p216 = scmp.eq.s32.totalorder %s17, 1
    %p217 = scmp.ne.s32.totalorder %s212, %s214
    %p218 = scmp.eq.s32.totalorder %s17, 0
    %p219 = por %p217, %p218
    %p220 = scmp.ne.s32.totalorder %s212, %s214
    %p221 = scmp.eq.s32.totalorder %s22, 1
    %p222 = por %p220, %p221
    %p223 = scmp.ne.s32.totalorder %s214, %s215
    %p224 = scmp.eq.s32.totalorder %s22, 0
    %p225 = por %p223, %p224
    %p226 = scmp.ne.s32.totalorder %s214, %s215
    %p227 = scmp.eq.s32.totalorder %s23, 1
    %p228 = por %p226, %p227
    %p230 = scmp.ne.s32.totalorder %s215, %s229
    %p231 = scmp.eq.s32.totalorder %s23, 0
    %p232 = por %p230, %p231
    %s234 = sadd.s32 %s233, 1
    %p237 = scmp.eq.s32.totalorder %s17, 1
    %p238 = scmp.ne.s32.totalorder %s233, %s235
    %p239 = scmp.eq.s32.totalorder %s17, 0
    %p240 = por %p238, %p239
    %p241 = scmp.ne.s32.totalorder %s233, %s235
    %p242 = scmp.eq.s32.totalorder %s22, 1
    %p243 = por %p241, %p242
    %p244 = scmp.ne.s32.totalorder %s235, %s236
    %p245 = scmp.eq.s32.totalorder %s22, 0
    %p246 = por %p244, %p245
    %p247 = scmp.ne.s32.totalorder %s235, %s236
    %p248 = scmp.eq.s32.totalorder %s23, 1
    %p249 = por %p247, %p248
    %p251 = scmp.ne.s32.totalorder %s236, %s250
    %p252 = scmp.eq.s32.totalorder %s23, 0
    %p253 = por %p251, %p252
    %s255 = sadd.s32 %s254, 1
    %p258 = scmp.eq.s32.totalorder %s17, 1
    %p259 = scmp.ne.s32.totalorder %s254, %s256
    %p260 = scmp.eq.s32.totalorder %s17, 0
    %p261 = por %p259, %p260
    %p262 = scmp.ne.s32.totalorder %s254, %s256
    %p263 = scmp.eq.s32.totalorder %s22, 1
    %p264 = por %p262, %p263
    %p265 = scmp.ne.s32.totalorder %s256, %s257
    %p266 = scmp.eq.s32.totalorder %s22, 0
    %p267 = por %p265, %p266
    %p268 = scmp.ne.s32.totalorder %s256, %s257
    %p269 = scmp.eq.s32.totalorder %s23, 1
    %p270 = por %p268, %p269
    %p272 = scmp.ne.s32.totalorder %s257, %s271
    %p273 = scmp.eq.s32.totalorder %s23, 0
    %p274 = por %p272, %p273
    %s275 = ssub.s32 %s24, %s36
    %s276 = ssub.s32 %s25, %s32
    %s277 = sor.u32 %s275, %s276
    %p278 = scmp.eq.s32.totalorder %s277, 0
    %s280 = sadd.s32 %s279, 1
    %s281 = scalar_select %p278, %s279, %s280
    %p284 = pneg %p278
    %p285 = scmp.eq.s32.totalorder %s17, 1
    %p286 = por %p284, %p285
    %p287 = scmp.ne.s32.totalorder %s279, %s282
    %p288 = scmp.eq.s32.totalorder %s17, 0
    %p289 = por %p287, %p288
    %p290 = scmp.ne.s32.totalorder %s279, %s282
    %p291 = scmp.eq.s32.totalorder %s22, 1
    %p292 = por %p290, %p291
    %p293 = scmp.ne.s32.totalorder %s282, %s283
    %p294 = scmp.eq.s32.totalorder %s22, 0
    %p295 = por %p293, %p294
    %p296 = scmp.ne.s32.totalorder %s282, %s283
    %p297 = scmp.eq.s32.totalorder %s23, 1
    %p298 = por %p296, %p297
    %p300 = scmp.ne.s32.totalorder %s283, %s299
    %p301 = scmp.eq.s32.totalorder %s23, 0
    %p302 = por %p300, %p301
    %p303 = scmp.le.s32.totalorder 1, %s17
    %p304 = scmp.lt.s32.totalorder %s17, 3
    %p305 = pnand %p303, %p304
    %p306 = pneg %p305
    // Predicated region
    $region9: #{ae_forward.1} parent=5 // pred_check
      _
    $region10: #{ae_forward.1} parent=5 // pred_check_branch
      %308 = sbr.rel (%p305) target = $region12
    $region11: #{ae_forward.1} parent=5 // pred_region
      %s309 = ssub.s32 %s17, 1
      // Predicated region
      $region13: #{ae_forward.1} parent=11 // pred_check
        %p310 = pneg %p78
      $region14: #{ae_forward.1} parent=11 // pred_check_branch
        %312 = sbr.rel (%p310) target = $region16
      $region15: #{ae_forward.1} parent=11 // pred_region
        _
      $region16: #{ae_forward.1} parent=11 // pred_fallthru
        _
      // Predicated region
      $region17: #{ae_forward.1} parent=11 // pred_check
        %p313 = pneg %p99
      $region18: #{ae_forward.1} parent=11 // pred_check_branch
        %315 = sbr.rel (%p313) target = $region20
      $region19: #{ae_forward.1} parent=11 // pred_region
        _
      $region20: #{ae_forward.1} parent=11 // pred_fallthru
        _
      // Predicated region
      $region21: #{ae_forward.1} parent=11 // pred_check
        %p316 = pneg %p120
      $region22: #{ae_forward.1} parent=11 // pred_check_branch
        %318 = sbr.rel (%p316) target = $region24
      $region23: #{ae_forward.1} parent=11 // pred_region
        _
      $region24: #{ae_forward.1} parent=11 // pred_fallthru
        _
      // Predicated region
      $region25: #{ae_forward.1} parent=11 // pred_check
        %p319 = pneg %p141
      $region26: #{ae_forward.1} parent=11 // pred_check_branch
        %321 = sbr.rel (%p319) target = $region28
      $region27: #{ae_forward.1} parent=11 // pred_region
        _
      $region28: #{ae_forward.1} parent=11 // pred_fallthru
        _
      // Predicated region
      $region29: #{ae_forward.1} parent=11 // pred_check
        %p322 = pneg %p162
      $region30: #{ae_forward.1} parent=11 // pred_check_branch
        %324 = sbr.rel (%p322) target = $region32
      $region31: #{ae_forward.1} parent=11 // pred_region
        _
      $region32: #{ae_forward.1} parent=11 // pred_fallthru
        _
      // Predicated region
      $region33: #{ae_forward.1} parent=11 // pred_check
        %p325 = pneg %p183
      $region34: #{ae_forward.1} parent=11 // pred_check_branch
        %327 = sbr.rel (%p325) target = $region36
      $region35: #{ae_forward.1} parent=11 // pred_region
        _
      $region36: #{ae_forward.1} parent=11 // pred_fallthru
        _
      // Predicated region
      $region37: #{ae_forward.1} parent=11 // pred_check
        %p328 = pneg %p204
      $region38: #{ae_forward.1} parent=11 // pred_check_branch
        %330 = sbr.rel (%p328) target = $region40
      $region39: #{ae_forward.1} parent=11 // pred_region
        _
      $region40: #{ae_forward.1} parent=11 // pred_fallthru
        _
      // Predicated region
      $region41: #{ae_forward.1} parent=11 // pred_check
        %p331 = pneg %p225
      $region42: #{ae_forward.1} parent=11 // pred_check_branch
        %333 = sbr.rel (%p331) target = $region44
      $region43: #{ae_forward.1} parent=11 // pred_region
        _
      $region44: #{ae_forward.1} parent=11 // pred_fallthru
        _
      // Predicated region
      $region45: #{ae_forward.1} parent=11 // pred_check
        %p334 = pneg %p246
      $region46: #{ae_forward.1} parent=11 // pred_check_branch
        %336 = sbr.rel (%p334) target = $region48
      $region47: #{ae_forward.1} parent=11 // pred_region
        _
      $region48: #{ae_forward.1} parent=11 // pred_fallthru
        _
      // Predicated region
      $region49: #{ae_forward.1} parent=11 // pred_check
        %p337 = pneg %p267
      $region50: #{ae_forward.1} parent=11 // pred_check_branch
        %339 = sbr.rel (%p337) target = $region52
      $region51: #{ae_forward.1} parent=11 // pred_region
        _
      $region52: #{ae_forward.1} parent=11 // pred_fallthru
        _
    $region12: #{ae_forward.1} parent=5 // pred_fallthru
      _
    %p340 = scmp.lt.s32.totalorder %s17, 2
    // Predicated region
    $region53: #{ae_forward.1} parent=5 // pred_check
      %p341 = pneg %p340
    $region54: #{ae_forward.1} parent=5 // pred_check_branch
      %343 = sbr.rel (%p341) target = $region56
    $region55: #{ae_forward.1} parent=5 // pred_region
      // Predicated region
      $region57: #{ae_forward.1} parent=55 // pred_check
        %p344 = pneg %p51
      $region58: #{ae_forward.1} parent=55 // pred_check_branch
        %346 = sbr.rel (%p344) target = $region60
      $region59: #{ae_forward.1} parent=55 // pred_region
        %s347 = smul.u32 2, %s25
        %p348 = scmp.lt.s32.totalorder %s24, 1
        %s349 = scalar_select %p348, %s24, 1
        %p350 = scmp.lt.s32.totalorder %s347, 1
        %s351 = scalar_select %p350, %s347, 1
        %s352 = smul.addr %s349, 902
        %s353 = sadd.s32 %s351, %s352
        %s354 = smul.addr %s353, 8
        %s355 = scalar_lea.vmem %s0, %s354
        %s356 = smul.u32 2, %s25
      $region60: #{ae_forward.1} parent=55 // pred_fallthru
        _
    $region56: #{ae_forward.1} parent=5 // pred_fallthru
      _
    %p357 = scmp.le.s32.totalorder 1, %s17
    %p358 = scmp.lt.s32.totalorder %s17, 3
    %p359 = pnand %p357, %p358
    %p360 = pneg %p359
    // Predicated region
    $region61: #{ae_forward.1} parent=5 // pred_check
      _
    $region62: #{ae_forward.1} parent=5 // pred_check_branch
      %362 = sbr.rel (%p359) target = $region64
    $region63: #{ae_forward.1} parent=5 // pred_region
      %s363 = ssub.s32 %s17, 1
      %s364 = smul.u32 2, %s27
      %p365 = scmp.lt.s32.totalorder %s26, 1
      %s366 = scalar_select %p365, %s26, 1
      %p367 = scmp.lt.s32.totalorder %s364, 1
      %s368 = scalar_select %p367, %s364, 1
      %s369 = smul.addr %s366, 902
      %s370 = sadd.s32 %s368, %s369
      %s371 = smul.addr %s370, 8
      %s372 = scalar_lea.vmem %s0, %s371
      %p373 = pneg %p57
      %p374 = pneg %p54
      %p375 = pneg %p78
      %p376 = pneg %p75
      %p377 = pneg %p99
      %p378 = pneg %p96
      %p379 = pneg %p120
      %p380 = pneg %p117
      %p381 = pneg %p141
      %p382 = pneg %p138
      %p383 = pneg %p162
      %p384 = pneg %p159
      %p385 = pneg %p183
      %p386 = pneg %p180
      %p387 = pneg %p204
      %p388 = pneg %p201
      %p389 = pneg %p225
      %p390 = pneg %p222
      %p391 = pneg %p246
      %p392 = pneg %p243
      %p393 = pneg %p267
      %p394 = pneg %p264
      %p395 = pneg %p295
      %p396 = pneg %p292
      %s397 = smul.u32 2, %s27
      %p398 = scmp.lt.s32.totalorder %s26, 1
      %s399 = scalar_select %p398, %s26, 1
      %p400 = scmp.lt.s32.totalorder %s397, 1
      %s401 = scalar_select %p400, %s397, 1
      %s402 = smul.addr %s399, 902
      %s403 = sadd.s32 %s401, %s402
      %s404 = smul.addr %s403, 4
      %s405 = scalar_lea.vmem %s11, %s404
      %s406 = smul.u32 2, %s27
      %p407 = scmp.lt.s32.totalorder %s26, 1
      %s408 = scalar_select %p407, %s26, 1
      %p409 = scmp.lt.s32.totalorder %s406, 1
      %s410 = scalar_select %p409, %s406, 1
      %s411 = smul.addr %s408, 902
      %s412 = sadd.s32 %s410, %s411
      %s413 = smul.addr %s412, 8
      %s414 = scalar_lea.vmem %s0, %s413
      %s415 = smul.u32 2, %s27
      %s416 = smul.u32 2, %s27
      %p417 = scmp.lt.s32.totalorder %s26, 1
      %s418 = scalar_select %p417, %s26, 1
      %p419 = scmp.lt.s32.totalorder %s416, 1
      %s420 = scalar_select %p419, %s416, 1
      %s421 = smul.addr %s418, 902
      %s422 = sadd.s32 %s420, %s421
      %s423 = smul.addr %s422, 4
      %s424 = scalar_lea.vmem %s11, %s423
      %s425 = smul.u32 2, %s27
      %v427 = vld [vmem:[%s414] sm:$0xff]
      %v428 = vld [vmem:[%s414 + $0x8] sm:$0xff]
      %v429 = vld [vmem:[%s414 + $0x10] sm:$0xff]
      %v430 = vld [vmem:[%s414 + $0x18] sm:$0xff]
      %v431 = vld [vmem:[%s414 + $0x20] sm:$0xff]
      %v432 = vld [vmem:[%s414 + $0x28] sm:$0xff]
      %v433 = vld [vmem:[%s414 + $0x30] sm:$0xff]
      %v434 = vld [vmem:[%s414 + $0x38] sm:$0xff]
      %v435 = vld [vmem:[%s414 + $0x40] sm:$0xff]
      %v436 = vld [vmem:[%s414 + $0x48] sm:$0xff]
      %v437 = vld [vmem:[%s414 + $0x50] sm:$0xff]
      %v438 = vld [vmem:[%s414 + $0x58] sm:$0xff]
      %v439 = vld [vmem:[%s414 + $0x60] sm:$0xff]
      %v440 = vld [vmem:[%s414 + $0x68] sm:$0xff]
      %v441 = vld [vmem:[%s414 + $0x70] sm:$0xff]
      %v442 = vld [vmem:[%s414 + $0x78] sm:$0xff]
      %v443 = vld [vmem:[%s414 + $0x80] sm:$0xff]
      %v444 = vld [vmem:[%s414 + $0x88] sm:$0xff]
      %v445 = vld [vmem:[%s414 + $0x90] sm:$0xff]
      %v446 = vld [vmem:[%s414 + $0x98] sm:$0xff]
      %v447 = vld [vmem:[%s414 + $0xa0] sm:$0xff]
      %v448 = vld [vmem:[%s414 + $0xa8] sm:$0xff]
      %v449 = vld [vmem:[%s414 + $0xb0] sm:$0xff]
      %v450 = vld [vmem:[%s414 + $0xb8] sm:$0xff]
      %v451 = vld [vmem:[%s414 + $0xc0] sm:$0xff]
      %v452 = vld [vmem:[%s414 + $0xc8] sm:$0xff]
      %v453 = vld [vmem:[%s414 + $0xd0] sm:$0xff]
      %v454 = vld [vmem:[%s414 + $0xd8] sm:$0xff]
      %v455 = vld [vmem:[%s414 + $0xe0] sm:$0xff]
      %v456 = vld [vmem:[%s414 + $0xe8] sm:$0xff]
      %v457 = vld [vmem:[%s414 + $0xf0] sm:$0xff]
      %v458 = vld [vmem:[%s414 + $0xf8] sm:$0xff]
      %v459 = vld [vmem:[%s414 + $0x100] sm:$0xff]
      %v460 = vld [vmem:[%s414 + $0x108] sm:$0xff]
      %v461 = vld [vmem:[%s414 + $0x110] sm:$0xff]
      %v462 = vld [vmem:[%s414 + $0x118] sm:$0xff]
      %v463 = vld [vmem:[%s414 + $0x120] sm:$0xff]
      %v464 = vld [vmem:[%s414 + $0x128] sm:$0xff]
      %v465 = vld [vmem:[%s414 + $0x130] sm:$0xff]
      %v466 = vld [vmem:[%s414 + $0x138] sm:$0xff]
      %v467 = vld [vmem:[%s414 + $0x140] sm:$0xff]
      %v468 = vld [vmem:[%s414 + $0x148] sm:$0xff]
      %v469 = vld [vmem:[%s414 + $0x150] sm:$0xff]
      %v470 = vld [vmem:[%s414 + $0x158] sm:$0xff]
      %v471 = vld [vmem:[%s414 + $0x160] sm:$0xff]
      %v472 = vld [vmem:[%s414 + $0x168] sm:$0xff]
      %v473 = vld [vmem:[%s414 + $0x170] sm:$0xff]
      %v474 = vld [vmem:[%s414 + $0x178] sm:$0xff]
      %v475 = vld [vmem:[%s414 + $0x180] sm:$0xff]
      %v476 = vld [vmem:[%s414 + $0x188] sm:$0xff]
      %v477 = vld [vmem:[%s414 + $0x190] sm:$0xff]
      %v478 = vld [vmem:[%s414 + $0x198] sm:$0xff]
      %v479 = vld [vmem:[%s414 + $0x1a0] sm:$0xff]
      %v480 = vld [vmem:[%s414 + $0x1a8] sm:$0xff]
      %v481 = vld [vmem:[%s414 + $0x1b0] sm:$0xff]
      %v482 = vld [vmem:[%s414 + $0x1b8] sm:$0xff]
      %v483 = vld [vmem:[%s414 + $0x1c0] sm:$0xff]
      %v484 = vld [vmem:[%s414 + $0x1c8] sm:$0xff]
      %v485 = vld [vmem:[%s414 + $0x1d0] sm:$0xff]
      %v486 = vld [vmem:[%s414 + $0x1d8] sm:$0xff]
      %v487 = vld [vmem:[%s414 + $0x1e0] sm:$0xff]
      %v488 = vld [vmem:[%s414 + $0x1e8] sm:$0xff]
      %v489 = vld [vmem:[%s414 + $0x1f0] sm:$0xff]
      %v490 = vld [vmem:[%s414 + $0x1f8] sm:$0xff]
      %v491 = vld [vmem:[%s414 + $0x200] sm:$0xff]
      %v492 = vld [vmem:[%s414 + $0x208] sm:$0xff]
      %v493 = vld [vmem:[%s414 + $0x210] sm:$0xff]
      %v494 = vld [vmem:[%s414 + $0x218] sm:$0xff]
      %v495 = vld [vmem:[%s414 + $0x220] sm:$0xff]
      %v496 = vld [vmem:[%s414 + $0x228] sm:$0xff]
      %v497 = vld [vmem:[%s414 + $0x230] sm:$0xff]
      %v498 = vld [vmem:[%s414 + $0x238] sm:$0xff]
      %v499 = vld [vmem:[%s414 + $0x240] sm:$0xff]
      %v500 = vld [vmem:[%s414 + $0x248] sm:$0xff]
      %v501 = vld [vmem:[%s414 + $0x250] sm:$0xff]
      %v502 = vld [vmem:[%s414 + $0x258] sm:$0xff]
      %v503 = vld [vmem:[%s414 + $0x260] sm:$0xff]
      %v504 = vld [vmem:[%s414 + $0x268] sm:$0xff]
      %v505 = vld [vmem:[%s414 + $0x270] sm:$0xff]
      %v506 = vld [vmem:[%s414 + $0x278] sm:$0xff]
      %v507 = vld [vmem:[%s414 + $0x280] sm:$0xff]
      %v508 = vld [vmem:[%s414 + $0x288] sm:$0xff]
      %v509 = vld [vmem:[%s414 + $0x290] sm:$0xff]
      %v510 = vld [vmem:[%s414 + $0x298] sm:$0xff]
      %v511 = vld [vmem:[%s414 + $0x2a0] sm:$0xff]
      %v512 = vld [vmem:[%s414 + $0x2a8] sm:$0xff]
      %v513 = vld [vmem:[%s414 + $0x2b0] sm:$0xff]
      %v514 = vld [vmem:[%s414 + $0x2b8] sm:$0xff]
      %v515 = vld [vmem:[%s414 + $0x2c0] sm:$0xff]
      %v516 = vld [vmem:[%s414 + $0x2c8] sm:$0xff]
      %v517 = vld [vmem:[%s414 + $0x2d0] sm:$0xff]
      %v518 = vld [vmem:[%s414 + $0x2d8] sm:$0xff]
      %v519 = vld [vmem:[%s414 + $0x2e0] sm:$0xff]
      %v520 = vld [vmem:[%s414 + $0x2e8] sm:$0xff]
      %v521 = vld [vmem:[%s414 + $0x2f0] sm:$0xff]
      %v522 = vld [vmem:[%s414 + $0x2f8] sm:$0xff]
      %v523 = vld [vmem:[%s414 + $0x300] sm:$0xff]
      %v524 = vld [vmem:[%s414 + $0x308] sm:$0xff]
      %v525 = vld [vmem:[%s414 + $0x310] sm:$0xff]
      %v526 = vld [vmem:[%s414 + $0x318] sm:$0xff]
      %v527 = vld [vmem:[%s414 + $0x320] sm:$0xff]
      %v528 = vld [vmem:[%s414 + $0x328] sm:$0xff]
      %v529 = vld [vmem:[%s414 + $0x330] sm:$0xff]
      %v530 = vld [vmem:[%s414 + $0x338] sm:$0xff]
      %v531 = vld [vmem:[%s414 + $0x340] sm:$0xff]
      %v532 = vld [vmem:[%s414 + $0x348] sm:$0xff]
      %v533 = vld [vmem:[%s414 + $0x350] sm:$0xff]
      %v534 = vld [vmem:[%s414 + $0x358] sm:$0xff]
      %v535 = vld [vmem:[%s414 + $0x360] sm:$0xff]
      %v536 = vld [vmem:[%s414 + $0x368] sm:$0xff]
      %v537 = vld [vmem:[%s414 + $0x370] sm:$0xff]
      %v538 = vld [vmem:[%s414 + $0x378] sm:$0xff]
      %v539 = vld [vmem:[%s414 + $0x380] sm:$0xff]
      %v540 = vld [vmem:[%s414 + $0x388] sm:$0xff]
      %v541 = vld [vmem:[%s414 + $0x390] sm:$0xff]
      %v542 = vld [vmem:[%s414 + $0x398] sm:$0xff]
      %v543 = vld [vmem:[%s414 + $0x3a0] sm:$0xff]
      %v544 = vld [vmem:[%s414 + $0x3a8] sm:$0xff]
      %v545 = vld [vmem:[%s414 + $0x3b0] sm:$0xff]
      %v546 = vld [vmem:[%s414 + $0x3b8] sm:$0xff]
      %v547 = vld [vmem:[%s414 + $0x3c0] sm:$0xff]
      %v548 = vld [vmem:[%s414 + $0x3c8] sm:$0xff]
      %v549 = vld [vmem:[%s414 + $0x3d0] sm:$0xff]
      %v550 = vld [vmem:[%s414 + $0x3d8] sm:$0xff]
      %v551 = vld [vmem:[%s414 + $0x3e0] sm:$0xff]
      %v552 = vld [vmem:[%s414 + $0x3e8] sm:$0xff]
      %v553 = vld [vmem:[%s414 + $0x3f0] sm:$0xff]
      %v554 = vld [vmem:[%s414 + $0x3f8] sm:$0xff]
      %v555 = vld [vmem:[%s414 + $0x400] sm:$0xff]
      %v556 = vld [vmem:[%s414 + $0x408] sm:$0xff]
      %v557 = vld [vmem:[%s414 + $0x410] sm:$0xff]
      %v558 = vld [vmem:[%s414 + $0x418] sm:$0xff]
      %v559 = vld [vmem:[%s414 + $0x420] sm:$0xff]
      %v560 = vld [vmem:[%s414 + $0x428] sm:$0xff]
      %v561 = vld [vmem:[%s414 + $0x430] sm:$0xff]
      %v562 = vld [vmem:[%s414 + $0x438] sm:$0xff]
      %v563 = vld [vmem:[%s414 + $0x440] sm:$0xff]
      %v564 = vld [vmem:[%s414 + $0x448] sm:$0xff]
      %v565 = vld [vmem:[%s414 + $0x450] sm:$0xff]
      %v566 = vld [vmem:[%s414 + $0x458] sm:$0xff]
      %v567 = vld [vmem:[%s414 + $0x460] sm:$0xff]
      %v568 = vld [vmem:[%s414 + $0x468] sm:$0xff]
      %v569 = vld [vmem:[%s414 + $0x470] sm:$0xff]
      %v570 = vld [vmem:[%s414 + $0x478] sm:$0xff]
      %v571 = vld [vmem:[%s414 + $0x480] sm:$0xff]
      %v572 = vld [vmem:[%s414 + $0x488] sm:$0xff]
      %v573 = vld [vmem:[%s414 + $0x490] sm:$0xff]
      %v574 = vld [vmem:[%s414 + $0x498] sm:$0xff]
      %v575 = vld [vmem:[%s414 + $0x4a0] sm:$0xff]
      %v576 = vld [vmem:[%s414 + $0x4a8] sm:$0xff]
      %v577 = vld [vmem:[%s414 + $0x4b0] sm:$0xff]
      %v578 = vld [vmem:[%s414 + $0x4b8] sm:$0xff]
      %v579 = vld [vmem:[%s414 + $0x4c0] sm:$0xff]
      %v580 = vld [vmem:[%s414 + $0x4c8] sm:$0xff]
      %v581 = vld [vmem:[%s414 + $0x4d0] sm:$0xff]
      %v582 = vld [vmem:[%s414 + $0x4d8] sm:$0xff]
      %v583 = vld [vmem:[%s414 + $0x4e0] sm:$0xff]
      %v584 = vld [vmem:[%s414 + $0x4e8] sm:$0xff]
      %v585 = vld [vmem:[%s414 + $0x4f0] sm:$0xff]
      %v586 = vld [vmem:[%s414 + $0x4f8] sm:$0xff]
      %v587 = vld [vmem:[%s414 + $0x500] sm:$0xff]
      %v588 = vld [vmem:[%s414 + $0x508] sm:$0xff]
      %v589 = vld [vmem:[%s414 + $0x510] sm:$0xff]
      %v590 = vld [vmem:[%s414 + $0x518] sm:$0xff]
      %v591 = vld [vmem:[%s414 + $0x520] sm:$0xff]
      %v592 = vld [vmem:[%s414 + $0x528] sm:$0xff]
      %v593 = vld [vmem:[%s414 + $0x530] sm:$0xff]
      %v594 = vld [vmem:[%s414 + $0x538] sm:$0xff]
      %v595 = vld [vmem:[%s414 + $0x540] sm:$0xff]
      %v596 = vld [vmem:[%s414 + $0x548] sm:$0xff]
      %v597 = vld [vmem:[%s414 + $0x550] sm:$0xff]
      %v598 = vld [vmem:[%s414 + $0x558] sm:$0xff]
      %v599 = vld [vmem:[%s414 + $0x560] sm:$0xff]
      %v600 = vld [vmem:[%s414 + $0x568] sm:$0xff]
      %v601 = vld [vmem:[%s414 + $0x570] sm:$0xff]
      %v602 = vld [vmem:[%s414 + $0x578] sm:$0xff]
      %v603 = vld [vmem:[%s414 + $0x580] sm:$0xff]
      %v604 = vld [vmem:[%s414 + $0x588] sm:$0xff]
      %v605 = vld [vmem:[%s414 + $0x590] sm:$0xff]
      %v606 = vld [vmem:[%s414 + $0x598] sm:$0xff]
      %v607 = vld [vmem:[%s414 + $0x5a0] sm:$0xff]
      %v608 = vld [vmem:[%s414 + $0x5a8] sm:$0xff]
      %v609 = vld [vmem:[%s414 + $0x5b0] sm:$0xff]
      %v610 = vld [vmem:[%s414 + $0x5b8] sm:$0xff]
      %v611 = vld [vmem:[%s414 + $0x5c0] sm:$0xff]
      %v612 = vld [vmem:[%s414 + $0x5c8] sm:$0xff]
      %v613 = vld [vmem:[%s414 + $0x5d0] sm:$0xff]
      %v614 = vld [vmem:[%s414 + $0x5d8] sm:$0xff]
      %v615 = vld [vmem:[%s414 + $0x5e0] sm:$0xff]
      %v616 = vld [vmem:[%s414 + $0x5e8] sm:$0xff]
      %v617 = vld [vmem:[%s414 + $0x5f0] sm:$0xff]
      %v618 = vld [vmem:[%s414 + $0x5f8] sm:$0xff]
      %v619 = vld [vmem:[%s414 + $0x600] sm:$0xff]
      %v620 = vld [vmem:[%s414 + $0x608] sm:$0xff]
      %v621 = vld [vmem:[%s414 + $0x610] sm:$0xff]
      %v622 = vld [vmem:[%s414 + $0x618] sm:$0xff]
      %v623 = vld [vmem:[%s414 + $0x620] sm:$0xff]
      %v624 = vld [vmem:[%s414 + $0x628] sm:$0xff]
      %v625 = vld [vmem:[%s414 + $0x630] sm:$0xff]
      %v626 = vld [vmem:[%s414 + $0x638] sm:$0xff]
      %v627 = vld [vmem:[%s414 + $0x640] sm:$0xff]
      %v628 = vld [vmem:[%s414 + $0x648] sm:$0xff]
      %v629 = vld [vmem:[%s414 + $0x650] sm:$0xff]
      %v630 = vld [vmem:[%s414 + $0x658] sm:$0xff]
      %v631 = vld [vmem:[%s414 + $0x660] sm:$0xff]
      %v632 = vld [vmem:[%s414 + $0x668] sm:$0xff]
      %v633 = vld [vmem:[%s414 + $0x670] sm:$0xff]
      %v634 = vld [vmem:[%s414 + $0x678] sm:$0xff]
      %v635 = vld [vmem:[%s414 + $0x680] sm:$0xff]
      %v636 = vld [vmem:[%s414 + $0x688] sm:$0xff]
      %v637 = vld [vmem:[%s414 + $0x690] sm:$0xff]
      %v638 = vld [vmem:[%s414 + $0x698] sm:$0xff]
      %v639 = vld [vmem:[%s414 + $0x6a0] sm:$0xff]
      %v640 = vld [vmem:[%s414 + $0x6a8] sm:$0xff]
      %v641 = vld [vmem:[%s414 + $0x6b0] sm:$0xff]
      %v642 = vld [vmem:[%s414 + $0x6b8] sm:$0xff]
      %v643 = vld [vmem:[%s414 + $0x6c0] sm:$0xff]
      %v644 = vld [vmem:[%s414 + $0x6c8] sm:$0xff]
      %v645 = vld [vmem:[%s414 + $0x6d0] sm:$0xff]
      %v646 = vld [vmem:[%s414 + $0x6d8] sm:$0xff]
      %v647 = vld [vmem:[%s414 + $0x6e0] sm:$0xff]
      %v648 = vld [vmem:[%s414 + $0x6e8] sm:$0xff]
      %v649 = vld [vmem:[%s414 + $0x6f0] sm:$0xff]
      %v650 = vld [vmem:[%s414 + $0x6f8] sm:$0xff]
      %v651 = vld [vmem:[%s414 + $0x700] sm:$0xff]
      %v652 = vld [vmem:[%s414 + $0x708] sm:$0xff]
      %v653 = vld [vmem:[%s414 + $0x710] sm:$0xff]
      %v654 = vld [vmem:[%s414 + $0x718] sm:$0xff]
      %v655 = vld [vmem:[%s414 + $0x720] sm:$0xff]
      %v656 = vld [vmem:[%s414 + $0x728] sm:$0xff]
      %v657 = vld [vmem:[%s414 + $0x730] sm:$0xff]
      %v658 = vld [vmem:[%s414 + $0x738] sm:$0xff]
      %v659 = vld [vmem:[%s414 + $0x740] sm:$0xff]
      %v660 = vld [vmem:[%s414 + $0x748] sm:$0xff]
      %v661 = vld [vmem:[%s414 + $0x750] sm:$0xff]
      %v662 = vld [vmem:[%s414 + $0x758] sm:$0xff]
      %v663 = vld [vmem:[%s414 + $0x760] sm:$0xff]
      %v664 = vld [vmem:[%s414 + $0x768] sm:$0xff]
      %v665 = vld [vmem:[%s414 + $0x770] sm:$0xff]
      %v666 = vld [vmem:[%s414 + $0x778] sm:$0xff]
      %v667 = vld [vmem:[%s414 + $0x780] sm:$0xff]
      %v668 = vld [vmem:[%s414 + $0x788] sm:$0xff]
      %v669 = vld [vmem:[%s414 + $0x790] sm:$0xff]
      %v670 = vld [vmem:[%s414 + $0x798] sm:$0xff]
      %v671 = vld [vmem:[%s414 + $0x7a0] sm:$0xff]
      %v672 = vld [vmem:[%s414 + $0x7a8] sm:$0xff]
      %v673 = vld [vmem:[%s414 + $0x7b0] sm:$0xff]
      %v674 = vld [vmem:[%s414 + $0x7b8] sm:$0xff]
      %v675 = vld [vmem:[%s414 + $0x7c0] sm:$0xff]
      %v676 = vld [vmem:[%s414 + $0x7c8] sm:$0xff]
      %v677 = vld [vmem:[%s414 + $0x7d0] sm:$0xff]
      %v678 = vld [vmem:[%s414 + $0x7d8] sm:$0xff]
      %v679 = vld [vmem:[%s414 + $0x7e0] sm:$0xff]
      %v680 = vld [vmem:[%s414 + $0x7e8] sm:$0xff]
      %v681 = vld [vmem:[%s414 + $0x7f0] sm:$0xff]
      %v682 = vld [vmem:[%s414 + $0x7f8] sm:$0xff]
      %v683 = vld [vmem:[%s414 + $0x800] sm:$0xff]
      %v684 = vld [vmem:[%s414 + $0x808] sm:$0xff]
      %v685 = vld [vmem:[%s414 + $0x810] sm:$0xff]
      %v686 = vld [vmem:[%s414 + $0x818] sm:$0xff]
      %v687 = vld [vmem:[%s414 + $0x820] sm:$0xff]
      %v688 = vld [vmem:[%s414 + $0x828] sm:$0xff]
      %v689 = vld [vmem:[%s414 + $0x830] sm:$0xff]
      %v690 = vld [vmem:[%s414 + $0x838] sm:$0xff]
      %v691 = vld [vmem:[%s414 + $0x840] sm:$0xff]
      %v692 = vld [vmem:[%s414 + $0x848] sm:$0xff]
      %v693 = vld [vmem:[%s414 + $0x850] sm:$0xff]
      %v694 = vld [vmem:[%s414 + $0x858] sm:$0xff]
      %v695 = vld [vmem:[%s414 + $0x860] sm:$0xff]
      %v696 = vld [vmem:[%s414 + $0x868] sm:$0xff]
      %v697 = vld [vmem:[%s414 + $0x870] sm:$0xff]
      %v698 = vld [vmem:[%s414 + $0x878] sm:$0xff]
      %v699 = vld [vmem:[%s414 + $0x880] sm:$0xff]
      %v700 = vld [vmem:[%s414 + $0x888] sm:$0xff]
      %v701 = vld [vmem:[%s414 + $0x890] sm:$0xff]
      %v702 = vld [vmem:[%s414 + $0x898] sm:$0xff]
      %v703 = vld [vmem:[%s414 + $0x8a0] sm:$0xff]
      %v704 = vld [vmem:[%s414 + $0x8a8] sm:$0xff]
      %v705 = vld [vmem:[%s414 + $0x8b0] sm:$0xff]
      %v706 = vld [vmem:[%s414 + $0x8b8] sm:$0xff]
      %v707 = vld [vmem:[%s414 + $0x8c0] sm:$0xff]
      %v708 = vld [vmem:[%s414 + $0x8c8] sm:$0xff]
      %v709 = vld [vmem:[%s414 + $0x8d0] sm:$0xff]
      %v710 = vld [vmem:[%s414 + $0x8d8] sm:$0xff]
      %v711 = vld [vmem:[%s414 + $0x8e0] sm:$0xff]
      %v712 = vld [vmem:[%s414 + $0x8e8] sm:$0xff]
      %v713 = vld [vmem:[%s414 + $0x8f0] sm:$0xff]
      %v714 = vld [vmem:[%s414 + $0x8f8] sm:$0xff]
      %v715 = vld [vmem:[%s414 + $0x900] sm:$0xff]
      %v716 = vld [vmem:[%s414 + $0x908] sm:$0xff]
      %v717 = vld [vmem:[%s414 + $0x910] sm:$0xff]
      %v718 = vld [vmem:[%s414 + $0x918] sm:$0xff]
      %v719 = vld [vmem:[%s414 + $0x920] sm:$0xff]
      %v720 = vld [vmem:[%s414 + $0x928] sm:$0xff]
      %v721 = vld [vmem:[%s414 + $0x930] sm:$0xff]
      %v722 = vld [vmem:[%s414 + $0x938] sm:$0xff]
      %v723 = vld [vmem:[%s414 + $0x940] sm:$0xff]
      %v724 = vld [vmem:[%s414 + $0x948] sm:$0xff]
      %v725 = vld [vmem:[%s414 + $0x950] sm:$0xff]
      %v726 = vld [vmem:[%s414 + $0x958] sm:$0xff]
      %v727 = vld [vmem:[%s414 + $0x960] sm:$0xff]
      %v728 = vld [vmem:[%s414 + $0x968] sm:$0xff]
      %v729 = vld [vmem:[%s414 + $0x970] sm:$0xff]
      %v730 = vld [vmem:[%s414 + $0x978] sm:$0xff]
      %v731 = vld [vmem:[%s414 + $0x980] sm:$0xff]
      %v732 = vld [vmem:[%s414 + $0x988] sm:$0xff]
      %v733 = vld [vmem:[%s414 + $0x990] sm:$0xff]
      %v734 = vld [vmem:[%s414 + $0x998] sm:$0xff]
      %v735 = vld [vmem:[%s414 + $0x9a0] sm:$0xff]
      %v736 = vld [vmem:[%s414 + $0x9a8] sm:$0xff]
      %v737 = vld [vmem:[%s414 + $0x9b0] sm:$0xff]
      %v738 = vld [vmem:[%s414 + $0x9b8] sm:$0xff]
      %v739 = vld [vmem:[%s414 + $0x9c0] sm:$0xff]
      %v740 = vld [vmem:[%s414 + $0x9c8] sm:$0xff]
      %v741 = vld [vmem:[%s414 + $0x9d0] sm:$0xff]
      %v742 = vld [vmem:[%s414 + $0x9d8] sm:$0xff]
      %v743 = vld [vmem:[%s414 + $0x9e0] sm:$0xff]
      %v744 = vld [vmem:[%s414 + $0x9e8] sm:$0xff]
      %v745 = vld [vmem:[%s414 + $0x9f0] sm:$0xff]
      %v746 = vld [vmem:[%s414 + $0x9f8] sm:$0xff]
      %v747 = vld [vmem:[%s414 + $0xa00] sm:$0xff]
      %v748 = vld [vmem:[%s414 + $0xa08] sm:$0xff]
      %v749 = vld [vmem:[%s414 + $0xa10] sm:$0xff]
      %v750 = vld [vmem:[%s414 + $0xa18] sm:$0xff]
      %v751 = vld [vmem:[%s414 + $0xa20] sm:$0xff]
      %v752 = vld [vmem:[%s414 + $0xa28] sm:$0xff]
      %v753 = vld [vmem:[%s414 + $0xa30] sm:$0xff]
      %v754 = vld [vmem:[%s414 + $0xa38] sm:$0xff]
      %v755 = vld [vmem:[%s414 + $0xa40] sm:$0xff]
      %v756 = vld [vmem:[%s414 + $0xa48] sm:$0xff]
      %v757 = vld [vmem:[%s414 + $0xa50] sm:$0xff]
      %v758 = vld [vmem:[%s414 + $0xa58] sm:$0xff]
      %v759 = vld [vmem:[%s414 + $0xa60] sm:$0xff]
      %v760 = vld [vmem:[%s414 + $0xa68] sm:$0xff]
      %v761 = vld [vmem:[%s414 + $0xa70] sm:$0xff]
      %v762 = vld [vmem:[%s414 + $0xa78] sm:$0xff]
      %v763 = vld [vmem:[%s414 + $0xa80] sm:$0xff]
      %v764 = vld [vmem:[%s414 + $0xa88] sm:$0xff]
      %v765 = vld [vmem:[%s414 + $0xa90] sm:$0xff]
      %v766 = vld [vmem:[%s414 + $0xa98] sm:$0xff]
      %v767 = vld [vmem:[%s414 + $0xaa0] sm:$0xff]
      %v768 = vld [vmem:[%s414 + $0xaa8] sm:$0xff]
      %v769 = vld [vmem:[%s414 + $0xab0] sm:$0xff]
      %v770 = vld [vmem:[%s414 + $0xab8] sm:$0xff]
      %v771 = vld [vmem:[%s414 + $0xac0] sm:$0xff]
      %v772 = vld [vmem:[%s414 + $0xac8] sm:$0xff]
      %v773 = vld [vmem:[%s414 + $0xad0] sm:$0xff]
      %v774 = vld [vmem:[%s414 + $0xad8] sm:$0xff]
      %v775 = vld [vmem:[%s414 + $0xae0] sm:$0xff]
      %v776 = vld [vmem:[%s414 + $0xae8] sm:$0xff]
      %v777 = vld [vmem:[%s414 + $0xaf0] sm:$0xff]
      %v778 = vld [vmem:[%s414 + $0xaf8] sm:$0xff]
      %v779 = vld [vmem:[%s414 + $0xb00] sm:$0xff]
      %v780 = vld [vmem:[%s414 + $0xb08] sm:$0xff]
      %v781 = vld [vmem:[%s414 + $0xb10] sm:$0xff]
      %v782 = vld [vmem:[%s414 + $0xb18] sm:$0xff]
      %v783 = vld [vmem:[%s414 + $0xb20] sm:$0xff]
      %v784 = vld [vmem:[%s414 + $0xb28] sm:$0xff]
      %v785 = vld [vmem:[%s414 + $0xb30] sm:$0xff]
      %v786 = vld [vmem:[%s414 + $0xb38] sm:$0xff]
      %v787 = vld [vmem:[%s414 + $0xb40] sm:$0xff]
      %v788 = vld [vmem:[%s414 + $0xb48] sm:$0xff]
      %v789 = vld [vmem:[%s414 + $0xb50] sm:$0xff]
      %v790 = vld [vmem:[%s414 + $0xb58] sm:$0xff]
      %v791 = vld [vmem:[%s414 + $0xb60] sm:$0xff]
      %v792 = vld [vmem:[%s414 + $0xb68] sm:$0xff]
      %v793 = vld [vmem:[%s414 + $0xb70] sm:$0xff]
      %v794 = vld [vmem:[%s414 + $0xb78] sm:$0xff]
      %v795 = vld [vmem:[%s414 + $0xb80] sm:$0xff]
      %v796 = vld [vmem:[%s414 + $0xb88] sm:$0xff]
      %v797 = vld [vmem:[%s414 + $0xb90] sm:$0xff]
      %v798 = vld [vmem:[%s414 + $0xb98] sm:$0xff]
      %v799 = vld [vmem:[%s414 + $0xba0] sm:$0xff]
      %v800 = vld [vmem:[%s414 + $0xba8] sm:$0xff]
      %v801 = vld [vmem:[%s414 + $0xbb0] sm:$0xff]
      %v802 = vld [vmem:[%s414 + $0xbb8] sm:$0xff]
      %v803 = vld [vmem:[%s414 + $0xbc0] sm:$0xff]
      %v804 = vld [vmem:[%s414 + $0xbc8] sm:$0xff]
      %v805 = vld [vmem:[%s414 + $0xbd0] sm:$0xff]
      %v806 = vld [vmem:[%s414 + $0xbd8] sm:$0xff]
      %v807 = vld [vmem:[%s414 + $0xbe0] sm:$0xff]
      %v808 = vld [vmem:[%s414 + $0xbe8] sm:$0xff]
      %v809 = vld [vmem:[%s414 + $0xbf0] sm:$0xff]
      %v810 = vld [vmem:[%s414 + $0xbf8] sm:$0xff]
      %v811 = vld [vmem:[%s414 + $0xc00] sm:$0xff]
      %v812 = vld [vmem:[%s414 + $0xc08] sm:$0xff]
      %v813 = vld [vmem:[%s414 + $0xc10] sm:$0xff]
      %v814 = vld [vmem:[%s414 + $0xc18] sm:$0xff]
      %v815 = vld [vmem:[%s414 + $0xc20] sm:$0xff]
      %v816 = vld [vmem:[%s414 + $0xc28] sm:$0xff]
      %v817 = vld [vmem:[%s414 + $0xc30] sm:$0xff]
      %v818 = vld [vmem:[%s414 + $0xc38] sm:$0xff]
      %v819 = vld [vmem:[%s414 + $0xc40] sm:$0xff]
      %v820 = vld [vmem:[%s414 + $0xc48] sm:$0xff]
      %v821 = vld [vmem:[%s414 + $0xc50] sm:$0xff]
      %v822 = vld [vmem:[%s414 + $0xc58] sm:$0xff]
      %v823 = vld [vmem:[%s414 + $0xc60] sm:$0xff]
      %v824 = vld [vmem:[%s414 + $0xc68] sm:$0xff]
      %v825 = vld [vmem:[%s414 + $0xc70] sm:$0xff]
      %v826 = vld [vmem:[%s414 + $0xc78] sm:$0xff]
      %v827 = vld [vmem:[%s414 + $0xc80] sm:$0xff]
      %v828 = vld [vmem:[%s414 + $0xc88] sm:$0xff]
      %v829 = vld [vmem:[%s414 + $0xc90] sm:$0xff]
      %v830 = vld [vmem:[%s414 + $0xc98] sm:$0xff]
      %v831 = vld [vmem:[%s414 + $0xca0] sm:$0xff]
      %v832 = vld [vmem:[%s414 + $0xca8] sm:$0xff]
      %v833 = vld [vmem:[%s414 + $0xcb0] sm:$0xff]
      %v834 = vld [vmem:[%s414 + $0xcb8] sm:$0xff]
      %v835 = vld [vmem:[%s414 + $0xcc0] sm:$0xff]
      %v836 = vld [vmem:[%s414 + $0xcc8] sm:$0xff]
      %v837 = vld [vmem:[%s414 + $0xcd0] sm:$0xff]
      %v838 = vld [vmem:[%s414 + $0xcd8] sm:$0xff]
      %v839 = vld [vmem:[%s414 + $0xce0] sm:$0xff]
      %v840 = vld [vmem:[%s414 + $0xce8] sm:$0xff]
      %v841 = vld [vmem:[%s414 + $0xcf0] sm:$0xff]
      %v842 = vld [vmem:[%s414 + $0xcf8] sm:$0xff]
      %v843 = vld [vmem:[%s414 + $0xd00] sm:$0xff]
      %v844 = vld [vmem:[%s414 + $0xd08] sm:$0xff]
      %v845 = vld [vmem:[%s414 + $0xd10] sm:$0xff]
      %v846 = vld [vmem:[%s414 + $0xd18] sm:$0xff]
      %v847 = vld [vmem:[%s414 + $0xd20] sm:$0xff]
      %v848 = vld [vmem:[%s414 + $0xd28] sm:$0xff]
      %v849 = vld [vmem:[%s414 + $0xd30] sm:$0xff]
      %v850 = vld [vmem:[%s414 + $0xd38] sm:$0xff]
      %v851 = vld [vmem:[%s414 + $0xd40] sm:$0xff]
      %v852 = vld [vmem:[%s414 + $0xd48] sm:$0xff]
      %v853 = vld [vmem:[%s414 + $0xd50] sm:$0xff]
      %v854 = vld [vmem:[%s414 + $0xd58] sm:$0xff]
      %v855 = vld [vmem:[%s414 + $0xd60] sm:$0xff]
      %v856 = vld [vmem:[%s414 + $0xd68] sm:$0xff]
      %v857 = vld [vmem:[%s414 + $0xd70] sm:$0xff]
      %v858 = vld [vmem:[%s414 + $0xd78] sm:$0xff]
      %v859 = vld [vmem:[%s414 + $0xd80] sm:$0xff]
      %v860 = vld [vmem:[%s414 + $0xd88] sm:$0xff]
      %v861 = vld [vmem:[%s414 + $0xd90] sm:$0xff]
      %v862 = vld [vmem:[%s414 + $0xd98] sm:$0xff]
      %v863 = vld [vmem:[%s414 + $0xda0] sm:$0xff]
      %v864 = vld [vmem:[%s414 + $0xda8] sm:$0xff]
      %v865 = vld [vmem:[%s414 + $0xdb0] sm:$0xff]
      %v866 = vld [vmem:[%s414 + $0xdb8] sm:$0xff]
      %v867 = vld [vmem:[%s414 + $0xdc0] sm:$0xff]
      %v868 = vld [vmem:[%s414 + $0xdc8] sm:$0xff]
      %v869 = vld [vmem:[%s414 + $0xdd0] sm:$0xff]
      %v870 = vld [vmem:[%s414 + $0xdd8] sm:$0xff]
      %v871 = vld [vmem:[%s414 + $0xde0] sm:$0xff]
      %v872 = vld [vmem:[%s414 + $0xde8] sm:$0xff]
      %v873 = vld [vmem:[%s414 + $0xdf0] sm:$0xff]
      %v874 = vld [vmem:[%s414 + $0xdf8] sm:$0xff]
      %v875 = vld [vmem:[%s414 + $0xe00] sm:$0xff]
      %v876 = vld [vmem:[%s414 + $0xe08] sm:$0xff]
      %v877 = vld [vmem:[%s414 + $0xe10] sm:$0xff]
      %v878 = vld [vmem:[%s414 + $0xe18] sm:$0xff]
      %v879 = vld [vmem:[%s414 + $0xe20] sm:$0xff]
      %v880 = vld [vmem:[%s414 + $0xe28] sm:$0xff]
      %v881 = vld [vmem:[%s414 + $0xe30] sm:$0xff]
      %v882 = vld [vmem:[%s414 + $0xe38] sm:$0xff]
      %v883 = vld [vmem:[%s414 + $0xe40] sm:$0xff]
      %v884 = vld [vmem:[%s414 + $0xe48] sm:$0xff]
      %v885 = vld [vmem:[%s414 + $0xe50] sm:$0xff]
      %v886 = vld [vmem:[%s414 + $0xe58] sm:$0xff]
      %v887 = vld [vmem:[%s414 + $0xe60] sm:$0xff]
      %v888 = vld [vmem:[%s414 + $0xe68] sm:$0xff]
      %v889 = vld [vmem:[%s414 + $0xe70] sm:$0xff]
      %v890 = vld [vmem:[%s414 + $0xe78] sm:$0xff]
      %v891 = vld [vmem:[%s414 + $0xe80] sm:$0xff]
      %v892 = vld [vmem:[%s414 + $0xe88] sm:$0xff]
      %v893 = vld [vmem:[%s414 + $0xe90] sm:$0xff]
      %v894 = vld [vmem:[%s414 + $0xe98] sm:$0xff]
      %v895 = vld [vmem:[%s414 + $0xea0] sm:$0xff]
      %v896 = vld [vmem:[%s414 + $0xea8] sm:$0xff]
      %v897 = vld [vmem:[%s414 + $0xeb0] sm:$0xff]
      %v898 = vld [vmem:[%s414 + $0xeb8] sm:$0xff]
      %v899 = vld [vmem:[%s414 + $0xec0] sm:$0xff]
      %v900 = vld [vmem:[%s414 + $0xec8] sm:$0xff]
      %v901 = vld [vmem:[%s414 + $0xed0] sm:$0xff]
      %v902 = vld [vmem:[%s414 + $0xed8] sm:$0xff]
      %v903 = vld [vmem:[%s414 + $0xee0] sm:$0xff]
      %v904 = vld [vmem:[%s414 + $0xee8] sm:$0xff]
      %v905 = vld [vmem:[%s414 + $0xef0] sm:$0xff]
      %v906 = vld [vmem:[%s414 + $0xef8] sm:$0xff]
      %v907 = vld [vmem:[%s414 + $0xf00] sm:$0xff]
      %v908 = vld [vmem:[%s414 + $0xf08] sm:$0xff]
      %v909 = vld [vmem:[%s414 + $0xf10] sm:$0xff]
      %v910 = vld [vmem:[%s414 + $0xf18] sm:$0xff]
      %v911 = vld [vmem:[%s414 + $0xf20] sm:$0xff]
      %v912 = vld [vmem:[%s414 + $0xf28] sm:$0xff]
      %v913 = vld [vmem:[%s414 + $0xf30] sm:$0xff]
      %v914 = vld [vmem:[%s414 + $0xf38] sm:$0xff]
      %v915 = vld [vmem:[%s414 + $0xf40] sm:$0xff]
      %v916 = vld [vmem:[%s414 + $0xf48] sm:$0xff]
      %v917 = vld [vmem:[%s414 + $0xf50] sm:$0xff]
      %v918 = vld [vmem:[%s414 + $0xf58] sm:$0xff]
      %v919 = vld [vmem:[%s414 + $0xf60] sm:$0xff]
      %v920 = vld [vmem:[%s414 + $0xf68] sm:$0xff]
      %v921 = vld [vmem:[%s414 + $0xf70] sm:$0xff]
      %v922 = vld [vmem:[%s414 + $0xf78] sm:$0xff]
      %v923 = vld [vmem:[%s414 + $0xf80] sm:$0xff]
      %v924 = vld [vmem:[%s414 + $0xf88] sm:$0xff]
      %v925 = vld [vmem:[%s414 + $0xf90] sm:$0xff]
      %v926 = vld [vmem:[%s414 + $0xf98] sm:$0xff]
      %v927 = vld [vmem:[%s414 + $0xfa0] sm:$0xff]
      %v928 = vld [vmem:[%s414 + $0xfa8] sm:$0xff]
      %v929 = vld [vmem:[%s414 + $0xfb0] sm:$0xff]
      %v930 = vld [vmem:[%s414 + $0xfb8] sm:$0xff]
      %v931 = vld [vmem:[%s414 + $0xfc0] sm:$0xff]
      %v932 = vld [vmem:[%s414 + $0xfc8] sm:$0xff]
      %v933 = vld [vmem:[%s414 + $0xfd0] sm:$0xff]
      %v934 = vld [vmem:[%s414 + $0xfd8] sm:$0xff]
      %v935 = vld [vmem:[%s414 + $0xfe0] sm:$0xff]
      %v936 = vld [vmem:[%s414 + $0xfe8] sm:$0xff]
      %v937 = vld [vmem:[%s414 + $0xff0] sm:$0xff]
      %v938 = vld [vmem:[%s414 + $0xff8] sm:$0xff]
      %v939 = vld [vmem:[%s414 + $0x1000] sm:$0xff]
      %v940 = vld [vmem:[%s414 + $0x1008] sm:$0xff]
      %v941 = vld [vmem:[%s414 + $0x1010] sm:$0xff]
      %v942 = vld [vmem:[%s414 + $0x1018] sm:$0xff]
      %v943 = vld [vmem:[%s414 + $0x1020] sm:$0xff]
      %v944 = vld [vmem:[%s414 + $0x1028] sm:$0xff]
      %v945 = vld [vmem:[%s414 + $0x1030] sm:$0xff]
      %v946 = vld [vmem:[%s414 + $0x1038] sm:$0xff]
      %v947 = vld [vmem:[%s414 + $0x1040] sm:$0xff]
      %v948 = vld [vmem:[%s414 + $0x1048] sm:$0xff]
      %v949 = vld [vmem:[%s414 + $0x1050] sm:$0xff]
      %v950 = vld [vmem:[%s414 + $0x1058] sm:$0xff]
      %v951 = vld [vmem:[%s414 + $0x1060] sm:$0xff]
      %v952 = vld [vmem:[%s414 + $0x1068] sm:$0xff]
      %v953 = vld [vmem:[%s414 + $0x1070] sm:$0xff]
      %v954 = vld [vmem:[%s414 + $0x1078] sm:$0xff]
      %v955 = vld [vmem:[%s414 + $0x1080] sm:$0xff]
      %v956 = vld [vmem:[%s414 + $0x1088] sm:$0xff]
      %v957 = vld [vmem:[%s414 + $0x1090] sm:$0xff]
      %v958 = vld [vmem:[%s414 + $0x1098] sm:$0xff]
      %v959 = vld [vmem:[%s414 + $0x10a0] sm:$0xff]
      %v960 = vld [vmem:[%s414 + $0x10a8] sm:$0xff]
      %v961 = vld [vmem:[%s414 + $0x10b0] sm:$0xff]
      %v962 = vld [vmem:[%s414 + $0x10b8] sm:$0xff]
      %v963 = vld [vmem:[%s414 + $0x10c0] sm:$0xff]
      %v964 = vld [vmem:[%s414 + $0x10c8] sm:$0xff]
      %v965 = vld [vmem:[%s414 + $0x10d0] sm:$0xff]
      %v966 = vld [vmem:[%s414 + $0x10d8] sm:$0xff]
      %v967 = vld [vmem:[%s414 + $0x10e0] sm:$0xff]
      %v968 = vld [vmem:[%s414 + $0x10e8] sm:$0xff]
      %v969 = vld [vmem:[%s414 + $0x10f0] sm:$0xff]
      %v970 = vld [vmem:[%s414 + $0x10f8] sm:$0xff]
      %v971 = vld [vmem:[%s414 + $0x1100] sm:$0xff]
      %v972 = vld [vmem:[%s414 + $0x1108] sm:$0xff]
      %v973 = vld [vmem:[%s414 + $0x1110] sm:$0xff]
      %v974 = vld [vmem:[%s414 + $0x1118] sm:$0xff]
      %v975 = vld [vmem:[%s414 + $0x1120] sm:$0xff]
      %v976 = vld [vmem:[%s414 + $0x1128] sm:$0xff]
      %v977 = vld [vmem:[%s414 + $0x1130] sm:$0xff]
      %v978 = vld [vmem:[%s414 + $0x1138] sm:$0xff]
      %v979 = vld [vmem:[%s414 + $0x1140] sm:$0xff]
      %v980 = vld [vmem:[%s414 + $0x1148] sm:$0xff]
      %v981 = vld [vmem:[%s414 + $0x1150] sm:$0xff]
      %v982 = vld [vmem:[%s414 + $0x1158] sm:$0xff]
      %v983 = vld [vmem:[%s414 + $0x1160] sm:$0xff]
      %v984 = vld [vmem:[%s414 + $0x1168] sm:$0xff]
      %v985 = vld [vmem:[%s414 + $0x1170] sm:$0xff]
      %v986 = vld [vmem:[%s414 + $0x1178] sm:$0xff]
      %v987 = vld [vmem:[%s414 + $0x1180] sm:$0xff]
      %v988 = vld [vmem:[%s414 + $0x1188] sm:$0xff]
      %v989 = vld [vmem:[%s414 + $0x1190] sm:$0xff]
      %v990 = vld [vmem:[%s414 + $0x1198] sm:$0xff]
      %v991 = vld [vmem:[%s414 + $0x11a0] sm:$0xff]
      %v992 = vld [vmem:[%s414 + $0x11a8] sm:$0xff]
      %v993 = vld [vmem:[%s414 + $0x11b0] sm:$0xff]
      %v994 = vld [vmem:[%s414 + $0x11b8] sm:$0xff]
      %v995 = vld [vmem:[%s414 + $0x11c0] sm:$0xff]
      %v996 = vld [vmem:[%s414 + $0x11c8] sm:$0xff]
      %v997 = vld [vmem:[%s414 + $0x11d0] sm:$0xff]
      %v998 = vld [vmem:[%s414 + $0x11d8] sm:$0xff]
      %v999 = vld [vmem:[%s414 + $0x11e0] sm:$0xff]
      %v1000 = vld [vmem:[%s414 + $0x11e8] sm:$0xff]
      %v1001 = vld [vmem:[%s414 + $0x11f0] sm:$0xff]
      %v1002 = vld [vmem:[%s414 + $0x11f8] sm:$0xff]
      %v1003 = vld [vmem:[%s414 + $0x1200] sm:$0xff]
      %v1004 = vld [vmem:[%s414 + $0x1208] sm:$0xff]
      %v1005 = vld [vmem:[%s414 + $0x1210] sm:$0xff]
      %v1006 = vld [vmem:[%s414 + $0x1218] sm:$0xff]
      %v1007 = vld [vmem:[%s414 + $0x1220] sm:$0xff]
      %v1008 = vld [vmem:[%s414 + $0x1228] sm:$0xff]
      %v1009 = vld [vmem:[%s414 + $0x1230] sm:$0xff]
      %v1010 = vld [vmem:[%s414 + $0x1238] sm:$0xff]
      %v1011 = vld [vmem:[%s414 + $0x1240] sm:$0xff]
      %v1012 = vld [vmem:[%s414 + $0x1248] sm:$0xff]
      %v1013 = vld [vmem:[%s414 + $0x1250] sm:$0xff]
      %v1014 = vld [vmem:[%s414 + $0x1258] sm:$0xff]
      %v1015 = vld [vmem:[%s414 + $0x1260] sm:$0xff]
      %v1016 = vld [vmem:[%s414 + $0x1268] sm:$0xff]
      %v1017 = vld [vmem:[%s414 + $0x1270] sm:$0xff]
      %v1018 = vld [vmem:[%s414 + $0x1278] sm:$0xff]
      %v1019 = vld [vmem:[%s414 + $0x1280] sm:$0xff]
      %v1020 = vld [vmem:[%s414 + $0x1288] sm:$0xff]
      %v1021 = vld [vmem:[%s414 + $0x1290] sm:$0xff]
      %v1022 = vld [vmem:[%s414 + $0x1298] sm:$0xff]
      %v1023 = vld [vmem:[%s414 + $0x12a0] sm:$0xff]
      %v1024 = vld [vmem:[%s414 + $0x12a8] sm:$0xff]
      %v1025 = vld [vmem:[%s414 + $0x12b0] sm:$0xff]
      %v1026 = vld [vmem:[%s414 + $0x12b8] sm:$0xff]
      %v1027 = vld [vmem:[%s414 + $0x12c0] sm:$0xff]
      %v1028 = vld [vmem:[%s414 + $0x12c8] sm:$0xff]
      %v1029 = vld [vmem:[%s414 + $0x12d0] sm:$0xff]
      %v1030 = vld [vmem:[%s414 + $0x12d8] sm:$0xff]
      %v1031 = vld [vmem:[%s414 + $0x12e0] sm:$0xff]
      %v1032 = vld [vmem:[%s414 + $0x12e8] sm:$0xff]
      %v1033 = vld [vmem:[%s414 + $0x12f0] sm:$0xff]
      %v1034 = vld [vmem:[%s414 + $0x12f8] sm:$0xff]
      %v1035 = vld [vmem:[%s414 + $0x1300] sm:$0xff]
      %v1036 = vld [vmem:[%s414 + $0x1308] sm:$0xff]
      %v1037 = vld [vmem:[%s414 + $0x1310] sm:$0xff]
      %v1038 = vld [vmem:[%s414 + $0x1318] sm:$0xff]
      %v1039 = vld [vmem:[%s414 + $0x1320] sm:$0xff]
      %v1040 = vld [vmem:[%s414 + $0x1328] sm:$0xff]
      %v1041 = vld [vmem:[%s414 + $0x1330] sm:$0xff]
      %v1042 = vld [vmem:[%s414 + $0x1338] sm:$0xff]
      %v1043 = vld [vmem:[%s414 + $0x1340] sm:$0xff]
      %v1044 = vld [vmem:[%s414 + $0x1348] sm:$0xff]
      %v1045 = vld [vmem:[%s414 + $0x1350] sm:$0xff]
      %v1046 = vld [vmem:[%s414 + $0x1358] sm:$0xff]
      %v1047 = vld [vmem:[%s414 + $0x1360] sm:$0xff]
      %v1048 = vld [vmem:[%s414 + $0x1368] sm:$0xff]
      %v1049 = vld [vmem:[%s414 + $0x1370] sm:$0xff]
      %v1050 = vld [vmem:[%s414 + $0x1378] sm:$0xff]
      %v1051 = vld [vmem:[%s414 + $0x1380] sm:$0xff]
      %v1052 = vld [vmem:[%s414 + $0x1388] sm:$0xff]
      %v1053 = vld [vmem:[%s414 + $0x1390] sm:$0xff]
      %v1054 = vld [vmem:[%s414 + $0x1398] sm:$0xff]
      %v1055 = vld [vmem:[%s414 + $0x13a0] sm:$0xff]
      %v1056 = vld [vmem:[%s414 + $0x13a8] sm:$0xff]
      %v1057 = vld [vmem:[%s414 + $0x13b0] sm:$0xff]
      %v1058 = vld [vmem:[%s414 + $0x13b8] sm:$0xff]
      %v1059 = vld [vmem:[%s414 + $0x13c0] sm:$0xff]
      %v1060 = vld [vmem:[%s414 + $0x13c8] sm:$0xff]
      %v1061 = vld [vmem:[%s414 + $0x13d0] sm:$0xff]
      %v1062 = vld [vmem:[%s414 + $0x13d8] sm:$0xff]
      %v1063 = vld [vmem:[%s414 + $0x13e0] sm:$0xff]
      %v1064 = vld [vmem:[%s414 + $0x13e8] sm:$0xff]
      %v1065 = vld [vmem:[%s414 + $0x13f0] sm:$0xff]
      %v1066 = vld [vmem:[%s414 + $0x13f8] sm:$0xff]
      %v1067 = vld [vmem:[%s414 + $0x1400] sm:$0xff]
      %v1068 = vld [vmem:[%s414 + $0x1408] sm:$0xff]
      %v1069 = vld [vmem:[%s414 + $0x1410] sm:$0xff]
      %v1070 = vld [vmem:[%s414 + $0x1418] sm:$0xff]
      %v1071 = vld [vmem:[%s414 + $0x1420] sm:$0xff]
      %v1072 = vld [vmem:[%s414 + $0x1428] sm:$0xff]
      %v1073 = vld [vmem:[%s414 + $0x1430] sm:$0xff]
      %v1074 = vld [vmem:[%s414 + $0x1438] sm:$0xff]
      %v1075 = vld [vmem:[%s414 + $0x1440] sm:$0xff]
      %v1076 = vld [vmem:[%s414 + $0x1448] sm:$0xff]
      %v1077 = vld [vmem:[%s414 + $0x1450] sm:$0xff]
      %v1078 = vld [vmem:[%s414 + $0x1458] sm:$0xff]
      %v1079 = vld [vmem:[%s414 + $0x1460] sm:$0xff]
      %v1080 = vld [vmem:[%s414 + $0x1468] sm:$0xff]
      %v1081 = vld [vmem:[%s414 + $0x1470] sm:$0xff]
      %v1082 = vld [vmem:[%s414 + $0x1478] sm:$0xff]
      %v1083 = vld [vmem:[%s414 + $0x1480] sm:$0xff]
      %v1084 = vld [vmem:[%s414 + $0x1488] sm:$0xff]
      %v1085 = vld [vmem:[%s414 + $0x1490] sm:$0xff]
      %v1086 = vld [vmem:[%s414 + $0x1498] sm:$0xff]
      %v1087 = vld [vmem:[%s414 + $0x14a0] sm:$0xff]
      %v1088 = vld [vmem:[%s414 + $0x14a8] sm:$0xff]
      %v1089 = vld [vmem:[%s414 + $0x14b0] sm:$0xff]
      %v1090 = vld [vmem:[%s414 + $0x14b8] sm:$0xff]
      %v1091 = vld [vmem:[%s414 + $0x14c0] sm:$0xff]
      %v1092 = vld [vmem:[%s414 + $0x14c8] sm:$0xff]
      %v1093 = vld [vmem:[%s414 + $0x14d0] sm:$0xff]
      %v1094 = vld [vmem:[%s414 + $0x14d8] sm:$0xff]
      %v1095 = vld [vmem:[%s414 + $0x14e0] sm:$0xff]
      %v1096 = vld [vmem:[%s414 + $0x14e8] sm:$0xff]
      %v1097 = vld [vmem:[%s414 + $0x14f0] sm:$0xff]
      %v1098 = vld [vmem:[%s414 + $0x14f8] sm:$0xff]
      %v1099 = vld [vmem:[%s414 + $0x1500] sm:$0xff]
      %v1100 = vld [vmem:[%s414 + $0x1508] sm:$0xff]
      %v1101 = vld [vmem:[%s414 + $0x1510] sm:$0xff]
      %v1102 = vld [vmem:[%s414 + $0x1518] sm:$0xff]
      %v1103 = vld [vmem:[%s414 + $0x1520] sm:$0xff]
      %v1104 = vld [vmem:[%s414 + $0x1528] sm:$0xff]
      %v1105 = vld [vmem:[%s414 + $0x1530] sm:$0xff]
      %v1106 = vld [vmem:[%s414 + $0x1538] sm:$0xff]
      %v1107 = vld [vmem:[%s414 + $0x1540] sm:$0xff]
      %v1108 = vld [vmem:[%s414 + $0x1548] sm:$0xff]
      %v1109 = vld [vmem:[%s414 + $0x1550] sm:$0xff]
      %v1110 = vld [vmem:[%s414 + $0x1558] sm:$0xff]
      %v1111 = vld [vmem:[%s414 + $0x1560] sm:$0xff]
      %v1112 = vld [vmem:[%s414 + $0x1568] sm:$0xff]
      %v1113 = vld [vmem:[%s414 + $0x1570] sm:$0xff]
      %v1114 = vld [vmem:[%s414 + $0x1578] sm:$0xff]
      %v1115 = vld [vmem:[%s414 + $0x1580] sm:$0xff]
      %v1116 = vld [vmem:[%s414 + $0x1588] sm:$0xff]
      %v1117 = vld [vmem:[%s414 + $0x1590] sm:$0xff]
      %v1118 = vld [vmem:[%s414 + $0x1598] sm:$0xff]
      %v1119 = vld [vmem:[%s414 + $0x15a0] sm:$0xff]
      %v1120 = vld [vmem:[%s414 + $0x15a8] sm:$0xff]
      %v1121 = vld [vmem:[%s414 + $0x15b0] sm:$0xff]
      %v1122 = vld [vmem:[%s414 + $0x15b8] sm:$0xff]
      %v1123 = vld [vmem:[%s414 + $0x15c0] sm:$0xff]
      %v1124 = vld [vmem:[%s414 + $0x15c8] sm:$0xff]
      %v1125 = vld [vmem:[%s414 + $0x15d0] sm:$0xff]
      %v1126 = vld [vmem:[%s414 + $0x15d8] sm:$0xff]
      %v1127 = vld [vmem:[%s414 + $0x15e0] sm:$0xff]
      %v1128 = vld [vmem:[%s414 + $0x15e8] sm:$0xff]
      %v1129 = vld [vmem:[%s414 + $0x15f0] sm:$0xff]
      %v1130 = vld [vmem:[%s414 + $0x15f8] sm:$0xff]
      %v1131 = vld [vmem:[%s414 + $0x1600] sm:$0xff]
      %v1132 = vld [vmem:[%s414 + $0x1608] sm:$0xff]
      %v1133 = vld [vmem:[%s414 + $0x1610] sm:$0xff]
      %v1134 = vld [vmem:[%s414 + $0x1618] sm:$0xff]
      %v1135 = vld [vmem:[%s414 + $0x1620] sm:$0xff]
      %v1136 = vld [vmem:[%s414 + $0x1628] sm:$0xff]
      %v1137 = vld [vmem:[%s414 + $0x1630] sm:$0xff]
      %v1138 = vld [vmem:[%s414 + $0x1638] sm:$0xff]
      %v1139 = vld [vmem:[%s414 + $0x1640] sm:$0xff]
      %v1140 = vld [vmem:[%s414 + $0x1648] sm:$0xff]
      %v1141 = vld [vmem:[%s414 + $0x1650] sm:$0xff]
      %v1142 = vld [vmem:[%s414 + $0x1658] sm:$0xff]
      %v1143 = vld [vmem:[%s414 + $0x1660] sm:$0xff]
      %v1144 = vld [vmem:[%s414 + $0x1668] sm:$0xff]
      %v1145 = vld [vmem:[%s414 + $0x1670] sm:$0xff]
      %v1146 = vld [vmem:[%s414 + $0x1678] sm:$0xff]
      %v1147 = vld [vmem:[%s414 + $0x1680] sm:$0xff]
      %v1148 = vld [vmem:[%s414 + $0x1688] sm:$0xff]
      %v1149 = vld [vmem:[%s414 + $0x1690] sm:$0xff]
      %v1150 = vld [vmem:[%s414 + $0x1698] sm:$0xff]
      %v1151 = vld [vmem:[%s414 + $0x16a0] sm:$0xff]
      %v1152 = vld [vmem:[%s414 + $0x16a8] sm:$0xff]
      %v1153 = vld [vmem:[%s414 + $0x16b0] sm:$0xff]
      %v1154 = vld [vmem:[%s414 + $0x16b8] sm:$0xff]
      %v1155 = vld [vmem:[%s414 + $0x16c0] sm:$0xff]
      %v1156 = vld [vmem:[%s414 + $0x16c8] sm:$0xff]
      %v1157 = vld [vmem:[%s414 + $0x16d0] sm:$0xff]
      %v1158 = vld [vmem:[%s414 + $0x16d8] sm:$0xff]
      %v1159 = vld [vmem:[%s414 + $0x16e0] sm:$0xff]
      %v1160 = vld [vmem:[%s414 + $0x16e8] sm:$0xff]
      %v1161 = vld [vmem:[%s414 + $0x16f0] sm:$0xff]
      %v1162 = vld [vmem:[%s414 + $0x16f8] sm:$0xff]
      %v1163 = vld [vmem:[%s414 + $0x1700] sm:$0xff]
      %v1164 = vld [vmem:[%s414 + $0x1708] sm:$0xff]
      %v1165 = vld [vmem:[%s414 + $0x1710] sm:$0xff]
      %v1166 = vld [vmem:[%s414 + $0x1718] sm:$0xff]
      %v1167 = vld [vmem:[%s414 + $0x1720] sm:$0xff]
      %v1168 = vld [vmem:[%s414 + $0x1728] sm:$0xff]
      %v1169 = vld [vmem:[%s414 + $0x1730] sm:$0xff]
      %v1170 = vld [vmem:[%s414 + $0x1738] sm:$0xff]
      %v1171 = vld [vmem:[%s414 + $0x1740] sm:$0xff]
      %v1172 = vld [vmem:[%s414 + $0x1748] sm:$0xff]
      %v1173 = vld [vmem:[%s414 + $0x1750] sm:$0xff]
      %v1174 = vld [vmem:[%s414 + $0x1758] sm:$0xff]
      %v1175 = vld [vmem:[%s414 + $0x1760] sm:$0xff]
      %v1176 = vld [vmem:[%s414 + $0x1768] sm:$0xff]
      %v1177 = vld [vmem:[%s414 + $0x1770] sm:$0xff]
      %v1178 = vld [vmem:[%s414 + $0x1778] sm:$0xff]
      %v1179 = vld [vmem:[%s414 + $0x1780] sm:$0xff]
      %v1180 = vld [vmem:[%s414 + $0x1788] sm:$0xff]
      %v1181 = vld [vmem:[%s414 + $0x1790] sm:$0xff]
      %v1182 = vld [vmem:[%s414 + $0x1798] sm:$0xff]
      %v1183 = vld [vmem:[%s414 + $0x17a0] sm:$0xff]
      %v1184 = vld [vmem:[%s414 + $0x17a8] sm:$0xff]
      %v1185 = vld [vmem:[%s414 + $0x17b0] sm:$0xff]
      %v1186 = vld [vmem:[%s414 + $0x17b8] sm:$0xff]
      %v1187 = vld [vmem:[%s414 + $0x17c0] sm:$0xff]
      %v1188 = vld [vmem:[%s414 + $0x17c8] sm:$0xff]
      %v1189 = vld [vmem:[%s414 + $0x17d0] sm:$0xff]
      %v1190 = vld [vmem:[%s414 + $0x17d8] sm:$0xff]
      %v1191 = vld [vmem:[%s414 + $0x17e0] sm:$0xff]
      %v1192 = vld [vmem:[%s414 + $0x17e8] sm:$0xff]
      %v1193 = vld [vmem:[%s414 + $0x17f0] sm:$0xff]
      %v1194 = vld [vmem:[%s414 + $0x17f8] sm:$0xff]
      %v1195 = vld [vmem:[%s414 + $0x1800] sm:$0xff]
      %v1196 = vld [vmem:[%s414 + $0x1808] sm:$0xff]
      %v1197 = vld [vmem:[%s414 + $0x1810] sm:$0xff]
      %v1198 = vld [vmem:[%s414 + $0x1818] sm:$0xff]
      %v1199 = vld [vmem:[%s414 + $0x1820] sm:$0xff]
      %v1200 = vld [vmem:[%s414 + $0x1828] sm:$0xff]
      %v1201 = vld [vmem:[%s414 + $0x1830] sm:$0xff]
      %v1202 = vld [vmem:[%s414 + $0x1838] sm:$0xff]
      %v1203 = vld [vmem:[%s414 + $0x1840] sm:$0xff]
      %v1204 = vld [vmem:[%s414 + $0x1848] sm:$0xff]
      %v1205 = vld [vmem:[%s414 + $0x1850] sm:$0xff]
      %v1206 = vld [vmem:[%s414 + $0x1858] sm:$0xff]
      %v1207 = vld [vmem:[%s414 + $0x1860] sm:$0xff]
      %v1208 = vld [vmem:[%s414 + $0x1868] sm:$0xff]
      %v1209 = vld [vmem:[%s414 + $0x1870] sm:$0xff]
      %v1210 = vld [vmem:[%s414 + $0x1878] sm:$0xff]
      %v1211 = vld [vmem:[%s414 + $0x1880] sm:$0xff]
      %v1212 = vld [vmem:[%s414 + $0x1888] sm:$0xff]
      %v1213 = vld [vmem:[%s414 + $0x1890] sm:$0xff]
      %v1214 = vld [vmem:[%s414 + $0x1898] sm:$0xff]
      %v1215 = vld [vmem:[%s414 + $0x18a0] sm:$0xff]
      %v1216 = vld [vmem:[%s414 + $0x18a8] sm:$0xff]
      %v1217 = vld [vmem:[%s414 + $0x18b0] sm:$0xff]
      %v1218 = vld [vmem:[%s414 + $0x18b8] sm:$0xff]
      %v1219 = vld [vmem:[%s414 + $0x18c0] sm:$0xff]
      %v1220 = vld [vmem:[%s414 + $0x18c8] sm:$0xff]
      %v1221 = vld [vmem:[%s414 + $0x18d0] sm:$0xff]
      %v1222 = vld [vmem:[%s414 + $0x18d8] sm:$0xff]
      %v1223 = vld [vmem:[%s414 + $0x18e0] sm:$0xff]
      %v1224 = vld [vmem:[%s414 + $0x18e8] sm:$0xff]
      %v1225 = vld [vmem:[%s414 + $0x18f0] sm:$0xff]
      %v1226 = vld [vmem:[%s414 + $0x18f8] sm:$0xff]
      %v1227 = vld [vmem:[%s414 + $0x1900] sm:$0xff]
      %v1228 = vld [vmem:[%s414 + $0x1908] sm:$0xff]
      %v1229 = vld [vmem:[%s414 + $0x1910] sm:$0xff]
      %v1230 = vld [vmem:[%s414 + $0x1918] sm:$0xff]
      %v1231 = vld [vmem:[%s414 + $0x1920] sm:$0xff]
      %v1232 = vld [vmem:[%s414 + $0x1928] sm:$0xff]
      %v1233 = vld [vmem:[%s414 + $0x1930] sm:$0xff]
      %v1234 = vld [vmem:[%s414 + $0x1938] sm:$0xff]
      %v1235 = vld [vmem:[%s414 + $0x1940] sm:$0xff]
      %v1236 = vld [vmem:[%s414 + $0x1948] sm:$0xff]
      %v1237 = vld [vmem:[%s414 + $0x1950] sm:$0xff]
      %v1238 = vld [vmem:[%s414 + $0x1958] sm:$0xff]
      %v1239 = vld [vmem:[%s414 + $0x1960] sm:$0xff]
      %v1240 = vld [vmem:[%s414 + $0x1968] sm:$0xff]
      %v1241 = vld [vmem:[%s414 + $0x1970] sm:$0xff]
      %v1242 = vld [vmem:[%s414 + $0x1978] sm:$0xff]
      %v1243 = vld [vmem:[%s414 + $0x1980] sm:$0xff]
      %v1244 = vld [vmem:[%s414 + $0x1988] sm:$0xff]
      %v1245 = vld [vmem:[%s414 + $0x1990] sm:$0xff]
      %v1246 = vld [vmem:[%s414 + $0x1998] sm:$0xff]
      %v1247 = vld [vmem:[%s414 + $0x19a0] sm:$0xff]
      %v1248 = vld [vmem:[%s414 + $0x19a8] sm:$0xff]
      %v1249 = vld [vmem:[%s414 + $0x19b0] sm:$0xff]
      %v1250 = vld [vmem:[%s414 + $0x19b8] sm:$0xff]
      %v1251 = vld [vmem:[%s414 + $0x19c0] sm:$0xff]
      %v1252 = vld [vmem:[%s414 + $0x19c8] sm:$0xff]
      %v1253 = vld [vmem:[%s414 + $0x19d0] sm:$0xff]
      %v1254 = vld [vmem:[%s414 + $0x19d8] sm:$0xff]
      %v1255 = vld [vmem:[%s414 + $0x19e0] sm:$0xff]
      %v1256 = vld [vmem:[%s414 + $0x19e8] sm:$0xff]
      %v1257 = vld [vmem:[%s414 + $0x19f0] sm:$0xff]
      %v1258 = vld [vmem:[%s414 + $0x19f8] sm:$0xff]
      %v1259 = vld [vmem:[%s414 + $0x1a00] sm:$0xff]
      %v1260 = vld [vmem:[%s414 + $0x1a08] sm:$0xff]
      %v1261 = vld [vmem:[%s414 + $0x1a10] sm:$0xff]
      %v1262 = vld [vmem:[%s414 + $0x1a18] sm:$0xff]
      %v1263 = vld [vmem:[%s414 + $0x1a20] sm:$0xff]
      %v1264 = vld [vmem:[%s414 + $0x1a28] sm:$0xff]
      %v1265 = vld [vmem:[%s414 + $0x1a30] sm:$0xff]
      %v1266 = vld [vmem:[%s414 + $0x1a38] sm:$0xff]
      %v1267 = vld [vmem:[%s414 + $0x1a40] sm:$0xff]
      %v1268 = vld [vmem:[%s414 + $0x1a48] sm:$0xff]
      %v1269 = vld [vmem:[%s414 + $0x1a50] sm:$0xff]
      %v1270 = vld [vmem:[%s414 + $0x1a58] sm:$0xff]
      %v1271 = vld [vmem:[%s414 + $0x1a60] sm:$0xff]
      %v1272 = vld [vmem:[%s414 + $0x1a68] sm:$0xff]
      %v1273 = vld [vmem:[%s414 + $0x1a70] sm:$0xff]
      %v1274 = vld [vmem:[%s414 + $0x1a78] sm:$0xff]
      %v1275 = vld [vmem:[%s414 + $0x1a80] sm:$0xff]
      %v1276 = vld [vmem:[%s414 + $0x1a88] sm:$0xff]
      %v1277 = vld [vmem:[%s414 + $0x1a90] sm:$0xff]
      %v1278 = vld [vmem:[%s414 + $0x1a98] sm:$0xff]
      %v1279 = vld [vmem:[%s414 + $0x1aa0] sm:$0xff]
      %v1280 = vld [vmem:[%s414 + $0x1aa8] sm:$0xff]
      %v1281 = vld [vmem:[%s414 + $0x1ab0] sm:$0xff]
      %v1282 = vld [vmem:[%s414 + $0x1ab8] sm:$0xff]
      %v1283 = vld [vmem:[%s414 + $0x1ac0] sm:$0xff]
      %v1284 = vld [vmem:[%s414 + $0x1ac8] sm:$0xff]
      %v1285 = vld [vmem:[%s414 + $0x1ad0] sm:$0xff]
      %v1286 = vld [vmem:[%s414 + $0x1ad8] sm:$0xff]
      %v1287 = vld [vmem:[%s414 + $0x1ae0] sm:$0xff]
      %v1288 = vld [vmem:[%s414 + $0x1ae8] sm:$0xff]
      %v1289 = vld [vmem:[%s414 + $0x1af0] sm:$0xff]
      %v1290 = vld [vmem:[%s414 + $0x1af8] sm:$0xff]
      %v1291 = vld [vmem:[%s414 + $0x1b00] sm:$0xff]
      %v1292 = vld [vmem:[%s414 + $0x1b08] sm:$0xff]
      %v1293 = vld [vmem:[%s414 + $0x1b10] sm:$0xff]
      %v1294 = vld [vmem:[%s414 + $0x1b18] sm:$0xff]
      %v1295 = vld [vmem:[%s414 + $0x1b20] sm:$0xff]
      %v1296 = vld [vmem:[%s414 + $0x1b28] sm:$0xff]
      %v1297 = vld [vmem:[%s414 + $0x1b30] sm:$0xff]
      %v1298 = vld [vmem:[%s414 + $0x1b38] sm:$0xff]
      %v1299 = vld [vmem:[%s414 + $0x1b40] sm:$0xff]
      %v1300 = vld [vmem:[%s414 + $0x1b48] sm:$0xff]
      %v1301 = vld [vmem:[%s414 + $0x1b50] sm:$0xff]
      %v1302 = vld [vmem:[%s414 + $0x1b58] sm:$0xff]
      %v1303 = vld [vmem:[%s414 + $0x1b60] sm:$0xff]
      %v1304 = vld [vmem:[%s414 + $0x1b68] sm:$0xff]
      %v1305 = vld [vmem:[%s414 + $0x1b70] sm:$0xff]
      %v1306 = vld [vmem:[%s414 + $0x1b78] sm:$0xff]
      %v1307 = vld [vmem:[%s414 + $0x1b80] sm:$0xff]
      %v1308 = vld [vmem:[%s414 + $0x1b88] sm:$0xff]
      %v1309 = vld [vmem:[%s414 + $0x1b90] sm:$0xff]
      %v1310 = vld [vmem:[%s414 + $0x1b98] sm:$0xff]
      %v1311 = vld [vmem:[%s414 + $0x1ba0] sm:$0xff]
      %v1312 = vld [vmem:[%s414 + $0x1ba8] sm:$0xff]
      %v1313 = vld [vmem:[%s414 + $0x1bb0] sm:$0xff]
      %v1314 = vld [vmem:[%s414 + $0x1bb8] sm:$0xff]
      %v1315 = vld [vmem:[%s414 + $0x1bc0] sm:$0xff]
      %v1316 = vld [vmem:[%s414 + $0x1bc8] sm:$0xff]
      %v1317 = vld [vmem:[%s414 + $0x1bd0] sm:$0xff]
      %v1318 = vld [vmem:[%s414 + $0x1bd8] sm:$0xff]
      %v1319 = vld [vmem:[%s414 + $0x1be0] sm:$0xff]
      %v1320 = vld [vmem:[%s414 + $0x1be8] sm:$0xff]
      %v1321 = vld [vmem:[%s414 + $0x1bf0] sm:$0xff]
      %v1322 = vld [vmem:[%s414 + $0x1bf8] sm:$0xff]
      %v1323 = vld [vmem:[%s414 + $0x1c00] sm:$0xff]
      %v1324 = vld [vmem:[%s414 + $0x1c08] sm:$0xff]
      %v1325 = vld [vmem:[%s414 + $0x1c10] sm:$0xff]
      %v1326 = vld [vmem:[%s414 + $0x1c18] sm:$0xff]
      %v1327 = vld [vmem:[%s414 + $0x1c20] sm:$0x3f]
      %v1328 = vld [vmem:[%s414 + $0x1c28] sm:$0x3f]
      %v1329 = vpack.c.bf16 %v429, %v427
      %v1330 = vpack.c.bf16 %v430, %v428
      %v1331 = vpack.c.bf16 %v433, %v431
      %v1332 = vpack.c.bf16 %v434, %v432
      %v1333 = vpack.c.bf16 %v437, %v435
      %v1334 = vpack.c.bf16 %v438, %v436
      %v1335 = vpack.c.bf16 %v441, %v439
      %v1336 = vpack.c.bf16 %v442, %v440
      %v1337 = vpack.c.bf16 %v445, %v443
      %v1338 = vpack.c.bf16 %v446, %v444
      %v1339 = vpack.c.bf16 %v449, %v447
      %v1340 = vpack.c.bf16 %v450, %v448
      %v1341 = vpack.c.bf16 %v453, %v451
      %v1342 = vpack.c.bf16 %v454, %v452
      %v1343 = vpack.c.bf16 %v457, %v455
      %v1344 = vpack.c.bf16 %v458, %v456
      %v1345 = vpack.c.bf16 %v461, %v459
      %v1346 = vpack.c.bf16 %v462, %v460
      %v1347 = vpack.c.bf16 %v465, %v463
      %v1348 = vpack.c.bf16 %v466, %v464
      %v1349 = vpack.c.bf16 %v469, %v467
      %v1350 = vpack.c.bf16 %v470, %v468
      %v1351 = vpack.c.bf16 %v473, %v471
      %v1352 = vpack.c.bf16 %v474, %v472
      %v1353 = vpack.c.bf16 %v477, %v475
      %v1354 = vpack.c.bf16 %v478, %v476
      %v1355 = vpack.c.bf16 %v481, %v479
      %v1356 = vpack.c.bf16 %v482, %v480
      %v1357 = vpack.c.bf16 %v485, %v483
      %v1358 = vpack.c.bf16 %v486, %v484
      %v1359 = vpack.c.bf16 %v489, %v487
      %v1360 = vpack.c.bf16 %v490, %v488
      %v1361 = vpack.c.bf16 %v493, %v491
      %v1362 = vpack.c.bf16 %v494, %v492
      %v1363 = vpack.c.bf16 %v497, %v495
      %v1364 = vpack.c.bf16 %v498, %v496
      %v1365 = vpack.c.bf16 %v501, %v499
      %v1366 = vpack.c.bf16 %v502, %v500
      %v1367 = vpack.c.bf16 %v505, %v503
      %v1368 = vpack.c.bf16 %v506, %v504
      %v1369 = vpack.c.bf16 %v509, %v507
      %v1370 = vpack.c.bf16 %v510, %v508
      %v1371 = vpack.c.bf16 %v513, %v511
      %v1372 = vpack.c.bf16 %v514, %v512
      %v1373 = vpack.c.bf16 %v517, %v515
      %v1374 = vpack.c.bf16 %v518, %v516
      %v1375 = vpack.c.bf16 %v521, %v519
      %v1376 = vpack.c.bf16 %v522, %v520
      %v1377 = vpack.c.bf16 %v525, %v523
      %v1378 = vpack.c.bf16 %v526, %v524
      %v1379 = vpack.c.bf16 %v529, %v527
      %v1380 = vpack.c.bf16 %v530, %v528
      %v1381 = vpack.c.bf16 %v533, %v531
      %v1382 = vpack.c.bf16 %v534, %v532
      %v1383 = vpack.c.bf16 %v537, %v535
      %v1384 = vpack.c.bf16 %v538, %v536
      %v1385 = vpack.c.bf16 %v541, %v539
      %v1386 = vpack.c.bf16 %v542, %v540
      %v1387 = vpack.c.bf16 %v545, %v543
      %v1388 = vpack.c.bf16 %v546, %v544
      %v1389 = vpack.c.bf16 %v549, %v547
      %v1390 = vpack.c.bf16 %v550, %v548
      %v1391 = vpack.c.bf16 %v553, %v551
      %v1392 = vpack.c.bf16 %v554, %v552
      %v1393 = vpack.c.bf16 %v557, %v555
      %v1394 = vpack.c.bf16 %v558, %v556
      %v1395 = vpack.c.bf16 %v561, %v559
      %v1396 = vpack.c.bf16 %v562, %v560
      %v1397 = vpack.c.bf16 %v565, %v563
      %v1398 = vpack.c.bf16 %v566, %v564
      %v1399 = vpack.c.bf16 %v569, %v567
      %v1400 = vpack.c.bf16 %v570, %v568
      %v1401 = vpack.c.bf16 %v573, %v571
      %v1402 = vpack.c.bf16 %v574, %v572
      %v1403 = vpack.c.bf16 %v577, %v575
      %v1404 = vpack.c.bf16 %v578, %v576
      %v1405 = vpack.c.bf16 %v581, %v579
      %v1406 = vpack.c.bf16 %v582, %v580
      %v1407 = vpack.c.bf16 %v585, %v583
      %v1408 = vpack.c.bf16 %v586, %v584
      %v1409 = vpack.c.bf16 %v589, %v587
      %v1410 = vpack.c.bf16 %v590, %v588
      %v1411 = vpack.c.bf16 %v593, %v591
      %v1412 = vpack.c.bf16 %v594, %v592
      %v1413 = vpack.c.bf16 %v597, %v595
      %v1414 = vpack.c.bf16 %v598, %v596
      %v1415 = vpack.c.bf16 %v601, %v599
      %v1416 = vpack.c.bf16 %v602, %v600
      %v1417 = vpack.c.bf16 %v605, %v603
      %v1418 = vpack.c.bf16 %v606, %v604
      %v1419 = vpack.c.bf16 %v609, %v607
      %v1420 = vpack.c.bf16 %v610, %v608
      %v1421 = vpack.c.bf16 %v613, %v611
      %v1422 = vpack.c.bf16 %v614, %v612
      %v1423 = vpack.c.bf16 %v617, %v615
      %v1424 = vpack.c.bf16 %v618, %v616
      %v1425 = vpack.c.bf16 %v621, %v619
      %v1426 = vpack.c.bf16 %v622, %v620
      %v1427 = vpack.c.bf16 %v625, %v623
      %v1428 = vpack.c.bf16 %v626, %v624
      %v1429 = vpack.c.bf16 %v629, %v627
      %v1430 = vpack.c.bf16 %v630, %v628
      %v1431 = vpack.c.bf16 %v633, %v631
      %v1432 = vpack.c.bf16 %v634, %v632
      %v1433 = vpack.c.bf16 %v637, %v635
      %v1434 = vpack.c.bf16 %v638, %v636
      %v1435 = vpack.c.bf16 %v641, %v639
      %v1436 = vpack.c.bf16 %v642, %v640
      %v1437 = vpack.c.bf16 %v645, %v643
      %v1438 = vpack.c.bf16 %v646, %v644
      %v1439 = vpack.c.bf16 %v649, %v647
      %v1440 = vpack.c.bf16 %v650, %v648
      %v1441 = vpack.c.bf16 %v653, %v651
      %v1442 = vpack.c.bf16 %v654, %v652
      %v1443 = vpack.c.bf16 %v657, %v655
      %v1444 = vpack.c.bf16 %v658, %v656
      %v1445 = vpack.c.bf16 %v661, %v659
      %v1446 = vpack.c.bf16 %v662, %v660
      %v1447 = vpack.c.bf16 %v665, %v663
      %v1448 = vpack.c.bf16 %v666, %v664
      %v1449 = vpack.c.bf16 %v669, %v667
      %v1450 = vpack.c.bf16 %v670, %v668
      %v1451 = vpack.c.bf16 %v673, %v671
      %v1452 = vpack.c.bf16 %v674, %v672
      %v1453 = vpack.c.bf16 %v677, %v675
      %v1454 = vpack.c.bf16 %v678, %v676
      %v1455 = vpack.c.bf16 %v681, %v679
      %v1456 = vpack.c.bf16 %v682, %v680
      %v1457 = vpack.c.bf16 %v685, %v683
      %v1458 = vpack.c.bf16 %v686, %v684
      %v1459 = vpack.c.bf16 %v689, %v687
      %v1460 = vpack.c.bf16 %v690, %v688
      %v1461 = vpack.c.bf16 %v693, %v691
      %v1462 = vpack.c.bf16 %v694, %v692
      %v1463 = vpack.c.bf16 %v697, %v695
      %v1464 = vpack.c.bf16 %v698, %v696
      %v1465 = vpack.c.bf16 %v701, %v699
      %v1466 = vpack.c.bf16 %v702, %v700
      %v1467 = vpack.c.bf16 %v705, %v703
      %v1468 = vpack.c.bf16 %v706, %v704
      %v1469 = vpack.c.bf16 %v709, %v707
      %v1470 = vpack.c.bf16 %v710, %v708
      %v1471 = vpack.c.bf16 %v713, %v711
      %v1472 = vpack.c.bf16 %v714, %v712
      %v1473 = vpack.c.bf16 %v717, %v715
      %v1474 = vpack.c.bf16 %v718, %v716
      %v1475 = vpack.c.bf16 %v721, %v719
      %v1476 = vpack.c.bf16 %v722, %v720
      %v1477 = vpack.c.bf16 %v725, %v723
      %v1478 = vpack.c.bf16 %v726, %v724
      %v1479 = vpack.c.bf16 %v729, %v727
      %v1480 = vpack.c.bf16 %v730, %v728
      %v1481 = vpack.c.bf16 %v733, %v731
      %v1482 = vpack.c.bf16 %v734, %v732
      %v1483 = vpack.c.bf16 %v737, %v735
      %v1484 = vpack.c.bf16 %v738, %v736
      %v1485 = vpack.c.bf16 %v741, %v739
      %v1486 = vpack.c.bf16 %v742, %v740
      %v1487 = vpack.c.bf16 %v745, %v743
      %v1488 = vpack.c.bf16 %v746, %v744
      %v1489 = vpack.c.bf16 %v749, %v747
      %v1490 = vpack.c.bf16 %v750, %v748
      %v1491 = vpack.c.bf16 %v753, %v751
      %v1492 = vpack.c.bf16 %v754, %v752
      %v1493 = vpack.c.bf16 %v757, %v755
      %v1494 = vpack.c.bf16 %v758, %v756
      %v1495 = vpack.c.bf16 %v761, %v759
      %v1496 = vpack.c.bf16 %v762, %v760
      %v1497 = vpack.c.bf16 %v765, %v763
      %v1498 = vpack.c.bf16 %v766, %v764
      %v1499 = vpack.c.bf16 %v769, %v767
      %v1500 = vpack.c.bf16 %v770, %v768
      %v1501 = vpack.c.bf16 %v773, %v771
      %v1502 = vpack.c.bf16 %v774, %v772
      %v1503 = vpack.c.bf16 %v777, %v775
      %v1504 = vpack.c.bf16 %v778, %v776
      %v1505 = vpack.c.bf16 %v781, %v779
      %v1506 = vpack.c.bf16 %v782, %v780
      %v1507 = vpack.c.bf16 %v785, %v783
      %v1508 = vpack.c.bf16 %v786, %v784
      %v1509 = vpack.c.bf16 %v789, %v787
      %v1510 = vpack.c.bf16 %v790, %v788
      %v1511 = vpack.c.bf16 %v793, %v791
      %v1512 = vpack.c.bf16 %v794, %v792
      %v1513 = vpack.c.bf16 %v797, %v795
      %v1514 = vpack.c.bf16 %v798, %v796
      %v1515 = vpack.c.bf16 %v801, %v799
      %v1516 = vpack.c.bf16 %v802, %v800
      %v1517 = vpack.c.bf16 %v805, %v803
      %v1518 = vpack.c.bf16 %v806, %v804
      %v1519 = vpack.c.bf16 %v809, %v807
      %v1520 = vpack.c.bf16 %v810, %v808
      %v1521 = vpack.c.bf16 %v813, %v811
      %v1522 = vpack.c.bf16 %v814, %v812
      %v1523 = vpack.c.bf16 %v817, %v815
      %v1524 = vpack.c.bf16 %v818, %v816
      %v1525 = vpack.c.bf16 %v821, %v819
      %v1526 = vpack.c.bf16 %v822, %v820
      %v1527 = vpack.c.bf16 %v825, %v823
      %v1528 = vpack.c.bf16 %v826, %v824
      %v1529 = vpack.c.bf16 %v829, %v827
      %v1530 = vpack.c.bf16 %v830, %v828
      %v1531 = vpack.c.bf16 %v833, %v831
      %v1532 = vpack.c.bf16 %v834, %v832
      %v1533 = vpack.c.bf16 %v837, %v835
      %v1534 = vpack.c.bf16 %v838, %v836
      %v1535 = vpack.c.bf16 %v841, %v839
      %v1536 = vpack.c.bf16 %v842, %v840
      %v1537 = vpack.c.bf16 %v845, %v843
      %v1538 = vpack.c.bf16 %v846, %v844
      %v1539 = vpack.c.bf16 %v849, %v847
      %v1540 = vpack.c.bf16 %v850, %v848
      %v1541 = vpack.c.bf16 %v853, %v851
      %v1542 = vpack.c.bf16 %v854, %v852
      %v1543 = vpack.c.bf16 %v857, %v855
      %v1544 = vpack.c.bf16 %v858, %v856
      %v1545 = vpack.c.bf16 %v861, %v859
      %v1546 = vpack.c.bf16 %v862, %v860
      %v1547 = vpack.c.bf16 %v865, %v863
      %v1548 = vpack.c.bf16 %v866, %v864
      %v1549 = vpack.c.bf16 %v869, %v867
      %v1550 = vpack.c.bf16 %v870, %v868
      %v1551 = vpack.c.bf16 %v873, %v871
      %v1552 = vpack.c.bf16 %v874, %v872
      %v1553 = vpack.c.bf16 %v877, %v875
      %v1554 = vpack.c.bf16 %v878, %v876
      %v1555 = vpack.c.bf16 %v881, %v879
      %v1556 = vpack.c.bf16 %v882, %v880
      %v1557 = vpack.c.bf16 %v885, %v883
      %v1558 = vpack.c.bf16 %v886, %v884
      %v1559 = vpack.c.bf16 %v889, %v887
      %v1560 = vpack.c.bf16 %v890, %v888
      %v1561 = vpack.c.bf16 %v893, %v891
      %v1562 = vpack.c.bf16 %v894, %v892
      %v1563 = vpack.c.bf16 %v897, %v895
      %v1564 = vpack.c.bf16 %v898, %v896
      %v1565 = vpack.c.bf16 %v901, %v899
      %v1566 = vpack.c.bf16 %v902, %v900
      %v1567 = vpack.c.bf16 %v905, %v903
      %v1568 = vpack.c.bf16 %v906, %v904
      %v1569 = vpack.c.bf16 %v909, %v907
      %v1570 = vpack.c.bf16 %v910, %v908
      %v1571 = vpack.c.bf16 %v913, %v911
      %v1572 = vpack.c.bf16 %v914, %v912
      %v1573 = vpack.c.bf16 %v917, %v915
      %v1574 = vpack.c.bf16 %v918, %v916
      %v1575 = vpack.c.bf16 %v921, %v919
      %v1576 = vpack.c.bf16 %v922, %v920
      %v1577 = vpack.c.bf16 %v925, %v923
      %v1578 = vpack.c.bf16 %v926, %v924
      %v1579 = vpack.c.bf16 %v929, %v927
      %v1580 = vpack.c.bf16 %v930, %v928
      %v1581 = vpack.c.bf16 %v933, %v931
      %v1582 = vpack.c.bf16 %v934, %v932
      %v1583 = vpack.c.bf16 %v937, %v935
      %v1584 = vpack.c.bf16 %v938, %v936
      %v1585 = vpack.c.bf16 %v941, %v939
      %v1586 = vpack.c.bf16 %v942, %v940
      %v1587 = vpack.c.bf16 %v945, %v943
      %v1588 = vpack.c.bf16 %v946, %v944
      %v1589 = vpack.c.bf16 %v949, %v947
      %v1590 = vpack.c.bf16 %v950, %v948
      %v1591 = vpack.c.bf16 %v953, %v951
      %v1592 = vpack.c.bf16 %v954, %v952
      %v1593 = vpack.c.bf16 %v957, %v955
      %v1594 = vpack.c.bf16 %v958, %v956
      %v1595 = vpack.c.bf16 %v961, %v959
      %v1596 = vpack.c.bf16 %v962, %v960
      %v1597 = vpack.c.bf16 %v965, %v963
      %v1598 = vpack.c.bf16 %v966, %v964
      %v1599 = vpack.c.bf16 %v969, %v967
      %v1600 = vpack.c.bf16 %v970, %v968
      %v1601 = vpack.c.bf16 %v973, %v971
      %v1602 = vpack.c.bf16 %v974, %v972
      %v1603 = vpack.c.bf16 %v977, %v975
      %v1604 = vpack.c.bf16 %v978, %v976
      %v1605 = vpack.c.bf16 %v981, %v979
      %v1606 = vpack.c.bf16 %v982, %v980
      %v1607 = vpack.c.bf16 %v985, %v983
      %v1608 = vpack.c.bf16 %v986, %v984
      %v1609 = vpack.c.bf16 %v989, %v987
      %v1610 = vpack.c.bf16 %v990, %v988
      %v1611 = vpack.c.bf16 %v993, %v991
      %v1612 = vpack.c.bf16 %v994, %v992
      %v1613 = vpack.c.bf16 %v997, %v995
      %v1614 = vpack.c.bf16 %v998, %v996
      %v1615 = vpack.c.bf16 %v1001, %v999
      %v1616 = vpack.c.bf16 %v1002, %v1000
      %v1617 = vpack.c.bf16 %v1005, %v1003
      %v1618 = vpack.c.bf16 %v1006, %v1004
      %v1619 = vpack.c.bf16 %v1009, %v1007
      %v1620 = vpack.c.bf16 %v1010, %v1008
      %v1621 = vpack.c.bf16 %v1013, %v1011
      %v1622 = vpack.c.bf16 %v1014, %v1012
      %v1623 = vpack.c.bf16 %v1017, %v1015
      %v1624 = vpack.c.bf16 %v1018, %v1016
      %v1625 = vpack.c.bf16 %v1021, %v1019
      %v1626 = vpack.c.bf16 %v1022, %v1020
      %v1627 = vpack.c.bf16 %v1025, %v1023
      %v1628 = vpack.c.bf16 %v1026, %v1024
      %v1629 = vpack.c.bf16 %v1029, %v1027
      %v1630 = vpack.c.bf16 %v1030, %v1028
      %v1631 = vpack.c.bf16 %v1033, %v1031
      %v1632 = vpack.c.bf16 %v1034, %v1032
      %v1633 = vpack.c.bf16 %v1037, %v1035
      %v1634 = vpack.c.bf16 %v1038, %v1036
      %v1635 = vpack.c.bf16 %v1041, %v1039
      %v1636 = vpack.c.bf16 %v1042, %v1040
      %v1637 = vpack.c.bf16 %v1045, %v1043
      %v1638 = vpack.c.bf16 %v1046, %v1044
      %v1639 = vpack.c.bf16 %v1049, %v1047
      %v1640 = vpack.c.bf16 %v1050, %v1048
      %v1641 = vpack.c.bf16 %v1053, %v1051
      %v1642 = vpack.c.bf16 %v1054, %v1052
      %v1643 = vpack.c.bf16 %v1057, %v1055
      %v1644 = vpack.c.bf16 %v1058, %v1056
      %v1645 = vpack.c.bf16 %v1061, %v1059
      %v1646 = vpack.c.bf16 %v1062, %v1060
      %v1647 = vpack.c.bf16 %v1065, %v1063
      %v1648 = vpack.c.bf16 %v1066, %v1064
      %v1649 = vpack.c.bf16 %v1069, %v1067
      %v1650 = vpack.c.bf16 %v1070, %v1068
      %v1651 = vpack.c.bf16 %v1073, %v1071
      %v1652 = vpack.c.bf16 %v1074, %v1072
      %v1653 = vpack.c.bf16 %v1077, %v1075
      %v1654 = vpack.c.bf16 %v1078, %v1076
      %v1655 = vpack.c.bf16 %v1081, %v1079
      %v1656 = vpack.c.bf16 %v1082, %v1080
      %v1657 = vpack.c.bf16 %v1085, %v1083
      %v1658 = vpack.c.bf16 %v1086, %v1084
      %v1659 = vpack.c.bf16 %v1089, %v1087
      %v1660 = vpack.c.bf16 %v1090, %v1088
      %v1661 = vpack.c.bf16 %v1093, %v1091
      %v1662 = vpack.c.bf16 %v1094, %v1092
      %v1663 = vpack.c.bf16 %v1097, %v1095
      %v1664 = vpack.c.bf16 %v1098, %v1096
      %v1665 = vpack.c.bf16 %v1101, %v1099
      %v1666 = vpack.c.bf16 %v1102, %v1100
      %v1667 = vpack.c.bf16 %v1105, %v1103
      %v1668 = vpack.c.bf16 %v1106, %v1104
      %v1669 = vpack.c.bf16 %v1109, %v1107
      %v1670 = vpack.c.bf16 %v1110, %v1108
      %v1671 = vpack.c.bf16 %v1113, %v1111
      %v1672 = vpack.c.bf16 %v1114, %v1112
      %v1673 = vpack.c.bf16 %v1117, %v1115
      %v1674 = vpack.c.bf16 %v1118, %v1116
      %v1675 = vpack.c.bf16 %v1121, %v1119
      %v1676 = vpack.c.bf16 %v1122, %v1120
      %v1677 = vpack.c.bf16 %v1125, %v1123
      %v1678 = vpack.c.bf16 %v1126, %v1124
      %v1679 = vpack.c.bf16 %v1129, %v1127
      %v1680 = vpack.c.bf16 %v1130, %v1128
      %v1681 = vpack.c.bf16 %v1133, %v1131
      %v1682 = vpack.c.bf16 %v1134, %v1132
      %v1683 = vpack.c.bf16 %v1137, %v1135
      %v1684 = vpack.c.bf16 %v1138, %v1136
      %v1685 = vpack.c.bf16 %v1141, %v1139
      %v1686 = vpack.c.bf16 %v1142, %v1140
      %v1687 = vpack.c.bf16 %v1145, %v1143
      %v1688 = vpack.c.bf16 %v1146, %v1144
      %v1689 = vpack.c.bf16 %v1149, %v1147
      %v1690 = vpack.c.bf16 %v1150, %v1148
      %v1691 = vpack.c.bf16 %v1153, %v1151
      %v1692 = vpack.c.bf16 %v1154, %v1152
      %v1693 = vpack.c.bf16 %v1157, %v1155
      %v1694 = vpack.c.bf16 %v1158, %v1156
      %v1695 = vpack.c.bf16 %v1161, %v1159
      %v1696 = vpack.c.bf16 %v1162, %v1160
      %v1697 = vpack.c.bf16 %v1165, %v1163
      %v1698 = vpack.c.bf16 %v1166, %v1164
      %v1699 = vpack.c.bf16 %v1169, %v1167
      %v1700 = vpack.c.bf16 %v1170, %v1168
      %v1701 = vpack.c.bf16 %v1173, %v1171
      %v1702 = vpack.c.bf16 %v1174, %v1172
      %v1703 = vpack.c.bf16 %v1177, %v1175
      %v1704 = vpack.c.bf16 %v1178, %v1176
      %v1705 = vpack.c.bf16 %v1181, %v1179
      %v1706 = vpack.c.bf16 %v1182, %v1180
      %v1707 = vpack.c.bf16 %v1185, %v1183
      %v1708 = vpack.c.bf16 %v1186, %v1184
      %v1709 = vpack.c.bf16 %v1189, %v1187
      %v1710 = vpack.c.bf16 %v1190, %v1188
      %v1711 = vpack.c.bf16 %v1193, %v1191
      %v1712 = vpack.c.bf16 %v1194, %v1192
      %v1713 = vpack.c.bf16 %v1197, %v1195
      %v1714 = vpack.c.bf16 %v1198, %v1196
      %v1715 = vpack.c.bf16 %v1201, %v1199
      %v1716 = vpack.c.bf16 %v1202, %v1200
      %v1717 = vpack.c.bf16 %v1205, %v1203
      %v1718 = vpack.c.bf16 %v1206, %v1204
      %v1719 = vpack.c.bf16 %v1209, %v1207
      %v1720 = vpack.c.bf16 %v1210, %v1208
      %v1721 = vpack.c.bf16 %v1213, %v1211
      %v1722 = vpack.c.bf16 %v1214, %v1212
      %v1723 = vpack.c.bf16 %v1217, %v1215
      %v1724 = vpack.c.bf16 %v1218, %v1216
      %v1725 = vpack.c.bf16 %v1221, %v1219
      %v1726 = vpack.c.bf16 %v1222, %v1220
      %v1727 = vpack.c.bf16 %v1225, %v1223
      %v1728 = vpack.c.bf16 %v1226, %v1224
      %v1729 = vpack.c.bf16 %v1229, %v1227
      %v1730 = vpack.c.bf16 %v1230, %v1228
      %v1731 = vpack.c.bf16 %v1233, %v1231
      %v1732 = vpack.c.bf16 %v1234, %v1232
      %v1733 = vpack.c.bf16 %v1237, %v1235
      %v1734 = vpack.c.bf16 %v1238, %v1236
      %v1735 = vpack.c.bf16 %v1241, %v1239
      %v1736 = vpack.c.bf16 %v1242, %v1240
      %v1737 = vpack.c.bf16 %v1245, %v1243
      %v1738 = vpack.c.bf16 %v1246, %v1244
      %v1739 = vpack.c.bf16 %v1249, %v1247
      %v1740 = vpack.c.bf16 %v1250, %v1248
      %v1741 = vpack.c.bf16 %v1253, %v1251
      %v1742 = vpack.c.bf16 %v1254, %v1252
      %v1743 = vpack.c.bf16 %v1257, %v1255
      %v1744 = vpack.c.bf16 %v1258, %v1256
      %v1745 = vpack.c.bf16 %v1261, %v1259
      %v1746 = vpack.c.bf16 %v1262, %v1260
      %v1747 = vpack.c.bf16 %v1265, %v1263
      %v1748 = vpack.c.bf16 %v1266, %v1264
      %v1749 = vpack.c.bf16 %v1269, %v1267
      %v1750 = vpack.c.bf16 %v1270, %v1268
      %v1751 = vpack.c.bf16 %v1273, %v1271
      %v1752 = vpack.c.bf16 %v1274, %v1272
      %v1753 = vpack.c.bf16 %v1277, %v1275
      %v1754 = vpack.c.bf16 %v1278, %v1276
      %v1755 = vpack.c.bf16 %v1281, %v1279
      %v1756 = vpack.c.bf16 %v1282, %v1280
      %v1757 = vpack.c.bf16 %v1285, %v1283
      %v1758 = vpack.c.bf16 %v1286, %v1284
      %v1759 = vpack.c.bf16 %v1289, %v1287
      %v1760 = vpack.c.bf16 %v1290, %v1288
      %v1761 = vpack.c.bf16 %v1293, %v1291
      %v1762 = vpack.c.bf16 %v1294, %v1292
      %v1763 = vpack.c.bf16 %v1297, %v1295
      %v1764 = vpack.c.bf16 %v1298, %v1296
      %v1765 = vpack.c.bf16 %v1301, %v1299
      %v1766 = vpack.c.bf16 %v1302, %v1300
      %v1767 = vpack.c.bf16 %v1305, %v1303
      %v1768 = vpack.c.bf16 %v1306, %v1304
      %v1769 = vpack.c.bf16 %v1309, %v1307
      %v1770 = vpack.c.bf16 %v1310, %v1308
      %v1771 = vpack.c.bf16 %v1313, %v1311
      %v1772 = vpack.c.bf16 %v1314, %v1312
      %v1773 = vpack.c.bf16 %v1317, %v1315
      %v1774 = vpack.c.bf16 %v1318, %v1316
      %v1775 = vpack.c.bf16 %v1321, %v1319
      %v1776 = vpack.c.bf16 %v1322, %v1320
      %v1777 = vpack.c.bf16 %v1325, %v1323
      %v1778 = vpack.c.bf16 %v1326, %v1324
      %v1779 = vpack.c.bf16 %v1327, %v1327
      %v1780 = vpack.c.bf16 %v1328, %v1328
      %v1781 = vld [vmem:[%s1] sm:$0xff]
      %v1782 = vld [vmem:[%s1 + $0x8] sm:$0xff]
      %v1783 = vld [vmem:[%s1 + $0x10] sm:$0xff]
      %v1784 = vld [vmem:[%s1 + $0x18] sm:$0xff]
      %v1785 = vld [vmem:[%s1 + $0x20] sm:$0xff]
      %v1786 = vld [vmem:[%s1 + $0x28] sm:$0xff]
      %v1787 = vld [vmem:[%s1 + $0x30] sm:$0xff]
      %v1788 = vld [vmem:[%s1 + $0x38] sm:$0xff]
      %v1789 = vld [vmem:[%s1 + $0x40] sm:$0xff]
      %v1790 = vld [vmem:[%s1 + $0x48] sm:$0xff]
      %v1791 = vld [vmem:[%s1 + $0x50] sm:$0xff]
      %v1792 = vld [vmem:[%s1 + $0x58] sm:$0xff]
      %v1793 = vld [vmem:[%s1 + $0x60] sm:$0xff]
      %v1794 = vld [vmem:[%s1 + $0x68] sm:$0xff]
      %v1795 = vld [vmem:[%s1 + $0x70] sm:$0xf]
      %v1796 = vld [vmem:[%s1 + $0x74] sm:$0xff]
      %v1797 = vld [vmem:[%s1 + $0x7c] sm:$0xff]
      %v1798 = vld [vmem:[%s1 + $0x84] sm:$0xff]
      %v1799 = vld [vmem:[%s1 + $0x8c] sm:$0xff]
      %v1800 = vld [vmem:[%s1 + $0x94] sm:$0xff]
      %v1801 = vld [vmem:[%s1 + $0x9c] sm:$0xff]
      %v1802 = vld [vmem:[%s1 + $0xa4] sm:$0xff]
      %v1803 = vld [vmem:[%s1 + $0xac] sm:$0xff]
      %v1804 = vld [vmem:[%s1 + $0xb4] sm:$0xff]
      %v1805 = vld [vmem:[%s1 + $0xbc] sm:$0xff]
      %v1806 = vld [vmem:[%s1 + $0xc4] sm:$0xff]
      %v1807 = vld [vmem:[%s1 + $0xcc] sm:$0xff]
      %v1808 = vld [vmem:[%s1 + $0xd4] sm:$0xff]
      %v1809 = vld [vmem:[%s1 + $0xdc] sm:$0xff]
      %v1810 = vld [vmem:[%s1 + $0xe4] sm:$0xf]
      %v1811 = vld [vmem:[%s1 + $0xe8] sm:$0xff]
      %v1812 = vld [vmem:[%s1 + $0xf0] sm:$0xff]
      %v1813 = vld [vmem:[%s1 + $0xf8] sm:$0xff]
      %v1814 = vld [vmem:[%s1 + $0x100] sm:$0xff]
      %v1815 = vld [vmem:[%s1 + $0x108] sm:$0xff]
      %v1816 = vld [vmem:[%s1 + $0x110] sm:$0xff]
      %v1817 = vld [vmem:[%s1 + $0x118] sm:$0xff]
      %v1818 = vld [vmem:[%s1 + $0x120] sm:$0xff]
      %v1819 = vld [vmem:[%s1 + $0x128] sm:$0xff]
      %v1820 = vld [vmem:[%s1 + $0x130] sm:$0xff]
      %v1821 = vld [vmem:[%s1 + $0x138] sm:$0xff]
      %v1822 = vld [vmem:[%s1 + $0x140] sm:$0xff]
      %v1823 = vld [vmem:[%s1 + $0x148] sm:$0xff]
      %v1824 = vld [vmem:[%s1 + $0x150] sm:$0xff]
      %v1825 = vld [vmem:[%s1 + $0x158] sm:$0xf]
      %v1826 = vld [vmem:[%s1 + $0x15c] sm:$0xff]
      %v1827 = vld [vmem:[%s1 + $0x164] sm:$0xff]
      %v1828 = vld [vmem:[%s1 + $0x16c] sm:$0xff]
      %v1829 = vld [vmem:[%s1 + $0x174] sm:$0xff]
      %v1830 = vld [vmem:[%s1 + $0x17c] sm:$0xff]
      %v1831 = vld [vmem:[%s1 + $0x184] sm:$0xff]
      %v1832 = vld [vmem:[%s1 + $0x18c] sm:$0xff]
      %v1833 = vld [vmem:[%s1 + $0x194] sm:$0xff]
      %v1834 = vld [vmem:[%s1 + $0x19c] sm:$0xff]
      %v1835 = vld [vmem:[%s1 + $0x1a4] sm:$0xff]
      %v1836 = vld [vmem:[%s1 + $0x1ac] sm:$0xff]
      %v1837 = vld [vmem:[%s1 + $0x1b4] sm:$0xff]
      %v1838 = vld [vmem:[%s1 + $0x1bc] sm:$0xff]
      %v1839 = vld [vmem:[%s1 + $0x1c4] sm:$0xff]
      %v1840 = vld [vmem:[%s1 + $0x1cc] sm:$0xf]
      %v1901 = vunpack.c.l.b16 %v1781
      %v1902 = vunpack.c.h.b16 %v1781
      %v1903 = vunpack.c.l.b16 %v1782
      %v1904 = vunpack.c.h.b16 %v1782
      %v1905 = vunpack.c.l.b16 %v1783
      %v1906 = vunpack.c.h.b16 %v1783
      %v1907 = vunpack.c.l.b16 %v1784
      %v1908 = vunpack.c.h.b16 %v1784
      %v1909 = vunpack.c.l.b16 %v1785
      %v1910 = vunpack.c.h.b16 %v1785
      %v1911 = vunpack.c.l.b16 %v1786
      %v1912 = vunpack.c.h.b16 %v1786
      %v1913 = vunpack.c.l.b16 %v1787
      %v1914 = vunpack.c.h.b16 %v1787
      %v1915 = vunpack.c.l.b16 %v1788
      %v1916 = vunpack.c.h.b16 %v1788
      %v1917 = vunpack.c.l.b16 %v1789
      %v1918 = vunpack.c.h.b16 %v1789
      %v1919 = vunpack.c.l.b16 %v1790
      %v1920 = vunpack.c.h.b16 %v1790
      %v1921 = vunpack.c.l.b16 %v1791
      %v1922 = vunpack.c.h.b16 %v1791
      %v1923 = vunpack.c.l.b16 %v1792
      %v1924 = vunpack.c.h.b16 %v1792
      %v1925 = vunpack.c.l.b16 %v1793
      %v1926 = vunpack.c.h.b16 %v1793
      %v1927 = vunpack.c.l.b16 %v1794
      %v1928 = vunpack.c.h.b16 %v1794
      %v1929 = vunpack.c.l.b16 %v1795
      %v1930 = vunpack.c.l.b16 %v1796
      %v1931 = vunpack.c.h.b16 %v1796
      %v1932 = vunpack.c.l.b16 %v1797
      %v1933 = vunpack.c.h.b16 %v1797
      %v1934 = vunpack.c.l.b16 %v1798
      %v1935 = vunpack.c.h.b16 %v1798
      %v1936 = vunpack.c.l.b16 %v1799
      %v1937 = vunpack.c.h.b16 %v1799
      %v1938 = vunpack.c.l.b16 %v1800
      %v1939 = vunpack.c.h.b16 %v1800
      %v1940 = vunpack.c.l.b16 %v1801
      %v1941 = vunpack.c.h.b16 %v1801
      %v1942 = vunpack.c.l.b16 %v1802
      %v1943 = vunpack.c.h.b16 %v1802
      %v1944 = vunpack.c.l.b16 %v1803
      %v1945 = vunpack.c.h.b16 %v1803
      %v1946 = vunpack.c.l.b16 %v1804
      %v1947 = vunpack.c.h.b16 %v1804
      %v1948 = vunpack.c.l.b16 %v1805
      %v1949 = vunpack.c.h.b16 %v1805
      %v1950 = vunpack.c.l.b16 %v1806
      %v1951 = vunpack.c.h.b16 %v1806
      %v1952 = vunpack.c.l.b16 %v1807
      %v1953 = vunpack.c.h.b16 %v1807
      %v1954 = vunpack.c.l.b16 %v1808
      %v1955 = vunpack.c.h.b16 %v1808
      %v1956 = vunpack.c.l.b16 %v1809
      %v1957 = vunpack.c.h.b16 %v1809
      %v1958 = vunpack.c.l.b16 %v1810
      %v1959 = vunpack.c.l.b16 %v1811
      %v1960 = vunpack.c.h.b16 %v1811
      %v1961 = vunpack.c.l.b16 %v1812
      %v1962 = vunpack.c.h.b16 %v1812
      %v1963 = vunpack.c.l.b16 %v1813
      %v1964 = vunpack.c.h.b16 %v1813
      %v1965 = vunpack.c.l.b16 %v1814
      %v1966 = vunpack.c.h.b16 %v1814
      %v1967 = vunpack.c.l.b16 %v1815
      %v1968 = vunpack.c.h.b16 %v1815
      %v1969 = vunpack.c.l.b16 %v1816
      %v1970 = vunpack.c.h.b16 %v1816
      %v1971 = vunpack.c.l.b16 %v1817
      %v1972 = vunpack.c.h.b16 %v1817
      %v1973 = vunpack.c.l.b16 %v1818
      %v1974 = vunpack.c.h.b16 %v1818
      %v1975 = vunpack.c.l.b16 %v1819
      %v1976 = vunpack.c.h.b16 %v1819
      %v1977 = vunpack.c.l.b16 %v1820
      %v1978 = vunpack.c.h.b16 %v1820
      %v1979 = vunpack.c.l.b16 %v1821
      %v1980 = vunpack.c.h.b16 %v1821
      %v1981 = vunpack.c.l.b16 %v1822
      %v1982 = vunpack.c.h.b16 %v1822
      %v1983 = vunpack.c.l.b16 %v1823
      %v1984 = vunpack.c.h.b16 %v1823
      %v1985 = vunpack.c.l.b16 %v1824
      %v1986 = vunpack.c.h.b16 %v1824
      %v1987 = vunpack.c.l.b16 %v1825
      %v1988 = vunpack.c.l.b16 %v1826
      %v1989 = vunpack.c.h.b16 %v1826
      %v1990 = vunpack.c.l.b16 %v1827
      %v1991 = vunpack.c.h.b16 %v1827
      %v1992 = vunpack.c.l.b16 %v1828
      %v1993 = vunpack.c.h.b16 %v1828
      %v1994 = vunpack.c.l.b16 %v1829
      %v1995 = vunpack.c.h.b16 %v1829
      %v1996 = vunpack.c.l.b16 %v1830
      %v1997 = vunpack.c.h.b16 %v1830
      %v1998 = vunpack.c.l.b16 %v1831
      %v1999 = vunpack.c.h.b16 %v1831
      %v2000 = vunpack.c.l.b16 %v1832
      %v2001 = vunpack.c.h.b16 %v1832
      %v2002 = vunpack.c.l.b16 %v1833
      %v2003 = vunpack.c.h.b16 %v1833
      %v2004 = vunpack.c.l.b16 %v1834
      %v2005 = vunpack.c.h.b16 %v1834
      %v2006 = vunpack.c.l.b16 %v1835
      %v2007 = vunpack.c.h.b16 %v1835
      %v2008 = vunpack.c.l.b16 %v1836
      %v2009 = vunpack.c.h.b16 %v1836
      %v2010 = vunpack.c.l.b16 %v1837
      %v2011 = vunpack.c.h.b16 %v1837
      %v2012 = vunpack.c.l.b16 %v1838
      %v2013 = vunpack.c.h.b16 %v1838
      %v2014 = vunpack.c.l.b16 %v1839
      %v2015 = vunpack.c.h.b16 %v1839
      %v2016 = vunpack.c.l.b16 %v1840
      %v2017 = vpack.c.b16 %v1930, %v1901
      %v2018 = vpack.c.b16 %v1931, %v1902
      %v2019 = vpack.c.b16 %v1932, %v1903
      %v2020 = vpack.c.b16 %v1933, %v1904
      %v2021 = vpack.c.b16 %v1934, %v1905
      %v2022 = vpack.c.b16 %v1935, %v1906
      %v2023 = vpack.c.b16 %v1936, %v1907
      %v2024 = vpack.c.b16 %v1937, %v1908
      %v2025 = vpack.c.b16 %v1938, %v1909
      %v2026 = vpack.c.b16 %v1939, %v1910
      %v2027 = vpack.c.b16 %v1940, %v1911
      %v2028 = vpack.c.b16 %v1941, %v1912
      %v2029 = vpack.c.b16 %v1942, %v1913
      %v2030 = vpack.c.b16 %v1943, %v1914
      %v2031 = vpack.c.b16 %v1944, %v1915
      %v2032 = vpack.c.b16 %v1945, %v1916
      %v2033 = vpack.c.b16 %v1946, %v1917
      %v2034 = vpack.c.b16 %v1947, %v1918
      %v2035 = vpack.c.b16 %v1948, %v1919
      %v2036 = vpack.c.b16 %v1949, %v1920
      %v2037 = vpack.c.b16 %v1950, %v1921
      %v2038 = vpack.c.b16 %v1951, %v1922
      %v2039 = vpack.c.b16 %v1952, %v1923
      %v2040 = vpack.c.b16 %v1953, %v1924
      %v2041 = vpack.c.b16 %v1954, %v1925
      %v2042 = vpack.c.b16 %v1955, %v1926
      %v2043 = vpack.c.b16 %v1956, %v1927
      %v2044 = vpack.c.b16 %v1957, %v1928
      %v2045 = vpack.c.b16 %v1958, %v1929
      %v2046 = vpack.c.b16 %v1988, %v1959
      %v2047 = vpack.c.b16 %v1989, %v1960
      %v2048 = vpack.c.b16 %v1990, %v1961
      %v2049 = vpack.c.b16 %v1991, %v1962
      %v2050 = vpack.c.b16 %v1992, %v1963
      %v2051 = vpack.c.b16 %v1993, %v1964
      %v2052 = vpack.c.b16 %v1994, %v1965
      %v2053 = vpack.c.b16 %v1995, %v1966
      %v2054 = vpack.c.b16 %v1996, %v1967
      %v2055 = vpack.c.b16 %v1997, %v1968
      %v2056 = vpack.c.b16 %v1998, %v1969
      %v2057 = vpack.c.b16 %v1999, %v1970
      %v2058 = vpack.c.b16 %v2000, %v1971
      %v2059 = vpack.c.b16 %v2001, %v1972
      %v2060 = vpack.c.b16 %v2002, %v1973
      %v2061 = vpack.c.b16 %v2003, %v1974
      %v2062 = vpack.c.b16 %v2004, %v1975
      %v2063 = vpack.c.b16 %v2005, %v1976
      %v2064 = vpack.c.b16 %v2006, %v1977
      %v2065 = vpack.c.b16 %v2007, %v1978
      %v2066 = vpack.c.b16 %v2008, %v1979
      %v2067 = vpack.c.b16 %v2009, %v1980
      %v2068 = vpack.c.b16 %v2010, %v1981
      %v2069 = vpack.c.b16 %v2011, %v1982
      %v2070 = vpack.c.b16 %v2012, %v1983
      %v2071 = vpack.c.b16 %v2013, %v1984
      %v2072 = vpack.c.b16 %v2014, %v1985
      %v2073 = vpack.c.b16 %v2015, %v1986
      %v2074 = vpack.c.b16 %v2016, %v1987
      %vm2131 = vcmask 179200
      %v2133 = vsel %vm2131, %v2045, 0
      %v2136 = vsel %vm2131, %v2074, 0
      %vm2138 = vcmask 1042432
      %v2140 = vsel %vm2138, %v1779, 0
      %v2143 = vsel %vm2138, %v1780, 0
      %2145 = vmatpush.bf16.msra.mxu0 %v1343
      %2146 = vmatpush.bf16.msra.mxu0 %v1341
      %2147 = vmatpush.bf16.msra.mxu0 %v1339
      %2148 = vmatpush.bf16.msra.mxu0 %v1337
      %2149 = vmatpush.bf16.msra.mxu0 %v1335
      %2150 = vmatpush.bf16.msra.mxu0 %v1333
      %2151 = vmatpush.bf16.msra.mxu0 %v1331
      %2152 = vmatpush.bf16.msra.mxu0 %v1329
      %2153 = vmatmul.bf16.gmra.mxu0 %v2017
      %v2154 = vpop.f32.mrf.mxu0
      %v2155 = vadd.f32 0.0, %v2154
      %v2156 = vpop.f32.mrf.mxu0
      %v2157 = vadd.f32 0.0, %v2156
      %2158 = vmatmul.bf16.gmra.mxu0 %v2046
      %v2159 = vpop.f32.mrf.mxu0
      %v2160 = vadd.f32 0.0, %v2159
      %v2161 = vpop.f32.mrf.mxu0
      %v2162 = vadd.f32 0.0, %v2161
      %2163 = vdwg.mxu0
      %2164 = vmatpush.bf16.msra.mxu0 %v1359
      %2165 = vmatpush.bf16.msra.mxu0 %v1357
      %2166 = vmatpush.bf16.msra.mxu0 %v1355
      %2167 = vmatpush.bf16.msra.mxu0 %v1353
      %2168 = vmatpush.bf16.msra.mxu0 %v1351
      %2169 = vmatpush.bf16.msra.mxu0 %v1349
      %2170 = vmatpush.bf16.msra.mxu0 %v1347
      %2171 = vmatpush.bf16.msra.mxu0 %v1345
      %2172 = vmatmul.bf16.gmra.mxu0 %v2018
      %v2173 = vpop.f32.mrf.mxu0
      %v2174 = vadd.f32 %v2155, %v2173
      %v2175 = vpop.f32.mrf.mxu0
      %v2176 = vadd.f32 %v2157, %v2175
      %2177 = vmatmul.bf16.gmra.mxu0 %v2047
      %v2178 = vpop.f32.mrf.mxu0
      %v2179 = vadd.f32 %v2160, %v2178
      %v2180 = vpop.f32.mrf.mxu0
      %v2181 = vadd.f32 %v2162, %v2180
      %2182 = vdwg.mxu0
      %2183 = vmatpush.bf16.msra.mxu0 %v1375
      %2184 = vmatpush.bf16.msra.mxu0 %v1373
      %2185 = vmatpush.bf16.msra.mxu0 %v1371
      %2186 = vmatpush.bf16.msra.mxu0 %v1369
      %2187 = vmatpush.bf16.msra.mxu0 %v1367
      %2188 = vmatpush.bf16.msra.mxu0 %v1365
      %2189 = vmatpush.bf16.msra.mxu0 %v1363
      %2190 = vmatpush.bf16.msra.mxu0 %v1361
      %2191 = vmatmul.bf16.gmra.mxu0 %v2019
      %v2192 = vpop.f32.mrf.mxu0
      %v2193 = vadd.f32 %v2174, %v2192
      %v2194 = vpop.f32.mrf.mxu0
      %v2195 = vadd.f32 %v2176, %v2194
      %2196 = vmatmul.bf16.gmra.mxu0 %v2048
      %v2197 = vpop.f32.mrf.mxu0
      %v2198 = vadd.f32 %v2179, %v2197
      %v2199 = vpop.f32.mrf.mxu0
      %v2200 = vadd.f32 %v2181, %v2199
      %2201 = vdwg.mxu0
      %2202 = vmatpush.bf16.msra.mxu0 %v1391
      %2203 = vmatpush.bf16.msra.mxu0 %v1389
      %2204 = vmatpush.bf16.msra.mxu0 %v1387
      %2205 = vmatpush.bf16.msra.mxu0 %v1385
      %2206 = vmatpush.bf16.msra.mxu0 %v1383
      %2207 = vmatpush.bf16.msra.mxu0 %v1381
      %2208 = vmatpush.bf16.msra.mxu0 %v1379
      %2209 = vmatpush.bf16.msra.mxu0 %v1377
      %2210 = vmatmul.bf16.gmra.mxu0 %v2020
      %v2211 = vpop.f32.mrf.mxu0
      %v2212 = vadd.f32 %v2193, %v2211
      %v2213 = vpop.f32.mrf.mxu0
      %v2214 = vadd.f32 %v2195, %v2213
      %2215 = vmatmul.bf16.gmra.mxu0 %v2049
      %v2216 = vpop.f32.mrf.mxu0
      %v2217 = vadd.f32 %v2198, %v2216
      %v2218 = vpop.f32.mrf.mxu0
      %v2219 = vadd.f32 %v2200, %v2218
      %2220 = vdwg.mxu0
      %2221 = vmatpush.bf16.msra.mxu0 %v1407
      %2222 = vmatpush.bf16.msra.mxu0 %v1405
      %2223 = vmatpush.bf16.msra.mxu0 %v1403
      %2224 = vmatpush.bf16.msra.mxu0 %v1401
      %2225 = vmatpush.bf16.msra.mxu0 %v1399
      %2226 = vmatpush.bf16.msra.mxu0 %v1397
      %2227 = vmatpush.bf16.msra.mxu0 %v1395
      %2228 = vmatpush.bf16.msra.mxu0 %v1393
      %2229 = vmatmul.bf16.gmra.mxu0 %v2021
      %v2230 = vpop.f32.mrf.mxu0
      %v2231 = vadd.f32 %v2212, %v2230
      %v2232 = vpop.f32.mrf.mxu0
      %v2233 = vadd.f32 %v2214, %v2232
      %2234 = vmatmul.bf16.gmra.mxu0 %v2050
      %v2235 = vpop.f32.mrf.mxu0
      %v2236 = vadd.f32 %v2217, %v2235
      %v2237 = vpop.f32.mrf.mxu0
      %v2238 = vadd.f32 %v2219, %v2237
      %2239 = vdwg.mxu0
      %2240 = vmatpush.bf16.msra.mxu0 %v1423
      %2241 = vmatpush.bf16.msra.mxu0 %v1421
      %2242 = vmatpush.bf16.msra.mxu0 %v1419
      %2243 = vmatpush.bf16.msra.mxu0 %v1417
      %2244 = vmatpush.bf16.msra.mxu0 %v1415
      %2245 = vmatpush.bf16.msra.mxu0 %v1413
      %2246 = vmatpush.bf16.msra.mxu0 %v1411
      %2247 = vmatpush.bf16.msra.mxu0 %v1409
      %2248 = vmatmul.bf16.gmra.mxu0 %v2022
      %v2249 = vpop.f32.mrf.mxu0
      %v2250 = vadd.f32 %v2231, %v2249
      %v2251 = vpop.f32.mrf.mxu0
      %v2252 = vadd.f32 %v2233, %v2251
      %2253 = vmatmul.bf16.gmra.mxu0 %v2051
      %v2254 = vpop.f32.mrf.mxu0
      %v2255 = vadd.f32 %v2236, %v2254
      %v2256 = vpop.f32.mrf.mxu0
      %v2257 = vadd.f32 %v2238, %v2256
      %2258 = vdwg.mxu0
      %2259 = vmatpush.bf16.msra.mxu0 %v1439
      %2260 = vmatpush.bf16.msra.mxu0 %v1437
      %2261 = vmatpush.bf16.msra.mxu0 %v1435
      %2262 = vmatpush.bf16.msra.mxu0 %v1433
      %2263 = vmatpush.bf16.msra.mxu0 %v1431
      %2264 = vmatpush.bf16.msra.mxu0 %v1429
      %2265 = vmatpush.bf16.msra.mxu0 %v1427
      %2266 = vmatpush.bf16.msra.mxu0 %v1425
      %2267 = vmatmul.bf16.gmra.mxu0 %v2023
      %v2268 = vpop.f32.mrf.mxu0
      %v2269 = vadd.f32 %v2250, %v2268
      %v2270 = vpop.f32.mrf.mxu0
      %v2271 = vadd.f32 %v2252, %v2270
      %2272 = vmatmul.bf16.gmra.mxu0 %v2052
      %v2273 = vpop.f32.mrf.mxu0
      %v2274 = vadd.f32 %v2255, %v2273
      %v2275 = vpop.f32.mrf.mxu0
      %v2276 = vadd.f32 %v2257, %v2275
      %2277 = vdwg.mxu0
      %2278 = vmatpush.bf16.msra.mxu0 %v1455
      %2279 = vmatpush.bf16.msra.mxu0 %v1453
      %2280 = vmatpush.bf16.msra.mxu0 %v1451
      %2281 = vmatpush.bf16.msra.mxu0 %v1449
      %2282 = vmatpush.bf16.msra.mxu0 %v1447
      %2283 = vmatpush.bf16.msra.mxu0 %v1445
      %2284 = vmatpush.bf16.msra.mxu0 %v1443
      %2285 = vmatpush.bf16.msra.mxu0 %v1441
      %2286 = vmatmul.bf16.gmra.mxu0 %v2024
      %v2287 = vpop.f32.mrf.mxu0
      %v2288 = vadd.f32 %v2269, %v2287
      %v2289 = vpop.f32.mrf.mxu0
      %v2290 = vadd.f32 %v2271, %v2289
      %2291 = vmatmul.bf16.gmra.mxu0 %v2053
      %v2292 = vpop.f32.mrf.mxu0
      %v2293 = vadd.f32 %v2274, %v2292
      %v2294 = vpop.f32.mrf.mxu0
      %v2295 = vadd.f32 %v2276, %v2294
      %2296 = vdwg.mxu0
      %2297 = vmatpush.bf16.msra.mxu0 %v1471
      %2298 = vmatpush.bf16.msra.mxu0 %v1469
      %2299 = vmatpush.bf16.msra.mxu0 %v1467
      %2300 = vmatpush.bf16.msra.mxu0 %v1465
      %2301 = vmatpush.bf16.msra.mxu0 %v1463
      %2302 = vmatpush.bf16.msra.mxu0 %v1461
      %2303 = vmatpush.bf16.msra.mxu0 %v1459
      %2304 = vmatpush.bf16.msra.mxu0 %v1457
      %2305 = vmatmul.bf16.gmra.mxu0 %v2025
      %v2306 = vpop.f32.mrf.mxu0
      %v2307 = vadd.f32 %v2288, %v2306
      %v2308 = vpop.f32.mrf.mxu0
      %v2309 = vadd.f32 %v2290, %v2308
      %2310 = vmatmul.bf16.gmra.mxu0 %v2054
      %v2311 = vpop.f32.mrf.mxu0
      %v2312 = vadd.f32 %v2293, %v2311
      %v2313 = vpop.f32.mrf.mxu0
      %v2314 = vadd.f32 %v2295, %v2313
      %2315 = vdwg.mxu0
      %2316 = vmatpush.bf16.msra.mxu0 %v1487
      %2317 = vmatpush.bf16.msra.mxu0 %v1485
      %2318 = vmatpush.bf16.msra.mxu0 %v1483
      %2319 = vmatpush.bf16.msra.mxu0 %v1481
      %2320 = vmatpush.bf16.msra.mxu0 %v1479
      %2321 = vmatpush.bf16.msra.mxu0 %v1477
      %2322 = vmatpush.bf16.msra.mxu0 %v1475
      %2323 = vmatpush.bf16.msra.mxu0 %v1473
      %2324 = vmatmul.bf16.gmra.mxu0 %v2026
      %v2325 = vpop.f32.mrf.mxu0
      %v2326 = vadd.f32 %v2307, %v2325
      %v2327 = vpop.f32.mrf.mxu0
      %v2328 = vadd.f32 %v2309, %v2327
      %2329 = vmatmul.bf16.gmra.mxu0 %v2055
      %v2330 = vpop.f32.mrf.mxu0
      %v2331 = vadd.f32 %v2312, %v2330
      %v2332 = vpop.f32.mrf.mxu0
      %v2333 = vadd.f32 %v2314, %v2332
      %2334 = vdwg.mxu0
      %2335 = vmatpush.bf16.msra.mxu0 %v1503
      %2336 = vmatpush.bf16.msra.mxu0 %v1501
      %2337 = vmatpush.bf16.msra.mxu0 %v1499
      %2338 = vmatpush.bf16.msra.mxu0 %v1497
      %2339 = vmatpush.bf16.msra.mxu0 %v1495
      %2340 = vmatpush.bf16.msra.mxu0 %v1493
      %2341 = vmatpush.bf16.msra.mxu0 %v1491
      %2342 = vmatpush.bf16.msra.mxu0 %v1489
      %2343 = vmatmul.bf16.gmra.mxu0 %v2027
      %v2344 = vpop.f32.mrf.mxu0
      %v2345 = vadd.f32 %v2326, %v2344
      %v2346 = vpop.f32.mrf.mxu0
      %v2347 = vadd.f32 %v2328, %v2346
      %2348 = vmatmul.bf16.gmra.mxu0 %v2056
      %v2349 = vpop.f32.mrf.mxu0
      %v2350 = vadd.f32 %v2331, %v2349
      %v2351 = vpop.f32.mrf.mxu0
      %v2352 = vadd.f32 %v2333, %v2351
      %2353 = vdwg.mxu0
      %2354 = vmatpush.bf16.msra.mxu0 %v1519
      %2355 = vmatpush.bf16.msra.mxu0 %v1517
      %2356 = vmatpush.bf16.msra.mxu0 %v1515
      %2357 = vmatpush.bf16.msra.mxu0 %v1513
      %2358 = vmatpush.bf16.msra.mxu0 %v1511
      %2359 = vmatpush.bf16.msra.mxu0 %v1509
      %2360 = vmatpush.bf16.msra.mxu0 %v1507
      %2361 = vmatpush.bf16.msra.mxu0 %v1505
      %2362 = vmatmul.bf16.gmra.mxu0 %v2028
      %v2363 = vpop.f32.mrf.mxu0
      %v2364 = vadd.f32 %v2345, %v2363
      %v2365 = vpop.f32.mrf.mxu0
      %v2366 = vadd.f32 %v2347, %v2365
      %2367 = vmatmul.bf16.gmra.mxu0 %v2057
      %v2368 = vpop.f32.mrf.mxu0
      %v2369 = vadd.f32 %v2350, %v2368
      %v2370 = vpop.f32.mrf.mxu0
      %v2371 = vadd.f32 %v2352, %v2370
      %2372 = vdwg.mxu0
      %2373 = vmatpush.bf16.msra.mxu0 %v1535
      %2374 = vmatpush.bf16.msra.mxu0 %v1533
      %2375 = vmatpush.bf16.msra.mxu0 %v1531
      %2376 = vmatpush.bf16.msra.mxu0 %v1529
      %2377 = vmatpush.bf16.msra.mxu0 %v1527
      %2378 = vmatpush.bf16.msra.mxu0 %v1525
      %2379 = vmatpush.bf16.msra.mxu0 %v1523
      %2380 = vmatpush.bf16.msra.mxu0 %v1521
      %2381 = vmatmul.bf16.gmra.mxu0 %v2029
      %v2382 = vpop.f32.mrf.mxu0
      %v2383 = vadd.f32 %v2364, %v2382
      %v2384 = vpop.f32.mrf.mxu0
      %v2385 = vadd.f32 %v2366, %v2384
      %2386 = vmatmul.bf16.gmra.mxu0 %v2058
      %v2387 = vpop.f32.mrf.mxu0
      %v2388 = vadd.f32 %v2369, %v2387
      %v2389 = vpop.f32.mrf.mxu0
      %v2390 = vadd.f32 %v2371, %v2389
      %2391 = vdwg.mxu0
      %2392 = vmatpush.bf16.msra.mxu0 %v1551
      %2393 = vmatpush.bf16.msra.mxu0 %v1549
      %2394 = vmatpush.bf16.msra.mxu0 %v1547
      %2395 = vmatpush.bf16.msra.mxu0 %v1545
      %2396 = vmatpush.bf16.msra.mxu0 %v1543
      %2397 = vmatpush.bf16.msra.mxu0 %v1541
      %2398 = vmatpush.bf16.msra.mxu0 %v1539
      %2399 = vmatpush.bf16.msra.mxu0 %v1537
      %2400 = vmatmul.bf16.gmra.mxu0 %v2030
      %v2401 = vpop.f32.mrf.mxu0
      %v2402 = vadd.f32 %v2383, %v2401
      %v2403 = vpop.f32.mrf.mxu0
      %v2404 = vadd.f32 %v2385, %v2403
      %2405 = vmatmul.bf16.gmra.mxu0 %v2059
      %v2406 = vpop.f32.mrf.mxu0
      %v2407 = vadd.f32 %v2388, %v2406
      %v2408 = vpop.f32.mrf.mxu0
      %v2409 = vadd.f32 %v2390, %v2408
      %2410 = vdwg.mxu0
      %2411 = vmatpush.bf16.msra.mxu0 %v1567
      %2412 = vmatpush.bf16.msra.mxu0 %v1565
      %2413 = vmatpush.bf16.msra.mxu0 %v1563
      %2414 = vmatpush.bf16.msra.mxu0 %v1561
      %2415 = vmatpush.bf16.msra.mxu0 %v1559
      %2416 = vmatpush.bf16.msra.mxu0 %v1557
      %2417 = vmatpush.bf16.msra.mxu0 %v1555
      %2418 = vmatpush.bf16.msra.mxu0 %v1553
      %2419 = vmatmul.bf16.gmra.mxu0 %v2031
      %v2420 = vpop.f32.mrf.mxu0
      %v2421 = vadd.f32 %v2402, %v2420
      %v2422 = vpop.f32.mrf.mxu0
      %v2423 = vadd.f32 %v2404, %v2422
      %2424 = vmatmul.bf16.gmra.mxu0 %v2060
      %v2425 = vpop.f32.mrf.mxu0
      %v2426 = vadd.f32 %v2407, %v2425
      %v2427 = vpop.f32.mrf.mxu0
      %v2428 = vadd.f32 %v2409, %v2427
      %2429 = vdwg.mxu0
      %2430 = vmatpush.bf16.msra.mxu0 %v1583
      %2431 = vmatpush.bf16.msra.mxu0 %v1581
      %2432 = vmatpush.bf16.msra.mxu0 %v1579
      %2433 = vmatpush.bf16.msra.mxu0 %v1577
      %2434 = vmatpush.bf16.msra.mxu0 %v1575
      %2435 = vmatpush.bf16.msra.mxu0 %v1573
      %2436 = vmatpush.bf16.msra.mxu0 %v1571
      %2437 = vmatpush.bf16.msra.mxu0 %v1569
      %2438 = vmatmul.bf16.gmra.mxu0 %v2032
      %v2439 = vpop.f32.mrf.mxu0
      %v2440 = vadd.f32 %v2421, %v2439
      %v2441 = vpop.f32.mrf.mxu0
      %v2442 = vadd.f32 %v2423, %v2441
      %2443 = vmatmul.bf16.gmra.mxu0 %v2061
      %v2444 = vpop.f32.mrf.mxu0
      %v2445 = vadd.f32 %v2426, %v2444
      %v2446 = vpop.f32.mrf.mxu0
      %v2447 = vadd.f32 %v2428, %v2446
      %2448 = vdwg.mxu0
      %2449 = vmatpush.bf16.msra.mxu0 %v1599
      %2450 = vmatpush.bf16.msra.mxu0 %v1597
      %2451 = vmatpush.bf16.msra.mxu0 %v1595
      %2452 = vmatpush.bf16.msra.mxu0 %v1593
      %2453 = vmatpush.bf16.msra.mxu0 %v1591
      %2454 = vmatpush.bf16.msra.mxu0 %v1589
      %2455 = vmatpush.bf16.msra.mxu0 %v1587
      %2456 = vmatpush.bf16.msra.mxu0 %v1585
      %2457 = vmatmul.bf16.gmra.mxu0 %v2033
      %v2458 = vpop.f32.mrf.mxu0
      %v2459 = vadd.f32 %v2440, %v2458
      %v2460 = vpop.f32.mrf.mxu0
      %v2461 = vadd.f32 %v2442, %v2460
      %2462 = vmatmul.bf16.gmra.mxu0 %v2062
      %v2463 = vpop.f32.mrf.mxu0
      %v2464 = vadd.f32 %v2445, %v2463
      %v2465 = vpop.f32.mrf.mxu0
      %v2466 = vadd.f32 %v2447, %v2465
      %2467 = vdwg.mxu0
      %2468 = vmatpush.bf16.msra.mxu0 %v1615
      %2469 = vmatpush.bf16.msra.mxu0 %v1613
      %2470 = vmatpush.bf16.msra.mxu0 %v1611
      %2471 = vmatpush.bf16.msra.mxu0 %v1609
      %2472 = vmatpush.bf16.msra.mxu0 %v1607
      %2473 = vmatpush.bf16.msra.mxu0 %v1605
      %2474 = vmatpush.bf16.msra.mxu0 %v1603
      %2475 = vmatpush.bf16.msra.mxu0 %v1601
      %2476 = vmatmul.bf16.gmra.mxu0 %v2034
      %v2477 = vpop.f32.mrf.mxu0
      %v2478 = vadd.f32 %v2459, %v2477
      %v2479 = vpop.f32.mrf.mxu0
      %v2480 = vadd.f32 %v2461, %v2479
      %2481 = vmatmul.bf16.gmra.mxu0 %v2063
      %v2482 = vpop.f32.mrf.mxu0
      %v2483 = vadd.f32 %v2464, %v2482
      %v2484 = vpop.f32.mrf.mxu0
      %v2485 = vadd.f32 %v2466, %v2484
      %2486 = vdwg.mxu0
      %2487 = vmatpush.bf16.msra.mxu0 %v1631
      %2488 = vmatpush.bf16.msra.mxu0 %v1629
      %2489 = vmatpush.bf16.msra.mxu0 %v1627
      %2490 = vmatpush.bf16.msra.mxu0 %v1625
      %2491 = vmatpush.bf16.msra.mxu0 %v1623
      %2492 = vmatpush.bf16.msra.mxu0 %v1621
      %2493 = vmatpush.bf16.msra.mxu0 %v1619
      %2494 = vmatpush.bf16.msra.mxu0 %v1617
      %2495 = vmatmul.bf16.gmra.mxu0 %v2035
      %v2496 = vpop.f32.mrf.mxu0
      %v2497 = vadd.f32 %v2478, %v2496
      %v2498 = vpop.f32.mrf.mxu0
      %v2499 = vadd.f32 %v2480, %v2498
      %2500 = vmatmul.bf16.gmra.mxu0 %v2064
      %v2501 = vpop.f32.mrf.mxu0
      %v2502 = vadd.f32 %v2483, %v2501
      %v2503 = vpop.f32.mrf.mxu0
      %v2504 = vadd.f32 %v2485, %v2503
      %2505 = vdwg.mxu0
      %2506 = vmatpush.bf16.msra.mxu0 %v1647
      %2507 = vmatpush.bf16.msra.mxu0 %v1645
      %2508 = vmatpush.bf16.msra.mxu0 %v1643
      %2509 = vmatpush.bf16.msra.mxu0 %v1641
      %2510 = vmatpush.bf16.msra.mxu0 %v1639
      %2511 = vmatpush.bf16.msra.mxu0 %v1637
      %2512 = vmatpush.bf16.msra.mxu0 %v1635
      %2513 = vmatpush.bf16.msra.mxu0 %v1633
      %2514 = vmatmul.bf16.gmra.mxu0 %v2036
      %v2515 = vpop.f32.mrf.mxu0
      %v2516 = vadd.f32 %v2497, %v2515
      %v2517 = vpop.f32.mrf.mxu0
      %v2518 = vadd.f32 %v2499, %v2517
      %2519 = vmatmul.bf16.gmra.mxu0 %v2065
      %v2520 = vpop.f32.mrf.mxu0
      %v2521 = vadd.f32 %v2502, %v2520
      %v2522 = vpop.f32.mrf.mxu0
      %v2523 = vadd.f32 %v2504, %v2522
      %2524 = vdwg.mxu0
      %2525 = vmatpush.bf16.msra.mxu0 %v1663
      %2526 = vmatpush.bf16.msra.mxu0 %v1661
      %2527 = vmatpush.bf16.msra.mxu0 %v1659
      %2528 = vmatpush.bf16.msra.mxu0 %v1657
      %2529 = vmatpush.bf16.msra.mxu0 %v1655
      %2530 = vmatpush.bf16.msra.mxu0 %v1653
      %2531 = vmatpush.bf16.msra.mxu0 %v1651
      %2532 = vmatpush.bf16.msra.mxu0 %v1649
      %2533 = vmatmul.bf16.gmra.mxu0 %v2037
      %v2534 = vpop.f32.mrf.mxu0
      %v2535 = vadd.f32 %v2516, %v2534
      %v2536 = vpop.f32.mrf.mxu0
      %v2537 = vadd.f32 %v2518, %v2536
      %2538 = vmatmul.bf16.gmra.mxu0 %v2066
      %v2539 = vpop.f32.mrf.mxu0
      %v2540 = vadd.f32 %v2521, %v2539
      %v2541 = vpop.f32.mrf.mxu0
      %v2542 = vadd.f32 %v2523, %v2541
      %2543 = vdwg.mxu0
      %2544 = vmatpush.bf16.msra.mxu0 %v1679
      %2545 = vmatpush.bf16.msra.mxu0 %v1677
      %2546 = vmatpush.bf16.msra.mxu0 %v1675
      %2547 = vmatpush.bf16.msra.mxu0 %v1673
      %2548 = vmatpush.bf16.msra.mxu0 %v1671
      %2549 = vmatpush.bf16.msra.mxu0 %v1669
      %2550 = vmatpush.bf16.msra.mxu0 %v1667
      %2551 = vmatpush.bf16.msra.mxu0 %v1665
      %2552 = vmatmul.bf16.gmra.mxu0 %v2038
      %v2553 = vpop.f32.mrf.mxu0
      %v2554 = vadd.f32 %v2535, %v2553
      %v2555 = vpop.f32.mrf.mxu0
      %v2556 = vadd.f32 %v2537, %v2555
      %2557 = vmatmul.bf16.gmra.mxu0 %v2067
      %v2558 = vpop.f32.mrf.mxu0
      %v2559 = vadd.f32 %v2540, %v2558
      %v2560 = vpop.f32.mrf.mxu0
      %v2561 = vadd.f32 %v2542, %v2560
      %2562 = vdwg.mxu0
      %2563 = vmatpush.bf16.msra.mxu0 %v1695
      %2564 = vmatpush.bf16.msra.mxu0 %v1693
      %2565 = vmatpush.bf16.msra.mxu0 %v1691
      %2566 = vmatpush.bf16.msra.mxu0 %v1689
      %2567 = vmatpush.bf16.msra.mxu0 %v1687
      %2568 = vmatpush.bf16.msra.mxu0 %v1685
      %2569 = vmatpush.bf16.msra.mxu0 %v1683
      %2570 = vmatpush.bf16.msra.mxu0 %v1681
      %2571 = vmatmul.bf16.gmra.mxu0 %v2039
      %v2572 = vpop.f32.mrf.mxu0
      %v2573 = vadd.f32 %v2554, %v2572
      %v2574 = vpop.f32.mrf.mxu0
      %v2575 = vadd.f32 %v2556, %v2574
      %2576 = vmatmul.bf16.gmra.mxu0 %v2068
      %v2577 = vpop.f32.mrf.mxu0
      %v2578 = vadd.f32 %v2559, %v2577
      %v2579 = vpop.f32.mrf.mxu0
      %v2580 = vadd.f32 %v2561, %v2579
      %2581 = vdwg.mxu0
      %2582 = vmatpush.bf16.msra.mxu0 %v1711
      %2583 = vmatpush.bf16.msra.mxu0 %v1709
      %2584 = vmatpush.bf16.msra.mxu0 %v1707
      %2585 = vmatpush.bf16.msra.mxu0 %v1705
      %2586 = vmatpush.bf16.msra.mxu0 %v1703
      %2587 = vmatpush.bf16.msra.mxu0 %v1701
      %2588 = vmatpush.bf16.msra.mxu0 %v1699
      %2589 = vmatpush.bf16.msra.mxu0 %v1697
      %2590 = vmatmul.bf16.gmra.mxu0 %v2040
      %v2591 = vpop.f32.mrf.mxu0
      %v2592 = vadd.f32 %v2573, %v2591
      %v2593 = vpop.f32.mrf.mxu0
      %v2594 = vadd.f32 %v2575, %v2593
      %2595 = vmatmul.bf16.gmra.mxu0 %v2069
      %v2596 = vpop.f32.mrf.mxu0
      %v2597 = vadd.f32 %v2578, %v2596
      %v2598 = vpop.f32.mrf.mxu0
      %v2599 = vadd.f32 %v2580, %v2598
      %2600 = vdwg.mxu0
      %2601 = vmatpush.bf16.msra.mxu0 %v1727
      %2602 = vmatpush.bf16.msra.mxu0 %v1725
      %2603 = vmatpush.bf16.msra.mxu0 %v1723
      %2604 = vmatpush.bf16.msra.mxu0 %v1721
      %2605 = vmatpush.bf16.msra.mxu0 %v1719
      %2606 = vmatpush.bf16.msra.mxu0 %v1717
      %2607 = vmatpush.bf16.msra.mxu0 %v1715
      %2608 = vmatpush.bf16.msra.mxu0 %v1713
      %2609 = vmatmul.bf16.gmra.mxu0 %v2041
      %v2610 = vpop.f32.mrf.mxu0
      %v2611 = vadd.f32 %v2592, %v2610
      %v2612 = vpop.f32.mrf.mxu0
      %v2613 = vadd.f32 %v2594, %v2612
      %2614 = vmatmul.bf16.gmra.mxu0 %v2070
      %v2615 = vpop.f32.mrf.mxu0
      %v2616 = vadd.f32 %v2597, %v2615
      %v2617 = vpop.f32.mrf.mxu0
      %v2618 = vadd.f32 %v2599, %v2617
      %2619 = vdwg.mxu0
      %2620 = vmatpush.bf16.msra.mxu0 %v1743
      %2621 = vmatpush.bf16.msra.mxu0 %v1741
      %2622 = vmatpush.bf16.msra.mxu0 %v1739
      %2623 = vmatpush.bf16.msra.mxu0 %v1737
      %2624 = vmatpush.bf16.msra.mxu0 %v1735
      %2625 = vmatpush.bf16.msra.mxu0 %v1733
      %2626 = vmatpush.bf16.msra.mxu0 %v1731
      %2627 = vmatpush.bf16.msra.mxu0 %v1729
      %2628 = vmatmul.bf16.gmra.mxu0 %v2042
      %v2629 = vpop.f32.mrf.mxu0
      %v2630 = vadd.f32 %v2611, %v2629
      %v2631 = vpop.f32.mrf.mxu0
      %v2632 = vadd.f32 %v2613, %v2631
      %2633 = vmatmul.bf16.gmra.mxu0 %v2071
      %v2634 = vpop.f32.mrf.mxu0
      %v2635 = vadd.f32 %v2616, %v2634
      %v2636 = vpop.f32.mrf.mxu0
      %v2637 = vadd.f32 %v2618, %v2636
      %2638 = vdwg.mxu0
      %2639 = vmatpush.bf16.msra.mxu0 %v1759
      %2640 = vmatpush.bf16.msra.mxu0 %v1757
      %2641 = vmatpush.bf16.msra.mxu0 %v1755
      %2642 = vmatpush.bf16.msra.mxu0 %v1753
      %2643 = vmatpush.bf16.msra.mxu0 %v1751
      %2644 = vmatpush.bf16.msra.mxu0 %v1749
      %2645 = vmatpush.bf16.msra.mxu0 %v1747
      %2646 = vmatpush.bf16.msra.mxu0 %v1745
      %2647 = vmatmul.bf16.gmra.mxu0 %v2043
      %v2648 = vpop.f32.mrf.mxu0
      %v2649 = vadd.f32 %v2630, %v2648
      %v2650 = vpop.f32.mrf.mxu0
      %v2651 = vadd.f32 %v2632, %v2650
      %2652 = vmatmul.bf16.gmra.mxu0 %v2072
      %v2653 = vpop.f32.mrf.mxu0
      %v2654 = vadd.f32 %v2635, %v2653
      %v2655 = vpop.f32.mrf.mxu0
      %v2656 = vadd.f32 %v2637, %v2655
      %2657 = vdwg.mxu0
      %2658 = vmatpush.bf16.msra.mxu0 %v1775
      %2659 = vmatpush.bf16.msra.mxu0 %v1773
      %2660 = vmatpush.bf16.msra.mxu0 %v1771
      %2661 = vmatpush.bf16.msra.mxu0 %v1769
      %2662 = vmatpush.bf16.msra.mxu0 %v1767
      %2663 = vmatpush.bf16.msra.mxu0 %v1765
      %2664 = vmatpush.bf16.msra.mxu0 %v1763
      %2665 = vmatpush.bf16.msra.mxu0 %v1761
      %2666 = vmatmul.bf16.gmra.mxu0 %v2044
      %v2667 = vpop.f32.mrf.mxu0
      %v2668 = vadd.f32 %v2649, %v2667
      %v2669 = vpop.f32.mrf.mxu0
      %v2670 = vadd.f32 %v2651, %v2669
      %2671 = vmatmul.bf16.gmra.mxu0 %v2073
      %v2672 = vpop.f32.mrf.mxu0
      %v2673 = vadd.f32 %v2654, %v2672
      %v2674 = vpop.f32.mrf.mxu0
      %v2675 = vadd.f32 %v2656, %v2674
      %2676 = vdwg.mxu0
      %2677 = vmatpush.bf16.msra.mxu0 0
      %2678 = vmatpush.bf16.msra.mxu0 0
      %2679 = vmatpush.bf16.msra.mxu0 0
      %2680 = vmatpush.bf16.msra.mxu0 0
      %2681 = vmatpush.bf16.msra.mxu0 0
      %2682 = vmatpush.bf16.msra.mxu0 0
      %2683 = vmatpush.bf16.msra.mxu0 %v2140
      %2684 = vmatpush.bf16.msra.mxu0 %v1777
      %2685 = vmatmul.bf16.gmra.mxu0 %v2133
      %v2686 = vpop.f32.mrf.mxu0
      %v2687 = vadd.f32 %v2668, %v2686
      %v2688 = vpop.f32.mrf.mxu0
      %v2689 = vadd.f32 %v2670, %v2688
      %2690 = vmatmul.bf16.gmra.mxu0 %v2136
      %v2691 = vpop.f32.mrf.mxu0
      %v2692 = vadd.f32 %v2673, %v2691
      %v2693 = vpop.f32.mrf.mxu0
      %v2694 = vadd.f32 %v2675, %v2693
      %2695 = vdwg.mxu0
      %2696 = vmatpush.bf16.msra.mxu0 %v1344
      %2697 = vmatpush.bf16.msra.mxu0 %v1342
      %2698 = vmatpush.bf16.msra.mxu0 %v1340
      %2699 = vmatpush.bf16.msra.mxu0 %v1338
      %2700 = vmatpush.bf16.msra.mxu0 %v1336
      %2701 = vmatpush.bf16.msra.mxu0 %v1334
      %2702 = vmatpush.bf16.msra.mxu0 %v1332
      %2703 = vmatpush.bf16.msra.mxu0 %v1330
      %2704 = vmatmul.bf16.gmra.mxu0 %v2017
      %v2705 = vpop.f32.mrf.mxu0
      %v2706 = vadd.f32 0.0, %v2705
      %v2707 = vpop.f32.mrf.mxu0
      %v2708 = vadd.f32 0.0, %v2707
      %2709 = vmatmul.bf16.gmra.mxu0 %v2046
      %v2710 = vpop.f32.mrf.mxu0
      %v2711 = vadd.f32 0.0, %v2710
      %v2712 = vpop.f32.mrf.mxu0
      %v2713 = vadd.f32 0.0, %v2712
      %2714 = vdwg.mxu0
      %2715 = vmatpush.bf16.msra.mxu0 %v1360
      %2716 = vmatpush.bf16.msra.mxu0 %v1358
      %2717 = vmatpush.bf16.msra.mxu0 %v1356
      %2718 = vmatpush.bf16.msra.mxu0 %v1354
      %2719 = vmatpush.bf16.msra.mxu0 %v1352
      %2720 = vmatpush.bf16.msra.mxu0 %v1350
      %2721 = vmatpush.bf16.msra.mxu0 %v1348
      %2722 = vmatpush.bf16.msra.mxu0 %v1346
      %2723 = vmatmul.bf16.gmra.mxu0 %v2018
      %v2724 = vpop.f32.mrf.mxu0
      %v2725 = vadd.f32 %v2706, %v2724
      %v2726 = vpop.f32.mrf.mxu0
      %v2727 = vadd.f32 %v2708, %v2726
      %2728 = vmatmul.bf16.gmra.mxu0 %v2047
      %v2729 = vpop.f32.mrf.mxu0
      %v2730 = vadd.f32 %v2711, %v2729
      %v2731 = vpop.f32.mrf.mxu0
      %v2732 = vadd.f32 %v2713, %v2731
      %2733 = vdwg.mxu0
      %2734 = vmatpush.bf16.msra.mxu0 %v1376
      %2735 = vmatpush.bf16.msra.mxu0 %v1374
      %2736 = vmatpush.bf16.msra.mxu0 %v1372
      %2737 = vmatpush.bf16.msra.mxu0 %v1370
      %2738 = vmatpush.bf16.msra.mxu0 %v1368
      %2739 = vmatpush.bf16.msra.mxu0 %v1366
      %2740 = vmatpush.bf16.msra.mxu0 %v1364
      %2741 = vmatpush.bf16.msra.mxu0 %v1362
      %2742 = vmatmul.bf16.gmra.mxu0 %v2019
      %v2743 = vpop.f32.mrf.mxu0
      %v2744 = vadd.f32 %v2725, %v2743
      %v2745 = vpop.f32.mrf.mxu0
      %v2746 = vadd.f32 %v2727, %v2745
      %2747 = vmatmul.bf16.gmra.mxu0 %v2048
      %v2748 = vpop.f32.mrf.mxu0
      %v2749 = vadd.f32 %v2730, %v2748
      %v2750 = vpop.f32.mrf.mxu0
      %v2751 = vadd.f32 %v2732, %v2750
      %2752 = vdwg.mxu0
      %2753 = vmatpush.bf16.msra.mxu0 %v1392
      %2754 = vmatpush.bf16.msra.mxu0 %v1390
      %2755 = vmatpush.bf16.msra.mxu0 %v1388
      %2756 = vmatpush.bf16.msra.mxu0 %v1386
      %2757 = vmatpush.bf16.msra.mxu0 %v1384
      %2758 = vmatpush.bf16.msra.mxu0 %v1382
      %2759 = vmatpush.bf16.msra.mxu0 %v1380
      %2760 = vmatpush.bf16.msra.mxu0 %v1378
      %2761 = vmatmul.bf16.gmra.mxu0 %v2020
      %v2762 = vpop.f32.mrf.mxu0
      %v2763 = vadd.f32 %v2744, %v2762
      %v2764 = vpop.f32.mrf.mxu0
      %v2765 = vadd.f32 %v2746, %v2764
      %2766 = vmatmul.bf16.gmra.mxu0 %v2049
      %v2767 = vpop.f32.mrf.mxu0
      %v2768 = vadd.f32 %v2749, %v2767
      %v2769 = vpop.f32.mrf.mxu0
      %v2770 = vadd.f32 %v2751, %v2769
      %2771 = vdwg.mxu0
      %2772 = vmatpush.bf16.msra.mxu0 %v1408
      %2773 = vmatpush.bf16.msra.mxu0 %v1406
      %2774 = vmatpush.bf16.msra.mxu0 %v1404
      %2775 = vmatpush.bf16.msra.mxu0 %v1402
      %2776 = vmatpush.bf16.msra.mxu0 %v1400
      %2777 = vmatpush.bf16.msra.mxu0 %v1398
      %2778 = vmatpush.bf16.msra.mxu0 %v1396
      %2779 = vmatpush.bf16.msra.mxu0 %v1394
      %2780 = vmatmul.bf16.gmra.mxu0 %v2021
      %v2781 = vpop.f32.mrf.mxu0
      %v2782 = vadd.f32 %v2763, %v2781
      %v2783 = vpop.f32.mrf.mxu0
      %v2784 = vadd.f32 %v2765, %v2783
      %2785 = vmatmul.bf16.gmra.mxu0 %v2050
      %v2786 = vpop.f32.mrf.mxu0
      %v2787 = vadd.f32 %v2768, %v2786
      %v2788 = vpop.f32.mrf.mxu0
      %v2789 = vadd.f32 %v2770, %v2788
      %2790 = vdwg.mxu0
      %2791 = vmatpush.bf16.msra.mxu0 %v1424
      %2792 = vmatpush.bf16.msra.mxu0 %v1422
      %2793 = vmatpush.bf16.msra.mxu0 %v1420
      %2794 = vmatpush.bf16.msra.mxu0 %v1418
      %2795 = vmatpush.bf16.msra.mxu0 %v1416
      %2796 = vmatpush.bf16.msra.mxu0 %v1414
      %2797 = vmatpush.bf16.msra.mxu0 %v1412
      %2798 = vmatpush.bf16.msra.mxu0 %v1410
      %2799 = vmatmul.bf16.gmra.mxu0 %v2022
      %v2800 = vpop.f32.mrf.mxu0
      %v2801 = vadd.f32 %v2782, %v2800
      %v2802 = vpop.f32.mrf.mxu0
      %v2803 = vadd.f32 %v2784, %v2802
      %2804 = vmatmul.bf16.gmra.mxu0 %v2051
      %v2805 = vpop.f32.mrf.mxu0
      %v2806 = vadd.f32 %v2787, %v2805
      %v2807 = vpop.f32.mrf.mxu0
      %v2808 = vadd.f32 %v2789, %v2807
      %2809 = vdwg.mxu0
      %2810 = vmatpush.bf16.msra.mxu0 %v1440
      %2811 = vmatpush.bf16.msra.mxu0 %v1438
      %2812 = vmatpush.bf16.msra.mxu0 %v1436
      %2813 = vmatpush.bf16.msra.mxu0 %v1434
      %2814 = vmatpush.bf16.msra.mxu0 %v1432
      %2815 = vmatpush.bf16.msra.mxu0 %v1430
      %2816 = vmatpush.bf16.msra.mxu0 %v1428
      %2817 = vmatpush.bf16.msra.mxu0 %v1426
      %2818 = vmatmul.bf16.gmra.mxu0 %v2023
      %v2819 = vpop.f32.mrf.mxu0
      %v2820 = vadd.f32 %v2801, %v2819
      %v2821 = vpop.f32.mrf.mxu0
      %v2822 = vadd.f32 %v2803, %v2821
      %2823 = vmatmul.bf16.gmra.mxu0 %v2052
      %v2824 = vpop.f32.mrf.mxu0
      %v2825 = vadd.f32 %v2806, %v2824
      %v2826 = vpop.f32.mrf.mxu0
      %v2827 = vadd.f32 %v2808, %v2826
      %2828 = vdwg.mxu0
      %2829 = vmatpush.bf16.msra.mxu0 %v1456
      %2830 = vmatpush.bf16.msra.mxu0 %v1454
      %2831 = vmatpush.bf16.msra.mxu0 %v1452
      %2832 = vmatpush.bf16.msra.mxu0 %v1450
      %2833 = vmatpush.bf16.msra.mxu0 %v1448
      %2834 = vmatpush.bf16.msra.mxu0 %v1446
      %2835 = vmatpush.bf16.msra.mxu0 %v1444
      %2836 = vmatpush.bf16.msra.mxu0 %v1442
      %2837 = vmatmul.bf16.gmra.mxu0 %v2024
      %v2838 = vpop.f32.mrf.mxu0
      %v2839 = vadd.f32 %v2820, %v2838
      %v2840 = vpop.f32.mrf.mxu0
      %v2841 = vadd.f32 %v2822, %v2840
      %2842 = vmatmul.bf16.gmra.mxu0 %v2053
      %v2843 = vpop.f32.mrf.mxu0
      %v2844 = vadd.f32 %v2825, %v2843
      %v2845 = vpop.f32.mrf.mxu0
      %v2846 = vadd.f32 %v2827, %v2845
      %2847 = vdwg.mxu0
      %2848 = vmatpush.bf16.msra.mxu0 %v1472
      %2849 = vmatpush.bf16.msra.mxu0 %v1470
      %2850 = vmatpush.bf16.msra.mxu0 %v1468
      %2851 = vmatpush.bf16.msra.mxu0 %v1466
      %2852 = vmatpush.bf16.msra.mxu0 %v1464
      %2853 = vmatpush.bf16.msra.mxu0 %v1462
      %2854 = vmatpush.bf16.msra.mxu0 %v1460
      %2855 = vmatpush.bf16.msra.mxu0 %v1458
      %2856 = vmatmul.bf16.gmra.mxu0 %v2025
      %v2857 = vpop.f32.mrf.mxu0
      %v2858 = vadd.f32 %v2839, %v2857
      %v2859 = vpop.f32.mrf.mxu0
      %v2860 = vadd.f32 %v2841, %v2859
      %2861 = vmatmul.bf16.gmra.mxu0 %v2054
      %v2862 = vpop.f32.mrf.mxu0
      %v2863 = vadd.f32 %v2844, %v2862
      %v2864 = vpop.f32.mrf.mxu0
      %v2865 = vadd.f32 %v2846, %v2864
      %2866 = vdwg.mxu0
      %2867 = vmatpush.bf16.msra.mxu0 %v1488
      %2868 = vmatpush.bf16.msra.mxu0 %v1486
      %2869 = vmatpush.bf16.msra.mxu0 %v1484
      %2870 = vmatpush.bf16.msra.mxu0 %v1482
      %2871 = vmatpush.bf16.msra.mxu0 %v1480
      %2872 = vmatpush.bf16.msra.mxu0 %v1478
      %2873 = vmatpush.bf16.msra.mxu0 %v1476
      %2874 = vmatpush.bf16.msra.mxu0 %v1474
      %2875 = vmatmul.bf16.gmra.mxu0 %v2026
      %v2876 = vpop.f32.mrf.mxu0
      %v2877 = vadd.f32 %v2858, %v2876
      %v2878 = vpop.f32.mrf.mxu0
      %v2879 = vadd.f32 %v2860, %v2878
      %2880 = vmatmul.bf16.gmra.mxu0 %v2055
      %v2881 = vpop.f32.mrf.mxu0
      %v2882 = vadd.f32 %v2863, %v2881
      %v2883 = vpop.f32.mrf.mxu0
      %v2884 = vadd.f32 %v2865, %v2883
      %2885 = vdwg.mxu0
      %2886 = vmatpush.bf16.msra.mxu0 %v1504
      %2887 = vmatpush.bf16.msra.mxu0 %v1502
      %2888 = vmatpush.bf16.msra.mxu0 %v1500
      %2889 = vmatpush.bf16.msra.mxu0 %v1498
      %2890 = vmatpush.bf16.msra.mxu0 %v1496
      %2891 = vmatpush.bf16.msra.mxu0 %v1494
      %2892 = vmatpush.bf16.msra.mxu0 %v1492
      %2893 = vmatpush.bf16.msra.mxu0 %v1490
      %2894 = vmatmul.bf16.gmra.mxu0 %v2027
      %v2895 = vpop.f32.mrf.mxu0
      %v2896 = vadd.f32 %v2877, %v2895
      %v2897 = vpop.f32.mrf.mxu0
      %v2898 = vadd.f32 %v2879, %v2897
      %2899 = vmatmul.bf16.gmra.mxu0 %v2056
      %v2900 = vpop.f32.mrf.mxu0
      %v2901 = vadd.f32 %v2882, %v2900
      %v2902 = vpop.f32.mrf.mxu0
      %v2903 = vadd.f32 %v2884, %v2902
      %2904 = vdwg.mxu0
      %2905 = vmatpush.bf16.msra.mxu0 %v1520
      %2906 = vmatpush.bf16.msra.mxu0 %v1518
      %2907 = vmatpush.bf16.msra.mxu0 %v1516
      %2908 = vmatpush.bf16.msra.mxu0 %v1514
      %2909 = vmatpush.bf16.msra.mxu0 %v1512
      %2910 = vmatpush.bf16.msra.mxu0 %v1510
      %2911 = vmatpush.bf16.msra.mxu0 %v1508
      %2912 = vmatpush.bf16.msra.mxu0 %v1506
      %2913 = vmatmul.bf16.gmra.mxu0 %v2028
      %v2914 = vpop.f32.mrf.mxu0
      %v2915 = vadd.f32 %v2896, %v2914
      %v2916 = vpop.f32.mrf.mxu0
      %v2917 = vadd.f32 %v2898, %v2916
      %2918 = vmatmul.bf16.gmra.mxu0 %v2057
      %v2919 = vpop.f32.mrf.mxu0
      %v2920 = vadd.f32 %v2901, %v2919
      %v2921 = vpop.f32.mrf.mxu0
      %v2922 = vadd.f32 %v2903, %v2921
      %2923 = vdwg.mxu0
      %2924 = vmatpush.bf16.msra.mxu0 %v1536
      %2925 = vmatpush.bf16.msra.mxu0 %v1534
      %2926 = vmatpush.bf16.msra.mxu0 %v1532
      %2927 = vmatpush.bf16.msra.mxu0 %v1530
      %2928 = vmatpush.bf16.msra.mxu0 %v1528
      %2929 = vmatpush.bf16.msra.mxu0 %v1526
      %2930 = vmatpush.bf16.msra.mxu0 %v1524
      %2931 = vmatpush.bf16.msra.mxu0 %v1522
      %2932 = vmatmul.bf16.gmra.mxu0 %v2029
      %v2933 = vpop.f32.mrf.mxu0
      %v2934 = vadd.f32 %v2915, %v2933
      %v2935 = vpop.f32.mrf.mxu0
      %v2936 = vadd.f32 %v2917, %v2935
      %2937 = vmatmul.bf16.gmra.mxu0 %v2058
      %v2938 = vpop.f32.mrf.mxu0
      %v2939 = vadd.f32 %v2920, %v2938
      %v2940 = vpop.f32.mrf.mxu0
      %v2941 = vadd.f32 %v2922, %v2940
      %2942 = vdwg.mxu0
      %2943 = vmatpush.bf16.msra.mxu0 %v1552
      %2944 = vmatpush.bf16.msra.mxu0 %v1550
      %2945 = vmatpush.bf16.msra.mxu0 %v1548
      %2946 = vmatpush.bf16.msra.mxu0 %v1546
      %2947 = vmatpush.bf16.msra.mxu0 %v1544
      %2948 = vmatpush.bf16.msra.mxu0 %v1542
      %2949 = vmatpush.bf16.msra.mxu0 %v1540
      %2950 = vmatpush.bf16.msra.mxu0 %v1538
      %2951 = vmatmul.bf16.gmra.mxu0 %v2030
      %v2952 = vpop.f32.mrf.mxu0
      %v2953 = vadd.f32 %v2934, %v2952
      %v2954 = vpop.f32.mrf.mxu0
      %v2955 = vadd.f32 %v2936, %v2954
      %2956 = vmatmul.bf16.gmra.mxu0 %v2059
      %v2957 = vpop.f32.mrf.mxu0
      %v2958 = vadd.f32 %v2939, %v2957
      %v2959 = vpop.f32.mrf.mxu0
      %v2960 = vadd.f32 %v2941, %v2959
      %2961 = vdwg.mxu0
      %2962 = vmatpush.bf16.msra.mxu0 %v1568
      %2963 = vmatpush.bf16.msra.mxu0 %v1566
      %2964 = vmatpush.bf16.msra.mxu0 %v1564
      %2965 = vmatpush.bf16.msra.mxu0 %v1562
      %2966 = vmatpush.bf16.msra.mxu0 %v1560
      %2967 = vmatpush.bf16.msra.mxu0 %v1558
      %2968 = vmatpush.bf16.msra.mxu0 %v1556
      %2969 = vmatpush.bf16.msra.mxu0 %v1554
      %2970 = vmatmul.bf16.gmra.mxu0 %v2031
      %v2971 = vpop.f32.mrf.mxu0
      %v2972 = vadd.f32 %v2953, %v2971
      %v2973 = vpop.f32.mrf.mxu0
      %v2974 = vadd.f32 %v2955, %v2973
      %2975 = vmatmul.bf16.gmra.mxu0 %v2060
      %v2976 = vpop.f32.mrf.mxu0
      %v2977 = vadd.f32 %v2958, %v2976
      %v2978 = vpop.f32.mrf.mxu0
      %v2979 = vadd.f32 %v2960, %v2978
      %2980 = vdwg.mxu0
      %2981 = vmatpush.bf16.msra.mxu0 %v1584
      %2982 = vmatpush.bf16.msra.mxu0 %v1582
      %2983 = vmatpush.bf16.msra.mxu0 %v1580
      %2984 = vmatpush.bf16.msra.mxu0 %v1578
      %2985 = vmatpush.bf16.msra.mxu0 %v1576
      %2986 = vmatpush.bf16.msra.mxu0 %v1574
      %2987 = vmatpush.bf16.msra.mxu0 %v1572
      %2988 = vmatpush.bf16.msra.mxu0 %v1570
      %2989 = vmatmul.bf16.gmra.mxu0 %v2032
      %v2990 = vpop.f32.mrf.mxu0
      %v2991 = vadd.f32 %v2972, %v2990
      %v2992 = vpop.f32.mrf.mxu0
      %v2993 = vadd.f32 %v2974, %v2992
      %2994 = vmatmul.bf16.gmra.mxu0 %v2061
      %v2995 = vpop.f32.mrf.mxu0
      %v2996 = vadd.f32 %v2977, %v2995
      %v2997 = vpop.f32.mrf.mxu0
      %v2998 = vadd.f32 %v2979, %v2997
      %2999 = vdwg.mxu0
      %3000 = vmatpush.bf16.msra.mxu0 %v1600
      %3001 = vmatpush.bf16.msra.mxu0 %v1598
      %3002 = vmatpush.bf16.msra.mxu0 %v1596
      %3003 = vmatpush.bf16.msra.mxu0 %v1594
      %3004 = vmatpush.bf16.msra.mxu0 %v1592
      %3005 = vmatpush.bf16.msra.mxu0 %v1590
      %3006 = vmatpush.bf16.msra.mxu0 %v1588
      %3007 = vmatpush.bf16.msra.mxu0 %v1586
      %3008 = vmatmul.bf16.gmra.mxu0 %v2033
      %v3009 = vpop.f32.mrf.mxu0
      %v3010 = vadd.f32 %v2991, %v3009
      %v3011 = vpop.f32.mrf.mxu0
      %v3012 = vadd.f32 %v2993, %v3011
      %3013 = vmatmul.bf16.gmra.mxu0 %v2062
      %v3014 = vpop.f32.mrf.mxu0
      %v3015 = vadd.f32 %v2996, %v3014
      %v3016 = vpop.f32.mrf.mxu0
      %v3017 = vadd.f32 %v2998, %v3016
      %3018 = vdwg.mxu0
      %3019 = vmatpush.bf16.msra.mxu0 %v1616
      %3020 = vmatpush.bf16.msra.mxu0 %v1614
      %3021 = vmatpush.bf16.msra.mxu0 %v1612
      %3022 = vmatpush.bf16.msra.mxu0 %v1610
      %3023 = vmatpush.bf16.msra.mxu0 %v1608
      %3024 = vmatpush.bf16.msra.mxu0 %v1606
      %3025 = vmatpush.bf16.msra.mxu0 %v1604
      %3026 = vmatpush.bf16.msra.mxu0 %v1602
      %3027 = vmatmul.bf16.gmra.mxu0 %v2034
      %v3028 = vpop.f32.mrf.mxu0
      %v3029 = vadd.f32 %v3010, %v3028
      %v3030 = vpop.f32.mrf.mxu0
      %v3031 = vadd.f32 %v3012, %v3030
      %3032 = vmatmul.bf16.gmra.mxu0 %v2063
      %v3033 = vpop.f32.mrf.mxu0
      %v3034 = vadd.f32 %v3015, %v3033
      %v3035 = vpop.f32.mrf.mxu0
      %v3036 = vadd.f32 %v3017, %v3035
      %3037 = vdwg.mxu0
      %3038 = vmatpush.bf16.msra.mxu0 %v1632
      %3039 = vmatpush.bf16.msra.mxu0 %v1630
      %3040 = vmatpush.bf16.msra.mxu0 %v1628
      %3041 = vmatpush.bf16.msra.mxu0 %v1626
      %3042 = vmatpush.bf16.msra.mxu0 %v1624
      %3043 = vmatpush.bf16.msra.mxu0 %v1622
      %3044 = vmatpush.bf16.msra.mxu0 %v1620
      %3045 = vmatpush.bf16.msra.mxu0 %v1618
      %3046 = vmatmul.bf16.gmra.mxu0 %v2035
      %v3047 = vpop.f32.mrf.mxu0
      %v3048 = vadd.f32 %v3029, %v3047
      %v3049 = vpop.f32.mrf.mxu0
      %v3050 = vadd.f32 %v3031, %v3049
      %3051 = vmatmul.bf16.gmra.mxu0 %v2064
      %v3052 = vpop.f32.mrf.mxu0
      %v3053 = vadd.f32 %v3034, %v3052
      %v3054 = vpop.f32.mrf.mxu0
      %v3055 = vadd.f32 %v3036, %v3054
      %3056 = vdwg.mxu0
      %3057 = vmatpush.bf16.msra.mxu0 %v1648
      %3058 = vmatpush.bf16.msra.mxu0 %v1646
      %3059 = vmatpush.bf16.msra.mxu0 %v1644
      %3060 = vmatpush.bf16.msra.mxu0 %v1642
      %3061 = vmatpush.bf16.msra.mxu0 %v1640
      %3062 = vmatpush.bf16.msra.mxu0 %v1638
      %3063 = vmatpush.bf16.msra.mxu0 %v1636
      %3064 = vmatpush.bf16.msra.mxu0 %v1634
      %3065 = vmatmul.bf16.gmra.mxu0 %v2036
      %v3066 = vpop.f32.mrf.mxu0
      %v3067 = vadd.f32 %v3048, %v3066
      %v3068 = vpop.f32.mrf.mxu0
      %v3069 = vadd.f32 %v3050, %v3068
      %3070 = vmatmul.bf16.gmra.mxu0 %v2065
      %v3071 = vpop.f32.mrf.mxu0
      %v3072 = vadd.f32 %v3053, %v3071
      %v3073 = vpop.f32.mrf.mxu0
      %v3074 = vadd.f32 %v3055, %v3073
      %3075 = vdwg.mxu0
      %3076 = vmatpush.bf16.msra.mxu0 %v1664
      %3077 = vmatpush.bf16.msra.mxu0 %v1662
      %3078 = vmatpush.bf16.msra.mxu0 %v1660
      %3079 = vmatpush.bf16.msra.mxu0 %v1658
      %3080 = vmatpush.bf16.msra.mxu0 %v1656
      %3081 = vmatpush.bf16.msra.mxu0 %v1654
      %3082 = vmatpush.bf16.msra.mxu0 %v1652
      %3083 = vmatpush.bf16.msra.mxu0 %v1650
      %3084 = vmatmul.bf16.gmra.mxu0 %v2037
      %v3085 = vpop.f32.mrf.mxu0
      %v3086 = vadd.f32 %v3067, %v3085
      %v3087 = vpop.f32.mrf.mxu0
      %v3088 = vadd.f32 %v3069, %v3087
      %3089 = vmatmul.bf16.gmra.mxu0 %v2066
      %v3090 = vpop.f32.mrf.mxu0
      %v3091 = vadd.f32 %v3072, %v3090
      %v3092 = vpop.f32.mrf.mxu0
      %v3093 = vadd.f32 %v3074, %v3092
      %3094 = vdwg.mxu0
      %3095 = vmatpush.bf16.msra.mxu0 %v1680
      %3096 = vmatpush.bf16.msra.mxu0 %v1678
      %3097 = vmatpush.bf16.msra.mxu0 %v1676
      %3098 = vmatpush.bf16.msra.mxu0 %v1674
      %3099 = vmatpush.bf16.msra.mxu0 %v1672
      %3100 = vmatpush.bf16.msra.mxu0 %v1670
      %3101 = vmatpush.bf16.msra.mxu0 %v1668
      %3102 = vmatpush.bf16.msra.mxu0 %v1666
      %3103 = vmatmul.bf16.gmra.mxu0 %v2038
      %v3104 = vpop.f32.mrf.mxu0
      %v3105 = vadd.f32 %v3086, %v3104
      %v3106 = vpop.f32.mrf.mxu0
      %v3107 = vadd.f32 %v3088, %v3106
      %3108 = vmatmul.bf16.gmra.mxu0 %v2067
      %v3109 = vpop.f32.mrf.mxu0
      %v3110 = vadd.f32 %v3091, %v3109
      %v3111 = vpop.f32.mrf.mxu0
      %v3112 = vadd.f32 %v3093, %v3111
      %3113 = vdwg.mxu0
      %3114 = vmatpush.bf16.msra.mxu0 %v1696
      %3115 = vmatpush.bf16.msra.mxu0 %v1694
      %3116 = vmatpush.bf16.msra.mxu0 %v1692
      %3117 = vmatpush.bf16.msra.mxu0 %v1690
      %3118 = vmatpush.bf16.msra.mxu0 %v1688
      %3119 = vmatpush.bf16.msra.mxu0 %v1686
      %3120 = vmatpush.bf16.msra.mxu0 %v1684
      %3121 = vmatpush.bf16.msra.mxu0 %v1682
      %3122 = vmatmul.bf16.gmra.mxu0 %v2039
      %v3123 = vpop.f32.mrf.mxu0
      %v3124 = vadd.f32 %v3105, %v3123
      %v3125 = vpop.f32.mrf.mxu0
      %v3126 = vadd.f32 %v3107, %v3125
      %3127 = vmatmul.bf16.gmra.mxu0 %v2068
      %v3128 = vpop.f32.mrf.mxu0
      %v3129 = vadd.f32 %v3110, %v3128
      %v3130 = vpop.f32.mrf.mxu0
      %v3131 = vadd.f32 %v3112, %v3130
      %3132 = vdwg.mxu0
      %3133 = vmatpush.bf16.msra.mxu0 %v1712
      %3134 = vmatpush.bf16.msra.mxu0 %v1710
      %3135 = vmatpush.bf16.msra.mxu0 %v1708
      %3136 = vmatpush.bf16.msra.mxu0 %v1706
      %3137 = vmatpush.bf16.msra.mxu0 %v1704
      %3138 = vmatpush.bf16.msra.mxu0 %v1702
      %3139 = vmatpush.bf16.msra.mxu0 %v1700
      %3140 = vmatpush.bf16.msra.mxu0 %v1698
      %3141 = vmatmul.bf16.gmra.mxu0 %v2040
      %v3142 = vpop.f32.mrf.mxu0
      %v3143 = vadd.f32 %v3124, %v3142
      %v3144 = vpop.f32.mrf.mxu0
      %v3145 = vadd.f32 %v3126, %v3144
      %3146 = vmatmul.bf16.gmra.mxu0 %v2069
      %v3147 = vpop.f32.mrf.mxu0
      %v3148 = vadd.f32 %v3129, %v3147
      %v3149 = vpop.f32.mrf.mxu0
      %v3150 = vadd.f32 %v3131, %v3149
      %3151 = vdwg.mxu0
      %3152 = vmatpush.bf16.msra.mxu0 %v1728
      %3153 = vmatpush.bf16.msra.mxu0 %v1726
      %3154 = vmatpush.bf16.msra.mxu0 %v1724
      %3155 = vmatpush.bf16.msra.mxu0 %v1722
      %3156 = vmatpush.bf16.msra.mxu0 %v1720
      %3157 = vmatpush.bf16.msra.mxu0 %v1718
      %3158 = vmatpush.bf16.msra.mxu0 %v1716
      %3159 = vmatpush.bf16.msra.mxu0 %v1714
      %3160 = vmatmul.bf16.gmra.mxu0 %v2041
      %v3161 = vpop.f32.mrf.mxu0
      %v3162 = vadd.f32 %v3143, %v3161
      %v3163 = vpop.f32.mrf.mxu0
      %v3164 = vadd.f32 %v3145, %v3163
      %3165 = vmatmul.bf16.gmra.mxu0 %v2070
      %v3166 = vpop.f32.mrf.mxu0
      %v3167 = vadd.f32 %v3148, %v3166
      %v3168 = vpop.f32.mrf.mxu0
      %v3169 = vadd.f32 %v3150, %v3168
      %3170 = vdwg.mxu0
      %3171 = vmatpush.bf16.msra.mxu0 %v1744
      %3172 = vmatpush.bf16.msra.mxu0 %v1742
      %3173 = vmatpush.bf16.msra.mxu0 %v1740
      %3174 = vmatpush.bf16.msra.mxu0 %v1738
      %3175 = vmatpush.bf16.msra.mxu0 %v1736
      %3176 = vmatpush.bf16.msra.mxu0 %v1734
      %3177 = vmatpush.bf16.msra.mxu0 %v1732
      %3178 = vmatpush.bf16.msra.mxu0 %v1730
      %3179 = vmatmul.bf16.gmra.mxu0 %v2042
      %v3180 = vpop.f32.mrf.mxu0
      %v3181 = vadd.f32 %v3162, %v3180
      %v3182 = vpop.f32.mrf.mxu0
      %v3183 = vadd.f32 %v3164, %v3182
      %3184 = vmatmul.bf16.gmra.mxu0 %v2071
      %v3185 = vpop.f32.mrf.mxu0
      %v3186 = vadd.f32 %v3167, %v3185
      %v3187 = vpop.f32.mrf.mxu0
      %v3188 = vadd.f32 %v3169, %v3187
      %3189 = vdwg.mxu0
      %3190 = vmatpush.bf16.msra.mxu0 %v1760
      %3191 = vmatpush.bf16.msra.mxu0 %v1758
      %3192 = vmatpush.bf16.msra.mxu0 %v1756
      %3193 = vmatpush.bf16.msra.mxu0 %v1754
      %3194 = vmatpush.bf16.msra.mxu0 %v1752
      %3195 = vmatpush.bf16.msra.mxu0 %v1750
      %3196 = vmatpush.bf16.msra.mxu0 %v1748
      %3197 = vmatpush.bf16.msra.mxu0 %v1746
      %3198 = vmatmul.bf16.gmra.mxu0 %v2043
      %v3199 = vpop.f32.mrf.mxu0
      %v3200 = vadd.f32 %v3181, %v3199
      %v3201 = vpop.f32.mrf.mxu0
      %v3202 = vadd.f32 %v3183, %v3201
      %3203 = vmatmul.bf16.gmra.mxu0 %v2072
      %v3204 = vpop.f32.mrf.mxu0
      %v3205 = vadd.f32 %v3186, %v3204
      %v3206 = vpop.f32.mrf.mxu0
      %v3207 = vadd.f32 %v3188, %v3206
      %3208 = vdwg.mxu0
      %3209 = vmatpush.bf16.msra.mxu0 %v1776
      %3210 = vmatpush.bf16.msra.mxu0 %v1774
      %3211 = vmatpush.bf16.msra.mxu0 %v1772
      %3212 = vmatpush.bf16.msra.mxu0 %v1770
      %3213 = vmatpush.bf16.msra.mxu0 %v1768
      %3214 = vmatpush.bf16.msra.mxu0 %v1766
      %3215 = vmatpush.bf16.msra.mxu0 %v1764
      %3216 = vmatpush.bf16.msra.mxu0 %v1762
      %3217 = vmatmul.bf16.gmra.mxu0 %v2044
      %v3218 = vpop.f32.mrf.mxu0
      %v3219 = vadd.f32 %v3200, %v3218
      %v3220 = vpop.f32.mrf.mxu0
      %v3221 = vadd.f32 %v3202, %v3220
      %3222 = vmatmul.bf16.gmra.mxu0 %v2073
      %v3223 = vpop.f32.mrf.mxu0
      %v3224 = vadd.f32 %v3205, %v3223
      %v3225 = vpop.f32.mrf.mxu0
      %v3226 = vadd.f32 %v3207, %v3225
      %3227 = vdwg.mxu0
      %3228 = vmatpush.bf16.msra.mxu0 0
      %3229 = vmatpush.bf16.msra.mxu0 0
      %3230 = vmatpush.bf16.msra.mxu0 0
      %3231 = vmatpush.bf16.msra.mxu0 0
      %3232 = vmatpush.bf16.msra.mxu0 0
      %3233 = vmatpush.bf16.msra.mxu0 0
      %3234 = vmatpush.bf16.msra.mxu0 %v2143
      %3235 = vmatpush.bf16.msra.mxu0 %v1778
      %3236 = vmatmul.bf16.gmra.mxu0 %v2133
      %v3237 = vpop.f32.mrf.mxu0
      %v3238 = vadd.f32 %v3219, %v3237
      %v3239 = vpop.f32.mrf.mxu0
      %v3240 = vadd.f32 %v3221, %v3239
      %3241 = vmatmul.bf16.gmra.mxu0 %v2136
      %v3242 = vpop.f32.mrf.mxu0
      %v3243 = vadd.f32 %v3224, %v3242
      %v3244 = vpop.f32.mrf.mxu0
      %v3245 = vadd.f32 %v3226, %v3244
      %3246 = vdwg.mxu0
      %vm3247 = vcmp.gt.f32.partialorder %v2687, 0.0
      %vm3248 = vcmp.gt.f32.partialorder %v3238, 0.0
      %vm3249 = vcmp.gt.f32.partialorder %v2689, 0.0
      %vm3250 = vcmp.gt.f32.partialorder %v3240, 0.0
      %vm3251 = vcmp.gt.f32.partialorder %v2692, 0.0
      %vm3252 = vcmp.gt.f32.partialorder %v3243, 0.0
      %vm3253 = vcmp.gt.f32.partialorder %v2694, 0.0
      %vm3254 = vcmp.gt.f32.partialorder %v3245, 0.0
      %v3255 = vmul.f32 %v2687, 0.01
      %v3256 = vmul.f32 %v3238, 0.01
      %v3257 = vmul.f32 %v2689, 0.01
      %v3258 = vmul.f32 %v3240, 0.01
      %v3259 = vmul.f32 %v2692, 0.01
      %v3260 = vmul.f32 %v3243, 0.01
      %v3261 = vmul.f32 %v2694, 0.01
      %v3262 = vmul.f32 %v3245, 0.01
      %v3263 = vsel %vm3247, %v2687, %v3255
      %v3264 = vsel %vm3248, %v3238, %v3256
      %v3265 = vsel %vm3249, %v2689, %v3257
      %v3266 = vsel %vm3250, %v3240, %v3258
      %v3267 = vsel %vm3251, %v2692, %v3259
      %v3268 = vsel %vm3252, %v3243, %v3260
      %v3269 = vsel %vm3253, %v2694, %v3261
      %v3270 = vsel %vm3254, %v3245, %v3262
      %v3271 = vld [vmem:[%s2] sm:$0xff]
      %v3272 = vld [vmem:[%s2 + $0x8] sm:$0xff]
      %v3273 = vld [vmem:[%s3] sm:$0xff]
      %v3274 = vld [vmem:[%s3 + $0x8] sm:$0xff]
      %3276 = vset.pattern.permute.xlu0 0
      %3277 = vperm.xlu0 %3276, %v3273
      %v3278 = vpop.permute.xlu0 %3277
      %3281 = vset.pattern.permute.xlu0 0
      %3282 = vperm.xlu0 %3281, %v3274
      %v3283 = vpop.permute.xlu0 %3282
      %vm3285 = vcmask 261120
      %v3287 = vsel %vm3285, %v3271, 0
      %v3290 = vsel %vm3285, %v3272, 0
      %3292 = vmatpush.msra.mxu0 0.0
      %3293 = vmatpush.msra.mxu0 0.0
      %3294 = vmatpush.msra.mxu0 0.0
      %3295 = vmatpush.msra.mxu0 0.0
      %3296 = vmatpush.msra.mxu0 0.0
      %3297 = vmatpush.msra.mxu0 0.0
      %3298 = vmatpush.msra.mxu0 0.0
      %3299 = vmatpush.msra.mxu0 0.0
      %3300 = vmatpush.msra.mxu0 0.0
      %3301 = vmatpush.msra.mxu0 0.0
      %3302 = vmatpush.msra.mxu0 0.0
      %3303 = vmatpush.msra.mxu0 0.0
      %3304 = vmatpush.msra.mxu0 %v3269
      %3305 = vmatpush.msra.mxu0 %v3267
      %3306 = vmatpush.msra.mxu0 %v3265
      %3307 = vmatpush.msra.mxu0 %v3263
      %3308 = vmatmul.f32.gmra.mxu0 %v3287
      %v3309 = vpop.f32.mrf.mxu0
      %v3310 = vadd.f32 %v3278, %v3309
      %3311 = vmatmul.f32.gmra.mxu0 %v3290
      %v3312 = vpop.f32.mrf.mxu0
      %v3313 = vadd.f32 %v3283, %v3312
      %3314 = vdwg.mxu0
      %3315 = vmatpush.msra.mxu0 0.0
      %3316 = vmatpush.msra.mxu0 0.0
      %3317 = vmatpush.msra.mxu0 0.0
      %3318 = vmatpush.msra.mxu0 0.0
      %3319 = vmatpush.msra.mxu0 0.0
      %3320 = vmatpush.msra.mxu0 0.0
      %3321 = vmatpush.msra.mxu0 0.0
      %3322 = vmatpush.msra.mxu0 0.0
      %3323 = vmatpush.msra.mxu0 0.0
      %3324 = vmatpush.msra.mxu0 0.0
      %3325 = vmatpush.msra.mxu0 0.0
      %3326 = vmatpush.msra.mxu0 0.0
      %3327 = vmatpush.msra.mxu0 %v3270
      %3328 = vmatpush.msra.mxu0 %v3268
      %3329 = vmatpush.msra.mxu0 %v3266
      %3330 = vmatpush.msra.mxu0 %v3264
      %3331 = vmatmul.f32.gmra.mxu0 %v3287
      %v3332 = vpop.f32.mrf.mxu0
      %v3333 = vadd.f32 %v3278, %v3332
      %3334 = vmatmul.f32.gmra.mxu0 %v3290
      %v3335 = vpop.f32.mrf.mxu0
      %v3336 = vadd.f32 %v3283, %v3335
      %3337 = vdwg.mxu0
      %vm3338 = vcmp.gt.f32.partialorder %v3310, 0.0
      %vm3339 = vcmp.gt.f32.partialorder %v3333, 0.0
      %vm3340 = vcmp.gt.f32.partialorder %v3313, 0.0
      %vm3341 = vcmp.gt.f32.partialorder %v3336, 0.0
      %v3342 = vmul.f32 %v3310, 0.01
      %v3343 = vmul.f32 %v3333, 0.01
      %v3344 = vmul.f32 %v3313, 0.01
      %v3345 = vmul.f32 %v3336, 0.01
      %v3346 = vsel %vm3338, %v3310, %v3342
      %v3347 = vsel %vm3339, %v3333, %v3343
      %v3348 = vsel %vm3340, %v3313, %v3344
      %v3349 = vsel %vm3341, %v3336, %v3345
      %v3350 = vld [vmem:[%s4] sm:$0xff]
      %v3351 = vld [vmem:[%s5] sm:$0xff]
      %3353 = vset.pattern.permute.xlu0 0
      %3354 = vperm.xlu0 %3353, %v3351
      %v3355 = vpop.permute.xlu0 %3354
      %vm3357 = vcmask 130048
      %v3359 = vsel %vm3357, %v3350, 0
      %3361 = vmatpush.msra.mxu0 0.0
      %3362 = vmatpush.msra.mxu0 0.0
      %3363 = vmatpush.msra.mxu0 0.0
      %3364 = vmatpush.msra.mxu0 0.0
      %3365 = vmatpush.msra.mxu0 0.0
      %3366 = vmatpush.msra.mxu0 0.0
      %3367 = vmatpush.msra.mxu0 0.0
      %3368 = vmatpush.msra.mxu0 0.0
      %3369 = vmatpush.msra.mxu0 0.0
      %3370 = vmatpush.msra.mxu0 0.0
      %3371 = vmatpush.msra.mxu0 0.0
      %3372 = vmatpush.msra.mxu0 0.0
      %3373 = vmatpush.msra.mxu0 0.0
      %3374 = vmatpush.msra.mxu0 0.0
      %3375 = vmatpush.msra.mxu0 %v3348
      %3376 = vmatpush.msra.mxu0 %v3346
      %3377 = vmatmul.f32.gmra.mxu0 %v3359
      %v3378 = vpop.f32.mrf.mxu0
      %v3379 = vadd.f32 %v3355, %v3378
      %3380 = vdwg.mxu0
      %3381 = vmatpush.msra.mxu0 0.0
      %3382 = vmatpush.msra.mxu0 0.0
      %3383 = vmatpush.msra.mxu0 0.0
      %3384 = vmatpush.msra.mxu0 0.0
      %3385 = vmatpush.msra.mxu0 0.0
      %3386 = vmatpush.msra.mxu0 0.0
      %3387 = vmatpush.msra.mxu0 0.0
      %3388 = vmatpush.msra.mxu0 0.0
      %3389 = vmatpush.msra.mxu0 0.0
      %3390 = vmatpush.msra.mxu0 0.0
      %3391 = vmatpush.msra.mxu0 0.0
      %3392 = vmatpush.msra.mxu0 0.0
      %3393 = vmatpush.msra.mxu0 0.0
      %3394 = vmatpush.msra.mxu0 0.0
      %3395 = vmatpush.msra.mxu0 %v3349
      %3396 = vmatpush.msra.mxu0 %v3347
      %3397 = vmatmul.f32.gmra.mxu0 %v3359
      %v3398 = vpop.f32.mrf.mxu0
      %v3399 = vadd.f32 %v3355, %v3398
      %3400 = vdwg.mxu0
      %v3401 = vtanh.pop %v3379
      %v3402 = vtanh.pop %v3399
      %v3403 = vld [vmem:[%s6] sm:$0xff]
      %v3404 = vld [vmem:[%s6 + $0x8] sm:$0xff]
      %v3405 = vld [vmem:[%s7] sm:$0xff]
      %v3406 = vld [vmem:[%s7 + $0x8] sm:$0xff]
      %3408 = vset.pattern.permute.xlu0 0
      %3409 = vperm.xlu0 %3408, %v3405
      %v3410 = vpop.permute.xlu0 %3409
      %3413 = vset.pattern.permute.xlu0 0
      %3414 = vperm.xlu0 %3413, %v3406
      %v3415 = vpop.permute.xlu0 %3414
      %vm3417 = vcmask 64512
      %v3419 = vsel %vm3417, %v3403, 0
      %v3422 = vsel %vm3417, %v3404, 0
      %3424 = vmatpush.msra.mxu0 0.0
      %3425 = vmatpush.msra.mxu0 0.0
      %3426 = vmatpush.msra.mxu0 0.0
      %3427 = vmatpush.msra.mxu0 0.0
      %3428 = vmatpush.msra.mxu0 0.0
      %3429 = vmatpush.msra.mxu0 0.0
      %3430 = vmatpush.msra.mxu0 0.0
      %3431 = vmatpush.msra.mxu0 0.0
      %3432 = vmatpush.msra.mxu0 0.0
      %3433 = vmatpush.msra.mxu0 0.0
      %3434 = vmatpush.msra.mxu0 0.0
      %3435 = vmatpush.msra.mxu0 0.0
      %3436 = vmatpush.msra.mxu0 0.0
      %3437 = vmatpush.msra.mxu0 0.0
      %3438 = vmatpush.msra.mxu0 0.0
      %3439 = vmatpush.msra.mxu0 %v3401
      %3440 = vmatmul.f32.gmra.mxu0 %v3419
      %v3441 = vpop.f32.mrf.mxu0
      %v3442 = vadd.f32 %v3410, %v3441
      %3443 = vmatmul.f32.gmra.mxu0 %v3422
      %v3444 = vpop.f32.mrf.mxu0
      %v3445 = vadd.f32 %v3415, %v3444
      %3446 = vdwg.mxu0
      %3447 = vmatpush.msra.mxu0 0.0
      %3448 = vmatpush.msra.mxu0 0.0
      %3449 = vmatpush.msra.mxu0 0.0
      %3450 = vmatpush.msra.mxu0 0.0
      %3451 = vmatpush.msra.mxu0 0.0
      %3452 = vmatpush.msra.mxu0 0.0
      %3453 = vmatpush.msra.mxu0 0.0
      %3454 = vmatpush.msra.mxu0 0.0
      %3455 = vmatpush.msra.mxu0 0.0
      %3456 = vmatpush.msra.mxu0 0.0
      %3457 = vmatpush.msra.mxu0 0.0
      %3458 = vmatpush.msra.mxu0 0.0
      %3459 = vmatpush.msra.mxu0 0.0
      %3460 = vmatpush.msra.mxu0 0.0
      %3461 = vmatpush.msra.mxu0 0.0
      %3462 = vmatpush.msra.mxu0 %v3402
      %3463 = vmatmul.f32.gmra.mxu0 %v3419
      %v3464 = vpop.f32.mrf.mxu0
      %v3465 = vadd.f32 %v3410, %v3464
      %3466 = vmatmul.f32.gmra.mxu0 %v3422
      %v3467 = vpop.f32.mrf.mxu0
      %v3468 = vadd.f32 %v3415, %v3467
      %3469 = vdwg.mxu0
      %vm3470 = vcmp.gt.f32.partialorder %v3442, 0.0
      %vm3471 = vcmp.gt.f32.partialorder %v3465, 0.0
      %vm3472 = vcmp.gt.f32.partialorder %v3445, 0.0
      %vm3473 = vcmp.gt.f32.partialorder %v3468, 0.0
      %v3474 = vmul.f32 %v3442, 0.01
      %v3475 = vmul.f32 %v3465, 0.01
      %v3476 = vmul.f32 %v3445, 0.01
      %v3477 = vmul.f32 %v3468, 0.01
      %v3478 = vsel %vm3470, %v3442, %v3474
      %v3479 = vsel %vm3471, %v3465, %v3475
      %v3480 = vsel %vm3472, %v3445, %v3476
      %v3481 = vsel %vm3473, %v3468, %v3477
      %v3482 = vld [vmem:[%s8] sm:$0xff]
      %v3483 = vld [vmem:[%s8 + $0x8] sm:$0xff]
      %v3484 = vld [vmem:[%s8 + $0x10] sm:$0xff]
      %v3485 = vld [vmem:[%s8 + $0x18] sm:$0xff]
      %v3486 = vld [vmem:[%s9] sm:$0xff]
      %v3487 = vld [vmem:[%s9 + $0x8] sm:$0xff]
      %v3488 = vld [vmem:[%s9 + $0x10] sm:$0xff]
      %v3489 = vld [vmem:[%s9 + $0x18] sm:$0xff]
      %3491 = vset.pattern.permute.xlu0 0
      %3492 = vperm.xlu0 %3491, %v3486
      %v3493 = vpop.permute.xlu0 %3492
      %3496 = vset.pattern.permute.xlu0 0
      %3497 = vperm.xlu0 %3496, %v3487
      %v3498 = vpop.permute.xlu0 %3497
      %3501 = vset.pattern.permute.xlu0 0
      %3502 = vperm.xlu0 %3501, %v3488
      %v3503 = vpop.permute.xlu0 %3502
      %3506 = vset.pattern.permute.xlu0 0
      %3507 = vperm.xlu0 %3506, %v3489
      %v3508 = vpop.permute.xlu0 %3507
      %v3511 = vsel %vm3357, %v3482, 0
      %v3514 = vsel %vm3357, %v3483, 0
      %v3517 = vsel %vm3357, %v3484, 0
      %v3520 = vsel %vm3357, %v3485, 0
      %3522 = vmatpush.msra.mxu0 0.0
      %3523 = vmatpush.msra.mxu0 0.0
      %3524 = vmatpush.msra.mxu0 0.0
      %3525 = vmatpush.msra.mxu0 0.0
      %3526 = vmatpush.msra.mxu0 0.0
      %3527 = vmatpush.msra.mxu0 0.0
      %3528 = vmatpush.msra.mxu0 0.0
      %3529 = vmatpush.msra.mxu0 0.0
      %3530 = vmatpush.msra.mxu0 0.0
      %3531 = vmatpush.msra.mxu0 0.0
      %3532 = vmatpush.msra.mxu0 0.0
      %3533 = vmatpush.msra.mxu0 0.0
      %3534 = vmatpush.msra.mxu0 0.0
      %3535 = vmatpush.msra.mxu0 0.0
      %3536 = vmatpush.msra.mxu0 %v3480
      %3537 = vmatpush.msra.mxu0 %v3478
      %3538 = vmatmul.f32.gmra.mxu0 %v3511
      %v3539 = vpop.f32.mrf.mxu0
      %v3540 = vadd.f32 %v3493, %v3539
      %3541 = vmatmul.f32.gmra.mxu0 %v3514
      %v3542 = vpop.f32.mrf.mxu0
      %v3543 = vadd.f32 %v3498, %v3542
      %3544 = vmatmul.f32.gmra.mxu0 %v3517
      %v3545 = vpop.f32.mrf.mxu0
      %v3546 = vadd.f32 %v3503, %v3545
      %3547 = vmatmul.f32.gmra.mxu0 %v3520
      %v3548 = vpop.f32.mrf.mxu0
      %v3549 = vadd.f32 %v3508, %v3548
      %3550 = vdwg.mxu0
      %3551 = vmatpush.msra.mxu0 0.0
      %3552 = vmatpush.msra.mxu0 0.0
      %3553 = vmatpush.msra.mxu0 0.0
      %3554 = vmatpush.msra.mxu0 0.0
      %3555 = vmatpush.msra.mxu0 0.0
      %3556 = vmatpush.msra.mxu0 0.0
      %3557 = vmatpush.msra.mxu0 0.0
      %3558 = vmatpush.msra.mxu0 0.0
      %3559 = vmatpush.msra.mxu0 0.0
      %3560 = vmatpush.msra.mxu0 0.0
      %3561 = vmatpush.msra.mxu0 0.0
      %3562 = vmatpush.msra.mxu0 0.0
      %3563 = vmatpush.msra.mxu0 0.0
      %3564 = vmatpush.msra.mxu0 0.0
      %3565 = vmatpush.msra.mxu0 %v3481
      %3566 = vmatpush.msra.mxu0 %v3479
      %3567 = vmatmul.f32.gmra.mxu0 %v3511
      %v3568 = vpop.f32.mrf.mxu0
      %v3569 = vadd.f32 %v3493, %v3568
      %3570 = vmatmul.f32.gmra.mxu0 %v3514
      %v3571 = vpop.f32.mrf.mxu0
      %v3572 = vadd.f32 %v3498, %v3571
      %3573 = vmatmul.f32.gmra.mxu0 %v3517
      %v3574 = vpop.f32.mrf.mxu0
      %v3575 = vadd.f32 %v3503, %v3574
      %3576 = vmatmul.f32.gmra.mxu0 %v3520
      %v3577 = vpop.f32.mrf.mxu0
      %v3578 = vadd.f32 %v3508, %v3577
      %3579 = vdwg.mxu0
      %vm3580 = vcmp.gt.f32.partialorder %v3540, 0.0
      %vm3581 = vcmp.gt.f32.partialorder %v3569, 0.0
      %vm3582 = vcmp.gt.f32.partialorder %v3543, 0.0
      %vm3583 = vcmp.gt.f32.partialorder %v3572, 0.0
      %vm3584 = vcmp.gt.f32.partialorder %v3546, 0.0
      %vm3585 = vcmp.gt.f32.partialorder %v3575, 0.0
      %vm3586 = vcmp.gt.f32.partialorder %v3549, 0.0
      %vm3587 = vcmp.gt.f32.partialorder %v3578, 0.0
      %v3588 = vmul.f32 %v3540, 0.01
      %v3589 = vmul.f32 %v3569, 0.01
      %v3590 = vmul.f32 %v3543, 0.01
      %v3591 = vmul.f32 %v3572, 0.01
      %v3592 = vmul.f32 %v3546, 0.01
      %v3593 = vmul.f32 %v3575, 0.01
      %v3594 = vmul.f32 %v3549, 0.01
      %v3595 = vmul.f32 %v3578, 0.01
      %v3596 = vsel %vm3580, %v3540, %v3588
      %v3597 = vsel %vm3581, %v3569, %v3589
      %v3598 = vsel %vm3582, %v3543, %v3590
      %v3599 = vsel %vm3583, %v3572, %v3591
      %v3600 = vsel %vm3584, %v3546, %v3592
      %v3601 = vsel %vm3585, %v3575, %v3593
      %v3602 = vsel %vm3586, %v3549, %v3594
      %v3603 = vsel %vm3587, %v3578, %v3595
      %v3604 = vld [vmem:[%s10] sm:$0xf]
      %v3605 = vld [vmem:[%s10 + $0x4] sm:$0xf]
      %v3606 = vld [vmem:[%s10 + $0x8] sm:$0xf]
      %v3607 = vld [vmem:[%s10 + $0xc] sm:$0xf]
      %v3608 = vld [vmem:[%s10 + $0x10] sm:$0xf]
      %v3609 = vld [vmem:[%s10 + $0x14] sm:$0xf]
      %v3610 = vld [vmem:[%s10 + $0x18] sm:$0xf]
      %v3611 = vld [vmem:[%s10 + $0x1c] sm:$0xf]
      %v3612 = vld [vmem:[%s10 + $0x20] sm:$0xf]
      %v3613 = vld [vmem:[%s10 + $0x24] sm:$0xf]
      %v3614 = vld [vmem:[%s10 + $0x28] sm:$0xf]
      %v3615 = vld [vmem:[%s10 + $0x2c] sm:$0xf]
      %v3616 = vld [vmem:[%s10 + $0x30] sm:$0xf]
      %v3617 = vld [vmem:[%s10 + $0x34] sm:$0xf]
      %v3618 = vld [vmem:[%s10 + $0x38] sm:$0xf]
      %v3619 = vld [vmem:[%s10 + $0x3c] sm:$0xf]
      %v3620 = vld [vmem:[%s10 + $0x40] sm:$0xf]
      %v3621 = vld [vmem:[%s10 + $0x44] sm:$0xf]
      %v3622 = vld [vmem:[%s10 + $0x48] sm:$0xf]
      %v3623 = vld [vmem:[%s10 + $0x4c] sm:$0xf]
      %v3624 = vld [vmem:[%s10 + $0x50] sm:$0xf]
      %v3625 = vld [vmem:[%s10 + $0x54] sm:$0xf]
      %v3626 = vld [vmem:[%s10 + $0x58] sm:$0xf]
      %v3627 = vld [vmem:[%s10 + $0x5c] sm:$0xf]
      %v3628 = vld [vmem:[%s10 + $0x60] sm:$0xf]
      %v3629 = vld [vmem:[%s10 + $0x64] sm:$0xf]
      %v3630 = vld [vmem:[%s10 + $0x68] sm:$0xf]
      %v3631 = vld [vmem:[%s10 + $0x6c] sm:$0xf]
      %v3632 = vld [vmem:[%s10 + $0x70] sm:$0xf]
      %v3633 = vld [vmem:[%s10 + $0x74] sm:$0xf]
      %v3634 = vld [vmem:[%s10 + $0x78] sm:$0xf]
      %v3635 = vld [vmem:[%s10 + $0x7c] sm:$0xf]
      %v3636 = vld [vmem:[%s10 + $0x80] sm:$0xf]
      %v3637 = vld [vmem:[%s10 + $0x84] sm:$0xf]
      %v3638 = vld [vmem:[%s10 + $0x88] sm:$0xf]
      %v3639 = vld [vmem:[%s10 + $0x8c] sm:$0xf]
      %v3640 = vld [vmem:[%s10 + $0x90] sm:$0xf]
      %v3641 = vld [vmem:[%s10 + $0x94] sm:$0xf]
      %v3642 = vld [vmem:[%s10 + $0x98] sm:$0xf]
      %v3643 = vld [vmem:[%s10 + $0x9c] sm:$0xf]
      %v3644 = vld [vmem:[%s10 + $0xa0] sm:$0xf]
      %v3645 = vld [vmem:[%s10 + $0xa4] sm:$0xf]
      %v3646 = vld [vmem:[%s10 + $0xa8] sm:$0xf]
      %v3647 = vld [vmem:[%s10 + $0xac] sm:$0xf]
      %v3648 = vld [vmem:[%s10 + $0xb0] sm:$0xf]
      %v3649 = vld [vmem:[%s10 + $0xb4] sm:$0xf]
      %v3650 = vld [vmem:[%s10 + $0xb8] sm:$0xf]
      %v3651 = vld [vmem:[%s10 + $0xbc] sm:$0xf]
      %v3652 = vld [vmem:[%s10 + $0xc0] sm:$0xf]
      %v3653 = vld [vmem:[%s10 + $0xc4] sm:$0xf]
      %v3654 = vld [vmem:[%s10 + $0xc8] sm:$0xf]
      %v3655 = vld [vmem:[%s10 + $0xcc] sm:$0xf]
      %v3656 = vld [vmem:[%s10 + $0xd0] sm:$0xf]
      %v3657 = vld [vmem:[%s10 + $0xd4] sm:$0xf]
      %v3658 = vld [vmem:[%s10 + $0xd8] sm:$0xf]
      %v3659 = vld [vmem:[%s10 + $0xdc] sm:$0xf]
      %v3660 = vld [vmem:[%s10 + $0xe0] sm:$0xf]
      %v3661 = vld [vmem:[%s10 + $0xe4] sm:$0xf]
      %v3662 = vld [vmem:[%s10 + $0xe8] sm:$0xf]
      %v3663 = vld [vmem:[%s10 + $0xec] sm:$0xf]
      %v3664 = vld [vmem:[%s10 + $0xf0] sm:$0xf]
      %v3665 = vld [vmem:[%s10 + $0xf4] sm:$0xf]
      %v3666 = vld [vmem:[%s10 + $0xf8] sm:$0xf]
      %v3667 = vld [vmem:[%s10 + $0xfc] sm:$0xf]
      %v3668 = vld [vmem:[%s10 + $0x100] sm:$0xf]
      %v3669 = vld [vmem:[%s10 + $0x104] sm:$0xf]
      %v3670 = vld [vmem:[%s10 + $0x108] sm:$0xf]
      %v3671 = vld [vmem:[%s10 + $0x10c] sm:$0xf]
      %v3672 = vld [vmem:[%s10 + $0x110] sm:$0xf]
      %v3673 = vld [vmem:[%s10 + $0x114] sm:$0xf]
      %v3674 = vld [vmem:[%s10 + $0x118] sm:$0xf]
      %v3675 = vld [vmem:[%s10 + $0x11c] sm:$0xf]
      %v3676 = vld [vmem:[%s10 + $0x120] sm:$0xf]
      %v3677 = vld [vmem:[%s10 + $0x124] sm:$0xf]
      %v3678 = vld [vmem:[%s10 + $0x128] sm:$0xf]
      %v3679 = vld [vmem:[%s10 + $0x12c] sm:$0xf]
      %v3680 = vld [vmem:[%s10 + $0x130] sm:$0xf]
      %v3681 = vld [vmem:[%s10 + $0x134] sm:$0xf]
      %v3682 = vld [vmem:[%s10 + $0x138] sm:$0xf]
      %v3683 = vld [vmem:[%s10 + $0x13c] sm:$0xf]
      %v3684 = vld [vmem:[%s10 + $0x140] sm:$0xf]
      %v3685 = vld [vmem:[%s10 + $0x144] sm:$0xf]
      %v3686 = vld [vmem:[%s10 + $0x148] sm:$0xf]
      %v3687 = vld [vmem:[%s10 + $0x14c] sm:$0xf]
      %v3688 = vld [vmem:[%s10 + $0x150] sm:$0xf]
      %v3689 = vld [vmem:[%s10 + $0x154] sm:$0xf]
      %v3690 = vld [vmem:[%s10 + $0x158] sm:$0xf]
      %v3691 = vld [vmem:[%s10 + $0x15c] sm:$0xf]
      %v3692 = vld [vmem:[%s10 + $0x160] sm:$0xf]
      %v3693 = vld [vmem:[%s10 + $0x164] sm:$0xf]
      %v3694 = vld [vmem:[%s10 + $0x168] sm:$0xf]
      %v3695 = vld [vmem:[%s10 + $0x16c] sm:$0xf]
      %v3696 = vld [vmem:[%s10 + $0x170] sm:$0xf]
      %v3697 = vld [vmem:[%s10 + $0x174] sm:$0xf]
      %v3698 = vld [vmem:[%s10 + $0x178] sm:$0xf]
      %v3699 = vld [vmem:[%s10 + $0x17c] sm:$0xf]
      %v3700 = vld [vmem:[%s10 + $0x180] sm:$0xf]
      %v3701 = vld [vmem:[%s10 + $0x184] sm:$0xf]
      %v3702 = vld [vmem:[%s10 + $0x188] sm:$0xf]
      %v3703 = vld [vmem:[%s10 + $0x18c] sm:$0xf]
      %v3704 = vld [vmem:[%s10 + $0x190] sm:$0xf]
      %v3705 = vld [vmem:[%s10 + $0x194] sm:$0xf]
      %v3706 = vld [vmem:[%s10 + $0x198] sm:$0xf]
      %v3707 = vld [vmem:[%s10 + $0x19c] sm:$0xf]
      %v3708 = vld [vmem:[%s10 + $0x1a0] sm:$0xf]
      %v3709 = vld [vmem:[%s10 + $0x1a4] sm:$0xf]
      %v3710 = vld [vmem:[%s10 + $0x1a8] sm:$0xf]
      %v3711 = vld [vmem:[%s10 + $0x1ac] sm:$0xf]
      %v3712 = vld [vmem:[%s10 + $0x1b0] sm:$0xf]
      %v3713 = vld [vmem:[%s10 + $0x1b4] sm:$0xf]
      %v3714 = vld [vmem:[%s10 + $0x1b8] sm:$0xf]
      %v3715 = vld [vmem:[%s10 + $0x1bc] sm:$0xf]
      %v3716 = vld [vmem:[%s10 + $0x1c0] sm:$0xf]
      %v3717 = vld [vmem:[%s10 + $0x1c4] sm:$0xf]
      %v3718 = vld [vmem:[%s10 + $0x1c8] sm:$0xf]
      %v3719 = vld [vmem:[%s10 + $0x1cc] sm:$0xf]
      %v3720 = vld [vmem:[%s10 + $0x1d0] sm:$0xf]
      %v3721 = vld [vmem:[%s10 + $0x1d4] sm:$0xf]
      %v3722 = vld [vmem:[%s10 + $0x1d8] sm:$0xf]
      %v3723 = vld [vmem:[%s10 + $0x1dc] sm:$0xf]
      %v3724 = vld [vmem:[%s10 + $0x1e0] sm:$0xf]
      %v3725 = vld [vmem:[%s10 + $0x1e4] sm:$0xf]
      %v3726 = vld [vmem:[%s10 + $0x1e8] sm:$0xf]
      %v3727 = vld [vmem:[%s10 + $0x1ec] sm:$0xf]
      %v3728 = vld [vmem:[%s10 + $0x1f0] sm:$0xf]
      %v3729 = vld [vmem:[%s10 + $0x1f4] sm:$0xf]
      %v3730 = vld [vmem:[%s10 + $0x1f8] sm:$0xf]
      %v3731 = vld [vmem:[%s10 + $0x1fc] sm:$0xf]
      %v3732 = vld [vmem:[%s10 + $0x200] sm:$0xf]
      %v3733 = vld [vmem:[%s10 + $0x204] sm:$0xf]
      %v3734 = vld [vmem:[%s10 + $0x208] sm:$0xf]
      %v3735 = vld [vmem:[%s10 + $0x20c] sm:$0xf]
      %v3736 = vld [vmem:[%s10 + $0x210] sm:$0xf]
      %v3737 = vld [vmem:[%s10 + $0x214] sm:$0xf]
      %v3738 = vld [vmem:[%s10 + $0x218] sm:$0xf]
      %v3739 = vld [vmem:[%s10 + $0x21c] sm:$0xf]
      %v3740 = vld [vmem:[%s10 + $0x220] sm:$0xf]
      %v3741 = vld [vmem:[%s10 + $0x224] sm:$0xf]
      %v3742 = vld [vmem:[%s10 + $0x228] sm:$0xf]
      %v3743 = vld [vmem:[%s10 + $0x22c] sm:$0xf]
      %v3744 = vld [vmem:[%s10 + $0x230] sm:$0xf]
      %v3745 = vld [vmem:[%s10 + $0x234] sm:$0xf]
      %v3746 = vld [vmem:[%s10 + $0x238] sm:$0xf]
      %v3747 = vld [vmem:[%s10 + $0x23c] sm:$0xf]
      %v3748 = vld [vmem:[%s10 + $0x240] sm:$0xf]
      %v3749 = vld [vmem:[%s10 + $0x244] sm:$0xf]
      %v3750 = vld [vmem:[%s10 + $0x248] sm:$0xf]
      %v3751 = vld [vmem:[%s10 + $0x24c] sm:$0xf]
      %v3752 = vld [vmem:[%s10 + $0x250] sm:$0xf]
      %v3753 = vld [vmem:[%s10 + $0x254] sm:$0xf]
      %v3754 = vld [vmem:[%s10 + $0x258] sm:$0xf]
      %v3755 = vld [vmem:[%s10 + $0x25c] sm:$0xf]
      %v3756 = vld [vmem:[%s10 + $0x260] sm:$0xf]
      %v3757 = vld [vmem:[%s10 + $0x264] sm:$0xf]
      %v3758 = vld [vmem:[%s10 + $0x268] sm:$0xf]
      %v3759 = vld [vmem:[%s10 + $0x26c] sm:$0xf]
      %v3760 = vld [vmem:[%s10 + $0x270] sm:$0xf]
      %v3761 = vld [vmem:[%s10 + $0x274] sm:$0xf]
      %v3762 = vld [vmem:[%s10 + $0x278] sm:$0xf]
      %v3763 = vld [vmem:[%s10 + $0x27c] sm:$0xf]
      %v3764 = vld [vmem:[%s10 + $0x280] sm:$0xf]
      %v3765 = vld [vmem:[%s10 + $0x284] sm:$0xf]
      %v3766 = vld [vmem:[%s10 + $0x288] sm:$0xf]
      %v3767 = vld [vmem:[%s10 + $0x28c] sm:$0xf]
      %v3768 = vld [vmem:[%s10 + $0x290] sm:$0xf]
      %v3769 = vld [vmem:[%s10 + $0x294] sm:$0xf]
      %v3770 = vld [vmem:[%s10 + $0x298] sm:$0xf]
      %v3771 = vld [vmem:[%s10 + $0x29c] sm:$0xf]
      %v3772 = vld [vmem:[%s10 + $0x2a0] sm:$0xf]
      %v3773 = vld [vmem:[%s10 + $0x2a4] sm:$0xf]
      %v3774 = vld [vmem:[%s10 + $0x2a8] sm:$0xf]
      %v3775 = vld [vmem:[%s10 + $0x2ac] sm:$0xf]
      %v3776 = vld [vmem:[%s10 + $0x2b0] sm:$0xf]
      %v3777 = vld [vmem:[%s10 + $0x2b4] sm:$0xf]
      %v3778 = vld [vmem:[%s10 + $0x2b8] sm:$0xf]
      %v3779 = vld [vmem:[%s10 + $0x2bc] sm:$0xf]
      %v3780 = vld [vmem:[%s10 + $0x2c0] sm:$0xf]
      %v3781 = vld [vmem:[%s10 + $0x2c4] sm:$0xf]
      %v3782 = vld [vmem:[%s10 + $0x2c8] sm:$0xf]
      %v3783 = vld [vmem:[%s10 + $0x2cc] sm:$0xf]
      %v3784 = vld [vmem:[%s10 + $0x2d0] sm:$0xf]
      %v3785 = vld [vmem:[%s10 + $0x2d4] sm:$0xf]
      %v3786 = vld [vmem:[%s10 + $0x2d8] sm:$0xf]
      %v3787 = vld [vmem:[%s10 + $0x2dc] sm:$0xf]
      %v3788 = vld [vmem:[%s10 + $0x2e0] sm:$0xf]
      %v3789 = vld [vmem:[%s10 + $0x2e4] sm:$0xf]
      %v3790 = vld [vmem:[%s10 + $0x2e8] sm:$0xf]
      %v3791 = vld [vmem:[%s10 + $0x2ec] sm:$0xf]
      %v3792 = vld [vmem:[%s10 + $0x2f0] sm:$0xf]
      %v3793 = vld [vmem:[%s10 + $0x2f4] sm:$0xf]
      %v3794 = vld [vmem:[%s10 + $0x2f8] sm:$0xf]
      %v3795 = vld [vmem:[%s10 + $0x2fc] sm:$0xf]
      %v3796 = vld [vmem:[%s10 + $0x300] sm:$0xf]
      %v3797 = vld [vmem:[%s10 + $0x304] sm:$0xf]
      %v3798 = vld [vmem:[%s10 + $0x308] sm:$0xf]
      %v3799 = vld [vmem:[%s10 + $0x30c] sm:$0xf]
      %v3800 = vld [vmem:[%s10 + $0x310] sm:$0xf]
      %v3801 = vld [vmem:[%s10 + $0x314] sm:$0xf]
      %v3802 = vld [vmem:[%s10 + $0x318] sm:$0xf]
      %v3803 = vld [vmem:[%s10 + $0x31c] sm:$0xf]
      %v3804 = vld [vmem:[%s10 + $0x320] sm:$0xf]
      %v3805 = vld [vmem:[%s10 + $0x324] sm:$0xf]
      %v3806 = vld [vmem:[%s10 + $0x328] sm:$0xf]
      %v3807 = vld [vmem:[%s10 + $0x32c] sm:$0xf]
      %v3808 = vld [vmem:[%s10 + $0x330] sm:$0xf]
      %v3809 = vld [vmem:[%s10 + $0x334] sm:$0xf]
      %v3810 = vld [vmem:[%s10 + $0x338] sm:$0xf]
      %v3811 = vld [vmem:[%s10 + $0x33c] sm:$0xf]
      %v3812 = vld [vmem:[%s10 + $0x340] sm:$0xf]
      %v3813 = vld [vmem:[%s10 + $0x344] sm:$0xf]
      %v3814 = vld [vmem:[%s10 + $0x348] sm:$0xf]
      %v3815 = vld [vmem:[%s10 + $0x34c] sm:$0xf]
      %v3816 = vld [vmem:[%s10 + $0x350] sm:$0xf]
      %v3817 = vld [vmem:[%s10 + $0x354] sm:$0xf]
      %v3818 = vld [vmem:[%s10 + $0x358] sm:$0xf]
      %v3819 = vld [vmem:[%s10 + $0x35c] sm:$0xf]
      %v3820 = vld [vmem:[%s10 + $0x360] sm:$0xf]
      %v3821 = vld [vmem:[%s10 + $0x364] sm:$0xf]
      %v3822 = vld [vmem:[%s10 + $0x368] sm:$0xf]
      %v3823 = vld [vmem:[%s10 + $0x36c] sm:$0xf]
      %v3824 = vld [vmem:[%s10 + $0x370] sm:$0xf]
      %v3825 = vld [vmem:[%s10 + $0x374] sm:$0xf]
      %v3826 = vld [vmem:[%s10 + $0x378] sm:$0xf]
      %v3827 = vld [vmem:[%s10 + $0x37c] sm:$0xf]
      %v3828 = vld [vmem:[%s10 + $0x380] sm:$0xf]
      %v3829 = vld [vmem:[%s10 + $0x384] sm:$0xf]
      %v3830 = vld [vmem:[%s10 + $0x388] sm:$0xf]
      %v3831 = vld [vmem:[%s10 + $0x38c] sm:$0xf]
      %v3832 = vld [vmem:[%s10 + $0x390] sm:$0xf]
      %v3833 = vld [vmem:[%s10 + $0x394] sm:$0xf]
      %v3834 = vld [vmem:[%s10 + $0x398] sm:$0xf]
      %v3835 = vld [vmem:[%s10 + $0x39c] sm:$0xf]
      %v3836 = vld [vmem:[%s10 + $0x3a0] sm:$0xf]
      %v3837 = vld [vmem:[%s10 + $0x3a4] sm:$0xf]
      %v3838 = vld [vmem:[%s10 + $0x3a8] sm:$0xf]
      %v3839 = vld [vmem:[%s10 + $0x3ac] sm:$0xf]
      %v3840 = vld [vmem:[%s10 + $0x3b0] sm:$0xf]
      %v3841 = vld [vmem:[%s10 + $0x3b4] sm:$0xf]
      %v3842 = vld [vmem:[%s10 + $0x3b8] sm:$0xf]
      %v3843 = vld [vmem:[%s10 + $0x3bc] sm:$0xf]
      %v3844 = vld [vmem:[%s10 + $0x3c0] sm:$0xf]
      %v3845 = vld [vmem:[%s10 + $0x3c4] sm:$0xf]
      %v3846 = vld [vmem:[%s10 + $0x3c8] sm:$0xf]
      %v3847 = vld [vmem:[%s10 + $0x3cc] sm:$0xf]
      %v3848 = vld [vmem:[%s10 + $0x3d0] sm:$0xf]
      %v3849 = vld [vmem:[%s10 + $0x3d4] sm:$0xf]
      %v3850 = vld [vmem:[%s10 + $0x3d8] sm:$0xf]
      %v3851 = vld [vmem:[%s10 + $0x3dc] sm:$0xf]
      %v3852 = vld [vmem:[%s10 + $0x3e0] sm:$0xf]
      %v3853 = vld [vmem:[%s10 + $0x3e4] sm:$0xf]
      %v3854 = vld [vmem:[%s10 + $0x3e8] sm:$0xf]
      %v3855 = vld [vmem:[%s10 + $0x3ec] sm:$0xf]
      %v3856 = vld [vmem:[%s10 + $0x3f0] sm:$0xf]
      %v3857 = vld [vmem:[%s10 + $0x3f4] sm:$0xf]
      %v3858 = vld [vmem:[%s10 + $0x3f8] sm:$0xf]
      %v3859 = vld [vmem:[%s10 + $0x3fc] sm:$0xf]
      %v3860 = vld [vmem:[%s10 + $0x400] sm:$0xf]
      %v3861 = vld [vmem:[%s10 + $0x404] sm:$0xf]
      %v3862 = vld [vmem:[%s10 + $0x408] sm:$0xf]
      %v3863 = vld [vmem:[%s10 + $0x40c] sm:$0xf]
      %v3864 = vld [vmem:[%s10 + $0x410] sm:$0xf]
      %v3865 = vld [vmem:[%s10 + $0x414] sm:$0xf]
      %v3866 = vld [vmem:[%s10 + $0x418] sm:$0xf]
      %v3867 = vld [vmem:[%s10 + $0x41c] sm:$0xf]
      %v3868 = vld [vmem:[%s10 + $0x420] sm:$0xf]
      %v3869 = vld [vmem:[%s10 + $0x424] sm:$0xf]
      %v3870 = vld [vmem:[%s10 + $0x428] sm:$0xf]
      %v3871 = vld [vmem:[%s10 + $0x42c] sm:$0xf]
      %v3872 = vld [vmem:[%s10 + $0x430] sm:$0xf]
      %v3873 = vld [vmem:[%s10 + $0x434] sm:$0xf]
      %v3874 = vld [vmem:[%s10 + $0x438] sm:$0xf]
      %v3875 = vld [vmem:[%s10 + $0x43c] sm:$0xf]
      %v3876 = vld [vmem:[%s10 + $0x440] sm:$0xf]
      %v3877 = vld [vmem:[%s10 + $0x444] sm:$0xf]
      %v3878 = vld [vmem:[%s10 + $0x448] sm:$0xf]
      %v3879 = vld [vmem:[%s10 + $0x44c] sm:$0xf]
      %v3880 = vld [vmem:[%s10 + $0x450] sm:$0xf]
      %v3881 = vld [vmem:[%s10 + $0x454] sm:$0xf]
      %v3882 = vld [vmem:[%s10 + $0x458] sm:$0xf]
      %v3883 = vld [vmem:[%s10 + $0x45c] sm:$0xf]
      %v3884 = vld [vmem:[%s10 + $0x460] sm:$0xf]
      %v3885 = vld [vmem:[%s10 + $0x464] sm:$0xf]
      %v3886 = vld [vmem:[%s10 + $0x468] sm:$0xf]
      %v3887 = vld [vmem:[%s10 + $0x46c] sm:$0xf]
      %v3888 = vld [vmem:[%s10 + $0x470] sm:$0xf]
      %v3889 = vld [vmem:[%s10 + $0x474] sm:$0xf]
      %v3890 = vld [vmem:[%s10 + $0x478] sm:$0xf]
      %v3891 = vld [vmem:[%s10 + $0x47c] sm:$0xf]
      %v3892 = vld [vmem:[%s10 + $0x480] sm:$0xf]
      %v3893 = vld [vmem:[%s10 + $0x484] sm:$0xf]
      %v3894 = vld [vmem:[%s10 + $0x488] sm:$0xf]
      %v3895 = vld [vmem:[%s10 + $0x48c] sm:$0xf]
      %v3896 = vld [vmem:[%s10 + $0x490] sm:$0xf]
      %v3897 = vld [vmem:[%s10 + $0x494] sm:$0xf]
      %v3898 = vld [vmem:[%s10 + $0x498] sm:$0xf]
      %v3899 = vld [vmem:[%s10 + $0x49c] sm:$0xf]
      %v3900 = vld [vmem:[%s10 + $0x4a0] sm:$0xf]
      %v3901 = vld [vmem:[%s10 + $0x4a4] sm:$0xf]
      %v3902 = vld [vmem:[%s10 + $0x4a8] sm:$0xf]
      %v3903 = vld [vmem:[%s10 + $0x4ac] sm:$0xf]
      %v3904 = vld [vmem:[%s10 + $0x4b0] sm:$0xf]
      %v3905 = vld [vmem:[%s10 + $0x4b4] sm:$0xf]
      %v3906 = vld [vmem:[%s10 + $0x4b8] sm:$0xf]
      %v3907 = vld [vmem:[%s10 + $0x4bc] sm:$0xf]
      %v3908 = vld [vmem:[%s10 + $0x4c0] sm:$0xf]
      %v3909 = vld [vmem:[%s10 + $0x4c4] sm:$0xf]
      %v3910 = vld [vmem:[%s10 + $0x4c8] sm:$0xf]
      %v3911 = vld [vmem:[%s10 + $0x4cc] sm:$0xf]
      %v3912 = vld [vmem:[%s10 + $0x4d0] sm:$0xf]
      %v3913 = vld [vmem:[%s10 + $0x4d4] sm:$0xf]
      %v3914 = vld [vmem:[%s10 + $0x4d8] sm:$0xf]
      %v3915 = vld [vmem:[%s10 + $0x4dc] sm:$0xf]
      %v3916 = vld [vmem:[%s10 + $0x4e0] sm:$0xf]
      %v3917 = vld [vmem:[%s10 + $0x4e4] sm:$0xf]
      %v3918 = vld [vmem:[%s10 + $0x4e8] sm:$0xf]
      %v3919 = vld [vmem:[%s10 + $0x4ec] sm:$0xf]
      %v3920 = vld [vmem:[%s10 + $0x4f0] sm:$0xf]
      %v3921 = vld [vmem:[%s10 + $0x4f4] sm:$0xf]
      %v3922 = vld [vmem:[%s10 + $0x4f8] sm:$0xf]
      %v3923 = vld [vmem:[%s10 + $0x4fc] sm:$0xf]
      %v3924 = vld [vmem:[%s10 + $0x500] sm:$0xf]
      %v3925 = vld [vmem:[%s10 + $0x504] sm:$0xf]
      %v3926 = vld [vmem:[%s10 + $0x508] sm:$0xf]
      %v3927 = vld [vmem:[%s10 + $0x50c] sm:$0xf]
      %v3928 = vld [vmem:[%s10 + $0x510] sm:$0xf]
      %v3929 = vld [vmem:[%s10 + $0x514] sm:$0xf]
      %v3930 = vld [vmem:[%s10 + $0x518] sm:$0xf]
      %v3931 = vld [vmem:[%s10 + $0x51c] sm:$0xf]
      %v3932 = vld [vmem:[%s10 + $0x520] sm:$0xf]
      %v3933 = vld [vmem:[%s10 + $0x524] sm:$0xf]
      %v3934 = vld [vmem:[%s10 + $0x528] sm:$0xf]
      %v3935 = vld [vmem:[%s10 + $0x52c] sm:$0xf]
      %v3936 = vld [vmem:[%s10 + $0x530] sm:$0xf]
      %v3937 = vld [vmem:[%s10 + $0x534] sm:$0xf]
      %v3938 = vld [vmem:[%s10 + $0x538] sm:$0xf]
      %v3939 = vld [vmem:[%s10 + $0x53c] sm:$0xf]
      %v3940 = vld [vmem:[%s10 + $0x540] sm:$0xf]
      %v3941 = vld [vmem:[%s10 + $0x544] sm:$0xf]
      %v3942 = vld [vmem:[%s10 + $0x548] sm:$0xf]
      %v3943 = vld [vmem:[%s10 + $0x54c] sm:$0xf]
      %v3944 = vld [vmem:[%s10 + $0x550] sm:$0xf]
      %v3945 = vld [vmem:[%s10 + $0x554] sm:$0xf]
      %v3946 = vld [vmem:[%s10 + $0x558] sm:$0xf]
      %v3947 = vld [vmem:[%s10 + $0x55c] sm:$0xf]
      %v3948 = vld [vmem:[%s10 + $0x560] sm:$0xf]
      %v3949 = vld [vmem:[%s10 + $0x564] sm:$0xf]
      %v3950 = vld [vmem:[%s10 + $0x568] sm:$0xf]
      %v3951 = vld [vmem:[%s10 + $0x56c] sm:$0xf]
      %v3952 = vld [vmem:[%s10 + $0x570] sm:$0xf]
      %v3953 = vld [vmem:[%s10 + $0x574] sm:$0xf]
      %v3954 = vld [vmem:[%s10 + $0x578] sm:$0xf]
      %v3955 = vld [vmem:[%s10 + $0x57c] sm:$0xf]
      %v3956 = vld [vmem:[%s10 + $0x580] sm:$0xf]
      %v3957 = vld [vmem:[%s10 + $0x584] sm:$0xf]
      %v3958 = vld [vmem:[%s10 + $0x588] sm:$0xf]
      %v3959 = vld [vmem:[%s10 + $0x58c] sm:$0xf]
      %v3960 = vld [vmem:[%s10 + $0x590] sm:$0xf]
      %v3961 = vld [vmem:[%s10 + $0x594] sm:$0xf]
      %v3962 = vld [vmem:[%s10 + $0x598] sm:$0xf]
      %v3963 = vld [vmem:[%s10 + $0x59c] sm:$0xf]
      %v3964 = vld [vmem:[%s10 + $0x5a0] sm:$0xf]
      %v3965 = vld [vmem:[%s10 + $0x5a4] sm:$0xf]
      %v3966 = vld [vmem:[%s10 + $0x5a8] sm:$0xf]
      %v3967 = vld [vmem:[%s10 + $0x5ac] sm:$0xf]
      %v3968 = vld [vmem:[%s10 + $0x5b0] sm:$0xf]
      %v3969 = vld [vmem:[%s10 + $0x5b4] sm:$0xf]
      %v3970 = vld [vmem:[%s10 + $0x5b8] sm:$0xf]
      %v3971 = vld [vmem:[%s10 + $0x5bc] sm:$0xf]
      %v3972 = vld [vmem:[%s10 + $0x5c0] sm:$0xf]
      %v3973 = vld [vmem:[%s10 + $0x5c4] sm:$0xf]
      %v3974 = vld [vmem:[%s10 + $0x5c8] sm:$0xf]
      %v3975 = vld [vmem:[%s10 + $0x5cc] sm:$0xf]
      %v3976 = vld [vmem:[%s10 + $0x5d0] sm:$0xf]
      %v3977 = vld [vmem:[%s10 + $0x5d4] sm:$0xf]
      %v3978 = vld [vmem:[%s10 + $0x5d8] sm:$0xf]
      %v3979 = vld [vmem:[%s10 + $0x5dc] sm:$0xf]
      %v3980 = vld [vmem:[%s10 + $0x5e0] sm:$0xf]
      %v3981 = vld [vmem:[%s10 + $0x5e4] sm:$0xf]
      %v3982 = vld [vmem:[%s10 + $0x5e8] sm:$0xf]
      %v3983 = vld [vmem:[%s10 + $0x5ec] sm:$0xf]
      %v3984 = vld [vmem:[%s10 + $0x5f0] sm:$0xf]
      %v3985 = vld [vmem:[%s10 + $0x5f4] sm:$0xf]
      %v3986 = vld [vmem:[%s10 + $0x5f8] sm:$0xf]
      %v3987 = vld [vmem:[%s10 + $0x5fc] sm:$0xf]
      %v3988 = vld [vmem:[%s10 + $0x600] sm:$0xf]
      %v3989 = vld [vmem:[%s10 + $0x604] sm:$0xf]
      %v3990 = vld [vmem:[%s10 + $0x608] sm:$0xf]
      %v3991 = vld [vmem:[%s10 + $0x60c] sm:$0xf]
      %v3992 = vld [vmem:[%s10 + $0x610] sm:$0xf]
      %v3993 = vld [vmem:[%s10 + $0x614] sm:$0xf]
      %v3994 = vld [vmem:[%s10 + $0x618] sm:$0xf]
      %v3995 = vld [vmem:[%s10 + $0x61c] sm:$0xf]
      %v3996 = vld [vmem:[%s10 + $0x620] sm:$0xf]
      %v3997 = vld [vmem:[%s10 + $0x624] sm:$0xf]
      %v3998 = vld [vmem:[%s10 + $0x628] sm:$0xf]
      %v3999 = vld [vmem:[%s10 + $0x62c] sm:$0xf]
      %v4000 = vld [vmem:[%s10 + $0x630] sm:$0xf]
      %v4001 = vld [vmem:[%s10 + $0x634] sm:$0xf]
      %v4002 = vld [vmem:[%s10 + $0x638] sm:$0xf]
      %v4003 = vld [vmem:[%s10 + $0x63c] sm:$0xf]
      %v4004 = vld [vmem:[%s10 + $0x640] sm:$0xf]
      %v4005 = vld [vmem:[%s10 + $0x644] sm:$0xf]
      %v4006 = vld [vmem:[%s10 + $0x648] sm:$0xf]
      %v4007 = vld [vmem:[%s10 + $0x64c] sm:$0xf]
      %v4008 = vld [vmem:[%s10 + $0x650] sm:$0xf]
      %v4009 = vld [vmem:[%s10 + $0x654] sm:$0xf]
      %v4010 = vld [vmem:[%s10 + $0x658] sm:$0xf]
      %v4011 = vld [vmem:[%s10 + $0x65c] sm:$0xf]
      %v4012 = vld [vmem:[%s10 + $0x660] sm:$0xf]
      %v4013 = vld [vmem:[%s10 + $0x664] sm:$0xf]
      %v4014 = vld [vmem:[%s10 + $0x668] sm:$0xf]
      %v4015 = vld [vmem:[%s10 + $0x66c] sm:$0xf]
      %v4016 = vld [vmem:[%s10 + $0x670] sm:$0xf]
      %v4017 = vld [vmem:[%s10 + $0x674] sm:$0xf]
      %v4018 = vld [vmem:[%s10 + $0x678] sm:$0xf]
      %v4019 = vld [vmem:[%s10 + $0x67c] sm:$0xf]
      %v4020 = vld [vmem:[%s10 + $0x680] sm:$0xf]
      %v4021 = vld [vmem:[%s10 + $0x684] sm:$0xf]
      %v4022 = vld [vmem:[%s10 + $0x688] sm:$0xf]
      %v4023 = vld [vmem:[%s10 + $0x68c] sm:$0xf]
      %v4024 = vld [vmem:[%s10 + $0x690] sm:$0xf]
      %v4025 = vld [vmem:[%s10 + $0x694] sm:$0xf]
      %v4026 = vld [vmem:[%s10 + $0x698] sm:$0xf]
      %v4027 = vld [vmem:[%s10 + $0x69c] sm:$0xf]
      %v4028 = vld [vmem:[%s10 + $0x6a0] sm:$0xf]
      %v4029 = vld [vmem:[%s10 + $0x6a4] sm:$0xf]
      %v4030 = vld [vmem:[%s10 + $0x6a8] sm:$0xf]
      %v4031 = vld [vmem:[%s10 + $0x6ac] sm:$0xf]
      %v4032 = vld [vmem:[%s10 + $0x6b0] sm:$0xf]
      %v4033 = vld [vmem:[%s10 + $0x6b4] sm:$0xf]
      %v4034 = vld [vmem:[%s10 + $0x6b8] sm:$0xf]
      %v4035 = vld [vmem:[%s10 + $0x6bc] sm:$0xf]
      %v4036 = vld [vmem:[%s10 + $0x6c0] sm:$0xf]
      %v4037 = vld [vmem:[%s10 + $0x6c4] sm:$0xf]
      %v4038 = vld [vmem:[%s10 + $0x6c8] sm:$0xf]
      %v4039 = vld [vmem:[%s10 + $0x6cc] sm:$0xf]
      %v4040 = vld [vmem:[%s10 + $0x6d0] sm:$0xf]
      %v4041 = vld [vmem:[%s10 + $0x6d4] sm:$0xf]
      %v4042 = vld [vmem:[%s10 + $0x6d8] sm:$0xf]
      %v4043 = vld [vmem:[%s10 + $0x6dc] sm:$0xf]
      %v4044 = vld [vmem:[%s10 + $0x6e0] sm:$0xf]
      %v4045 = vld [vmem:[%s10 + $0x6e4] sm:$0xf]
      %v4046 = vld [vmem:[%s10 + $0x6e8] sm:$0xf]
      %v4047 = vld [vmem:[%s10 + $0x6ec] sm:$0xf]
      %v4048 = vld [vmem:[%s10 + $0x6f0] sm:$0xf]
      %v4049 = vld [vmem:[%s10 + $0x6f4] sm:$0xf]
      %v4050 = vld [vmem:[%s10 + $0x6f8] sm:$0xf]
      %v4051 = vld [vmem:[%s10 + $0x6fc] sm:$0xf]
      %v4052 = vld [vmem:[%s10 + $0x700] sm:$0xf]
      %v4053 = vld [vmem:[%s10 + $0x704] sm:$0xf]
      %v4054 = vld [vmem:[%s10 + $0x708] sm:$0x7]
      %v4055 = vpack.c.bf16 %v3598, %v3596
      %v4056 = vpack.c.bf16 %v3599, %v3597
      %v4057 = vpack.c.bf16 %v3602, %v3600
      %v4058 = vpack.c.bf16 %v3603, %v3601
      %v4510 = vunpack.c.l.b16 %v3604
      %v4511 = vunpack.c.l.b16 %v3605
      %v4512 = vunpack.c.l.b16 %v3606
      %v4513 = vunpack.c.l.b16 %v3607
      %v4514 = vunpack.c.l.b16 %v3608
      %v4515 = vunpack.c.l.b16 %v3609
      %v4516 = vunpack.c.l.b16 %v3610
      %v4517 = vunpack.c.l.b16 %v3611
      %v4518 = vunpack.c.l.b16 %v3612
      %v4519 = vunpack.c.l.b16 %v3613
      %v4520 = vunpack.c.l.b16 %v3614
      %v4521 = vunpack.c.l.b16 %v3615
      %v4522 = vunpack.c.l.b16 %v3616
      %v4523 = vunpack.c.l.b16 %v3617
      %v4524 = vunpack.c.l.b16 %v3618
      %v4525 = vunpack.c.l.b16 %v3619
      %v4526 = vunpack.c.l.b16 %v3620
      %v4527 = vunpack.c.l.b16 %v3621
      %v4528 = vunpack.c.l.b16 %v3622
      %v4529 = vunpack.c.l.b16 %v3623
      %v4530 = vunpack.c.l.b16 %v3624
      %v4531 = vunpack.c.l.b16 %v3625
      %v4532 = vunpack.c.l.b16 %v3626
      %v4533 = vunpack.c.l.b16 %v3627
      %v4534 = vunpack.c.l.b16 %v3628
      %v4535 = vunpack.c.l.b16 %v3629
      %v4536 = vunpack.c.l.b16 %v3630
      %v4537 = vunpack.c.l.b16 %v3631
      %v4538 = vunpack.c.l.b16 %v3632
      %v4539 = vunpack.c.l.b16 %v3633
      %v4540 = vunpack.c.l.b16 %v3634
      %v4541 = vunpack.c.l.b16 %v3635
      %v4542 = vunpack.c.l.b16 %v3636
      %v4543 = vunpack.c.l.b16 %v3637
      %v4544 = vunpack.c.l.b16 %v3638
      %v4545 = vunpack.c.l.b16 %v3639
      %v4546 = vunpack.c.l.b16 %v3640
      %v4547 = vunpack.c.l.b16 %v3641
      %v4548 = vunpack.c.l.b16 %v3642
      %v4549 = vunpack.c.l.b16 %v3643
      %v4550 = vunpack.c.l.b16 %v3644
      %v4551 = vunpack.c.l.b16 %v3645
      %v4552 = vunpack.c.l.b16 %v3646
      %v4553 = vunpack.c.l.b16 %v3647
      %v4554 = vunpack.c.l.b16 %v3648
      %v4555 = vunpack.c.l.b16 %v3649
      %v4556 = vunpack.c.l.b16 %v3650
      %v4557 = vunpack.c.l.b16 %v3651
      %v4558 = vunpack.c.l.b16 %v3652
      %v4559 = vunpack.c.l.b16 %v3653
      %v4560 = vunpack.c.l.b16 %v3654
      %v4561 = vunpack.c.l.b16 %v3655
      %v4562 = vunpack.c.l.b16 %v3656
      %v4563 = vunpack.c.l.b16 %v3657
      %v4564 = vunpack.c.l.b16 %v3658
      %v4565 = vunpack.c.l.b16 %v3659
      %v4566 = vunpack.c.l.b16 %v3660
      %v4567 = vunpack.c.l.b16 %v3661
      %v4568 = vunpack.c.l.b16 %v3662
      %v4569 = vunpack.c.l.b16 %v3663
      %v4570 = vunpack.c.l.b16 %v3664
      %v4571 = vunpack.c.l.b16 %v3665
      %v4572 = vunpack.c.l.b16 %v3666
      %v4573 = vunpack.c.l.b16 %v3667
      %v4574 = vunpack.c.l.b16 %v3668
      %v4575 = vunpack.c.l.b16 %v3669
      %v4576 = vunpack.c.l.b16 %v3670
      %v4577 = vunpack.c.l.b16 %v3671
      %v4578 = vunpack.c.l.b16 %v3672
      %v4579 = vunpack.c.l.b16 %v3673
      %v4580 = vunpack.c.l.b16 %v3674
      %v4581 = vunpack.c.l.b16 %v3675
      %v4582 = vunpack.c.l.b16 %v3676
      %v4583 = vunpack.c.l.b16 %v3677
      %v4584 = vunpack.c.l.b16 %v3678
      %v4585 = vunpack.c.l.b16 %v3679
      %v4586 = vunpack.c.l.b16 %v3680
      %v4587 = vunpack.c.l.b16 %v3681
      %v4588 = vunpack.c.l.b16 %v3682
      %v4589 = vunpack.c.l.b16 %v3683
      %v4590 = vunpack.c.l.b16 %v3684
      %v4591 = vunpack.c.l.b16 %v3685
      %v4592 = vunpack.c.l.b16 %v3686
      %v4593 = vunpack.c.l.b16 %v3687
      %v4594 = vunpack.c.l.b16 %v3688
      %v4595 = vunpack.c.l.b16 %v3689
      %v4596 = vunpack.c.l.b16 %v3690
      %v4597 = vunpack.c.l.b16 %v3691
      %v4598 = vunpack.c.l.b16 %v3692
      %v4599 = vunpack.c.l.b16 %v3693
      %v4600 = vunpack.c.l.b16 %v3694
      %v4601 = vunpack.c.l.b16 %v3695
      %v4602 = vunpack.c.l.b16 %v3696
      %v4603 = vunpack.c.l.b16 %v3697
      %v4604 = vunpack.c.l.b16 %v3698
      %v4605 = vunpack.c.l.b16 %v3699
      %v4606 = vunpack.c.l.b16 %v3700
      %v4607 = vunpack.c.l.b16 %v3701
      %v4608 = vunpack.c.l.b16 %v3702
      %v4609 = vunpack.c.l.b16 %v3703
      %v4610 = vunpack.c.l.b16 %v3704
      %v4611 = vunpack.c.l.b16 %v3705
      %v4612 = vunpack.c.l.b16 %v3706
      %v4613 = vunpack.c.l.b16 %v3707
      %v4614 = vunpack.c.l.b16 %v3708
      %v4615 = vunpack.c.l.b16 %v3709
      %v4616 = vunpack.c.l.b16 %v3710
      %v4617 = vunpack.c.l.b16 %v3711
      %v4618 = vunpack.c.l.b16 %v3712
      %v4619 = vunpack.c.l.b16 %v3713
      %v4620 = vunpack.c.l.b16 %v3714
      %v4621 = vunpack.c.l.b16 %v3715
      %v4622 = vunpack.c.l.b16 %v3716
      %v4623 = vunpack.c.l.b16 %v3717
      %v4624 = vunpack.c.l.b16 %v3718
      %v4625 = vunpack.c.l.b16 %v3719
      %v4626 = vunpack.c.l.b16 %v3720
      %v4627 = vunpack.c.l.b16 %v3721
      %v4628 = vunpack.c.l.b16 %v3722
      %v4629 = vunpack.c.l.b16 %v3723
      %v4630 = vunpack.c.l.b16 %v3724
      %v4631 = vunpack.c.l.b16 %v3725
      %v4632 = vunpack.c.l.b16 %v3726
      %v4633 = vunpack.c.l.b16 %v3727
      %v4634 = vunpack.c.l.b16 %v3728
      %v4635 = vunpack.c.l.b16 %v3729
      %v4636 = vunpack.c.l.b16 %v3730
      %v4637 = vunpack.c.l.b16 %v3731
      %v4638 = vunpack.c.l.b16 %v3732
      %v4639 = vunpack.c.l.b16 %v3733
      %v4640 = vunpack.c.l.b16 %v3734
      %v4641 = vunpack.c.l.b16 %v3735
      %v4642 = vunpack.c.l.b16 %v3736
      %v4643 = vunpack.c.l.b16 %v3737
      %v4644 = vunpack.c.l.b16 %v3738
      %v4645 = vunpack.c.l.b16 %v3739
      %v4646 = vunpack.c.l.b16 %v3740
      %v4647 = vunpack.c.l.b16 %v3741
      %v4648 = vunpack.c.l.b16 %v3742
      %v4649 = vunpack.c.l.b16 %v3743
      %v4650 = vunpack.c.l.b16 %v3744
      %v4651 = vunpack.c.l.b16 %v3745
      %v4652 = vunpack.c.l.b16 %v3746
      %v4653 = vunpack.c.l.b16 %v3747
      %v4654 = vunpack.c.l.b16 %v3748
      %v4655 = vunpack.c.l.b16 %v3749
      %v4656 = vunpack.c.l.b16 %v3750
      %v4657 = vunpack.c.l.b16 %v3751
      %v4658 = vunpack.c.l.b16 %v3752
      %v4659 = vunpack.c.l.b16 %v3753
      %v4660 = vunpack.c.l.b16 %v3754
      %v4661 = vunpack.c.l.b16 %v3755
      %v4662 = vunpack.c.l.b16 %v3756
      %v4663 = vunpack.c.l.b16 %v3757
      %v4664 = vunpack.c.l.b16 %v3758
      %v4665 = vunpack.c.l.b16 %v3759
      %v4666 = vunpack.c.l.b16 %v3760
      %v4667 = vunpack.c.l.b16 %v3761
      %v4668 = vunpack.c.l.b16 %v3762
      %v4669 = vunpack.c.l.b16 %v3763
      %v4670 = vunpack.c.l.b16 %v3764
      %v4671 = vunpack.c.l.b16 %v3765
      %v4672 = vunpack.c.l.b16 %v3766
      %v4673 = vunpack.c.l.b16 %v3767
      %v4674 = vunpack.c.l.b16 %v3768
      %v4675 = vunpack.c.l.b16 %v3769
      %v4676 = vunpack.c.l.b16 %v3770
      %v4677 = vunpack.c.l.b16 %v3771
      %v4678 = vunpack.c.l.b16 %v3772
      %v4679 = vunpack.c.l.b16 %v3773
      %v4680 = vunpack.c.l.b16 %v3774
      %v4681 = vunpack.c.l.b16 %v3775
      %v4682 = vunpack.c.l.b16 %v3776
      %v4683 = vunpack.c.l.b16 %v3777
      %v4684 = vunpack.c.l.b16 %v3778
      %v4685 = vunpack.c.l.b16 %v3779
      %v4686 = vunpack.c.l.b16 %v3780
      %v4687 = vunpack.c.l.b16 %v3781
      %v4688 = vunpack.c.l.b16 %v3782
      %v4689 = vunpack.c.l.b16 %v3783
      %v4690 = vunpack.c.l.b16 %v3784
      %v4691 = vunpack.c.l.b16 %v3785
      %v4692 = vunpack.c.l.b16 %v3786
      %v4693 = vunpack.c.l.b16 %v3787
      %v4694 = vunpack.c.l.b16 %v3788
      %v4695 = vunpack.c.l.b16 %v3789
      %v4696 = vunpack.c.l.b16 %v3790
      %v4697 = vunpack.c.l.b16 %v3791
      %v4698 = vunpack.c.l.b16 %v3792
      %v4699 = vunpack.c.l.b16 %v3793
      %v4700 = vunpack.c.l.b16 %v3794
      %v4701 = vunpack.c.l.b16 %v3795
      %v4702 = vunpack.c.l.b16 %v3796
      %v4703 = vunpack.c.l.b16 %v3797
      %v4704 = vunpack.c.l.b16 %v3798
      %v4705 = vunpack.c.l.b16 %v3799
      %v4706 = vunpack.c.l.b16 %v3800
      %v4707 = vunpack.c.l.b16 %v3801
      %v4708 = vunpack.c.l.b16 %v3802
      %v4709 = vunpack.c.l.b16 %v3803
      %v4710 = vunpack.c.l.b16 %v3804
      %v4711 = vunpack.c.l.b16 %v3805
      %v4712 = vunpack.c.l.b16 %v3806
      %v4713 = vunpack.c.l.b16 %v3807
      %v4714 = vunpack.c.l.b16 %v3808
      %v4715 = vunpack.c.l.b16 %v3809
      %v4716 = vunpack.c.l.b16 %v3810
      %v4717 = vunpack.c.l.b16 %v3811
      %v4718 = vunpack.c.l.b16 %v3812
      %v4719 = vunpack.c.l.b16 %v3813
      %v4720 = vunpack.c.l.b16 %v3814
      %v4721 = vunpack.c.l.b16 %v3815
      %v4722 = vunpack.c.l.b16 %v3816
      %v4723 = vunpack.c.l.b16 %v3817
      %v4724 = vunpack.c.l.b16 %v3818
      %v4725 = vunpack.c.l.b16 %v3819
      %v4726 = vunpack.c.l.b16 %v3820
      %v4727 = vunpack.c.l.b16 %v3821
      %v4728 = vunpack.c.l.b16 %v3822
      %v4729 = vunpack.c.l.b16 %v3823
      %v4730 = vunpack.c.l.b16 %v3824
      %v4731 = vunpack.c.l.b16 %v3825
      %v4732 = vunpack.c.l.b16 %v3826
      %v4733 = vunpack.c.l.b16 %v3827
      %v4734 = vunpack.c.l.b16 %v3828
      %v4735 = vunpack.c.l.b16 %v3829
      %v4736 = vunpack.c.l.b16 %v3830
      %v4737 = vunpack.c.l.b16 %v3831
      %v4738 = vunpack.c.l.b16 %v3832
      %v4739 = vunpack.c.l.b16 %v3833
      %v4740 = vunpack.c.l.b16 %v3834
      %v4741 = vunpack.c.l.b16 %v3835
      %v4742 = vunpack.c.l.b16 %v3836
      %v4743 = vunpack.c.l.b16 %v3837
      %v4744 = vunpack.c.l.b16 %v3838
      %v4745 = vunpack.c.l.b16 %v3839
      %v4746 = vunpack.c.l.b16 %v3840
      %v4747 = vunpack.c.l.b16 %v3841
      %v4748 = vunpack.c.l.b16 %v3842
      %v4749 = vunpack.c.l.b16 %v3843
      %v4750 = vunpack.c.l.b16 %v3844
      %v4751 = vunpack.c.l.b16 %v3845
      %v4752 = vunpack.c.l.b16 %v3846
      %v4753 = vunpack.c.l.b16 %v3847
      %v4754 = vunpack.c.l.b16 %v3848
      %v4755 = vunpack.c.l.b16 %v3849
      %v4756 = vunpack.c.l.b16 %v3850
      %v4757 = vunpack.c.l.b16 %v3851
      %v4758 = vunpack.c.l.b16 %v3852
      %v4759 = vunpack.c.l.b16 %v3853
      %v4760 = vunpack.c.l.b16 %v3854
      %v4761 = vunpack.c.l.b16 %v3855
      %v4762 = vunpack.c.l.b16 %v3856
      %v4763 = vunpack.c.l.b16 %v3857
      %v4764 = vunpack.c.l.b16 %v3858
      %v4765 = vunpack.c.l.b16 %v3859
      %v4766 = vunpack.c.l.b16 %v3860
      %v4767 = vunpack.c.l.b16 %v3861
      %v4768 = vunpack.c.l.b16 %v3862
      %v4769 = vunpack.c.l.b16 %v3863
      %v4770 = vunpack.c.l.b16 %v3864
      %v4771 = vunpack.c.l.b16 %v3865
      %v4772 = vunpack.c.l.b16 %v3866
      %v4773 = vunpack.c.l.b16 %v3867
      %v4774 = vunpack.c.l.b16 %v3868
      %v4775 = vunpack.c.l.b16 %v3869
      %v4776 = vunpack.c.l.b16 %v3870
      %v4777 = vunpack.c.l.b16 %v3871
      %v4778 = vunpack.c.l.b16 %v3872
      %v4779 = vunpack.c.l.b16 %v3873
      %v4780 = vunpack.c.l.b16 %v3874
      %v4781 = vunpack.c.l.b16 %v3875
      %v4782 = vunpack.c.l.b16 %v3876
      %v4783 = vunpack.c.l.b16 %v3877
      %v4784 = vunpack.c.l.b16 %v3878
      %v4785 = vunpack.c.l.b16 %v3879
      %v4786 = vunpack.c.l.b16 %v3880
      %v4787 = vunpack.c.l.b16 %v3881
      %v4788 = vunpack.c.l.b16 %v3882
      %v4789 = vunpack.c.l.b16 %v3883
      %v4790 = vunpack.c.l.b16 %v3884
      %v4791 = vunpack.c.l.b16 %v3885
      %v4792 = vunpack.c.l.b16 %v3886
      %v4793 = vunpack.c.l.b16 %v3887
      %v4794 = vunpack.c.l.b16 %v3888
      %v4795 = vunpack.c.l.b16 %v3889
      %v4796 = vunpack.c.l.b16 %v3890
      %v4797 = vunpack.c.l.b16 %v3891
      %v4798 = vunpack.c.l.b16 %v3892
      %v4799 = vunpack.c.l.b16 %v3893
      %v4800 = vunpack.c.l.b16 %v3894
      %v4801 = vunpack.c.l.b16 %v3895
      %v4802 = vunpack.c.l.b16 %v3896
      %v4803 = vunpack.c.l.b16 %v3897
      %v4804 = vunpack.c.l.b16 %v3898
      %v4805 = vunpack.c.l.b16 %v3899
      %v4806 = vunpack.c.l.b16 %v3900
      %v4807 = vunpack.c.l.b16 %v3901
      %v4808 = vunpack.c.l.b16 %v3902
      %v4809 = vunpack.c.l.b16 %v3903
      %v4810 = vunpack.c.l.b16 %v3904
      %v4811 = vunpack.c.l.b16 %v3905
      %v4812 = vunpack.c.l.b16 %v3906
      %v4813 = vunpack.c.l.b16 %v3907
      %v4814 = vunpack.c.l.b16 %v3908
      %v4815 = vunpack.c.l.b16 %v3909
      %v4816 = vunpack.c.l.b16 %v3910
      %v4817 = vunpack.c.l.b16 %v3911
      %v4818 = vunpack.c.l.b16 %v3912
      %v4819 = vunpack.c.l.b16 %v3913
      %v4820 = vunpack.c.l.b16 %v3914
      %v4821 = vunpack.c.l.b16 %v3915
      %v4822 = vunpack.c.l.b16 %v3916
      %v4823 = vunpack.c.l.b16 %v3917
      %v4824 = vunpack.c.l.b16 %v3918
      %v4825 = vunpack.c.l.b16 %v3919
      %v4826 = vunpack.c.l.b16 %v3920
      %v4827 = vunpack.c.l.b16 %v3921
      %v4828 = vunpack.c.l.b16 %v3922
      %v4829 = vunpack.c.l.b16 %v3923
      %v4830 = vunpack.c.l.b16 %v3924
      %v4831 = vunpack.c.l.b16 %v3925
      %v4832 = vunpack.c.l.b16 %v3926
      %v4833 = vunpack.c.l.b16 %v3927
      %v4834 = vunpack.c.l.b16 %v3928
      %v4835 = vunpack.c.l.b16 %v3929
      %v4836 = vunpack.c.l.b16 %v3930
      %v4837 = vunpack.c.l.b16 %v3931
      %v4838 = vunpack.c.l.b16 %v3932
      %v4839 = vunpack.c.l.b16 %v3933
      %v4840 = vunpack.c.l.b16 %v3934
      %v4841 = vunpack.c.l.b16 %v3935
      %v4842 = vunpack.c.l.b16 %v3936
      %v4843 = vunpack.c.l.b16 %v3937
      %v4844 = vunpack.c.l.b16 %v3938
      %v4845 = vunpack.c.l.b16 %v3939
      %v4846 = vunpack.c.l.b16 %v3940
      %v4847 = vunpack.c.l.b16 %v3941
      %v4848 = vunpack.c.l.b16 %v3942
      %v4849 = vunpack.c.l.b16 %v3943
      %v4850 = vunpack.c.l.b16 %v3944
      %v4851 = vunpack.c.l.b16 %v3945
      %v4852 = vunpack.c.l.b16 %v3946
      %v4853 = vunpack.c.l.b16 %v3947
      %v4854 = vunpack.c.l.b16 %v3948
      %v4855 = vunpack.c.l.b16 %v3949
      %v4856 = vunpack.c.l.b16 %v3950
      %v4857 = vunpack.c.l.b16 %v3951
      %v4858 = vunpack.c.l.b16 %v3952
      %v4859 = vunpack.c.l.b16 %v3953
      %v4860 = vunpack.c.l.b16 %v3954
      %v4861 = vunpack.c.l.b16 %v3955
      %v4862 = vunpack.c.l.b16 %v3956
      %v4863 = vunpack.c.l.b16 %v3957
      %v4864 = vunpack.c.l.b16 %v3958
      %v4865 = vunpack.c.l.b16 %v3959
      %v4866 = vunpack.c.l.b16 %v3960
      %v4867 = vunpack.c.l.b16 %v3961
      %v4868 = vunpack.c.l.b16 %v3962
      %v4869 = vunpack.c.l.b16 %v3963
      %v4870 = vunpack.c.l.b16 %v3964
      %v4871 = vunpack.c.l.b16 %v3965
      %v4872 = vunpack.c.l.b16 %v3966
      %v4873 = vunpack.c.l.b16 %v3967
      %v4874 = vunpack.c.l.b16 %v3968
      %v4875 = vunpack.c.l.b16 %v3969
      %v4876 = vunpack.c.l.b16 %v3970
      %v4877 = vunpack.c.l.b16 %v3971
      %v4878 = vunpack.c.l.b16 %v3972
      %v4879 = vunpack.c.l.b16 %v3973
      %v4880 = vunpack.c.l.b16 %v3974
      %v4881 = vunpack.c.l.b16 %v3975
      %v4882 = vunpack.c.l.b16 %v3976
      %v4883 = vunpack.c.l.b16 %v3977
      %v4884 = vunpack.c.l.b16 %v3978
      %v4885 = vunpack.c.l.b16 %v3979
      %v4886 = vunpack.c.l.b16 %v3980
      %v4887 = vunpack.c.l.b16 %v3981
      %v4888 = vunpack.c.l.b16 %v3982
      %v4889 = vunpack.c.l.b16 %v3983
      %v4890 = vunpack.c.l.b16 %v3984
      %v4891 = vunpack.c.l.b16 %v3985
      %v4892 = vunpack.c.l.b16 %v3986
      %v4893 = vunpack.c.l.b16 %v3987
      %v4894 = vunpack.c.l.b16 %v3988
      %v4895 = vunpack.c.l.b16 %v3989
      %v4896 = vunpack.c.l.b16 %v3990
      %v4897 = vunpack.c.l.b16 %v3991
      %v4898 = vunpack.c.l.b16 %v3992
      %v4899 = vunpack.c.l.b16 %v3993
      %v4900 = vunpack.c.l.b16 %v3994
      %v4901 = vunpack.c.l.b16 %v3995
      %v4902 = vunpack.c.l.b16 %v3996
      %v4903 = vunpack.c.l.b16 %v3997
      %v4904 = vunpack.c.l.b16 %v3998
      %v4905 = vunpack.c.l.b16 %v3999
      %v4906 = vunpack.c.l.b16 %v4000
      %v4907 = vunpack.c.l.b16 %v4001
      %v4908 = vunpack.c.l.b16 %v4002
      %v4909 = vunpack.c.l.b16 %v4003
      %v4910 = vunpack.c.l.b16 %v4004
      %v4911 = vunpack.c.l.b16 %v4005
      %v4912 = vunpack.c.l.b16 %v4006
      %v4913 = vunpack.c.l.b16 %v4007
      %v4914 = vunpack.c.l.b16 %v4008
      %v4915 = vunpack.c.l.b16 %v4009
      %v4916 = vunpack.c.l.b16 %v4010
      %v4917 = vunpack.c.l.b16 %v4011
      %v4918 = vunpack.c.l.b16 %v4012
      %v4919 = vunpack.c.l.b16 %v4013
      %v4920 = vunpack.c.l.b16 %v4014
      %v4921 = vunpack.c.l.b16 %v4015
      %v4922 = vunpack.c.l.b16 %v4016
      %v4923 = vunpack.c.l.b16 %v4017
      %v4924 = vunpack.c.l.b16 %v4018
      %v4925 = vunpack.c.l.b16 %v4019
      %v4926 = vunpack.c.l.b16 %v4020
      %v4927 = vunpack.c.l.b16 %v4021
      %v4928 = vunpack.c.l.b16 %v4022
      %v4929 = vunpack.c.l.b16 %v4023
      %v4930 = vunpack.c.l.b16 %v4024
      %v4931 = vunpack.c.l.b16 %v4025
      %v4932 = vunpack.c.l.b16 %v4026
      %v4933 = vunpack.c.l.b16 %v4027
      %v4934 = vunpack.c.l.b16 %v4028
      %v4935 = vunpack.c.l.b16 %v4029
      %v4936 = vunpack.c.l.b16 %v4030
      %v4937 = vunpack.c.l.b16 %v4031
      %v4938 = vunpack.c.l.b16 %v4032
      %v4939 = vunpack.c.l.b16 %v4033
      %v4940 = vunpack.c.l.b16 %v4034
      %v4941 = vunpack.c.l.b16 %v4035
      %v4942 = vunpack.c.l.b16 %v4036
      %v4943 = vunpack.c.l.b16 %v4037
      %v4944 = vunpack.c.l.b16 %v4038
      %v4945 = vunpack.c.l.b16 %v4039
      %v4946 = vunpack.c.l.b16 %v4040
      %v4947 = vunpack.c.l.b16 %v4041
      %v4948 = vunpack.c.l.b16 %v4042
      %v4949 = vunpack.c.l.b16 %v4043
      %v4950 = vunpack.c.l.b16 %v4044
      %v4951 = vunpack.c.l.b16 %v4045
      %v4952 = vunpack.c.l.b16 %v4046
      %v4953 = vunpack.c.l.b16 %v4047
      %v4954 = vunpack.c.l.b16 %v4048
      %v4955 = vunpack.c.l.b16 %v4049
      %v4956 = vunpack.c.l.b16 %v4050
      %v4957 = vunpack.c.l.b16 %v4051
      %v4958 = vunpack.c.l.b16 %v4052
      %v4959 = vunpack.c.l.b16 %v4053
      %v4960 = vunpack.c.l.b16 %v4054
      %v4961 = vpack.c.b16 %v4511, %v4510
      %v4962 = vpack.c.b16 %v4513, %v4512
      %v4963 = vpack.c.b16 %v4515, %v4514
      %v4964 = vpack.c.b16 %v4517, %v4516
      %v4965 = vpack.c.b16 %v4519, %v4518
      %v4966 = vpack.c.b16 %v4521, %v4520
      %v4967 = vpack.c.b16 %v4523, %v4522
      %v4968 = vpack.c.b16 %v4525, %v4524
      %v4969 = vpack.c.b16 %v4527, %v4526
      %v4970 = vpack.c.b16 %v4529, %v4528
      %v4971 = vpack.c.b16 %v4531, %v4530
      %v4972 = vpack.c.b16 %v4533, %v4532
      %v4973 = vpack.c.b16 %v4535, %v4534
      %v4974 = vpack.c.b16 %v4537, %v4536
      %v4975 = vpack.c.b16 %v4539, %v4538
      %v4976 = vpack.c.b16 %v4541, %v4540
      %v4977 = vpack.c.b16 %v4543, %v4542
      %v4978 = vpack.c.b16 %v4545, %v4544
      %v4979 = vpack.c.b16 %v4547, %v4546
      %v4980 = vpack.c.b16 %v4549, %v4548
      %v4981 = vpack.c.b16 %v4551, %v4550
      %v4982 = vpack.c.b16 %v4553, %v4552
      %v4983 = vpack.c.b16 %v4555, %v4554
      %v4984 = vpack.c.b16 %v4557, %v4556
      %v4985 = vpack.c.b16 %v4559, %v4558
      %v4986 = vpack.c.b16 %v4561, %v4560
      %v4987 = vpack.c.b16 %v4563, %v4562
      %v4988 = vpack.c.b16 %v4565, %v4564
      %v4989 = vpack.c.b16 %v4567, %v4566
      %v4990 = vpack.c.b16 %v4569, %v4568
      %v4991 = vpack.c.b16 %v4571, %v4570
      %v4992 = vpack.c.b16 %v4573, %v4572
      %v4993 = vpack.c.b16 %v4575, %v4574
      %v4994 = vpack.c.b16 %v4577, %v4576
      %v4995 = vpack.c.b16 %v4579, %v4578
      %v4996 = vpack.c.b16 %v4581, %v4580
      %v4997 = vpack.c.b16 %v4583, %v4582
      %v4998 = vpack.c.b16 %v4585, %v4584
      %v4999 = vpack.c.b16 %v4587, %v4586
      %v5000 = vpack.c.b16 %v4589, %v4588
      %v5001 = vpack.c.b16 %v4591, %v4590
      %v5002 = vpack.c.b16 %v4593, %v4592
      %v5003 = vpack.c.b16 %v4595, %v4594
      %v5004 = vpack.c.b16 %v4597, %v4596
      %v5005 = vpack.c.b16 %v4599, %v4598
      %v5006 = vpack.c.b16 %v4601, %v4600
      %v5007 = vpack.c.b16 %v4603, %v4602
      %v5008 = vpack.c.b16 %v4605, %v4604
      %v5009 = vpack.c.b16 %v4607, %v4606
      %v5010 = vpack.c.b16 %v4609, %v4608
      %v5011 = vpack.c.b16 %v4611, %v4610
      %v5012 = vpack.c.b16 %v4613, %v4612
      %v5013 = vpack.c.b16 %v4615, %v4614
      %v5014 = vpack.c.b16 %v4617, %v4616
      %v5015 = vpack.c.b16 %v4619, %v4618
      %v5016 = vpack.c.b16 %v4621, %v4620
      %v5017 = vpack.c.b16 %v4623, %v4622
      %v5018 = vpack.c.b16 %v4625, %v4624
      %v5019 = vpack.c.b16 %v4627, %v4626
      %v5020 = vpack.c.b16 %v4629, %v4628
      %v5021 = vpack.c.b16 %v4631, %v4630
      %v5022 = vpack.c.b16 %v4633, %v4632
      %v5023 = vpack.c.b16 %v4635, %v4634
      %v5024 = vpack.c.b16 %v4637, %v4636
      %v5025 = vpack.c.b16 %v4639, %v4638
      %v5026 = vpack.c.b16 %v4641, %v4640
      %v5027 = vpack.c.b16 %v4643, %v4642
      %v5028 = vpack.c.b16 %v4645, %v4644
      %v5029 = vpack.c.b16 %v4647, %v4646
      %v5030 = vpack.c.b16 %v4649, %v4648
      %v5031 = vpack.c.b16 %v4651, %v4650
      %v5032 = vpack.c.b16 %v4653, %v4652
      %v5033 = vpack.c.b16 %v4655, %v4654
      %v5034 = vpack.c.b16 %v4657, %v4656
      %v5035 = vpack.c.b16 %v4659, %v4658
      %v5036 = vpack.c.b16 %v4661, %v4660
      %v5037 = vpack.c.b16 %v4663, %v4662
      %v5038 = vpack.c.b16 %v4665, %v4664
      %v5039 = vpack.c.b16 %v4667, %v4666
      %v5040 = vpack.c.b16 %v4669, %v4668
      %v5041 = vpack.c.b16 %v4671, %v4670
      %v5042 = vpack.c.b16 %v4673, %v4672
      %v5043 = vpack.c.b16 %v4675, %v4674
      %v5044 = vpack.c.b16 %v4677, %v4676
      %v5045 = vpack.c.b16 %v4679, %v4678
      %v5046 = vpack.c.b16 %v4681, %v4680
      %v5047 = vpack.c.b16 %v4683, %v4682
      %v5048 = vpack.c.b16 %v4685, %v4684
      %v5049 = vpack.c.b16 %v4687, %v4686
      %v5050 = vpack.c.b16 %v4689, %v4688
      %v5051 = vpack.c.b16 %v4691, %v4690
      %v5052 = vpack.c.b16 %v4693, %v4692
      %v5053 = vpack.c.b16 %v4695, %v4694
      %v5054 = vpack.c.b16 %v4697, %v4696
      %v5055 = vpack.c.b16 %v4699, %v4698
      %v5056 = vpack.c.b16 %v4701, %v4700
      %v5057 = vpack.c.b16 %v4703, %v4702
      %v5058 = vpack.c.b16 %v4705, %v4704
      %v5059 = vpack.c.b16 %v4707, %v4706
      %v5060 = vpack.c.b16 %v4709, %v4708
      %v5061 = vpack.c.b16 %v4711, %v4710
      %v5062 = vpack.c.b16 %v4713, %v4712
      %v5063 = vpack.c.b16 %v4715, %v4714
      %v5064 = vpack.c.b16 %v4717, %v4716
      %v5065 = vpack.c.b16 %v4719, %v4718
      %v5066 = vpack.c.b16 %v4721, %v4720
      %v5067 = vpack.c.b16 %v4723, %v4722
      %v5068 = vpack.c.b16 %v4725, %v4724
      %v5069 = vpack.c.b16 %v4727, %v4726
      %v5070 = vpack.c.b16 %v4729, %v4728
      %v5071 = vpack.c.b16 %v4731, %v4730
      %v5072 = vpack.c.b16 %v4733, %v4732
      %v5073 = vpack.c.b16 %v4735, %v4734
      %v5074 = vpack.c.b16 %v4737, %v4736
      %v5075 = vpack.c.b16 %v4739, %v4738
      %v5076 = vpack.c.b16 %v4741, %v4740
      %v5077 = vpack.c.b16 %v4743, %v4742
      %v5078 = vpack.c.b16 %v4745, %v4744
      %v5079 = vpack.c.b16 %v4747, %v4746
      %v5080 = vpack.c.b16 %v4749, %v4748
      %v5081 = vpack.c.b16 %v4751, %v4750
      %v5082 = vpack.c.b16 %v4753, %v4752
      %v5083 = vpack.c.b16 %v4755, %v4754
      %v5084 = vpack.c.b16 %v4757, %v4756
      %v5085 = vpack.c.b16 %v4759, %v4758
      %v5086 = vpack.c.b16 %v4761, %v4760
      %v5087 = vpack.c.b16 %v4763, %v4762
      %v5088 = vpack.c.b16 %v4765, %v4764
      %v5089 = vpack.c.b16 %v4767, %v4766
      %v5090 = vpack.c.b16 %v4769, %v4768
      %v5091 = vpack.c.b16 %v4771, %v4770
      %v5092 = vpack.c.b16 %v4773, %v4772
      %v5093 = vpack.c.b16 %v4775, %v4774
      %v5094 = vpack.c.b16 %v4777, %v4776
      %v5095 = vpack.c.b16 %v4779, %v4778
      %v5096 = vpack.c.b16 %v4781, %v4780
      %v5097 = vpack.c.b16 %v4783, %v4782
      %v5098 = vpack.c.b16 %v4785, %v4784
      %v5099 = vpack.c.b16 %v4787, %v4786
      %v5100 = vpack.c.b16 %v4789, %v4788
      %v5101 = vpack.c.b16 %v4791, %v4790
      %v5102 = vpack.c.b16 %v4793, %v4792
      %v5103 = vpack.c.b16 %v4795, %v4794
      %v5104 = vpack.c.b16 %v4797, %v4796
      %v5105 = vpack.c.b16 %v4799, %v4798
      %v5106 = vpack.c.b16 %v4801, %v4800
      %v5107 = vpack.c.b16 %v4803, %v4802
      %v5108 = vpack.c.b16 %v4805, %v4804
      %v5109 = vpack.c.b16 %v4807, %v4806
      %v5110 = vpack.c.b16 %v4809, %v4808
      %v5111 = vpack.c.b16 %v4811, %v4810
      %v5112 = vpack.c.b16 %v4813, %v4812
      %v5113 = vpack.c.b16 %v4815, %v4814
      %v5114 = vpack.c.b16 %v4817, %v4816
      %v5115 = vpack.c.b16 %v4819, %v4818
      %v5116 = vpack.c.b16 %v4821, %v4820
      %v5117 = vpack.c.b16 %v4823, %v4822
      %v5118 = vpack.c.b16 %v4825, %v4824
      %v5119 = vpack.c.b16 %v4827, %v4826
      %v5120 = vpack.c.b16 %v4829, %v4828
      %v5121 = vpack.c.b16 %v4831, %v4830
      %v5122 = vpack.c.b16 %v4833, %v4832
      %v5123 = vpack.c.b16 %v4835, %v4834
      %v5124 = vpack.c.b16 %v4837, %v4836
      %v5125 = vpack.c.b16 %v4839, %v4838
      %v5126 = vpack.c.b16 %v4841, %v4840
      %v5127 = vpack.c.b16 %v4843, %v4842
      %v5128 = vpack.c.b16 %v4845, %v4844
      %v5129 = vpack.c.b16 %v4847, %v4846
      %v5130 = vpack.c.b16 %v4849, %v4848
      %v5131 = vpack.c.b16 %v4851, %v4850
      %v5132 = vpack.c.b16 %v4853, %v4852
      %v5133 = vpack.c.b16 %v4855, %v4854
      %v5134 = vpack.c.b16 %v4857, %v4856
      %v5135 = vpack.c.b16 %v4859, %v4858
      %v5136 = vpack.c.b16 %v4861, %v4860
      %v5137 = vpack.c.b16 %v4863, %v4862
      %v5138 = vpack.c.b16 %v4865, %v4864
      %v5139 = vpack.c.b16 %v4867, %v4866
      %v5140 = vpack.c.b16 %v4869, %v4868
      %v5141 = vpack.c.b16 %v4871, %v4870
      %v5142 = vpack.c.b16 %v4873, %v4872
      %v5143 = vpack.c.b16 %v4875, %v4874
      %v5144 = vpack.c.b16 %v4877, %v4876
      %v5145 = vpack.c.b16 %v4879, %v4878
      %v5146 = vpack.c.b16 %v4881, %v4880
      %v5147 = vpack.c.b16 %v4883, %v4882
      %v5148 = vpack.c.b16 %v4885, %v4884
      %v5149 = vpack.c.b16 %v4887, %v4886
      %v5150 = vpack.c.b16 %v4889, %v4888
      %v5151 = vpack.c.b16 %v4891, %v4890
      %v5152 = vpack.c.b16 %v4893, %v4892
      %v5153 = vpack.c.b16 %v4895, %v4894
      %v5154 = vpack.c.b16 %v4897, %v4896
      %v5155 = vpack.c.b16 %v4899, %v4898
      %v5156 = vpack.c.b16 %v4901, %v4900
      %v5157 = vpack.c.b16 %v4903, %v4902
      %v5158 = vpack.c.b16 %v4905, %v4904
      %v5159 = vpack.c.b16 %v4907, %v4906
      %v5160 = vpack.c.b16 %v4909, %v4908
      %v5161 = vpack.c.b16 %v4911, %v4910
      %v5162 = vpack.c.b16 %v4913, %v4912
      %v5163 = vpack.c.b16 %v4915, %v4914
      %v5164 = vpack.c.b16 %v4917, %v4916
      %v5165 = vpack.c.b16 %v4919, %v4918
      %v5166 = vpack.c.b16 %v4921, %v4920
      %v5167 = vpack.c.b16 %v4923, %v4922
      %v5168 = vpack.c.b16 %v4925, %v4924
      %v5169 = vpack.c.b16 %v4927, %v4926
      %v5170 = vpack.c.b16 %v4929, %v4928
      %v5171 = vpack.c.b16 %v4931, %v4930
      %v5172 = vpack.c.b16 %v4933, %v4932
      %v5173 = vpack.c.b16 %v4935, %v4934
      %v5174 = vpack.c.b16 %v4937, %v4936
      %v5175 = vpack.c.b16 %v4939, %v4938
      %v5176 = vpack.c.b16 %v4941, %v4940
      %v5177 = vpack.c.b16 %v4943, %v4942
      %v5178 = vpack.c.b16 %v4945, %v4944
      %v5179 = vpack.c.b16 %v4947, %v4946
      %v5180 = vpack.c.b16 %v4949, %v4948
      %v5181 = vpack.c.b16 %v4951, %v4950
      %v5182 = vpack.c.b16 %v4953, %v4952
      %v5183 = vpack.c.b16 %v4955, %v4954
      %v5184 = vpack.c.b16 %v4957, %v4956
      %v5185 = vpack.c.b16 %v4959, %v4958
      %v5186 = vpack.c.b16 %v4960, %v4960
      %v5188 = vsel %vm3285, %v4961, 0
      %v5191 = vsel %vm3285, %v4962, 0
      %v5194 = vsel %vm3285, %v4963, 0
      %v5197 = vsel %vm3285, %v4964, 0
      %v5200 = vsel %vm3285, %v4965, 0
      %v5203 = vsel %vm3285, %v4966, 0
      %v5206 = vsel %vm3285, %v4967, 0
      %v5209 = vsel %vm3285, %v4968, 0
      %v5212 = vsel %vm3285, %v4969, 0
      %v5215 = vsel %vm3285, %v4970, 0
      %v5218 = vsel %vm3285, %v4971, 0
      %v5221 = vsel %vm3285, %v4972, 0
      %v5224 = vsel %vm3285, %v4973, 0
      %v5227 = vsel %vm3285, %v4974, 0
      %v5230 = vsel %vm3285, %v4975, 0
      %v5233 = vsel %vm3285, %v4976, 0
      %v5236 = vsel %vm3285, %v4977, 0
      %v5239 = vsel %vm3285, %v4978, 0
      %v5242 = vsel %vm3285, %v4979, 0
      %v5245 = vsel %vm3285, %v4980, 0
      %v5248 = vsel %vm3285, %v4981, 0
      %v5251 = vsel %vm3285, %v4982, 0
      %v5254 = vsel %vm3285, %v4983, 0
      %v5257 = vsel %vm3285, %v4984, 0
      %v5260 = vsel %vm3285, %v4985, 0
      %v5263 = vsel %vm3285, %v4986, 0
      %v5266 = vsel %vm3285, %v4987, 0
      %v5269 = vsel %vm3285, %v4988, 0
      %v5272 = vsel %vm3285, %v4989, 0
      %v5275 = vsel %vm3285, %v4990, 0
      %v5278 = vsel %vm3285, %v4991, 0
      %v5281 = vsel %vm3285, %v4992, 0
      %v5284 = vsel %vm3285, %v4993, 0
      %v5287 = vsel %vm3285, %v4994, 0
      %v5290 = vsel %vm3285, %v4995, 0
      %v5293 = vsel %vm3285, %v4996, 0
      %v5296 = vsel %vm3285, %v4997, 0
      %v5299 = vsel %vm3285, %v4998, 0
      %v5302 = vsel %vm3285, %v4999, 0
      %v5305 = vsel %vm3285, %v5000, 0
      %v5308 = vsel %vm3285, %v5001, 0
      %v5311 = vsel %vm3285, %v5002, 0
      %v5314 = vsel %vm3285, %v5003, 0
      %v5317 = vsel %vm3285, %v5004, 0
      %v5320 = vsel %vm3285, %v5005, 0
      %v5323 = vsel %vm3285, %v5006, 0
      %v5326 = vsel %vm3285, %v5007, 0
      %v5329 = vsel %vm3285, %v5008, 0
      %v5332 = vsel %vm3285, %v5009, 0
      %v5335 = vsel %vm3285, %v5010, 0
      %v5338 = vsel %vm3285, %v5011, 0
      %v5341 = vsel %vm3285, %v5012, 0
      %v5344 = vsel %vm3285, %v5013, 0
      %v5347 = vsel %vm3285, %v5014, 0
      %v5350 = vsel %vm3285, %v5015, 0
      %v5353 = vsel %vm3285, %v5016, 0
      %v5356 = vsel %vm3285, %v5017, 0
      %v5359 = vsel %vm3285, %v5018, 0
      %v5362 = vsel %vm3285, %v5019, 0
      %v5365 = vsel %vm3285, %v5020, 0
      %v5368 = vsel %vm3285, %v5021, 0
      %v5371 = vsel %vm3285, %v5022, 0
      %v5374 = vsel %vm3285, %v5023, 0
      %v5377 = vsel %vm3285, %v5024, 0
      %v5380 = vsel %vm3285, %v5025, 0
      %v5383 = vsel %vm3285, %v5026, 0
      %v5386 = vsel %vm3285, %v5027, 0
      %v5389 = vsel %vm3285, %v5028, 0
      %v5392 = vsel %vm3285, %v5029, 0
      %v5395 = vsel %vm3285, %v5030, 0
      %v5398 = vsel %vm3285, %v5031, 0
      %v5401 = vsel %vm3285, %v5032, 0
      %v5404 = vsel %vm3285, %v5033, 0
      %v5407 = vsel %vm3285, %v5034, 0
      %v5410 = vsel %vm3285, %v5035, 0
      %v5413 = vsel %vm3285, %v5036, 0
      %v5416 = vsel %vm3285, %v5037, 0
      %v5419 = vsel %vm3285, %v5038, 0
      %v5422 = vsel %vm3285, %v5039, 0
      %v5425 = vsel %vm3285, %v5040, 0
      %v5428 = vsel %vm3285, %v5041, 0
      %v5431 = vsel %vm3285, %v5042, 0
      %v5434 = vsel %vm3285, %v5043, 0
      %v5437 = vsel %vm3285, %v5044, 0
      %v5440 = vsel %vm3285, %v5045, 0
      %v5443 = vsel %vm3285, %v5046, 0
      %v5446 = vsel %vm3285, %v5047, 0
      %v5449 = vsel %vm3285, %v5048, 0
      %v5452 = vsel %vm3285, %v5049, 0
      %v5455 = vsel %vm3285, %v5050, 0
      %v5458 = vsel %vm3285, %v5051, 0
      %v5461 = vsel %vm3285, %v5052, 0
      %v5464 = vsel %vm3285, %v5053, 0
      %v5467 = vsel %vm3285, %v5054, 0
      %v5470 = vsel %vm3285, %v5055, 0
      %v5473 = vsel %vm3285, %v5056, 0
      %v5476 = vsel %vm3285, %v5057, 0
      %v5479 = vsel %vm3285, %v5058, 0
      %v5482 = vsel %vm3285, %v5059, 0
      %v5485 = vsel %vm3285, %v5060, 0
      %v5488 = vsel %vm3285, %v5061, 0
      %v5491 = vsel %vm3285, %v5062, 0
      %v5494 = vsel %vm3285, %v5063, 0
      %v5497 = vsel %vm3285, %v5064, 0
      %v5500 = vsel %vm3285, %v5065, 0
      %v5503 = vsel %vm3285, %v5066, 0
      %v5506 = vsel %vm3285, %v5067, 0
      %v5509 = vsel %vm3285, %v5068, 0
      %v5512 = vsel %vm3285, %v5069, 0
      %v5515 = vsel %vm3285, %v5070, 0
      %v5518 = vsel %vm3285, %v5071, 0
      %v5521 = vsel %vm3285, %v5072, 0
      %v5524 = vsel %vm3285, %v5073, 0
      %v5527 = vsel %vm3285, %v5074, 0
      %v5530 = vsel %vm3285, %v5075, 0
      %v5533 = vsel %vm3285, %v5076, 0
      %v5536 = vsel %vm3285, %v5077, 0
      %v5539 = vsel %vm3285, %v5078, 0
      %v5542 = vsel %vm3285, %v5079, 0
      %v5545 = vsel %vm3285, %v5080, 0
      %v5548 = vsel %vm3285, %v5081, 0
      %v5551 = vsel %vm3285, %v5082, 0
      %v5554 = vsel %vm3285, %v5083, 0
      %v5557 = vsel %vm3285, %v5084, 0
      %v5560 = vsel %vm3285, %v5085, 0
      %v5563 = vsel %vm3285, %v5086, 0
      %v5566 = vsel %vm3285, %v5087, 0
      %v5569 = vsel %vm3285, %v5088, 0
      %v5572 = vsel %vm3285, %v5089, 0
      %v5575 = vsel %vm3285, %v5090, 0
      %v5578 = vsel %vm3285, %v5091, 0
      %v5581 = vsel %vm3285, %v5092, 0
      %v5584 = vsel %vm3285, %v5093, 0
      %v5587 = vsel %vm3285, %v5094, 0
      %v5590 = vsel %vm3285, %v5095, 0
      %v5593 = vsel %vm3285, %v5096, 0
      %v5596 = vsel %vm3285, %v5097, 0
      %v5599 = vsel %vm3285, %v5098, 0
      %v5602 = vsel %vm3285, %v5099, 0
      %v5605 = vsel %vm3285, %v5100, 0
      %v5608 = vsel %vm3285, %v5101, 0
      %v5611 = vsel %vm3285, %v5102, 0
      %v5614 = vsel %vm3285, %v5103, 0
      %v5617 = vsel %vm3285, %v5104, 0
      %v5620 = vsel %vm3285, %v5105, 0
      %v5623 = vsel %vm3285, %v5106, 0
      %v5626 = vsel %vm3285, %v5107, 0
      %v5629 = vsel %vm3285, %v5108, 0
      %v5632 = vsel %vm3285, %v5109, 0
      %v5635 = vsel %vm3285, %v5110, 0
      %v5638 = vsel %vm3285, %v5111, 0
      %v5641 = vsel %vm3285, %v5112, 0
      %v5644 = vsel %vm3285, %v5113, 0
      %v5647 = vsel %vm3285, %v5114, 0
      %v5650 = vsel %vm3285, %v5115, 0
      %v5653 = vsel %vm3285, %v5116, 0
      %v5656 = vsel %vm3285, %v5117, 0
      %v5659 = vsel %vm3285, %v5118, 0
      %v5662 = vsel %vm3285, %v5119, 0
      %v5665 = vsel %vm3285, %v5120, 0
      %v5668 = vsel %vm3285, %v5121, 0
      %v5671 = vsel %vm3285, %v5122, 0
      %v5674 = vsel %vm3285, %v5123, 0
      %v5677 = vsel %vm3285, %v5124, 0
      %v5680 = vsel %vm3285, %v5125, 0
      %v5683 = vsel %vm3285, %v5126, 0
      %v5686 = vsel %vm3285, %v5127, 0
      %v5689 = vsel %vm3285, %v5128, 0
      %v5692 = vsel %vm3285, %v5129, 0
      %v5695 = vsel %vm3285, %v5130, 0
      %v5698 = vsel %vm3285, %v5131, 0
      %v5701 = vsel %vm3285, %v5132, 0
      %v5704 = vsel %vm3285, %v5133, 0
      %v5707 = vsel %vm3285, %v5134, 0
      %v5710 = vsel %vm3285, %v5135, 0
      %v5713 = vsel %vm3285, %v5136, 0
      %v5716 = vsel %vm3285, %v5137, 0
      %v5719 = vsel %vm3285, %v5138, 0
      %v5722 = vsel %vm3285, %v5139, 0
      %v5725 = vsel %vm3285, %v5140, 0
      %v5728 = vsel %vm3285, %v5141, 0
      %v5731 = vsel %vm3285, %v5142, 0
      %v5734 = vsel %vm3285, %v5143, 0
      %v5737 = vsel %vm3285, %v5144, 0
      %v5740 = vsel %vm3285, %v5145, 0
      %v5743 = vsel %vm3285, %v5146, 0
      %v5746 = vsel %vm3285, %v5147, 0
      %v5749 = vsel %vm3285, %v5148, 0
      %v5752 = vsel %vm3285, %v5149, 0
      %v5755 = vsel %vm3285, %v5150, 0
      %v5758 = vsel %vm3285, %v5151, 0
      %v5761 = vsel %vm3285, %v5152, 0
      %v5764 = vsel %vm3285, %v5153, 0
      %v5767 = vsel %vm3285, %v5154, 0
      %v5770 = vsel %vm3285, %v5155, 0
      %v5773 = vsel %vm3285, %v5156, 0
      %v5776 = vsel %vm3285, %v5157, 0
      %v5779 = vsel %vm3285, %v5158, 0
      %v5782 = vsel %vm3285, %v5159, 0
      %v5785 = vsel %vm3285, %v5160, 0
      %v5788 = vsel %vm3285, %v5161, 0
      %v5791 = vsel %vm3285, %v5162, 0
      %v5794 = vsel %vm3285, %v5163, 0
      %v5797 = vsel %vm3285, %v5164, 0
      %v5800 = vsel %vm3285, %v5165, 0
      %v5803 = vsel %vm3285, %v5166, 0
      %v5806 = vsel %vm3285, %v5167, 0
      %v5809 = vsel %vm3285, %v5168, 0
      %v5812 = vsel %vm3285, %v5169, 0
      %v5815 = vsel %vm3285, %v5170, 0
      %v5818 = vsel %vm3285, %v5171, 0
      %v5821 = vsel %vm3285, %v5172, 0
      %v5824 = vsel %vm3285, %v5173, 0
      %v5827 = vsel %vm3285, %v5174, 0
      %v5830 = vsel %vm3285, %v5175, 0
      %v5833 = vsel %vm3285, %v5176, 0
      %v5836 = vsel %vm3285, %v5177, 0
      %v5839 = vsel %vm3285, %v5178, 0
      %v5842 = vsel %vm3285, %v5179, 0
      %v5845 = vsel %vm3285, %v5180, 0
      %v5848 = vsel %vm3285, %v5181, 0
      %v5851 = vsel %vm3285, %v5182, 0
      %v5854 = vsel %vm3285, %v5183, 0
      %v5857 = vsel %vm3285, %v5184, 0
      %v5860 = vsel %vm3285, %v5185, 0
      %v5863 = vsel %vm3285, %v5186, 0
      %5865 = vmatpush.bf16.msra.mxu0 0
      %5866 = vmatpush.bf16.msra.mxu0 0
      %5867 = vmatpush.bf16.msra.mxu0 0
      %5868 = vmatpush.bf16.msra.mxu0 0
      %5869 = vmatpush.bf16.msra.mxu0 0
      %5870 = vmatpush.bf16.msra.mxu0 0
      %5871 = vmatpush.bf16.msra.mxu0 %v4057
      %5872 = vmatpush.bf16.msra.mxu0 %v4055
      %5873 = vmatmul.bf16.gmra.mxu0 %v5188
      %v5874 = vpop.f32.mrf.mxu0
      %v5875 = vadd.f32 0.0, %v5874
      %v5876 = vpop.f32.mrf.mxu0
      %v5877 = vadd.f32 0.0, %v5876
      %5878 = vmatmul.bf16.gmra.mxu0 %v5191
      %v5879 = vpop.f32.mrf.mxu0
      %v5880 = vadd.f32 0.0, %v5879
      %v5881 = vpop.f32.mrf.mxu0
      %v5882 = vadd.f32 0.0, %v5881
      %5883 = vmatmul.bf16.gmra.mxu0 %v5194
      %v5884 = vpop.f32.mrf.mxu0
      %v5885 = vadd.f32 0.0, %v5884
      %v5886 = vpop.f32.mrf.mxu0
      %v5887 = vadd.f32 0.0, %v5886
      %5888 = vmatmul.bf16.gmra.mxu0 %v5197
      %v5889 = vpop.f32.mrf.mxu0
      %v5890 = vadd.f32 0.0, %v5889
      %v5891 = vpop.f32.mrf.mxu0
      %v5892 = vadd.f32 0.0, %v5891
      %5893 = vmatmul.bf16.gmra.mxu0 %v5200
      %v5894 = vpop.f32.mrf.mxu0
      %v5895 = vadd.f32 0.0, %v5894
      %v5896 = vpop.f32.mrf.mxu0
      %v5897 = vadd.f32 0.0, %v5896
      %5898 = vmatmul.bf16.gmra.mxu0 %v5203
      %v5899 = vpop.f32.mrf.mxu0
      %v5900 = vadd.f32 0.0, %v5899
      %v5901 = vpop.f32.mrf.mxu0
      %v5902 = vadd.f32 0.0, %v5901
      %5903 = vmatmul.bf16.gmra.mxu0 %v5206
      %v5904 = vpop.f32.mrf.mxu0
      %v5905 = vadd.f32 0.0, %v5904
      %v5906 = vpop.f32.mrf.mxu0
      %v5907 = vadd.f32 0.0, %v5906
      %5908 = vmatmul.bf16.gmra.mxu0 %v5209
      %v5909 = vpop.f32.mrf.mxu0
      %v5910 = vadd.f32 0.0, %v5909
      %v5911 = vpop.f32.mrf.mxu0
      %v5912 = vadd.f32 0.0, %v5911
      %5913 = vmatmul.bf16.gmra.mxu0 %v5212
      %v5914 = vpop.f32.mrf.mxu0
      %v5915 = vadd.f32 0.0, %v5914
      %v5916 = vpop.f32.mrf.mxu0
      %v5917 = vadd.f32 0.0, %v5916
      %5918 = vmatmul.bf16.gmra.mxu0 %v5215
      %v5919 = vpop.f32.mrf.mxu0
      %v5920 = vadd.f32 0.0, %v5919
      %v5921 = vpop.f32.mrf.mxu0
      %v5922 = vadd.f32 0.0, %v5921
      %5923 = vmatmul.bf16.gmra.mxu0 %v5218
      %v5924 = vpop.f32.mrf.mxu0
      %v5925 = vadd.f32 0.0, %v5924
      %v5926 = vpop.f32.mrf.mxu0
      %v5927 = vadd.f32 0.0, %v5926
      %5928 = vmatmul.bf16.gmra.mxu0 %v5221
      %v5929 = vpop.f32.mrf.mxu0
      %v5930 = vadd.f32 0.0, %v5929
      %v5931 = vpop.f32.mrf.mxu0
      %v5932 = vadd.f32 0.0, %v5931
      %5933 = vmatmul.bf16.gmra.mxu0 %v5224
      %v5934 = vpop.f32.mrf.mxu0
      %v5935 = vadd.f32 0.0, %v5934
      %v5936 = vpop.f32.mrf.mxu0
      %v5937 = vadd.f32 0.0, %v5936
      %5938 = vmatmul.bf16.gmra.mxu0 %v5227
      %v5939 = vpop.f32.mrf.mxu0
      %v5940 = vadd.f32 0.0, %v5939
      %v5941 = vpop.f32.mrf.mxu0
      %v5942 = vadd.f32 0.0, %v5941
      %5943 = vmatmul.bf16.gmra.mxu0 %v5230
      %v5944 = vpop.f32.mrf.mxu0
      %v5945 = vadd.f32 0.0, %v5944
      %v5946 = vpop.f32.mrf.mxu0
      %v5947 = vadd.f32 0.0, %v5946
      %5948 = vmatmul.bf16.gmra.mxu0 %v5233
      %v5949 = vpop.f32.mrf.mxu0
      %v5950 = vadd.f32 0.0, %v5949
      %v5951 = vpop.f32.mrf.mxu0
      %v5952 = vadd.f32 0.0, %v5951
      %5953 = vmatmul.bf16.gmra.mxu0 %v5236
      %v5954 = vpop.f32.mrf.mxu0
      %v5955 = vadd.f32 0.0, %v5954
      %v5956 = vpop.f32.mrf.mxu0
      %v5957 = vadd.f32 0.0, %v5956
      %5958 = vmatmul.bf16.gmra.mxu0 %v5239
      %v5959 = vpop.f32.mrf.mxu0
      %v5960 = vadd.f32 0.0, %v5959
      %v5961 = vpop.f32.mrf.mxu0
      %v5962 = vadd.f32 0.0, %v5961
      %5963 = vmatmul.bf16.gmra.mxu0 %v5242
      %v5964 = vpop.f32.mrf.mxu0
      %v5965 = vadd.f32 0.0, %v5964
      %v5966 = vpop.f32.mrf.mxu0
      %v5967 = vadd.f32 0.0, %v5966
      %5968 = vmatmul.bf16.gmra.mxu0 %v5245
      %v5969 = vpop.f32.mrf.mxu0
      %v5970 = vadd.f32 0.0, %v5969
      %v5971 = vpop.f32.mrf.mxu0
      %v5972 = vadd.f32 0.0, %v5971
      %5973 = vmatmul.bf16.gmra.mxu0 %v5248
      %v5974 = vpop.f32.mrf.mxu0
      %v5975 = vadd.f32 0.0, %v5974
      %v5976 = vpop.f32.mrf.mxu0
      %v5977 = vadd.f32 0.0, %v5976
      %5978 = vmatmul.bf16.gmra.mxu0 %v5251
      %v5979 = vpop.f32.mrf.mxu0
      %v5980 = vadd.f32 0.0, %v5979
      %v5981 = vpop.f32.mrf.mxu0
      %v5982 = vadd.f32 0.0, %v5981
      %5983 = vmatmul.bf16.gmra.mxu0 %v5254
      %v5984 = vpop.f32.mrf.mxu0
      %v5985 = vadd.f32 0.0, %v5984
      %v5986 = vpop.f32.mrf.mxu0
      %v5987 = vadd.f32 0.0, %v5986
      %5988 = vmatmul.bf16.gmra.mxu0 %v5257
      %v5989 = vpop.f32.mrf.mxu0
      %v5990 = vadd.f32 0.0, %v5989
      %v5991 = vpop.f32.mrf.mxu0
      %v5992 = vadd.f32 0.0, %v5991
      %5993 = vmatmul.bf16.gmra.mxu0 %v5260
      %v5994 = vpop.f32.mrf.mxu0
      %v5995 = vadd.f32 0.0, %v5994
      %v5996 = vpop.f32.mrf.mxu0
      %v5997 = vadd.f32 0.0, %v5996
      %5998 = vmatmul.bf16.gmra.mxu0 %v5263
      %v5999 = vpop.f32.mrf.mxu0
      %v6000 = vadd.f32 0.0, %v5999
      %v6001 = vpop.f32.mrf.mxu0
      %v6002 = vadd.f32 0.0, %v6001
      %6003 = vmatmul.bf16.gmra.mxu0 %v5266
      %v6004 = vpop.f32.mrf.mxu0
      %v6005 = vadd.f32 0.0, %v6004
      %v6006 = vpop.f32.mrf.mxu0
      %v6007 = vadd.f32 0.0, %v6006
      %6008 = vmatmul.bf16.gmra.mxu0 %v5269
      %v6009 = vpop.f32.mrf.mxu0
      %v6010 = vadd.f32 0.0, %v6009
      %v6011 = vpop.f32.mrf.mxu0
      %v6012 = vadd.f32 0.0, %v6011
      %6013 = vmatmul.bf16.gmra.mxu0 %v5272
      %v6014 = vpop.f32.mrf.mxu0
      %v6015 = vadd.f32 0.0, %v6014
      %v6016 = vpop.f32.mrf.mxu0
      %v6017 = vadd.f32 0.0, %v6016
      %6018 = vmatmul.bf16.gmra.mxu0 %v5275
      %v6019 = vpop.f32.mrf.mxu0
      %v6020 = vadd.f32 0.0, %v6019
      %v6021 = vpop.f32.mrf.mxu0
      %v6022 = vadd.f32 0.0, %v6021
      %6023 = vmatmul.bf16.gmra.mxu0 %v5278
      %v6024 = vpop.f32.mrf.mxu0
      %v6025 = vadd.f32 0.0, %v6024
      %v6026 = vpop.f32.mrf.mxu0
      %v6027 = vadd.f32 0.0, %v6026
      %6028 = vmatmul.bf16.gmra.mxu0 %v5281
      %v6029 = vpop.f32.mrf.mxu0
      %v6030 = vadd.f32 0.0, %v6029
      %v6031 = vpop.f32.mrf.mxu0
      %v6032 = vadd.f32 0.0, %v6031
      %6033 = vmatmul.bf16.gmra.mxu0 %v5284
      %v6034 = vpop.f32.mrf.mxu0
      %v6035 = vadd.f32 0.0, %v6034
      %v6036 = vpop.f32.mrf.mxu0
      %v6037 = vadd.f32 0.0, %v6036
      %6038 = vmatmul.bf16.gmra.mxu0 %v5287
      %v6039 = vpop.f32.mrf.mxu0
      %v6040 = vadd.f32 0.0, %v6039
      %v6041 = vpop.f32.mrf.mxu0
      %v6042 = vadd.f32 0.0, %v6041
      %6043 = vmatmul.bf16.gmra.mxu0 %v5290
      %v6044 = vpop.f32.mrf.mxu0
      %v6045 = vadd.f32 0.0, %v6044
      %v6046 = vpop.f32.mrf.mxu0
      %v6047 = vadd.f32 0.0, %v6046
      %6048 = vmatmul.bf16.gmra.mxu0 %v5293
      %v6049 = vpop.f32.mrf.mxu0
      %v6050 = vadd.f32 0.0, %v6049
      %v6051 = vpop.f32.mrf.mxu0
      %v6052 = vadd.f32 0.0, %v6051
      %6053 = vmatmul.bf16.gmra.mxu0 %v5296
      %v6054 = vpop.f32.mrf.mxu0
      %v6055 = vadd.f32 0.0, %v6054
      %v6056 = vpop.f32.mrf.mxu0
      %v6057 = vadd.f32 0.0, %v6056
      %6058 = vmatmul.bf16.gmra.mxu0 %v5299
      %v6059 = vpop.f32.mrf.mxu0
      %v6060 = vadd.f32 0.0, %v6059
      %v6061 = vpop.f32.mrf.mxu0
      %v6062 = vadd.f32 0.0, %v6061
      %6063 = vmatmul.bf16.gmra.mxu0 %v5302
      %v6064 = vpop.f32.mrf.mxu0
      %v6065 = vadd.f32 0.0, %v6064
      %v6066 = vpop.f32.mrf.mxu0
      %v6067 = vadd.f32 0.0, %v6066
      %6068 = vmatmul.bf16.gmra.mxu0 %v5305
      %v6069 = vpop.f32.mrf.mxu0
      %v6070 = vadd.f32 0.0, %v6069
      %v6071 = vpop.f32.mrf.mxu0
      %v6072 = vadd.f32 0.0, %v6071
      %6073 = vmatmul.bf16.gmra.mxu0 %v5308
      %v6074 = vpop.f32.mrf.mxu0
      %v6075 = vadd.f32 0.0, %v6074
      %v6076 = vpop.f32.mrf.mxu0
      %v6077 = vadd.f32 0.0, %v6076
      %6078 = vmatmul.bf16.gmra.mxu0 %v5311
      %v6079 = vpop.f32.mrf.mxu0
      %v6080 = vadd.f32 0.0, %v6079
      %v6081 = vpop.f32.mrf.mxu0
      %v6082 = vadd.f32 0.0, %v6081
      %6083 = vmatmul.bf16.gmra.mxu0 %v5314
      %v6084 = vpop.f32.mrf.mxu0
      %v6085 = vadd.f32 0.0, %v6084
      %v6086 = vpop.f32.mrf.mxu0
      %v6087 = vadd.f32 0.0, %v6086
      %6088 = vmatmul.bf16.gmra.mxu0 %v5317
      %v6089 = vpop.f32.mrf.mxu0
      %v6090 = vadd.f32 0.0, %v6089
      %v6091 = vpop.f32.mrf.mxu0
      %v6092 = vadd.f32 0.0, %v6091
      %6093 = vmatmul.bf16.gmra.mxu0 %v5320
      %v6094 = vpop.f32.mrf.mxu0
      %v6095 = vadd.f32 0.0, %v6094
      %v6096 = vpop.f32.mrf.mxu0
      %v6097 = vadd.f32 0.0, %v6096
      %6098 = vmatmul.bf16.gmra.mxu0 %v5323
      %v6099 = vpop.f32.mrf.mxu0
      %v6100 = vadd.f32 0.0, %v6099
      %v6101 = vpop.f32.mrf.mxu0
      %v6102 = vadd.f32 0.0, %v6101
      %6103 = vmatmul.bf16.gmra.mxu0 %v5326
      %v6104 = vpop.f32.mrf.mxu0
      %v6105 = vadd.f32 0.0, %v6104
      %v6106 = vpop.f32.mrf.mxu0
      %v6107 = vadd.f32 0.0, %v6106
      %6108 = vmatmul.bf16.gmra.mxu0 %v5329
      %v6109 = vpop.f32.mrf.mxu0
      %v6110 = vadd.f32 0.0, %v6109
      %v6111 = vpop.f32.mrf.mxu0
      %v6112 = vadd.f32 0.0, %v6111
      %6113 = vmatmul.bf16.gmra.mxu0 %v5332
      %v6114 = vpop.f32.mrf.mxu0
      %v6115 = vadd.f32 0.0, %v6114
      %v6116 = vpop.f32.mrf.mxu0
      %v6117 = vadd.f32 0.0, %v6116
      %6118 = vmatmul.bf16.gmra.mxu0 %v5335
      %v6119 = vpop.f32.mrf.mxu0
      %v6120 = vadd.f32 0.0, %v6119
      %v6121 = vpop.f32.mrf.mxu0
      %v6122 = vadd.f32 0.0, %v6121
      %6123 = vmatmul.bf16.gmra.mxu0 %v5338
      %v6124 = vpop.f32.mrf.mxu0
      %v6125 = vadd.f32 0.0, %v6124
      %v6126 = vpop.f32.mrf.mxu0
      %v6127 = vadd.f32 0.0, %v6126
      %6128 = vmatmul.bf16.gmra.mxu0 %v5341
      %v6129 = vpop.f32.mrf.mxu0
      %v6130 = vadd.f32 0.0, %v6129
      %v6131 = vpop.f32.mrf.mxu0
      %v6132 = vadd.f32 0.0, %v6131
      %6133 = vmatmul.bf16.gmra.mxu0 %v5344
      %v6134 = vpop.f32.mrf.mxu0
      %v6135 = vadd.f32 0.0, %v6134
      %v6136 = vpop.f32.mrf.mxu0
      %v6137 = vadd.f32 0.0, %v6136
      %6138 = vmatmul.bf16.gmra.mxu0 %v5347
      %v6139 = vpop.f32.mrf.mxu0
      %v6140 = vadd.f32 0.0, %v6139
      %v6141 = vpop.f32.mrf.mxu0
      %v6142 = vadd.f32 0.0, %v6141
      %6143 = vmatmul.bf16.gmra.mxu0 %v5350
      %v6144 = vpop.f32.mrf.mxu0
      %v6145 = vadd.f32 0.0, %v6144
      %v6146 = vpop.f32.mrf.mxu0
      %v6147 = vadd.f32 0.0, %v6146
      %6148 = vmatmul.bf16.gmra.mxu0 %v5353
      %v6149 = vpop.f32.mrf.mxu0
      %v6150 = vadd.f32 0.0, %v6149
      %v6151 = vpop.f32.mrf.mxu0
      %v6152 = vadd.f32 0.0, %v6151
      %6153 = vmatmul.bf16.gmra.mxu0 %v5356
      %v6154 = vpop.f32.mrf.mxu0
      %v6155 = vadd.f32 0.0, %v6154
      %v6156 = vpop.f32.mrf.mxu0
      %v6157 = vadd.f32 0.0, %v6156
      %6158 = vmatmul.bf16.gmra.mxu0 %v5359
      %v6159 = vpop.f32.mrf.mxu0
      %v6160 = vadd.f32 0.0, %v6159
      %v6161 = vpop.f32.mrf.mxu0
      %v6162 = vadd.f32 0.0, %v6161
      %6163 = vmatmul.bf16.gmra.mxu0 %v5362
      %v6164 = vpop.f32.mrf.mxu0
      %v6165 = vadd.f32 0.0, %v6164
      %v6166 = vpop.f32.mrf.mxu0
      %v6167 = vadd.f32 0.0, %v6166
      %6168 = vmatmul.bf16.gmra.mxu0 %v5365
      %v6169 = vpop.f32.mrf.mxu0
      %v6170 = vadd.f32 0.0, %v6169
      %v6171 = vpop.f32.mrf.mxu0
      %v6172 = vadd.f32 0.0, %v6171
      %6173 = vmatmul.bf16.gmra.mxu0 %v5368
      %v6174 = vpop.f32.mrf.mxu0
      %v6175 = vadd.f32 0.0, %v6174
      %v6176 = vpop.f32.mrf.mxu0
      %v6177 = vadd.f32 0.0, %v6176
      %6178 = vmatmul.bf16.gmra.mxu0 %v5371
      %v6179 = vpop.f32.mrf.mxu0
      %v6180 = vadd.f32 0.0, %v6179
      %v6181 = vpop.f32.mrf.mxu0
      %v6182 = vadd.f32 0.0, %v6181
      %6183 = vmatmul.bf16.gmra.mxu0 %v5374
      %v6184 = vpop.f32.mrf.mxu0
      %v6185 = vadd.f32 0.0, %v6184
      %v6186 = vpop.f32.mrf.mxu0
      %v6187 = vadd.f32 0.0, %v6186
      %6188 = vmatmul.bf16.gmra.mxu0 %v5377
      %v6189 = vpop.f32.mrf.mxu0
      %v6190 = vadd.f32 0.0, %v6189
      %v6191 = vpop.f32.mrf.mxu0
      %v6192 = vadd.f32 0.0, %v6191
      %6193 = vmatmul.bf16.gmra.mxu0 %v5380
      %v6194 = vpop.f32.mrf.mxu0
      %v6195 = vadd.f32 0.0, %v6194
      %v6196 = vpop.f32.mrf.mxu0
      %v6197 = vadd.f32 0.0, %v6196
      %6198 = vmatmul.bf16.gmra.mxu0 %v5383
      %v6199 = vpop.f32.mrf.mxu0
      %v6200 = vadd.f32 0.0, %v6199
      %v6201 = vpop.f32.mrf.mxu0
      %v6202 = vadd.f32 0.0, %v6201
      %6203 = vmatmul.bf16.gmra.mxu0 %v5386
      %v6204 = vpop.f32.mrf.mxu0
      %v6205 = vadd.f32 0.0, %v6204
      %v6206 = vpop.f32.mrf.mxu0
      %v6207 = vadd.f32 0.0, %v6206
      %6208 = vmatmul.bf16.gmra.mxu0 %v5389
      %v6209 = vpop.f32.mrf.mxu0
      %v6210 = vadd.f32 0.0, %v6209
      %v6211 = vpop.f32.mrf.mxu0
      %v6212 = vadd.f32 0.0, %v6211
      %6213 = vmatmul.bf16.gmra.mxu0 %v5392
      %v6214 = vpop.f32.mrf.mxu0
      %v6215 = vadd.f32 0.0, %v6214
      %v6216 = vpop.f32.mrf.mxu0
      %v6217 = vadd.f32 0.0, %v6216
      %6218 = vmatmul.bf16.gmra.mxu0 %v5395
      %v6219 = vpop.f32.mrf.mxu0
      %v6220 = vadd.f32 0.0, %v6219
      %v6221 = vpop.f32.mrf.mxu0
      %v6222 = vadd.f32 0.0, %v6221
      %6223 = vmatmul.bf16.gmra.mxu0 %v5398
      %v6224 = vpop.f32.mrf.mxu0
      %v6225 = vadd.f32 0.0, %v6224
      %v6226 = vpop.f32.mrf.mxu0
      %v6227 = vadd.f32 0.0, %v6226
      %6228 = vmatmul.bf16.gmra.mxu0 %v5401
      %v6229 = vpop.f32.mrf.mxu0
      %v6230 = vadd.f32 0.0, %v6229
      %v6231 = vpop.f32.mrf.mxu0
      %v6232 = vadd.f32 0.0, %v6231
      %6233 = vmatmul.bf16.gmra.mxu0 %v5404
      %v6234 = vpop.f32.mrf.mxu0
      %v6235 = vadd.f32 0.0, %v6234
      %v6236 = vpop.f32.mrf.mxu0
      %v6237 = vadd.f32 0.0, %v6236
      %6238 = vmatmul.bf16.gmra.mxu0 %v5407
      %v6239 = vpop.f32.mrf.mxu0
      %v6240 = vadd.f32 0.0, %v6239
      %v6241 = vpop.f32.mrf.mxu0
      %v6242 = vadd.f32 0.0, %v6241
      %6243 = vmatmul.bf16.gmra.mxu0 %v5410
      %v6244 = vpop.f32.mrf.mxu0
      %v6245 = vadd.f32 0.0, %v6244
      %v6246 = vpop.f32.mrf.mxu0
      %v6247 = vadd.f32 0.0, %v6246
      %6248 = vmatmul.bf16.gmra.mxu0 %v5413
      %v6249 = vpop.f32.mrf.mxu0
      %v6250 = vadd.f32 0.0, %v6249
      %v6251 = vpop.f32.mrf.mxu0
      %v6252 = vadd.f32 0.0, %v6251
      %6253 = vmatmul.bf16.gmra.mxu0 %v5416
      %v6254 = vpop.f32.mrf.mxu0
      %v6255 = vadd.f32 0.0, %v6254
      %v6256 = vpop.f32.mrf.mxu0
      %v6257 = vadd.f32 0.0, %v6256
      %6258 = vmatmul.bf16.gmra.mxu0 %v5419
      %v6259 = vpop.f32.mrf.mxu0
      %v6260 = vadd.f32 0.0, %v6259
      %v6261 = vpop.f32.mrf.mxu0
      %v6262 = vadd.f32 0.0, %v6261
      %6263 = vmatmul.bf16.gmra.mxu0 %v5422
      %v6264 = vpop.f32.mrf.mxu0
      %v6265 = vadd.f32 0.0, %v6264
      %v6266 = vpop.f32.mrf.mxu0
      %v6267 = vadd.f32 0.0, %v6266
      %6268 = vmatmul.bf16.gmra.mxu0 %v5425
      %v6269 = vpop.f32.mrf.mxu0
      %v6270 = vadd.f32 0.0, %v6269
      %v6271 = vpop.f32.mrf.mxu0
      %v6272 = vadd.f32 0.0, %v6271
      %6273 = vmatmul.bf16.gmra.mxu0 %v5428
      %v6274 = vpop.f32.mrf.mxu0
      %v6275 = vadd.f32 0.0, %v6274
      %v6276 = vpop.f32.mrf.mxu0
      %v6277 = vadd.f32 0.0, %v6276
      %6278 = vmatmul.bf16.gmra.mxu0 %v5431
      %v6279 = vpop.f32.mrf.mxu0
      %v6280 = vadd.f32 0.0, %v6279
      %v6281 = vpop.f32.mrf.mxu0
      %v6282 = vadd.f32 0.0, %v6281
      %6283 = vmatmul.bf16.gmra.mxu0 %v5434
      %v6284 = vpop.f32.mrf.mxu0
      %v6285 = vadd.f32 0.0, %v6284
      %v6286 = vpop.f32.mrf.mxu0
      %v6287 = vadd.f32 0.0, %v6286
      %6288 = vmatmul.bf16.gmra.mxu0 %v5437
      %v6289 = vpop.f32.mrf.mxu0
      %v6290 = vadd.f32 0.0, %v6289
      %v6291 = vpop.f32.mrf.mxu0
      %v6292 = vadd.f32 0.0, %v6291
      %6293 = vmatmul.bf16.gmra.mxu0 %v5440
      %v6294 = vpop.f32.mrf.mxu0
      %v6295 = vadd.f32 0.0, %v6294
      %v6296 = vpop.f32.mrf.mxu0
      %v6297 = vadd.f32 0.0, %v6296
      %6298 = vmatmul.bf16.gmra.mxu0 %v5443
      %v6299 = vpop.f32.mrf.mxu0
      %v6300 = vadd.f32 0.0, %v6299
      %v6301 = vpop.f32.mrf.mxu0
      %v6302 = vadd.f32 0.0, %v6301
      %6303 = vmatmul.bf16.gmra.mxu0 %v5446
      %v6304 = vpop.f32.mrf.mxu0
      %v6305 = vadd.f32 0.0, %v6304
      %v6306 = vpop.f32.mrf.mxu0
      %v6307 = vadd.f32 0.0, %v6306
      %6308 = vmatmul.bf16.gmra.mxu0 %v5449
      %v6309 = vpop.f32.mrf.mxu0
      %v6310 = vadd.f32 0.0, %v6309
      %v6311 = vpop.f32.mrf.mxu0
      %v6312 = vadd.f32 0.0, %v6311
      %6313 = vmatmul.bf16.gmra.mxu0 %v5452
      %v6314 = vpop.f32.mrf.mxu0
      %v6315 = vadd.f32 0.0, %v6314
      %v6316 = vpop.f32.mrf.mxu0
      %v6317 = vadd.f32 0.0, %v6316
      %6318 = vmatmul.bf16.gmra.mxu0 %v5455
      %v6319 = vpop.f32.mrf.mxu0
      %v6320 = vadd.f32 0.0, %v6319
      %v6321 = vpop.f32.mrf.mxu0
      %v6322 = vadd.f32 0.0, %v6321
      %6323 = vmatmul.bf16.gmra.mxu0 %v5458
      %v6324 = vpop.f32.mrf.mxu0
      %v6325 = vadd.f32 0.0, %v6324
      %v6326 = vpop.f32.mrf.mxu0
      %v6327 = vadd.f32 0.0, %v6326
      %6328 = vmatmul.bf16.gmra.mxu0 %v5461
      %v6329 = vpop.f32.mrf.mxu0
      %v6330 = vadd.f32 0.0, %v6329
      %v6331 = vpop.f32.mrf.mxu0
      %v6332 = vadd.f32 0.0, %v6331
      %6333 = vmatmul.bf16.gmra.mxu0 %v5464
      %v6334 = vpop.f32.mrf.mxu0
      %v6335 = vadd.f32 0.0, %v6334
      %v6336 = vpop.f32.mrf.mxu0
      %v6337 = vadd.f32 0.0, %v6336
      %6338 = vmatmul.bf16.gmra.mxu0 %v5467
      %v6339 = vpop.f32.mrf.mxu0
      %v6340 = vadd.f32 0.0, %v6339
      %v6341 = vpop.f32.mrf.mxu0
      %v6342 = vadd.f32 0.0, %v6341
      %6343 = vmatmul.bf16.gmra.mxu0 %v5470
      %v6344 = vpop.f32.mrf.mxu0
      %v6345 = vadd.f32 0.0, %v6344
      %v6346 = vpop.f32.mrf.mxu0
      %v6347 = vadd.f32 0.0, %v6346
      %6348 = vmatmul.bf16.gmra.mxu0 %v5473
      %v6349 = vpop.f32.mrf.mxu0
      %v6350 = vadd.f32 0.0, %v6349
      %v6351 = vpop.f32.mrf.mxu0
      %v6352 = vadd.f32 0.0, %v6351
      %6353 = vmatmul.bf16.gmra.mxu0 %v5476
      %v6354 = vpop.f32.mrf.mxu0
      %v6355 = vadd.f32 0.0, %v6354
      %v6356 = vpop.f32.mrf.mxu0
      %v6357 = vadd.f32 0.0, %v6356
      %6358 = vmatmul.bf16.gmra.mxu0 %v5479
      %v6359 = vpop.f32.mrf.mxu0
      %v6360 = vadd.f32 0.0, %v6359
      %v6361 = vpop.f32.mrf.mxu0
      %v6362 = vadd.f32 0.0, %v6361
      %6363 = vmatmul.bf16.gmra.mxu0 %v5482
      %v6364 = vpop.f32.mrf.mxu0
      %v6365 = vadd.f32 0.0, %v6364
      %v6366 = vpop.f32.mrf.mxu0
      %v6367 = vadd.f32 0.0, %v6366
      %6368 = vmatmul.bf16.gmra.mxu0 %v5485
      %v6369 = vpop.f32.mrf.mxu0
      %v6370 = vadd.f32 0.0, %v6369
      %v6371 = vpop.f32.mrf.mxu0
      %v6372 = vadd.f32 0.0, %v6371
      %6373 = vmatmul.bf16.gmra.mxu0 %v5488
      %v6374 = vpop.f32.mrf.mxu0
      %v6375 = vadd.f32 0.0, %v6374
      %v6376 = vpop.f32.mrf.mxu0
      %v6377 = vadd.f32 0.0, %v6376
      %6378 = vmatmul.bf16.gmra.mxu0 %v5491
      %v6379 = vpop.f32.mrf.mxu0
      %v6380 = vadd.f32 0.0, %v6379
      %v6381 = vpop.f32.mrf.mxu0
      %v6382 = vadd.f32 0.0, %v6381
      %6383 = vmatmul.bf16.gmra.mxu0 %v5494
      %v6384 = vpop.f32.mrf.mxu0
      %v6385 = vadd.f32 0.0, %v6384
      %v6386 = vpop.f32.mrf.mxu0
      %v6387 = vadd.f32 0.0, %v6386
      %6388 = vmatmul.bf16.gmra.mxu0 %v5497
      %v6389 = vpop.f32.mrf.mxu0
      %v6390 = vadd.f32 0.0, %v6389
      %v6391 = vpop.f32.mrf.mxu0
      %v6392 = vadd.f32 0.0, %v6391
      %6393 = vmatmul.bf16.gmra.mxu0 %v5500
      %v6394 = vpop.f32.mrf.mxu0
      %v6395 = vadd.f32 0.0, %v6394
      %v6396 = vpop.f32.mrf.mxu0
      %v6397 = vadd.f32 0.0, %v6396
      %6398 = vmatmul.bf16.gmra.mxu0 %v5503
      %v6399 = vpop.f32.mrf.mxu0
      %v6400 = vadd.f32 0.0, %v6399
      %v6401 = vpop.f32.mrf.mxu0
      %v6402 = vadd.f32 0.0, %v6401
      %6403 = vmatmul.bf16.gmra.mxu0 %v5506
      %v6404 = vpop.f32.mrf.mxu0
      %v6405 = vadd.f32 0.0, %v6404
      %v6406 = vpop.f32.mrf.mxu0
      %v6407 = vadd.f32 0.0, %v6406
      %6408 = vmatmul.bf16.gmra.mxu0 %v5509
      %v6409 = vpop.f32.mrf.mxu0
      %v6410 = vadd.f32 0.0, %v6409
      %v6411 = vpop.f32.mrf.mxu0
      %v6412 = vadd.f32 0.0, %v6411
      %6413 = vmatmul.bf16.gmra.mxu0 %v5512
      %v6414 = vpop.f32.mrf.mxu0
      %v6415 = vadd.f32 0.0, %v6414
      %v6416 = vpop.f32.mrf.mxu0
      %v6417 = vadd.f32 0.0, %v6416
      %6418 = vmatmul.bf16.gmra.mxu0 %v5515
      %v6419 = vpop.f32.mrf.mxu0
      %v6420 = vadd.f32 0.0, %v6419
      %v6421 = vpop.f32.mrf.mxu0
      %v6422 = vadd.f32 0.0, %v6421
      %6423 = vmatmul.bf16.gmra.mxu0 %v5518
      %v6424 = vpop.f32.mrf.mxu0
      %v6425 = vadd.f32 0.0, %v6424
      %v6426 = vpop.f32.mrf.mxu0
      %v6427 = vadd.f32 0.0, %v6426
      %6428 = vmatmul.bf16.gmra.mxu0 %v5521
      %v6429 = vpop.f32.mrf.mxu0
      %v6430 = vadd.f32 0.0, %v6429
      %v6431 = vpop.f32.mrf.mxu0
      %v6432 = vadd.f32 0.0, %v6431
      %6433 = vmatmul.bf16.gmra.mxu0 %v5524
      %v6434 = vpop.f32.mrf.mxu0
      %v6435 = vadd.f32 0.0, %v6434
      %v6436 = vpop.f32.mrf.mxu0
      %v6437 = vadd.f32 0.0, %v6436
      %6438 = vmatmul.bf16.gmra.mxu0 %v5527
      %v6439 = vpop.f32.mrf.mxu0
      %v6440 = vadd.f32 0.0, %v6439
      %v6441 = vpop.f32.mrf.mxu0
      %v6442 = vadd.f32 0.0, %v6441
      %6443 = vmatmul.bf16.gmra.mxu0 %v5530
      %v6444 = vpop.f32.mrf.mxu0
      %v6445 = vadd.f32 0.0, %v6444
      %v6446 = vpop.f32.mrf.mxu0
      %v6447 = vadd.f32 0.0, %v6446
      %6448 = vmatmul.bf16.gmra.mxu0 %v5533
      %v6449 = vpop.f32.mrf.mxu0
      %v6450 = vadd.f32 0.0, %v6449
      %v6451 = vpop.f32.mrf.mxu0
      %v6452 = vadd.f32 0.0, %v6451
      %6453 = vmatmul.bf16.gmra.mxu0 %v5536
      %v6454 = vpop.f32.mrf.mxu0
      %v6455 = vadd.f32 0.0, %v6454
      %v6456 = vpop.f32.mrf.mxu0
      %v6457 = vadd.f32 0.0, %v6456
      %6458 = vmatmul.bf16.gmra.mxu0 %v5539
      %v6459 = vpop.f32.mrf.mxu0
      %v6460 = vadd.f32 0.0, %v6459
      %v6461 = vpop.f32.mrf.mxu0
      %v6462 = vadd.f32 0.0, %v6461
      %6463 = vmatmul.bf16.gmra.mxu0 %v5542
      %v6464 = vpop.f32.mrf.mxu0
      %v6465 = vadd.f32 0.0, %v6464
      %v6466 = vpop.f32.mrf.mxu0
      %v6467 = vadd.f32 0.0, %v6466
      %6468 = vmatmul.bf16.gmra.mxu0 %v5545
      %v6469 = vpop.f32.mrf.mxu0
      %v6470 = vadd.f32 0.0, %v6469
      %v6471 = vpop.f32.mrf.mxu0
      %v6472 = vadd.f32 0.0, %v6471
      %6473 = vmatmul.bf16.gmra.mxu0 %v5548
      %v6474 = vpop.f32.mrf.mxu0
      %v6475 = vadd.f32 0.0, %v6474
      %v6476 = vpop.f32.mrf.mxu0
      %v6477 = vadd.f32 0.0, %v6476
      %6478 = vmatmul.bf16.gmra.mxu0 %v5551
      %v6479 = vpop.f32.mrf.mxu0
      %v6480 = vadd.f32 0.0, %v6479
      %v6481 = vpop.f32.mrf.mxu0
      %v6482 = vadd.f32 0.0, %v6481
      %6483 = vmatmul.bf16.gmra.mxu0 %v5554
      %v6484 = vpop.f32.mrf.mxu0
      %v6485 = vadd.f32 0.0, %v6484
      %v6486 = vpop.f32.mrf.mxu0
      %v6487 = vadd.f32 0.0, %v6486
      %6488 = vmatmul.bf16.gmra.mxu0 %v5557
      %v6489 = vpop.f32.mrf.mxu0
      %v6490 = vadd.f32 0.0, %v6489
      %v6491 = vpop.f32.mrf.mxu0
      %v6492 = vadd.f32 0.0, %v6491
      %6493 = vmatmul.bf16.gmra.mxu0 %v5560
      %v6494 = vpop.f32.mrf.mxu0
      %v6495 = vadd.f32 0.0, %v6494
      %v6496 = vpop.f32.mrf.mxu0
      %v6497 = vadd.f32 0.0, %v6496
      %6498 = vmatmul.bf16.gmra.mxu0 %v5563
      %v6499 = vpop.f32.mrf.mxu0
      %v6500 = vadd.f32 0.0, %v6499
      %v6501 = vpop.f32.mrf.mxu0
      %v6502 = vadd.f32 0.0, %v6501
      %6503 = vmatmul.bf16.gmra.mxu0 %v5566
      %v6504 = vpop.f32.mrf.mxu0
      %v6505 = vadd.f32 0.0, %v6504
      %v6506 = vpop.f32.mrf.mxu0
      %v6507 = vadd.f32 0.0, %v6506
      %6508 = vmatmul.bf16.gmra.mxu0 %v5569
      %v6509 = vpop.f32.mrf.mxu0
      %v6510 = vadd.f32 0.0, %v6509
      %v6511 = vpop.f32.mrf.mxu0
      %v6512 = vadd.f32 0.0, %v6511
      %6513 = vmatmul.bf16.gmra.mxu0 %v5572
      %v6514 = vpop.f32.mrf.mxu0
      %v6515 = vadd.f32 0.0, %v6514
      %v6516 = vpop.f32.mrf.mxu0
      %v6517 = vadd.f32 0.0, %v6516
      %6518 = vmatmul.bf16.gmra.mxu0 %v5575
      %v6519 = vpop.f32.mrf.mxu0
      %v6520 = vadd.f32 0.0, %v6519
      %v6521 = vpop.f32.mrf.mxu0
      %v6522 = vadd.f32 0.0, %v6521
      %6523 = vmatmul.bf16.gmra.mxu0 %v5578
      %v6524 = vpop.f32.mrf.mxu0
      %v6525 = vadd.f32 0.0, %v6524
      %v6526 = vpop.f32.mrf.mxu0
      %v6527 = vadd.f32 0.0, %v6526
      %6528 = vmatmul.bf16.gmra.mxu0 %v5581
      %v6529 = vpop.f32.mrf.mxu0
      %v6530 = vadd.f32 0.0, %v6529
      %v6531 = vpop.f32.mrf.mxu0
      %v6532 = vadd.f32 0.0, %v6531
      %6533 = vmatmul.bf16.gmra.mxu0 %v5584
      %v6534 = vpop.f32.mrf.mxu0
      %v6535 = vadd.f32 0.0, %v6534
      %v6536 = vpop.f32.mrf.mxu0
      %v6537 = vadd.f32 0.0, %v6536
      %6538 = vmatmul.bf16.gmra.mxu0 %v5587
      %v6539 = vpop.f32.mrf.mxu0
      %v6540 = vadd.f32 0.0, %v6539
      %v6541 = vpop.f32.mrf.mxu0
      %v6542 = vadd.f32 0.0, %v6541
      %6543 = vmatmul.bf16.gmra.mxu0 %v5590
      %v6544 = vpop.f32.mrf.mxu0
      %v6545 = vadd.f32 0.0, %v6544
      %v6546 = vpop.f32.mrf.mxu0
      %v6547 = vadd.f32 0.0, %v6546
      %6548 = vmatmul.bf16.gmra.mxu0 %v5593
      %v6549 = vpop.f32.mrf.mxu0
      %v6550 = vadd.f32 0.0, %v6549
      %v6551 = vpop.f32.mrf.mxu0
      %v6552 = vadd.f32 0.0, %v6551
      %6553 = vmatmul.bf16.gmra.mxu0 %v5596
      %v6554 = vpop.f32.mrf.mxu0
      %v6555 = vadd.f32 0.0, %v6554
      %v6556 = vpop.f32.mrf.mxu0
      %v6557 = vadd.f32 0.0, %v6556
      %6558 = vmatmul.bf16.gmra.mxu0 %v5599
      %v6559 = vpop.f32.mrf.mxu0
      %v6560 = vadd.f32 0.0, %v6559
      %v6561 = vpop.f32.mrf.mxu0
      %v6562 = vadd.f32 0.0, %v6561
      %6563 = vmatmul.bf16.gmra.mxu0 %v5602
      %v6564 = vpop.f32.mrf.mxu0
      %v6565 = vadd.f32 0.0, %v6564
      %v6566 = vpop.f32.mrf.mxu0
      %v6567 = vadd.f32 0.0, %v6566
      %6568 = vmatmul.bf16.gmra.mxu0 %v5605
      %v6569 = vpop.f32.mrf.mxu0
      %v6570 = vadd.f32 0.0, %v6569
      %v6571 = vpop.f32.mrf.mxu0
      %v6572 = vadd.f32 0.0, %v6571
      %6573 = vmatmul.bf16.gmra.mxu0 %v5608
      %v6574 = vpop.f32.mrf.mxu0
      %v6575 = vadd.f32 0.0, %v6574
      %v6576 = vpop.f32.mrf.mxu0
      %v6577 = vadd.f32 0.0, %v6576
      %6578 = vmatmul.bf16.gmra.mxu0 %v5611
      %v6579 = vpop.f32.mrf.mxu0
      %v6580 = vadd.f32 0.0, %v6579
      %v6581 = vpop.f32.mrf.mxu0
      %v6582 = vadd.f32 0.0, %v6581
      %6583 = vmatmul.bf16.gmra.mxu0 %v5614
      %v6584 = vpop.f32.mrf.mxu0
      %v6585 = vadd.f32 0.0, %v6584
      %v6586 = vpop.f32.mrf.mxu0
      %v6587 = vadd.f32 0.0, %v6586
      %6588 = vmatmul.bf16.gmra.mxu0 %v5617
      %v6589 = vpop.f32.mrf.mxu0
      %v6590 = vadd.f32 0.0, %v6589
      %v6591 = vpop.f32.mrf.mxu0
      %v6592 = vadd.f32 0.0, %v6591
      %6593 = vmatmul.bf16.gmra.mxu0 %v5620
      %v6594 = vpop.f32.mrf.mxu0
      %v6595 = vadd.f32 0.0, %v6594
      %v6596 = vpop.f32.mrf.mxu0
      %v6597 = vadd.f32 0.0, %v6596
      %6598 = vmatmul.bf16.gmra.mxu0 %v5623
      %v6599 = vpop.f32.mrf.mxu0
      %v6600 = vadd.f32 0.0, %v6599
      %v6601 = vpop.f32.mrf.mxu0
      %v6602 = vadd.f32 0.0, %v6601
      %6603 = vmatmul.bf16.gmra.mxu0 %v5626
      %v6604 = vpop.f32.mrf.mxu0
      %v6605 = vadd.f32 0.0, %v6604
      %v6606 = vpop.f32.mrf.mxu0
      %v6607 = vadd.f32 0.0, %v6606
      %6608 = vmatmul.bf16.gmra.mxu0 %v5629
      %v6609 = vpop.f32.mrf.mxu0
      %v6610 = vadd.f32 0.0, %v6609
      %v6611 = vpop.f32.mrf.mxu0
      %v6612 = vadd.f32 0.0, %v6611
      %6613 = vmatmul.bf16.gmra.mxu0 %v5632
      %v6614 = vpop.f32.mrf.mxu0
      %v6615 = vadd.f32 0.0, %v6614
      %v6616 = vpop.f32.mrf.mxu0
      %v6617 = vadd.f32 0.0, %v6616
      %6618 = vmatmul.bf16.gmra.mxu0 %v5635
      %v6619 = vpop.f32.mrf.mxu0
      %v6620 = vadd.f32 0.0, %v6619
      %v6621 = vpop.f32.mrf.mxu0
      %v6622 = vadd.f32 0.0, %v6621
      %6623 = vmatmul.bf16.gmra.mxu0 %v5638
      %v6624 = vpop.f32.mrf.mxu0
      %v6625 = vadd.f32 0.0, %v6624
      %v6626 = vpop.f32.mrf.mxu0
      %v6627 = vadd.f32 0.0, %v6626
      %6628 = vmatmul.bf16.gmra.mxu0 %v5641
      %v6629 = vpop.f32.mrf.mxu0
      %v6630 = vadd.f32 0.0, %v6629
      %v6631 = vpop.f32.mrf.mxu0
      %v6632 = vadd.f32 0.0, %v6631
      %6633 = vmatmul.bf16.gmra.mxu0 %v5644
      %v6634 = vpop.f32.mrf.mxu0
      %v6635 = vadd.f32 0.0, %v6634
      %v6636 = vpop.f32.mrf.mxu0
      %v6637 = vadd.f32 0.0, %v6636
      %6638 = vmatmul.bf16.gmra.mxu0 %v5647
      %v6639 = vpop.f32.mrf.mxu0
      %v6640 = vadd.f32 0.0, %v6639
      %v6641 = vpop.f32.mrf.mxu0
      %v6642 = vadd.f32 0.0, %v6641
      %6643 = vmatmul.bf16.gmra.mxu0 %v5650
      %v6644 = vpop.f32.mrf.mxu0
      %v6645 = vadd.f32 0.0, %v6644
      %v6646 = vpop.f32.mrf.mxu0
      %v6647 = vadd.f32 0.0, %v6646
      %6648 = vmatmul.bf16.gmra.mxu0 %v5653
      %v6649 = vpop.f32.mrf.mxu0
      %v6650 = vadd.f32 0.0, %v6649
      %v6651 = vpop.f32.mrf.mxu0
      %v6652 = vadd.f32 0.0, %v6651
      %6653 = vmatmul.bf16.gmra.mxu0 %v5656
      %v6654 = vpop.f32.mrf.mxu0
      %v6655 = vadd.f32 0.0, %v6654
      %v6656 = vpop.f32.mrf.mxu0
      %v6657 = vadd.f32 0.0, %v6656
      %6658 = vmatmul.bf16.gmra.mxu0 %v5659
      %v6659 = vpop.f32.mrf.mxu0
      %v6660 = vadd.f32 0.0, %v6659
      %v6661 = vpop.f32.mrf.mxu0
      %v6662 = vadd.f32 0.0, %v6661
      %6663 = vmatmul.bf16.gmra.mxu0 %v5662
      %v6664 = vpop.f32.mrf.mxu0
      %v6665 = vadd.f32 0.0, %v6664
      %v6666 = vpop.f32.mrf.mxu0
      %v6667 = vadd.f32 0.0, %v6666
      %6668 = vmatmul.bf16.gmra.mxu0 %v5665
      %v6669 = vpop.f32.mrf.mxu0
      %v6670 = vadd.f32 0.0, %v6669
      %v6671 = vpop.f32.mrf.mxu0
      %v6672 = vadd.f32 0.0, %v6671
      %6673 = vmatmul.bf16.gmra.mxu0 %v5668
      %v6674 = vpop.f32.mrf.mxu0
      %v6675 = vadd.f32 0.0, %v6674
      %v6676 = vpop.f32.mrf.mxu0
      %v6677 = vadd.f32 0.0, %v6676
      %6678 = vmatmul.bf16.gmra.mxu0 %v5671
      %v6679 = vpop.f32.mrf.mxu0
      %v6680 = vadd.f32 0.0, %v6679
      %v6681 = vpop.f32.mrf.mxu0
      %v6682 = vadd.f32 0.0, %v6681
      %6683 = vmatmul.bf16.gmra.mxu0 %v5674
      %v6684 = vpop.f32.mrf.mxu0
      %v6685 = vadd.f32 0.0, %v6684
      %v6686 = vpop.f32.mrf.mxu0
      %v6687 = vadd.f32 0.0, %v6686
      %6688 = vmatmul.bf16.gmra.mxu0 %v5677
      %v6689 = vpop.f32.mrf.mxu0
      %v6690 = vadd.f32 0.0, %v6689
      %v6691 = vpop.f32.mrf.mxu0
      %v6692 = vadd.f32 0.0, %v6691
      %6693 = vmatmul.bf16.gmra.mxu0 %v5680
      %v6694 = vpop.f32.mrf.mxu0
      %v6695 = vadd.f32 0.0, %v6694
      %v6696 = vpop.f32.mrf.mxu0
      %v6697 = vadd.f32 0.0, %v6696
      %6698 = vmatmul.bf16.gmra.mxu0 %v5683
      %v6699 = vpop.f32.mrf.mxu0
      %v6700 = vadd.f32 0.0, %v6699
      %v6701 = vpop.f32.mrf.mxu0
      %v6702 = vadd.f32 0.0, %v6701
      %6703 = vmatmul.bf16.gmra.mxu0 %v5686
      %v6704 = vpop.f32.mrf.mxu0
      %v6705 = vadd.f32 0.0, %v6704
      %v6706 = vpop.f32.mrf.mxu0
      %v6707 = vadd.f32 0.0, %v6706
      %6708 = vmatmul.bf16.gmra.mxu0 %v5689
      %v6709 = vpop.f32.mrf.mxu0
      %v6710 = vadd.f32 0.0, %v6709
      %v6711 = vpop.f32.mrf.mxu0
      %v6712 = vadd.f32 0.0, %v6711
      %6713 = vmatmul.bf16.gmra.mxu0 %v5692
      %v6714 = vpop.f32.mrf.mxu0
      %v6715 = vadd.f32 0.0, %v6714
      %v6716 = vpop.f32.mrf.mxu0
      %v6717 = vadd.f32 0.0, %v6716
      %6718 = vmatmul.bf16.gmra.mxu0 %v5695
      %v6719 = vpop.f32.mrf.mxu0
      %v6720 = vadd.f32 0.0, %v6719
      %v6721 = vpop.f32.mrf.mxu0
      %v6722 = vadd.f32 0.0, %v6721
      %6723 = vmatmul.bf16.gmra.mxu0 %v5698
      %v6724 = vpop.f32.mrf.mxu0
      %v6725 = vadd.f32 0.0, %v6724
      %v6726 = vpop.f32.mrf.mxu0
      %v6727 = vadd.f32 0.0, %v6726
      %6728 = vmatmul.bf16.gmra.mxu0 %v5701
      %v6729 = vpop.f32.mrf.mxu0
      %v6730 = vadd.f32 0.0, %v6729
      %v6731 = vpop.f32.mrf.mxu0
      %v6732 = vadd.f32 0.0, %v6731
      %6733 = vmatmul.bf16.gmra.mxu0 %v5704
      %v6734 = vpop.f32.mrf.mxu0
      %v6735 = vadd.f32 0.0, %v6734
      %v6736 = vpop.f32.mrf.mxu0
      %v6737 = vadd.f32 0.0, %v6736
      %6738 = vmatmul.bf16.gmra.mxu0 %v5707
      %v6739 = vpop.f32.mrf.mxu0
      %v6740 = vadd.f32 0.0, %v6739
      %v6741 = vpop.f32.mrf.mxu0
      %v6742 = vadd.f32 0.0, %v6741
      %6743 = vmatmul.bf16.gmra.mxu0 %v5710
      %v6744 = vpop.f32.mrf.mxu0
      %v6745 = vadd.f32 0.0, %v6744
      %v6746 = vpop.f32.mrf.mxu0
      %v6747 = vadd.f32 0.0, %v6746
      %6748 = vmatmul.bf16.gmra.mxu0 %v5713
      %v6749 = vpop.f32.mrf.mxu0
      %v6750 = vadd.f32 0.0, %v6749
      %v6751 = vpop.f32.mrf.mxu0
      %v6752 = vadd.f32 0.0, %v6751
      %6753 = vmatmul.bf16.gmra.mxu0 %v5716
      %v6754 = vpop.f32.mrf.mxu0
      %v6755 = vadd.f32 0.0, %v6754
      %v6756 = vpop.f32.mrf.mxu0
      %v6757 = vadd.f32 0.0, %v6756
      %6758 = vmatmul.bf16.gmra.mxu0 %v5719
      %v6759 = vpop.f32.mrf.mxu0
      %v6760 = vadd.f32 0.0, %v6759
      %v6761 = vpop.f32.mrf.mxu0
      %v6762 = vadd.f32 0.0, %v6761
      %6763 = vmatmul.bf16.gmra.mxu0 %v5722
      %v6764 = vpop.f32.mrf.mxu0
      %v6765 = vadd.f32 0.0, %v6764
      %v6766 = vpop.f32.mrf.mxu0
      %v6767 = vadd.f32 0.0, %v6766
      %6768 = vmatmul.bf16.gmra.mxu0 %v5725
      %v6769 = vpop.f32.mrf.mxu0
      %v6770 = vadd.f32 0.0, %v6769
      %v6771 = vpop.f32.mrf.mxu0
      %v6772 = vadd.f32 0.0, %v6771
      %6773 = vmatmul.bf16.gmra.mxu0 %v5728
      %v6774 = vpop.f32.mrf.mxu0
      %v6775 = vadd.f32 0.0, %v6774
      %v6776 = vpop.f32.mrf.mxu0
      %v6777 = vadd.f32 0.0, %v6776
      %6778 = vmatmul.bf16.gmra.mxu0 %v5731
      %v6779 = vpop.f32.mrf.mxu0
      %v6780 = vadd.f32 0.0, %v6779
      %v6781 = vpop.f32.mrf.mxu0
      %v6782 = vadd.f32 0.0, %v6781
      %6783 = vmatmul.bf16.gmra.mxu0 %v5734
      %v6784 = vpop.f32.mrf.mxu0
      %v6785 = vadd.f32 0.0, %v6784
      %v6786 = vpop.f32.mrf.mxu0
      %v6787 = vadd.f32 0.0, %v6786
      %6788 = vmatmul.bf16.gmra.mxu0 %v5737
      %v6789 = vpop.f32.mrf.mxu0
      %v6790 = vadd.f32 0.0, %v6789
      %v6791 = vpop.f32.mrf.mxu0
      %v6792 = vadd.f32 0.0, %v6791
      %6793 = vmatmul.bf16.gmra.mxu0 %v5740
      %v6794 = vpop.f32.mrf.mxu0
      %v6795 = vadd.f32 0.0, %v6794
      %v6796 = vpop.f32.mrf.mxu0
      %v6797 = vadd.f32 0.0, %v6796
      %6798 = vmatmul.bf16.gmra.mxu0 %v5743
      %v6799 = vpop.f32.mrf.mxu0
      %v6800 = vadd.f32 0.0, %v6799
      %v6801 = vpop.f32.mrf.mxu0
      %v6802 = vadd.f32 0.0, %v6801
      %6803 = vmatmul.bf16.gmra.mxu0 %v5746
      %v6804 = vpop.f32.mrf.mxu0
      %v6805 = vadd.f32 0.0, %v6804
      %v6806 = vpop.f32.mrf.mxu0
      %v6807 = vadd.f32 0.0, %v6806
      %6808 = vmatmul.bf16.gmra.mxu0 %v5749
      %v6809 = vpop.f32.mrf.mxu0
      %v6810 = vadd.f32 0.0, %v6809
      %v6811 = vpop.f32.mrf.mxu0
      %v6812 = vadd.f32 0.0, %v6811
      %6813 = vmatmul.bf16.gmra.mxu0 %v5752
      %v6814 = vpop.f32.mrf.mxu0
      %v6815 = vadd.f32 0.0, %v6814
      %v6816 = vpop.f32.mrf.mxu0
      %v6817 = vadd.f32 0.0, %v6816
      %6818 = vmatmul.bf16.gmra.mxu0 %v5755
      %v6819 = vpop.f32.mrf.mxu0
      %v6820 = vadd.f32 0.0, %v6819
      %v6821 = vpop.f32.mrf.mxu0
      %v6822 = vadd.f32 0.0, %v6821
      %6823 = vmatmul.bf16.gmra.mxu0 %v5758
      %v6824 = vpop.f32.mrf.mxu0
      %v6825 = vadd.f32 0.0, %v6824
      %v6826 = vpop.f32.mrf.mxu0
      %v6827 = vadd.f32 0.0, %v6826
      %6828 = vmatmul.bf16.gmra.mxu0 %v5761
      %v6829 = vpop.f32.mrf.mxu0
      %v6830 = vadd.f32 0.0, %v6829
      %v6831 = vpop.f32.mrf.mxu0
      %v6832 = vadd.f32 0.0, %v6831
      %6833 = vmatmul.bf16.gmra.mxu0 %v5764
      %v6834 = vpop.f32.mrf.mxu0
      %v6835 = vadd.f32 0.0, %v6834
      %v6836 = vpop.f32.mrf.mxu0
      %v6837 = vadd.f32 0.0, %v6836
      %6838 = vmatmul.bf16.gmra.mxu0 %v5767
      %v6839 = vpop.f32.mrf.mxu0
      %v6840 = vadd.f32 0.0, %v6839
      %v6841 = vpop.f32.mrf.mxu0
      %v6842 = vadd.f32 0.0, %v6841
      %6843 = vmatmul.bf16.gmra.mxu0 %v5770
      %v6844 = vpop.f32.mrf.mxu0
      %v6845 = vadd.f32 0.0, %v6844
      %v6846 = vpop.f32.mrf.mxu0
      %v6847 = vadd.f32 0.0, %v6846
      %6848 = vmatmul.bf16.gmra.mxu0 %v5773
      %v6849 = vpop.f32.mrf.mxu0
      %v6850 = vadd.f32 0.0, %v6849
      %v6851 = vpop.f32.mrf.mxu0
      %v6852 = vadd.f32 0.0, %v6851
      %6853 = vmatmul.bf16.gmra.mxu0 %v5776
      %v6854 = vpop.f32.mrf.mxu0
      %v6855 = vadd.f32 0.0, %v6854
      %v6856 = vpop.f32.mrf.mxu0
      %v6857 = vadd.f32 0.0, %v6856
      %6858 = vmatmul.bf16.gmra.mxu0 %v5779
      %v6859 = vpop.f32.mrf.mxu0
      %v6860 = vadd.f32 0.0, %v6859
      %v6861 = vpop.f32.mrf.mxu0
      %v6862 = vadd.f32 0.0, %v6861
      %6863 = vmatmul.bf16.gmra.mxu0 %v5782
      %v6864 = vpop.f32.mrf.mxu0
      %v6865 = vadd.f32 0.0, %v6864
      %v6866 = vpop.f32.mrf.mxu0
      %v6867 = vadd.f32 0.0, %v6866
      %6868 = vmatmul.bf16.gmra.mxu0 %v5785
      %v6869 = vpop.f32.mrf.mxu0
      %v6870 = vadd.f32 0.0, %v6869
      %v6871 = vpop.f32.mrf.mxu0
      %v6872 = vadd.f32 0.0, %v6871
      %6873 = vmatmul.bf16.gmra.mxu0 %v5788
      %v6874 = vpop.f32.mrf.mxu0
      %v6875 = vadd.f32 0.0, %v6874
      %v6876 = vpop.f32.mrf.mxu0
      %v6877 = vadd.f32 0.0, %v6876
      %6878 = vmatmul.bf16.gmra.mxu0 %v5791
      %v6879 = vpop.f32.mrf.mxu0
      %v6880 = vadd.f32 0.0, %v6879
      %v6881 = vpop.f32.mrf.mxu0
      %v6882 = vadd.f32 0.0, %v6881
      %6883 = vmatmul.bf16.gmra.mxu0 %v5794
      %v6884 = vpop.f32.mrf.mxu0
      %v6885 = vadd.f32 0.0, %v6884
      %v6886 = vpop.f32.mrf.mxu0
      %v6887 = vadd.f32 0.0, %v6886
      %6888 = vmatmul.bf16.gmra.mxu0 %v5797
      %v6889 = vpop.f32.mrf.mxu0
      %v6890 = vadd.f32 0.0, %v6889
      %v6891 = vpop.f32.mrf.mxu0
      %v6892 = vadd.f32 0.0, %v6891
      %6893 = vmatmul.bf16.gmra.mxu0 %v5800
      %v6894 = vpop.f32.mrf.mxu0
      %v6895 = vadd.f32 0.0, %v6894
      %v6896 = vpop.f32.mrf.mxu0
      %v6897 = vadd.f32 0.0, %v6896
      %6898 = vmatmul.bf16.gmra.mxu0 %v5803
      %v6899 = vpop.f32.mrf.mxu0
      %v6900 = vadd.f32 0.0, %v6899
      %v6901 = vpop.f32.mrf.mxu0
      %v6902 = vadd.f32 0.0, %v6901
      %6903 = vmatmul.bf16.gmra.mxu0 %v5806
      %v6904 = vpop.f32.mrf.mxu0
      %v6905 = vadd.f32 0.0, %v6904
      %v6906 = vpop.f32.mrf.mxu0
      %v6907 = vadd.f32 0.0, %v6906
      %6908 = vmatmul.bf16.gmra.mxu0 %v5809
      %v6909 = vpop.f32.mrf.mxu0
      %v6910 = vadd.f32 0.0, %v6909
      %v6911 = vpop.f32.mrf.mxu0
      %v6912 = vadd.f32 0.0, %v6911
      %6913 = vmatmul.bf16.gmra.mxu0 %v5812
      %v6914 = vpop.f32.mrf.mxu0
      %v6915 = vadd.f32 0.0, %v6914
      %v6916 = vpop.f32.mrf.mxu0
      %v6917 = vadd.f32 0.0, %v6916
      %6918 = vmatmul.bf16.gmra.mxu0 %v5815
      %v6919 = vpop.f32.mrf.mxu0
      %v6920 = vadd.f32 0.0, %v6919
      %v6921 = vpop.f32.mrf.mxu0
      %v6922 = vadd.f32 0.0, %v6921
      %6923 = vmatmul.bf16.gmra.mxu0 %v5818
      %v6924 = vpop.f32.mrf.mxu0
      %v6925 = vadd.f32 0.0, %v6924
      %v6926 = vpop.f32.mrf.mxu0
      %v6927 = vadd.f32 0.0, %v6926
      %6928 = vmatmul.bf16.gmra.mxu0 %v5821
      %v6929 = vpop.f32.mrf.mxu0
      %v6930 = vadd.f32 0.0, %v6929
      %v6931 = vpop.f32.mrf.mxu0
      %v6932 = vadd.f32 0.0, %v6931
      %6933 = vmatmul.bf16.gmra.mxu0 %v5824
      %v6934 = vpop.f32.mrf.mxu0
      %v6935 = vadd.f32 0.0, %v6934
      %v6936 = vpop.f32.mrf.mxu0
      %v6937 = vadd.f32 0.0, %v6936
      %6938 = vmatmul.bf16.gmra.mxu0 %v5827
      %v6939 = vpop.f32.mrf.mxu0
      %v6940 = vadd.f32 0.0, %v6939
      %v6941 = vpop.f32.mrf.mxu0
      %v6942 = vadd.f32 0.0, %v6941
      %6943 = vmatmul.bf16.gmra.mxu0 %v5830
      %v6944 = vpop.f32.mrf.mxu0
      %v6945 = vadd.f32 0.0, %v6944
      %v6946 = vpop.f32.mrf.mxu0
      %v6947 = vadd.f32 0.0, %v6946
      %6948 = vmatmul.bf16.gmra.mxu0 %v5833
      %v6949 = vpop.f32.mrf.mxu0
      %v6950 = vadd.f32 0.0, %v6949
      %v6951 = vpop.f32.mrf.mxu0
      %v6952 = vadd.f32 0.0, %v6951
      %6953 = vmatmul.bf16.gmra.mxu0 %v5836
      %v6954 = vpop.f32.mrf.mxu0
      %v6955 = vadd.f32 0.0, %v6954
      %v6956 = vpop.f32.mrf.mxu0
      %v6957 = vadd.f32 0.0, %v6956
      %6958 = vmatmul.bf16.gmra.mxu0 %v5839
      %v6959 = vpop.f32.mrf.mxu0
      %v6960 = vadd.f32 0.0, %v6959
      %v6961 = vpop.f32.mrf.mxu0
      %v6962 = vadd.f32 0.0, %v6961
      %6963 = vmatmul.bf16.gmra.mxu0 %v5842
      %v6964 = vpop.f32.mrf.mxu0
      %v6965 = vadd.f32 0.0, %v6964
      %v6966 = vpop.f32.mrf.mxu0
      %v6967 = vadd.f32 0.0, %v6966
      %6968 = vmatmul.bf16.gmra.mxu0 %v5845
      %v6969 = vpop.f32.mrf.mxu0
      %v6970 = vadd.f32 0.0, %v6969
      %v6971 = vpop.f32.mrf.mxu0
      %v6972 = vadd.f32 0.0, %v6971
      %6973 = vmatmul.bf16.gmra.mxu0 %v5848
      %v6974 = vpop.f32.mrf.mxu0
      %v6975 = vadd.f32 0.0, %v6974
      %v6976 = vpop.f32.mrf.mxu0
      %v6977 = vadd.f32 0.0, %v6976
      %6978 = vmatmul.bf16.gmra.mxu0 %v5851
      %v6979 = vpop.f32.mrf.mxu0
      %v6980 = vadd.f32 0.0, %v6979
      %v6981 = vpop.f32.mrf.mxu0
      %v6982 = vadd.f32 0.0, %v6981
      %6983 = vmatmul.bf16.gmra.mxu0 %v5854
      %v6984 = vpop.f32.mrf.mxu0
      %v6985 = vadd.f32 0.0, %v6984
      %v6986 = vpop.f32.mrf.mxu0
      %v6987 = vadd.f32 0.0, %v6986
      %6988 = vmatmul.bf16.gmra.mxu0 %v5857
      %v6989 = vpop.f32.mrf.mxu0
      %v6990 = vadd.f32 0.0, %v6989
      %v6991 = vpop.f32.mrf.mxu0
      %v6992 = vadd.f32 0.0, %v6991
      %6993 = vmatmul.bf16.gmra.mxu0 %v5860
      %v6994 = vpop.f32.mrf.mxu0
      %v6995 = vadd.f32 0.0, %v6994
      %v6996 = vpop.f32.mrf.mxu0
      %v6997 = vadd.f32 0.0, %v6996
      %6998 = vmatmul.bf16.gmra.mxu0 %v5863
      %v6999 = vpop.f32.mrf.mxu0
      %v7000 = vadd.f32 0.0, %v6999
      %v7001 = vpop.f32.mrf.mxu0
      %7002 = vdwg.mxu0
      %7003 = vmatpush.bf16.msra.mxu0 0
      %7004 = vmatpush.bf16.msra.mxu0 0
      %7005 = vmatpush.bf16.msra.mxu0 0
      %7006 = vmatpush.bf16.msra.mxu0 0
      %7007 = vmatpush.bf16.msra.mxu0 0
      %7008 = vmatpush.bf16.msra.mxu0 0
      %7009 = vmatpush.bf16.msra.mxu0 %v4058
      %7010 = vmatpush.bf16.msra.mxu0 %v4056
      %7011 = vmatmul.bf16.gmra.mxu0 %v5188
      %v7012 = vpop.f32.mrf.mxu0
      %v7013 = vadd.f32 0.0, %v7012
      %v7014 = vpop.f32.mrf.mxu0
      %v7015 = vadd.f32 0.0, %v7014
      %7016 = vmatmul.bf16.gmra.mxu0 %v5191
      %v7017 = vpop.f32.mrf.mxu0
      %v7018 = vadd.f32 0.0, %v7017
      %v7019 = vpop.f32.mrf.mxu0
      %v7020 = vadd.f32 0.0, %v7019
      %7021 = vmatmul.bf16.gmra.mxu0 %v5194
      %v7022 = vpop.f32.mrf.mxu0
      %v7023 = vadd.f32 0.0, %v7022
      %v7024 = vpop.f32.mrf.mxu0
      %v7025 = vadd.f32 0.0, %v7024
      %7026 = vmatmul.bf16.gmra.mxu0 %v5197
      %v7027 = vpop.f32.mrf.mxu0
      %v7028 = vadd.f32 0.0, %v7027
      %v7029 = vpop.f32.mrf.mxu0
      %v7030 = vadd.f32 0.0, %v7029
      %7031 = vmatmul.bf16.gmra.mxu0 %v5200
      %v7032 = vpop.f32.mrf.mxu0
      %v7033 = vadd.f32 0.0, %v7032
      %v7034 = vpop.f32.mrf.mxu0
      %v7035 = vadd.f32 0.0, %v7034
      %7036 = vmatmul.bf16.gmra.mxu0 %v5203
      %v7037 = vpop.f32.mrf.mxu0
      %v7038 = vadd.f32 0.0, %v7037
      %v7039 = vpop.f32.mrf.mxu0
      %v7040 = vadd.f32 0.0, %v7039
      %7041 = vmatmul.bf16.gmra.mxu0 %v5206
      %v7042 = vpop.f32.mrf.mxu0
      %v7043 = vadd.f32 0.0, %v7042
      %v7044 = vpop.f32.mrf.mxu0
      %v7045 = vadd.f32 0.0, %v7044
      %7046 = vmatmul.bf16.gmra.mxu0 %v5209
      %v7047 = vpop.f32.mrf.mxu0
      %v7048 = vadd.f32 0.0, %v7047
      %v7049 = vpop.f32.mrf.mxu0
      %v7050 = vadd.f32 0.0, %v7049
      %7051 = vmatmul.bf16.gmra.mxu0 %v5212
      %v7052 = vpop.f32.mrf.mxu0
      %v7053 = vadd.f32 0.0, %v7052
      %v7054 = vpop.f32.mrf.mxu0
      %v7055 = vadd.f32 0.0, %v7054
      %7056 = vmatmul.bf16.gmra.mxu0 %v5215
      %v7057 = vpop.f32.mrf.mxu0
      %v7058 = vadd.f32 0.0, %v7057
      %v7059 = vpop.f32.mrf.mxu0
      %v7060 = vadd.f32 0.0, %v7059
      %7061 = vmatmul.bf16.gmra.mxu0 %v5218
      %v7062 = vpop.f32.mrf.mxu0
      %v7063 = vadd.f32 0.0, %v7062
      %v7064 = vpop.f32.mrf.mxu0
      %v7065 = vadd.f32 0.0, %v7064
      %7066 = vmatmul.bf16.gmra.mxu0 %v5221
      %v7067 = vpop.f32.mrf.mxu0
      %v7068 = vadd.f32 0.0, %v7067
      %v7069 = vpop.f32.mrf.mxu0
      %v7070 = vadd.f32 0.0, %v7069
      %7071 = vmatmul.bf16.gmra.mxu0 %v5224
      %v7072 = vpop.f32.mrf.mxu0
      %v7073 = vadd.f32 0.0, %v7072
      %v7074 = vpop.f32.mrf.mxu0
      %v7075 = vadd.f32 0.0, %v7074
      %7076 = vmatmul.bf16.gmra.mxu0 %v5227
      %v7077 = vpop.f32.mrf.mxu0
      %v7078 = vadd.f32 0.0, %v7077
      %v7079 = vpop.f32.mrf.mxu0
      %v7080 = vadd.f32 0.0, %v7079
      %7081 = vmatmul.bf16.gmra.mxu0 %v5230
      %v7082 = vpop.f32.mrf.mxu0
      %v7083 = vadd.f32 0.0, %v7082
      %v7084 = vpop.f32.mrf.mxu0
      %v7085 = vadd.f32 0.0, %v7084
      %7086 = vmatmul.bf16.gmra.mxu0 %v5233
      %v7087 = vpop.f32.mrf.mxu0
      %v7088 = vadd.f32 0.0, %v7087
      %v7089 = vpop.f32.mrf.mxu0
      %v7090 = vadd.f32 0.0, %v7089
      %7091 = vmatmul.bf16.gmra.mxu0 %v5236
      %v7092 = vpop.f32.mrf.mxu0
      %v7093 = vadd.f32 0.0, %v7092
      %v7094 = vpop.f32.mrf.mxu0
      %v7095 = vadd.f32 0.0, %v7094
      %7096 = vmatmul.bf16.gmra.mxu0 %v5239
      %v7097 = vpop.f32.mrf.mxu0
      %v7098 = vadd.f32 0.0, %v7097
      %v7099 = vpop.f32.mrf.mxu0
      %v7100 = vadd.f32 0.0, %v7099
      %7101 = vmatmul.bf16.gmra.mxu0 %v5242
      %v7102 = vpop.f32.mrf.mxu0
      %v7103 = vadd.f32 0.0, %v7102
      %v7104 = vpop.f32.mrf.mxu0
      %v7105 = vadd.f32 0.0, %v7104
      %7106 = vmatmul.bf16.gmra.mxu0 %v5245
      %v7107 = vpop.f32.mrf.mxu0
      %v7108 = vadd.f32 0.0, %v7107
      %v7109 = vpop.f32.mrf.mxu0
      %v7110 = vadd.f32 0.0, %v7109
      %7111 = vmatmul.bf16.gmra.mxu0 %v5248
      %v7112 = vpop.f32.mrf.mxu0
      %v7113 = vadd.f32 0.0, %v7112
      %v7114 = vpop.f32.mrf.mxu0
      %v7115 = vadd.f32 0.0, %v7114
      %7116 = vmatmul.bf16.gmra.mxu0 %v5251
      %v7117 = vpop.f32.mrf.mxu0
      %v7118 = vadd.f32 0.0, %v7117
      %v7119 = vpop.f32.mrf.mxu0
      %v7120 = vadd.f32 0.0, %v7119
      %7121 = vmatmul.bf16.gmra.mxu0 %v5254
      %v7122 = vpop.f32.mrf.mxu0
      %v7123 = vadd.f32 0.0, %v7122
      %v7124 = vpop.f32.mrf.mxu0
      %v7125 = vadd.f32 0.0, %v7124
      %7126 = vmatmul.bf16.gmra.mxu0 %v5257
      %v7127 = vpop.f32.mrf.mxu0
      %v7128 = vadd.f32 0.0, %v7127
      %v7129 = vpop.f32.mrf.mxu0
      %v7130 = vadd.f32 0.0, %v7129
      %7131 = vmatmul.bf16.gmra.mxu0 %v5260
      %v7132 = vpop.f32.mrf.mxu0
      %v7133 = vadd.f32 0.0, %v7132
      %v7134 = vpop.f32.mrf.mxu0
      %v7135 = vadd.f32 0.0, %v7134
      %7136 = vmatmul.bf16.gmra.mxu0 %v5263
      %v7137 = vpop.f32.mrf.mxu0
      %v7138 = vadd.f32 0.0, %v7137
      %v7139 = vpop.f32.mrf.mxu0
      %v7140 = vadd.f32 0.0, %v7139
      %7141 = vmatmul.bf16.gmra.mxu0 %v5266
      %v7142 = vpop.f32.mrf.mxu0
      %v7143 = vadd.f32 0.0, %v7142
      %v7144 = vpop.f32.mrf.mxu0
      %v7145 = vadd.f32 0.0, %v7144
      %7146 = vmatmul.bf16.gmra.mxu0 %v5269
      %v7147 = vpop.f32.mrf.mxu0
      %v7148 = vadd.f32 0.0, %v7147
      %v7149 = vpop.f32.mrf.mxu0
      %v7150 = vadd.f32 0.0, %v7149
      %7151 = vmatmul.bf16.gmra.mxu0 %v5272
      %v7152 = vpop.f32.mrf.mxu0
      %v7153 = vadd.f32 0.0, %v7152
      %v7154 = vpop.f32.mrf.mxu0
      %v7155 = vadd.f32 0.0, %v7154
      %7156 = vmatmul.bf16.gmra.mxu0 %v5275
      %v7157 = vpop.f32.mrf.mxu0
      %v7158 = vadd.f32 0.0, %v7157
      %v7159 = vpop.f32.mrf.mxu0
      %v7160 = vadd.f32 0.0, %v7159
      %7161 = vmatmul.bf16.gmra.mxu0 %v5278
      %v7162 = vpop.f32.mrf.mxu0
      %v7163 = vadd.f32 0.0, %v7162
      %v7164 = vpop.f32.mrf.mxu0
      %v7165 = vadd.f32 0.0, %v7164
      %7166 = vmatmul.bf16.gmra.mxu0 %v5281
      %v7167 = vpop.f32.mrf.mxu0
      %v7168 = vadd.f32 0.0, %v7167
      %v7169 = vpop.f32.mrf.mxu0
      %v7170 = vadd.f32 0.0, %v7169
      %7171 = vmatmul.bf16.gmra.mxu0 %v5284
      %v7172 = vpop.f32.mrf.mxu0
      %v7173 = vadd.f32 0.0, %v7172
      %v7174 = vpop.f32.mrf.mxu0
      %v7175 = vadd.f32 0.0, %v7174
      %7176 = vmatmul.bf16.gmra.mxu0 %v5287
      %v7177 = vpop.f32.mrf.mxu0
      %v7178 = vadd.f32 0.0, %v7177
      %v7179 = vpop.f32.mrf.mxu0
      %v7180 = vadd.f32 0.0, %v7179
      %7181 = vmatmul.bf16.gmra.mxu0 %v5290
      %v7182 = vpop.f32.mrf.mxu0
      %v7183 = vadd.f32 0.0, %v7182
      %v7184 = vpop.f32.mrf.mxu0
      %v7185 = vadd.f32 0.0, %v7184
      %7186 = vmatmul.bf16.gmra.mxu0 %v5293
      %v7187 = vpop.f32.mrf.mxu0
      %v7188 = vadd.f32 0.0, %v7187
      %v7189 = vpop.f32.mrf.mxu0
      %v7190 = vadd.f32 0.0, %v7189
      %7191 = vmatmul.bf16.gmra.mxu0 %v5296
      %v7192 = vpop.f32.mrf.mxu0
      %v7193 = vadd.f32 0.0, %v7192
      %v7194 = vpop.f32.mrf.mxu0
      %v7195 = vadd.f32 0.0, %v7194
      %7196 = vmatmul.bf16.gmra.mxu0 %v5299
      %v7197 = vpop.f32.mrf.mxu0
      %v7198 = vadd.f32 0.0, %v7197
      %v7199 = vpop.f32.mrf.mxu0
      %v7200 = vadd.f32 0.0, %v7199
      %7201 = vmatmul.bf16.gmra.mxu0 %v5302
      %v7202 = vpop.f32.mrf.mxu0
      %v7203 = vadd.f32 0.0, %v7202
      %v7204 = vpop.f32.mrf.mxu0
      %v7205 = vadd.f32 0.0, %v7204
      %7206 = vmatmul.bf16.gmra.mxu0 %v5305
      %v7207 = vpop.f32.mrf.mxu0
      %v7208 = vadd.f32 0.0, %v7207
      %v7209 = vpop.f32.mrf.mxu0
      %v7210 = vadd.f32 0.0, %v7209
      %7211 = vmatmul.bf16.gmra.mxu0 %v5308
      %v7212 = vpop.f32.mrf.mxu0
      %v7213 = vadd.f32 0.0, %v7212
      %v7214 = vpop.f32.mrf.mxu0
      %v7215 = vadd.f32 0.0, %v7214
      %7216 = vmatmul.bf16.gmra.mxu0 %v5311
      %v7217 = vpop.f32.mrf.mxu0
      %v7218 = vadd.f32 0.0, %v7217
      %v7219 = vpop.f32.mrf.mxu0
      %v7220 = vadd.f32 0.0, %v7219
      %7221 = vmatmul.bf16.gmra.mxu0 %v5314
      %v7222 = vpop.f32.mrf.mxu0
      %v7223 = vadd.f32 0.0, %v7222
      %v7224 = vpop.f32.mrf.mxu0
      %v7225 = vadd.f32 0.0, %v7224
      %7226 = vmatmul.bf16.gmra.mxu0 %v5317
      %v7227 = vpop.f32.mrf.mxu0
      %v7228 = vadd.f32 0.0, %v7227
      %v7229 = vpop.f32.mrf.mxu0
      %v7230 = vadd.f32 0.0, %v7229
      %7231 = vmatmul.bf16.gmra.mxu0 %v5320
      %v7232 = vpop.f32.mrf.mxu0
      %v7233 = vadd.f32 0.0, %v7232
      %v7234 = vpop.f32.mrf.mxu0
      %v7235 = vadd.f32 0.0, %v7234
      %7236 = vmatmul.bf16.gmra.mxu0 %v5323
      %v7237 = vpop.f32.mrf.mxu0
      %v7238 = vadd.f32 0.0, %v7237
      %v7239 = vpop.f32.mrf.mxu0
      %v7240 = vadd.f32 0.0, %v7239
      %7241 = vmatmul.bf16.gmra.mxu0 %v5326
      %v7242 = vpop.f32.mrf.mxu0
      %v7243 = vadd.f32 0.0, %v7242
      %v7244 = vpop.f32.mrf.mxu0
      %v7245 = vadd.f32 0.0, %v7244
      %7246 = vmatmul.bf16.gmra.mxu0 %v5329
      %v7247 = vpop.f32.mrf.mxu0
      %v7248 = vadd.f32 0.0, %v7247
      %v7249 = vpop.f32.mrf.mxu0
      %v7250 = vadd.f32 0.0, %v7249
      %7251 = vmatmul.bf16.gmra.mxu0 %v5332
      %v7252 = vpop.f32.mrf.mxu0
      %v7253 = vadd.f32 0.0, %v7252
      %v7254 = vpop.f32.mrf.mxu0
      %v7255 = vadd.f32 0.0, %v7254
      %7256 = vmatmul.bf16.gmra.mxu0 %v5335
      %v7257 = vpop.f32.mrf.mxu0
      %v7258 = vadd.f32 0.0, %v7257
      %v7259 = vpop.f32.mrf.mxu0
      %v7260 = vadd.f32 0.0, %v7259
      %7261 = vmatmul.bf16.gmra.mxu0 %v5338
      %v7262 = vpop.f32.mrf.mxu0
      %v7263 = vadd.f32 0.0, %v7262
      %v7264 = vpop.f32.mrf.mxu0
      %v7265 = vadd.f32 0.0, %v7264
      %7266 = vmatmul.bf16.gmra.mxu0 %v5341
      %v7267 = vpop.f32.mrf.mxu0
      %v7268 = vadd.f32 0.0, %v7267
      %v7269 = vpop.f32.mrf.mxu0
      %v7270 = vadd.f32 0.0, %v7269
      %7271 = vmatmul.bf16.gmra.mxu0 %v5344
      %v7272 = vpop.f32.mrf.mxu0
      %v7273 = vadd.f32 0.0, %v7272
      %v7274 = vpop.f32.mrf.mxu0
      %v7275 = vadd.f32 0.0, %v7274
      %7276 = vmatmul.bf16.gmra.mxu0 %v5347
      %v7277 = vpop.f32.mrf.mxu0
      %v7278 = vadd.f32 0.0, %v7277
      %v7279 = vpop.f32.mrf.mxu0
      %v7280 = vadd.f32 0.0, %v7279
      %7281 = vmatmul.bf16.gmra.mxu0 %v5350
      %v7282 = vpop.f32.mrf.mxu0
      %v7283 = vadd.f32 0.0, %v7282
      %v7284 = vpop.f32.mrf.mxu0
      %v7285 = vadd.f32 0.0, %v7284
      %7286 = vmatmul.bf16.gmra.mxu0 %v5353
      %v7287 = vpop.f32.mrf.mxu0
      %v7288 = vadd.f32 0.0, %v7287
      %v7289 = vpop.f32.mrf.mxu0
      %v7290 = vadd.f32 0.0, %v7289
      %7291 = vmatmul.bf16.gmra.mxu0 %v5356
      %v7292 = vpop.f32.mrf.mxu0
      %v7293 = vadd.f32 0.0, %v7292
      %v7294 = vpop.f32.mrf.mxu0
      %v7295 = vadd.f32 0.0, %v7294
      %7296 = vmatmul.bf16.gmra.mxu0 %v5359
      %v7297 = vpop.f32.mrf.mxu0
      %v7298 = vadd.f32 0.0, %v7297
      %v7299 = vpop.f32.mrf.mxu0
      %v7300 = vadd.f32 0.0, %v7299
      %7301 = vmatmul.bf16.gmra.mxu0 %v5362
      %v7302 = vpop.f32.mrf.mxu0
      %v7303 = vadd.f32 0.0, %v7302
      %v7304 = vpop.f32.mrf.mxu0
      %v7305 = vadd.f32 0.0, %v7304
      %7306 = vmatmul.bf16.gmra.mxu0 %v5365
      %v7307 = vpop.f32.mrf.mxu0
      %v7308 = vadd.f32 0.0, %v7307
      %v7309 = vpop.f32.mrf.mxu0
      %v7310 = vadd.f32 0.0, %v7309
      %7311 = vmatmul.bf16.gmra.mxu0 %v5368
      %v7312 = vpop.f32.mrf.mxu0
      %v7313 = vadd.f32 0.0, %v7312
      %v7314 = vpop.f32.mrf.mxu0
      %v7315 = vadd.f32 0.0, %v7314
      %7316 = vmatmul.bf16.gmra.mxu0 %v5371
      %v7317 = vpop.f32.mrf.mxu0
      %v7318 = vadd.f32 0.0, %v7317
      %v7319 = vpop.f32.mrf.mxu0
      %v7320 = vadd.f32 0.0, %v7319
      %7321 = vmatmul.bf16.gmra.mxu0 %v5374
      %v7322 = vpop.f32.mrf.mxu0
      %v7323 = vadd.f32 0.0, %v7322
      %v7324 = vpop.f32.mrf.mxu0
      %v7325 = vadd.f32 0.0, %v7324
      %7326 = vmatmul.bf16.gmra.mxu0 %v5377
      %v7327 = vpop.f32.mrf.mxu0
      %v7328 = vadd.f32 0.0, %v7327
      %v7329 = vpop.f32.mrf.mxu0
      %v7330 = vadd.f32 0.0, %v7329
      %7331 = vmatmul.bf16.gmra.mxu0 %v5380
      %v7332 = vpop.f32.mrf.mxu0
      %v7333 = vadd.f32 0.0, %v7332
      %v7334 = vpop.f32.mrf.mxu0
      %v7335 = vadd.f32 0.0, %v7334
      %7336 = vmatmul.bf16.gmra.mxu0 %v5383
      %v7337 = vpop.f32.mrf.mxu0
      %v7338 = vadd.f32 0.0, %v7337
      %v7339 = vpop.f32.mrf.mxu0
      %v7340 = vadd.f32 0.0, %v7339
      %7341 = vmatmul.bf16.gmra.mxu0 %v5386
      %v7342 = vpop.f32.mrf.mxu0
      %v7343 = vadd.f32 0.0, %v7342
      %v7344 = vpop.f32.mrf.mxu0
      %v7345 = vadd.f32 0.0, %v7344
      %7346 = vmatmul.bf16.gmra.mxu0 %v5389
      %v7347 = vpop.f32.mrf.mxu0
      %v7348 = vadd.f32 0.0, %v7347
      %v7349 = vpop.f32.mrf.mxu0
      %v7350 = vadd.f32 0.0, %v7349
      %7351 = vmatmul.bf16.gmra.mxu0 %v5392
      %v7352 = vpop.f32.mrf.mxu0
      %v7353 = vadd.f32 0.0, %v7352
      %v7354 = vpop.f32.mrf.mxu0
      %v7355 = vadd.f32 0.0, %v7354
      %7356 = vmatmul.bf16.gmra.mxu0 %v5395
      %v7357 = vpop.f32.mrf.mxu0
      %v7358 = vadd.f32 0.0, %v7357
      %v7359 = vpop.f32.mrf.mxu0
      %v7360 = vadd.f32 0.0, %v7359
      %7361 = vmatmul.bf16.gmra.mxu0 %v5398
      %v7362 = vpop.f32.mrf.mxu0
      %v7363 = vadd.f32 0.0, %v7362
      %v7364 = vpop.f32.mrf.mxu0
      %v7365 = vadd.f32 0.0, %v7364
      %7366 = vmatmul.bf16.gmra.mxu0 %v5401
      %v7367 = vpop.f32.mrf.mxu0
      %v7368 = vadd.f32 0.0, %v7367
      %v7369 = vpop.f32.mrf.mxu0
      %v7370 = vadd.f32 0.0, %v7369
      %7371 = vmatmul.bf16.gmra.mxu0 %v5404
      %v7372 = vpop.f32.mrf.mxu0
      %v7373 = vadd.f32 0.0, %v7372
      %v7374 = vpop.f32.mrf.mxu0
      %v7375 = vadd.f32 0.0, %v7374
      %7376 = vmatmul.bf16.gmra.mxu0 %v5407
      %v7377 = vpop.f32.mrf.mxu0
      %v7378 = vadd.f32 0.0, %v7377
      %v7379 = vpop.f32.mrf.mxu0
      %v7380 = vadd.f32 0.0, %v7379
      %7381 = vmatmul.bf16.gmra.mxu0 %v5410
      %v7382 = vpop.f32.mrf.mxu0
      %v7383 = vadd.f32 0.0, %v7382
      %v7384 = vpop.f32.mrf.mxu0
      %v7385 = vadd.f32 0.0, %v7384
      %7386 = vmatmul.bf16.gmra.mxu0 %v5413
      %v7387 = vpop.f32.mrf.mxu0
      %v7388 = vadd.f32 0.0, %v7387
      %v7389 = vpop.f32.mrf.mxu0
      %v7390 = vadd.f32 0.0, %v7389
      %7391 = vmatmul.bf16.gmra.mxu0 %v5416
      %v7392 = vpop.f32.mrf.mxu0
      %v7393 = vadd.f32 0.0, %v7392
      %v7394 = vpop.f32.mrf.mxu0
      %v7395 = vadd.f32 0.0, %v7394
      %7396 = vmatmul.bf16.gmra.mxu0 %v5419
      %v7397 = vpop.f32.mrf.mxu0
      %v7398 = vadd.f32 0.0, %v7397
      %v7399 = vpop.f32.mrf.mxu0
      %v7400 = vadd.f32 0.0, %v7399
      %7401 = vmatmul.bf16.gmra.mxu0 %v5422
      %v7402 = vpop.f32.mrf.mxu0
      %v7403 = vadd.f32 0.0, %v7402
      %v7404 = vpop.f32.mrf.mxu0
      %v7405 = vadd.f32 0.0, %v7404
      %7406 = vmatmul.bf16.gmra.mxu0 %v5425
      %v7407 = vpop.f32.mrf.mxu0
      %v7408 = vadd.f32 0.0, %v7407
      %v7409 = vpop.f32.mrf.mxu0
      %v7410 = vadd.f32 0.0, %v7409
      %7411 = vmatmul.bf16.gmra.mxu0 %v5428
      %v7412 = vpop.f32.mrf.mxu0
      %v7413 = vadd.f32 0.0, %v7412
      %v7414 = vpop.f32.mrf.mxu0
      %v7415 = vadd.f32 0.0, %v7414
      %7416 = vmatmul.bf16.gmra.mxu0 %v5431
      %v7417 = vpop.f32.mrf.mxu0
      %v7418 = vadd.f32 0.0, %v7417
      %v7419 = vpop.f32.mrf.mxu0
      %v7420 = vadd.f32 0.0, %v7419
      %7421 = vmatmul.bf16.gmra.mxu0 %v5434
      %v7422 = vpop.f32.mrf.mxu0
      %v7423 = vadd.f32 0.0, %v7422
      %v7424 = vpop.f32.mrf.mxu0
      %v7425 = vadd.f32 0.0, %v7424
      %7426 = vmatmul.bf16.gmra.mxu0 %v5437
      %v7427 = vpop.f32.mrf.mxu0
      %v7428 = vadd.f32 0.0, %v7427
      %v7429 = vpop.f32.mrf.mxu0
      %v7430 = vadd.f32 0.0, %v7429
      %7431 = vmatmul.bf16.gmra.mxu0 %v5440
      %v7432 = vpop.f32.mrf.mxu0
      %v7433 = vadd.f32 0.0, %v7432
      %v7434 = vpop.f32.mrf.mxu0
      %v7435 = vadd.f32 0.0, %v7434
      %7436 = vmatmul.bf16.gmra.mxu0 %v5443
      %v7437 = vpop.f32.mrf.mxu0
      %v7438 = vadd.f32 0.0, %v7437
      %v7439 = vpop.f32.mrf.mxu0
      %v7440 = vadd.f32 0.0, %v7439
      %7441 = vmatmul.bf16.gmra.mxu0 %v5446
      %v7442 = vpop.f32.mrf.mxu0
      %v7443 = vadd.f32 0.0, %v7442
      %v7444 = vpop.f32.mrf.mxu0
      %v7445 = vadd.f32 0.0, %v7444
      %7446 = vmatmul.bf16.gmra.mxu0 %v5449
      %v7447 = vpop.f32.mrf.mxu0
      %v7448 = vadd.f32 0.0, %v7447
      %v7449 = vpop.f32.mrf.mxu0
      %v7450 = vadd.f32 0.0, %v7449
      %7451 = vmatmul.bf16.gmra.mxu0 %v5452
      %v7452 = vpop.f32.mrf.mxu0
      %v7453 = vadd.f32 0.0, %v7452
      %v7454 = vpop.f32.mrf.mxu0
      %v7455 = vadd.f32 0.0, %v7454
      %7456 = vmatmul.bf16.gmra.mxu0 %v5455
      %v7457 = vpop.f32.mrf.mxu0
      %v7458 = vadd.f32 0.0, %v7457
      %v7459 = vpop.f32.mrf.mxu0
      %v7460 = vadd.f32 0.0, %v7459
      %7461 = vmatmul.bf16.gmra.mxu0 %v5458
      %v7462 = vpop.f32.mrf.mxu0
      %v7463 = vadd.f32 0.0, %v7462
      %v7464 = vpop.f32.mrf.mxu0
      %v7465 = vadd.f32 0.0, %v7464
      %7466 = vmatmul.bf16.gmra.mxu0 %v5461
      %v7467 = vpop.f32.mrf.mxu0
      %v7468 = vadd.f32 0.0, %v7467
      %v7469 = vpop.f32.mrf.mxu0
      %v7470 = vadd.f32 0.0, %v7469
      %7471 = vmatmul.bf16.gmra.mxu0 %v5464
      %v7472 = vpop.f32.mrf.mxu0
      %v7473 = vadd.f32 0.0, %v7472
      %v7474 = vpop.f32.mrf.mxu0
      %v7475 = vadd.f32 0.0, %v7474
      %7476 = vmatmul.bf16.gmra.mxu0 %v5467
      %v7477 = vpop.f32.mrf.mxu0
      %v7478 = vadd.f32 0.0, %v7477
      %v7479 = vpop.f32.mrf.mxu0
      %v7480 = vadd.f32 0.0, %v7479
      %7481 = vmatmul.bf16.gmra.mxu0 %v5470
      %v7482 = vpop.f32.mrf.mxu0
      %v7483 = vadd.f32 0.0, %v7482
      %v7484 = vpop.f32.mrf.mxu0
      %v7485 = vadd.f32 0.0, %v7484
      %7486 = vmatmul.bf16.gmra.mxu0 %v5473
      %v7487 = vpop.f32.mrf.mxu0
      %v7488 = vadd.f32 0.0, %v7487
      %v7489 = vpop.f32.mrf.mxu0
      %v7490 = vadd.f32 0.0, %v7489
      %7491 = vmatmul.bf16.gmra.mxu0 %v5476
      %v7492 = vpop.f32.mrf.mxu0
      %v7493 = vadd.f32 0.0, %v7492
      %v7494 = vpop.f32.mrf.mxu0
      %v7495 = vadd.f32 0.0, %v7494
      %7496 = vmatmul.bf16.gmra.mxu0 %v5479
      %v7497 = vpop.f32.mrf.mxu0
      %v7498 = vadd.f32 0.0, %v7497
      %v7499 = vpop.f32.mrf.mxu0
      %v7500 = vadd.f32 0.0, %v7499
      %7501 = vmatmul.bf16.gmra.mxu0 %v5482
      %v7502 = vpop.f32.mrf.mxu0
      %v7503 = vadd.f32 0.0, %v7502
      %v7504 = vpop.f32.mrf.mxu0
      %v7505 = vadd.f32 0.0, %v7504
      %7506 = vmatmul.bf16.gmra.mxu0 %v5485
      %v7507 = vpop.f32.mrf.mxu0
      %v7508 = vadd.f32 0.0, %v7507
      %v7509 = vpop.f32.mrf.mxu0
      %v7510 = vadd.f32 0.0, %v7509
      %7511 = vmatmul.bf16.gmra.mxu0 %v5488
      %v7512 = vpop.f32.mrf.mxu0
      %v7513 = vadd.f32 0.0, %v7512
      %v7514 = vpop.f32.mrf.mxu0
      %v7515 = vadd.f32 0.0, %v7514
      %7516 = vmatmul.bf16.gmra.mxu0 %v5491
      %v7517 = vpop.f32.mrf.mxu0
      %v7518 = vadd.f32 0.0, %v7517
      %v7519 = vpop.f32.mrf.mxu0
      %v7520 = vadd.f32 0.0, %v7519
      %7521 = vmatmul.bf16.gmra.mxu0 %v5494
      %v7522 = vpop.f32.mrf.mxu0
      %v7523 = vadd.f32 0.0, %v7522
      %v7524 = vpop.f32.mrf.mxu0
      %v7525 = vadd.f32 0.0, %v7524
      %7526 = vmatmul.bf16.gmra.mxu0 %v5497
      %v7527 = vpop.f32.mrf.mxu0
      %v7528 = vadd.f32 0.0, %v7527
      %v7529 = vpop.f32.mrf.mxu0
      %v7530 = vadd.f32 0.0, %v7529
      %7531 = vmatmul.bf16.gmra.mxu0 %v5500
      %v7532 = vpop.f32.mrf.mxu0
      %v7533 = vadd.f32 0.0, %v7532
      %v7534 = vpop.f32.mrf.mxu0
      %v7535 = vadd.f32 0.0, %v7534
      %7536 = vmatmul.bf16.gmra.mxu0 %v5503
      %v7537 = vpop.f32.mrf.mxu0
      %v7538 = vadd.f32 0.0, %v7537
      %v7539 = vpop.f32.mrf.mxu0
      %v7540 = vadd.f32 0.0, %v7539
      %7541 = vmatmul.bf16.gmra.mxu0 %v5506
      %v7542 = vpop.f32.mrf.mxu0
      %v7543 = vadd.f32 0.0, %v7542
      %v7544 = vpop.f32.mrf.mxu0
      %v7545 = vadd.f32 0.0, %v7544
      %7546 = vmatmul.bf16.gmra.mxu0 %v5509
      %v7547 = vpop.f32.mrf.mxu0
      %v7548 = vadd.f32 0.0, %v7547
      %v7549 = vpop.f32.mrf.mxu0
      %v7550 = vadd.f32 0.0, %v7549
      %7551 = vmatmul.bf16.gmra.mxu0 %v5512
      %v7552 = vpop.f32.mrf.mxu0
      %v7553 = vadd.f32 0.0, %v7552
      %v7554 = vpop.f32.mrf.mxu0
      %v7555 = vadd.f32 0.0, %v7554
      %7556 = vmatmul.bf16.gmra.mxu0 %v5515
      %v7557 = vpop.f32.mrf.mxu0
      %v7558 = vadd.f32 0.0, %v7557
      %v7559 = vpop.f32.mrf.mxu0
      %v7560 = vadd.f32 0.0, %v7559
      %7561 = vmatmul.bf16.gmra.mxu0 %v5518
      %v7562 = vpop.f32.mrf.mxu0
      %v7563 = vadd.f32 0.0, %v7562
      %v7564 = vpop.f32.mrf.mxu0
      %v7565 = vadd.f32 0.0, %v7564
      %7566 = vmatmul.bf16.gmra.mxu0 %v5521
      %v7567 = vpop.f32.mrf.mxu0
      %v7568 = vadd.f32 0.0, %v7567
      %v7569 = vpop.f32.mrf.mxu0
      %v7570 = vadd.f32 0.0, %v7569
      %7571 = vmatmul.bf16.gmra.mxu0 %v5524
      %v7572 = vpop.f32.mrf.mxu0
      %v7573 = vadd.f32 0.0, %v7572
      %v7574 = vpop.f32.mrf.mxu0
      %v7575 = vadd.f32 0.0, %v7574
      %7576 = vmatmul.bf16.gmra.mxu0 %v5527
      %v7577 = vpop.f32.mrf.mxu0
      %v7578 = vadd.f32 0.0, %v7577
      %v7579 = vpop.f32.mrf.mxu0
      %v7580 = vadd.f32 0.0, %v7579
      %7581 = vmatmul.bf16.gmra.mxu0 %v5530
      %v7582 = vpop.f32.mrf.mxu0
      %v7583 = vadd.f32 0.0, %v7582
      %v7584 = vpop.f32.mrf.mxu0
      %v7585 = vadd.f32 0.0, %v7584
      %7586 = vmatmul.bf16.gmra.mxu0 %v5533
      %v7587 = vpop.f32.mrf.mxu0
      %v7588 = vadd.f32 0.0, %v7587
      %v7589 = vpop.f32.mrf.mxu0
      %v7590 = vadd.f32 0.0, %v7589
      %7591 = vmatmul.bf16.gmra.mxu0 %v5536
      %v7592 = vpop.f32.mrf.mxu0
      %v7593 = vadd.f32 0.0, %v7592
      %v7594 = vpop.f32.mrf.mxu0
      %v7595 = vadd.f32 0.0, %v7594
      %7596 = vmatmul.bf16.gmra.mxu0 %v5539
      %v7597 = vpop.f32.mrf.mxu0
      %v7598 = vadd.f32 0.0, %v7597
      %v7599 = vpop.f32.mrf.mxu0
      %v7600 = vadd.f32 0.0, %v7599
      %7601 = vmatmul.bf16.gmra.mxu0 %v5542
      %v7602 = vpop.f32.mrf.mxu0
      %v7603 = vadd.f32 0.0, %v7602
      %v7604 = vpop.f32.mrf.mxu0
      %v7605 = vadd.f32 0.0, %v7604
      %7606 = vmatmul.bf16.gmra.mxu0 %v5545
      %v7607 = vpop.f32.mrf.mxu0
      %v7608 = vadd.f32 0.0, %v7607
      %v7609 = vpop.f32.mrf.mxu0
      %v7610 = vadd.f32 0.0, %v7609
      %7611 = vmatmul.bf16.gmra.mxu0 %v5548
      %v7612 = vpop.f32.mrf.mxu0
      %v7613 = vadd.f32 0.0, %v7612
      %v7614 = vpop.f32.mrf.mxu0
      %v7615 = vadd.f32 0.0, %v7614
      %7616 = vmatmul.bf16.gmra.mxu0 %v5551
      %v7617 = vpop.f32.mrf.mxu0
      %v7618 = vadd.f32 0.0, %v7617
      %v7619 = vpop.f32.mrf.mxu0
      %v7620 = vadd.f32 0.0, %v7619
      %7621 = vmatmul.bf16.gmra.mxu0 %v5554
      %v7622 = vpop.f32.mrf.mxu0
      %v7623 = vadd.f32 0.0, %v7622
      %v7624 = vpop.f32.mrf.mxu0
      %v7625 = vadd.f32 0.0, %v7624
      %7626 = vmatmul.bf16.gmra.mxu0 %v5557
      %v7627 = vpop.f32.mrf.mxu0
      %v7628 = vadd.f32 0.0, %v7627
      %v7629 = vpop.f32.mrf.mxu0
      %v7630 = vadd.f32 0.0, %v7629
      %7631 = vmatmul.bf16.gmra.mxu0 %v5560
      %v7632 = vpop.f32.mrf.mxu0
      %v7633 = vadd.f32 0.0, %v7632
      %v7634 = vpop.f32.mrf.mxu0
      %v7635 = vadd.f32 0.0, %v7634
      %7636 = vmatmul.bf16.gmra.mxu0 %v5563
      %v7637 = vpop.f32.mrf.mxu0
      %v7638 = vadd.f32 0.0, %v7637
      %v7639 = vpop.f32.mrf.mxu0
      %v7640 = vadd.f32 0.0, %v7639
      %7641 = vmatmul.bf16.gmra.mxu0 %v5566
      %v7642 = vpop.f32.mrf.mxu0
      %v7643 = vadd.f32 0.0, %v7642
      %v7644 = vpop.f32.mrf.mxu0
      %v7645 = vadd.f32 0.0, %v7644
      %7646 = vmatmul.bf16.gmra.mxu0 %v5569
      %v7647 = vpop.f32.mrf.mxu0
      %v7648 = vadd.f32 0.0, %v7647
      %v7649 = vpop.f32.mrf.mxu0
      %v7650 = vadd.f32 0.0, %v7649
      %7651 = vmatmul.bf16.gmra.mxu0 %v5572
      %v7652 = vpop.f32.mrf.mxu0
      %v7653 = vadd.f32 0.0, %v7652
      %v7654 = vpop.f32.mrf.mxu0
      %v7655 = vadd.f32 0.0, %v7654
      %7656 = vmatmul.bf16.gmra.mxu0 %v5575
      %v7657 = vpop.f32.mrf.mxu0
      %v7658 = vadd.f32 0.0, %v7657
      %v7659 = vpop.f32.mrf.mxu0
      %v7660 = vadd.f32 0.0, %v7659
      %7661 = vmatmul.bf16.gmra.mxu0 %v5578
      %v7662 = vpop.f32.mrf.mxu0
      %v7663 = vadd.f32 0.0, %v7662
      %v7664 = vpop.f32.mrf.mxu0
      %v7665 = vadd.f32 0.0, %v7664
      %7666 = vmatmul.bf16.gmra.mxu0 %v5581
      %v7667 = vpop.f32.mrf.mxu0
      %v7668 = vadd.f32 0.0, %v7667
      %v7669 = vpop.f32.mrf.mxu0
      %v7670 = vadd.f32 0.0, %v7669
      %7671 = vmatmul.bf16.gmra.mxu0 %v5584
      %v7672 = vpop.f32.mrf.mxu0
      %v7673 = vadd.f32 0.0, %v7672
      %v7674 = vpop.f32.mrf.mxu0
      %v7675 = vadd.f32 0.0, %v7674
      %7676 = vmatmul.bf16.gmra.mxu0 %v5587
      %v7677 = vpop.f32.mrf.mxu0
      %v7678 = vadd.f32 0.0, %v7677
      %v7679 = vpop.f32.mrf.mxu0
      %v7680 = vadd.f32 0.0, %v7679
      %7681 = vmatmul.bf16.gmra.mxu0 %v5590
      %v7682 = vpop.f32.mrf.mxu0
      %v7683 = vadd.f32 0.0, %v7682
      %v7684 = vpop.f32.mrf.mxu0
      %v7685 = vadd.f32 0.0, %v7684
      %7686 = vmatmul.bf16.gmra.mxu0 %v5593
      %v7687 = vpop.f32.mrf.mxu0
      %v7688 = vadd.f32 0.0, %v7687
      %v7689 = vpop.f32.mrf.mxu0
      %v7690 = vadd.f32 0.0, %v7689
      %7691 = vmatmul.bf16.gmra.mxu0 %v5596
      %v7692 = vpop.f32.mrf.mxu0
      %v7693 = vadd.f32 0.0, %v7692
      %v7694 = vpop.f32.mrf.mxu0
      %v7695 = vadd.f32 0.0, %v7694
      %7696 = vmatmul.bf16.gmra.mxu0 %v5599
      %v7697 = vpop.f32.mrf.mxu0
      %v7698 = vadd.f32 0.0, %v7697
      %v7699 = vpop.f32.mrf.mxu0
      %v7700 = vadd.f32 0.0, %v7699
      %7701 = vmatmul.bf16.gmra.mxu0 %v5602
      %v7702 = vpop.f32.mrf.mxu0
      %v7703 = vadd.f32 0.0, %v7702
      %v7704 = vpop.f32.mrf.mxu0
      %v7705 = vadd.f32 0.0, %v7704
      %7706 = vmatmul.bf16.gmra.mxu0 %v5605
      %v7707 = vpop.f32.mrf.mxu0
      %v7708 = vadd.f32 0.0, %v7707
      %v7709 = vpop.f32.mrf.mxu0
      %v7710 = vadd.f32 0.0, %v7709
      %7711 = vmatmul.bf16.gmra.mxu0 %v5608
      %v7712 = vpop.f32.mrf.mxu0
      %v7713 = vadd.f32 0.0, %v7712
      %v7714 = vpop.f32.mrf.mxu0
      %v7715 = vadd.f32 0.0, %v7714
      %7716 = vmatmul.bf16.gmra.mxu0 %v5611
      %v7717 = vpop.f32.mrf.mxu0
      %v7718 = vadd.f32 0.0, %v7717
      %v7719 = vpop.f32.mrf.mxu0
      %v7720 = vadd.f32 0.0, %v7719
      %7721 = vmatmul.bf16.gmra.mxu0 %v5614
      %v7722 = vpop.f32.mrf.mxu0
      %v7723 = vadd.f32 0.0, %v7722
      %v7724 = vpop.f32.mrf.mxu0
      %v7725 = vadd.f32 0.0, %v7724
      %7726 = vmatmul.bf16.gmra.mxu0 %v5617
      %v7727 = vpop.f32.mrf.mxu0
      %v7728 = vadd.f32 0.0, %v7727
      %v7729 = vpop.f32.mrf.mxu0
      %v7730 = vadd.f32 0.0, %v7729
      %7731 = vmatmul.bf16.gmra.mxu0 %v5620
      %v7732 = vpop.f32.mrf.mxu0
      %v7733 = vadd.f32 0.0, %v7732
      %v7734 = vpop.f32.mrf.mxu0
      %v7735 = vadd.f32 0.0, %v7734
      %7736 = vmatmul.bf16.gmra.mxu0 %v5623
      %v7737 = vpop.f32.mrf.mxu0
      %v7738 = vadd.f32 0.0, %v7737
      %v7739 = vpop.f32.mrf.mxu0
      %v7740 = vadd.f32 0.0, %v7739
      %7741 = vmatmul.bf16.gmra.mxu0 %v5626
      %v7742 = vpop.f32.mrf.mxu0
      %v7743 = vadd.f32 0.0, %v7742
      %v7744 = vpop.f32.mrf.mxu0
      %v7745 = vadd.f32 0.0, %v7744
      %7746 = vmatmul.bf16.gmra.mxu0 %v5629
      %v7747 = vpop.f32.mrf.mxu0
      %v7748 = vadd.f32 0.0, %v7747
      %v7749 = vpop.f32.mrf.mxu0
      %v7750 = vadd.f32 0.0, %v7749
      %7751 = vmatmul.bf16.gmra.mxu0 %v5632
      %v7752 = vpop.f32.mrf.mxu0
      %v7753 = vadd.f32 0.0, %v7752
      %v7754 = vpop.f32.mrf.mxu0
      %v7755 = vadd.f32 0.0, %v7754
      %7756 = vmatmul.bf16.gmra.mxu0 %v5635
      %v7757 = vpop.f32.mrf.mxu0
      %v7758 = vadd.f32 0.0, %v7757
      %v7759 = vpop.f32.mrf.mxu0
      %v7760 = vadd.f32 0.0, %v7759
      %7761 = vmatmul.bf16.gmra.mxu0 %v5638
      %v7762 = vpop.f32.mrf.mxu0
      %v7763 = vadd.f32 0.0, %v7762
      %v7764 = vpop.f32.mrf.mxu0
      %v7765 = vadd.f32 0.0, %v7764
      %7766 = vmatmul.bf16.gmra.mxu0 %v5641
      %v7767 = vpop.f32.mrf.mxu0
      %v7768 = vadd.f32 0.0, %v7767
      %v7769 = vpop.f32.mrf.mxu0
      %v7770 = vadd.f32 0.0, %v7769
      %7771 = vmatmul.bf16.gmra.mxu0 %v5644
      %v7772 = vpop.f32.mrf.mxu0
      %v7773 = vadd.f32 0.0, %v7772
      %v7774 = vpop.f32.mrf.mxu0
      %v7775 = vadd.f32 0.0, %v7774
      %7776 = vmatmul.bf16.gmra.mxu0 %v5647
      %v7777 = vpop.f32.mrf.mxu0
      %v7778 = vadd.f32 0.0, %v7777
      %v7779 = vpop.f32.mrf.mxu0
      %v7780 = vadd.f32 0.0, %v7779
      %7781 = vmatmul.bf16.gmra.mxu0 %v5650
      %v7782 = vpop.f32.mrf.mxu0
      %v7783 = vadd.f32 0.0, %v7782
      %v7784 = vpop.f32.mrf.mxu0
      %v7785 = vadd.f32 0.0, %v7784
      %7786 = vmatmul.bf16.gmra.mxu0 %v5653
      %v7787 = vpop.f32.mrf.mxu0
      %v7788 = vadd.f32 0.0, %v7787
      %v7789 = vpop.f32.mrf.mxu0
      %v7790 = vadd.f32 0.0, %v7789
      %7791 = vmatmul.bf16.gmra.mxu0 %v5656
      %v7792 = vpop.f32.mrf.mxu0
      %v7793 = vadd.f32 0.0, %v7792
      %v7794 = vpop.f32.mrf.mxu0
      %v7795 = vadd.f32 0.0, %v7794
      %7796 = vmatmul.bf16.gmra.mxu0 %v5659
      %v7797 = vpop.f32.mrf.mxu0
      %v7798 = vadd.f32 0.0, %v7797
      %v7799 = vpop.f32.mrf.mxu0
      %v7800 = vadd.f32 0.0, %v7799
      %7801 = vmatmul.bf16.gmra.mxu0 %v5662
      %v7802 = vpop.f32.mrf.mxu0
      %v7803 = vadd.f32 0.0, %v7802
      %v7804 = vpop.f32.mrf.mxu0
      %v7805 = vadd.f32 0.0, %v7804
      %7806 = vmatmul.bf16.gmra.mxu0 %v5665
      %v7807 = vpop.f32.mrf.mxu0
      %v7808 = vadd.f32 0.0, %v7807
      %v7809 = vpop.f32.mrf.mxu0
      %v7810 = vadd.f32 0.0, %v7809
      %7811 = vmatmul.bf16.gmra.mxu0 %v5668
      %v7812 = vpop.f32.mrf.mxu0
      %v7813 = vadd.f32 0.0, %v7812
      %v7814 = vpop.f32.mrf.mxu0
      %v7815 = vadd.f32 0.0, %v7814
      %7816 = vmatmul.bf16.gmra.mxu0 %v5671
      %v7817 = vpop.f32.mrf.mxu0
      %v7818 = vadd.f32 0.0, %v7817
      %v7819 = vpop.f32.mrf.mxu0
      %v7820 = vadd.f32 0.0, %v7819
      %7821 = vmatmul.bf16.gmra.mxu0 %v5674
      %v7822 = vpop.f32.mrf.mxu0
      %v7823 = vadd.f32 0.0, %v7822
      %v7824 = vpop.f32.mrf.mxu0
      %v7825 = vadd.f32 0.0, %v7824
      %7826 = vmatmul.bf16.gmra.mxu0 %v5677
      %v7827 = vpop.f32.mrf.mxu0
      %v7828 = vadd.f32 0.0, %v7827
      %v7829 = vpop.f32.mrf.mxu0
      %v7830 = vadd.f32 0.0, %v7829
      %7831 = vmatmul.bf16.gmra.mxu0 %v5680
      %v7832 = vpop.f32.mrf.mxu0
      %v7833 = vadd.f32 0.0, %v7832
      %v7834 = vpop.f32.mrf.mxu0
      %v7835 = vadd.f32 0.0, %v7834
      %7836 = vmatmul.bf16.gmra.mxu0 %v5683
      %v7837 = vpop.f32.mrf.mxu0
      %v7838 = vadd.f32 0.0, %v7837
      %v7839 = vpop.f32.mrf.mxu0
      %v7840 = vadd.f32 0.0, %v7839
      %7841 = vmatmul.bf16.gmra.mxu0 %v5686
      %v7842 = vpop.f32.mrf.mxu0
      %v7843 = vadd.f32 0.0, %v7842
      %v7844 = vpop.f32.mrf.mxu0
      %v7845 = vadd.f32 0.0, %v7844
      %7846 = vmatmul.bf16.gmra.mxu0 %v5689
      %v7847 = vpop.f32.mrf.mxu0
      %v7848 = vadd.f32 0.0, %v7847
      %v7849 = vpop.f32.mrf.mxu0
      %v7850 = vadd.f32 0.0, %v7849
      %7851 = vmatmul.bf16.gmra.mxu0 %v5692
      %v7852 = vpop.f32.mrf.mxu0
      %v7853 = vadd.f32 0.0, %v7852
      %v7854 = vpop.f32.mrf.mxu0
      %v7855 = vadd.f32 0.0, %v7854
      %7856 = vmatmul.bf16.gmra.mxu0 %v5695
      %v7857 = vpop.f32.mrf.mxu0
      %v7858 = vadd.f32 0.0, %v7857
      %v7859 = vpop.f32.mrf.mxu0
      %v7860 = vadd.f32 0.0, %v7859
      %7861 = vmatmul.bf16.gmra.mxu0 %v5698
      %v7862 = vpop.f32.mrf.mxu0
      %v7863 = vadd.f32 0.0, %v7862
      %v7864 = vpop.f32.mrf.mxu0
      %v7865 = vadd.f32 0.0, %v7864
      %7866 = vmatmul.bf16.gmra.mxu0 %v5701
      %v7867 = vpop.f32.mrf.mxu0
      %v7868 = vadd.f32 0.0, %v7867
      %v7869 = vpop.f32.mrf.mxu0
      %v7870 = vadd.f32 0.0, %v7869
      %7871 = vmatmul.bf16.gmra.mxu0 %v5704
      %v7872 = vpop.f32.mrf.mxu0
      %v7873 = vadd.f32 0.0, %v7872
      %v7874 = vpop.f32.mrf.mxu0
      %v7875 = vadd.f32 0.0, %v7874
      %7876 = vmatmul.bf16.gmra.mxu0 %v5707
      %v7877 = vpop.f32.mrf.mxu0
      %v7878 = vadd.f32 0.0, %v7877
      %v7879 = vpop.f32.mrf.mxu0
      %v7880 = vadd.f32 0.0, %v7879
      %7881 = vmatmul.bf16.gmra.mxu0 %v5710
      %v7882 = vpop.f32.mrf.mxu0
      %v7883 = vadd.f32 0.0, %v7882
      %v7884 = vpop.f32.mrf.mxu0
      %v7885 = vadd.f32 0.0, %v7884
      %7886 = vmatmul.bf16.gmra.mxu0 %v5713
      %v7887 = vpop.f32.mrf.mxu0
      %v7888 = vadd.f32 0.0, %v7887
      %v7889 = vpop.f32.mrf.mxu0
      %v7890 = vadd.f32 0.0, %v7889
      %7891 = vmatmul.bf16.gmra.mxu0 %v5716
      %v7892 = vpop.f32.mrf.mxu0
      %v7893 = vadd.f32 0.0, %v7892
      %v7894 = vpop.f32.mrf.mxu0
      %v7895 = vadd.f32 0.0, %v7894
      %7896 = vmatmul.bf16.gmra.mxu0 %v5719
      %v7897 = vpop.f32.mrf.mxu0
      %v7898 = vadd.f32 0.0, %v7897
      %v7899 = vpop.f32.mrf.mxu0
      %v7900 = vadd.f32 0.0, %v7899
      %7901 = vmatmul.bf16.gmra.mxu0 %v5722
      %v7902 = vpop.f32.mrf.mxu0
      %v7903 = vadd.f32 0.0, %v7902
      %v7904 = vpop.f32.mrf.mxu0
      %v7905 = vadd.f32 0.0, %v7904
      %7906 = vmatmul.bf16.gmra.mxu0 %v5725
      %v7907 = vpop.f32.mrf.mxu0
      %v7908 = vadd.f32 0.0, %v7907
      %v7909 = vpop.f32.mrf.mxu0
      %v7910 = vadd.f32 0.0, %v7909
      %7911 = vmatmul.bf16.gmra.mxu0 %v5728
      %v7912 = vpop.f32.mrf.mxu0
      %v7913 = vadd.f32 0.0, %v7912
      %v7914 = vpop.f32.mrf.mxu0
      %v7915 = vadd.f32 0.0, %v7914
      %7916 = vmatmul.bf16.gmra.mxu0 %v5731
      %v7917 = vpop.f32.mrf.mxu0
      %v7918 = vadd.f32 0.0, %v7917
      %v7919 = vpop.f32.mrf.mxu0
      %v7920 = vadd.f32 0.0, %v7919
      %7921 = vmatmul.bf16.gmra.mxu0 %v5734
      %v7922 = vpop.f32.mrf.mxu0
      %v7923 = vadd.f32 0.0, %v7922
      %v7924 = vpop.f32.mrf.mxu0
      %v7925 = vadd.f32 0.0, %v7924
      %7926 = vmatmul.bf16.gmra.mxu0 %v5737
      %v7927 = vpop.f32.mrf.mxu0
      %v7928 = vadd.f32 0.0, %v7927
      %v7929 = vpop.f32.mrf.mxu0
      %v7930 = vadd.f32 0.0, %v7929
      %7931 = vmatmul.bf16.gmra.mxu0 %v5740
      %v7932 = vpop.f32.mrf.mxu0
      %v7933 = vadd.f32 0.0, %v7932
      %v7934 = vpop.f32.mrf.mxu0
      %v7935 = vadd.f32 0.0, %v7934
      %7936 = vmatmul.bf16.gmra.mxu0 %v5743
      %v7937 = vpop.f32.mrf.mxu0
      %v7938 = vadd.f32 0.0, %v7937
      %v7939 = vpop.f32.mrf.mxu0
      %v7940 = vadd.f32 0.0, %v7939
      %7941 = vmatmul.bf16.gmra.mxu0 %v5746
      %v7942 = vpop.f32.mrf.mxu0
      %v7943 = vadd.f32 0.0, %v7942
      %v7944 = vpop.f32.mrf.mxu0
      %v7945 = vadd.f32 0.0, %v7944
      %7946 = vmatmul.bf16.gmra.mxu0 %v5749
      %v7947 = vpop.f32.mrf.mxu0
      %v7948 = vadd.f32 0.0, %v7947
      %v7949 = vpop.f32.mrf.mxu0
      %v7950 = vadd.f32 0.0, %v7949
      %7951 = vmatmul.bf16.gmra.mxu0 %v5752
      %v7952 = vpop.f32.mrf.mxu0
      %v7953 = vadd.f32 0.0, %v7952
      %v7954 = vpop.f32.mrf.mxu0
      %v7955 = vadd.f32 0.0, %v7954
      %7956 = vmatmul.bf16.gmra.mxu0 %v5755
      %v7957 = vpop.f32.mrf.mxu0
      %v7958 = vadd.f32 0.0, %v7957
      %v7959 = vpop.f32.mrf.mxu0
      %v7960 = vadd.f32 0.0, %v7959
      %7961 = vmatmul.bf16.gmra.mxu0 %v5758
      %v7962 = vpop.f32.mrf.mxu0
      %v7963 = vadd.f32 0.0, %v7962
      %v7964 = vpop.f32.mrf.mxu0
      %v7965 = vadd.f32 0.0, %v7964
      %7966 = vmatmul.bf16.gmra.mxu0 %v5761
      %v7967 = vpop.f32.mrf.mxu0
      %v7968 = vadd.f32 0.0, %v7967
      %v7969 = vpop.f32.mrf.mxu0
      %v7970 = vadd.f32 0.0, %v7969
      %7971 = vmatmul.bf16.gmra.mxu0 %v5764
      %v7972 = vpop.f32.mrf.mxu0
      %v7973 = vadd.f32 0.0, %v7972
      %v7974 = vpop.f32.mrf.mxu0
      %v7975 = vadd.f32 0.0, %v7974
      %7976 = vmatmul.bf16.gmra.mxu0 %v5767
      %v7977 = vpop.f32.mrf.mxu0
      %v7978 = vadd.f32 0.0, %v7977
      %v7979 = vpop.f32.mrf.mxu0
      %v7980 = vadd.f32 0.0, %v7979
      %7981 = vmatmul.bf16.gmra.mxu0 %v5770
      %v7982 = vpop.f32.mrf.mxu0
      %v7983 = vadd.f32 0.0, %v7982
      %v7984 = vpop.f32.mrf.mxu0
      %v7985 = vadd.f32 0.0, %v7984
      %7986 = vmatmul.bf16.gmra.mxu0 %v5773
      %v7987 = vpop.f32.mrf.mxu0
      %v7988 = vadd.f32 0.0, %v7987
      %v7989 = vpop.f32.mrf.mxu0
      %v7990 = vadd.f32 0.0, %v7989
      %7991 = vmatmul.bf16.gmra.mxu0 %v5776
      %v7992 = vpop.f32.mrf.mxu0
      %v7993 = vadd.f32 0.0, %v7992
      %v7994 = vpop.f32.mrf.mxu0
      %v7995 = vadd.f32 0.0, %v7994
      %7996 = vmatmul.bf16.gmra.mxu0 %v5779
      %v7997 = vpop.f32.mrf.mxu0
      %v7998 = vadd.f32 0.0, %v7997
      %v7999 = vpop.f32.mrf.mxu0
      %v8000 = vadd.f32 0.0, %v7999
      %8001 = vmatmul.bf16.gmra.mxu0 %v5782
      %v8002 = vpop.f32.mrf.mxu0
      %v8003 = vadd.f32 0.0, %v8002
      %v8004 = vpop.f32.mrf.mxu0
      %v8005 = vadd.f32 0.0, %v8004
      %8006 = vmatmul.bf16.gmra.mxu0 %v5785
      %v8007 = vpop.f32.mrf.mxu0
      %v8008 = vadd.f32 0.0, %v8007
      %v8009 = vpop.f32.mrf.mxu0
      %v8010 = vadd.f32 0.0, %v8009
      %8011 = vmatmul.bf16.gmra.mxu0 %v5788
      %v8012 = vpop.f32.mrf.mxu0
      %v8013 = vadd.f32 0.0, %v8012
      %v8014 = vpop.f32.mrf.mxu0
      %v8015 = vadd.f32 0.0, %v8014
      %8016 = vmatmul.bf16.gmra.mxu0 %v5791
      %v8017 = vpop.f32.mrf.mxu0
      %v8018 = vadd.f32 0.0, %v8017
      %v8019 = vpop.f32.mrf.mxu0
      %v8020 = vadd.f32 0.0, %v8019
      %8021 = vmatmul.bf16.gmra.mxu0 %v5794
      %v8022 = vpop.f32.mrf.mxu0
      %v8023 = vadd.f32 0.0, %v8022
      %v8024 = vpop.f32.mrf.mxu0
      %v8025 = vadd.f32 0.0, %v8024
      %8026 = vmatmul.bf16.gmra.mxu0 %v5797
      %v8027 = vpop.f32.mrf.mxu0
      %v8028 = vadd.f32 0.0, %v8027
      %v8029 = vpop.f32.mrf.mxu0
      %v8030 = vadd.f32 0.0, %v8029
      %8031 = vmatmul.bf16.gmra.mxu0 %v5800
      %v8032 = vpop.f32.mrf.mxu0
      %v8033 = vadd.f32 0.0, %v8032
      %v8034 = vpop.f32.mrf.mxu0
      %v8035 = vadd.f32 0.0, %v8034
      %8036 = vmatmul.bf16.gmra.mxu0 %v5803
      %v8037 = vpop.f32.mrf.mxu0
      %v8038 = vadd.f32 0.0, %v8037
      %v8039 = vpop.f32.mrf.mxu0
      %v8040 = vadd.f32 0.0, %v8039
      %8041 = vmatmul.bf16.gmra.mxu0 %v5806
      %v8042 = vpop.f32.mrf.mxu0
      %v8043 = vadd.f32 0.0, %v8042
      %v8044 = vpop.f32.mrf.mxu0
      %v8045 = vadd.f32 0.0, %v8044
      %8046 = vmatmul.bf16.gmra.mxu0 %v5809
      %v8047 = vpop.f32.mrf.mxu0
      %v8048 = vadd.f32 0.0, %v8047
      %v8049 = vpop.f32.mrf.mxu0
      %v8050 = vadd.f32 0.0, %v8049
      %8051 = vmatmul.bf16.gmra.mxu0 %v5812
      %v8052 = vpop.f32.mrf.mxu0
      %v8053 = vadd.f32 0.0, %v8052
      %v8054 = vpop.f32.mrf.mxu0
      %v8055 = vadd.f32 0.0, %v8054
      %8056 = vmatmul.bf16.gmra.mxu0 %v5815
      %v8057 = vpop.f32.mrf.mxu0
      %v8058 = vadd.f32 0.0, %v8057
      %v8059 = vpop.f32.mrf.mxu0
      %v8060 = vadd.f32 0.0, %v8059
      %8061 = vmatmul.bf16.gmra.mxu0 %v5818
      %v8062 = vpop.f32.mrf.mxu0
      %v8063 = vadd.f32 0.0, %v8062
      %v8064 = vpop.f32.mrf.mxu0
      %v8065 = vadd.f32 0.0, %v8064
      %8066 = vmatmul.bf16.gmra.mxu0 %v5821
      %v8067 = vpop.f32.mrf.mxu0
      %v8068 = vadd.f32 0.0, %v8067
      %v8069 = vpop.f32.mrf.mxu0
      %v8070 = vadd.f32 0.0, %v8069
      %8071 = vmatmul.bf16.gmra.mxu0 %v5824
      %v8072 = vpop.f32.mrf.mxu0
      %v8073 = vadd.f32 0.0, %v8072
      %v8074 = vpop.f32.mrf.mxu0
      %v8075 = vadd.f32 0.0, %v8074
      %8076 = vmatmul.bf16.gmra.mxu0 %v5827
      %v8077 = vpop.f32.mrf.mxu0
      %v8078 = vadd.f32 0.0, %v8077
      %v8079 = vpop.f32.mrf.mxu0
      %v8080 = vadd.f32 0.0, %v8079
      %8081 = vmatmul.bf16.gmra.mxu0 %v5830
      %v8082 = vpop.f32.mrf.mxu0
      %v8083 = vadd.f32 0.0, %v8082
      %v8084 = vpop.f32.mrf.mxu0
      %v8085 = vadd.f32 0.0, %v8084
      %8086 = vmatmul.bf16.gmra.mxu0 %v5833
      %v8087 = vpop.f32.mrf.mxu0
      %v8088 = vadd.f32 0.0, %v8087
      %v8089 = vpop.f32.mrf.mxu0
      %v8090 = vadd.f32 0.0, %v8089
      %8091 = vmatmul.bf16.gmra.mxu0 %v5836
      %v8092 = vpop.f32.mrf.mxu0
      %v8093 = vadd.f32 0.0, %v8092
      %v8094 = vpop.f32.mrf.mxu0
      %v8095 = vadd.f32 0.0, %v8094
      %8096 = vmatmul.bf16.gmra.mxu0 %v5839
      %v8097 = vpop.f32.mrf.mxu0
      %v8098 = vadd.f32 0.0, %v8097
      %v8099 = vpop.f32.mrf.mxu0
      %v8100 = vadd.f32 0.0, %v8099
      %8101 = vmatmul.bf16.gmra.mxu0 %v5842
      %v8102 = vpop.f32.mrf.mxu0
      %v8103 = vadd.f32 0.0, %v8102
      %v8104 = vpop.f32.mrf.mxu0
      %v8105 = vadd.f32 0.0, %v8104
      %8106 = vmatmul.bf16.gmra.mxu0 %v5845
      %v8107 = vpop.f32.mrf.mxu0
      %v8108 = vadd.f32 0.0, %v8107
      %v8109 = vpop.f32.mrf.mxu0
      %v8110 = vadd.f32 0.0, %v8109
      %8111 = vmatmul.bf16.gmra.mxu0 %v5848
      %v8112 = vpop.f32.mrf.mxu0
      %v8113 = vadd.f32 0.0, %v8112
      %v8114 = vpop.f32.mrf.mxu0
      %v8115 = vadd.f32 0.0, %v8114
      %8116 = vmatmul.bf16.gmra.mxu0 %v5851
      %v8117 = vpop.f32.mrf.mxu0
      %v8118 = vadd.f32 0.0, %v8117
      %v8119 = vpop.f32.mrf.mxu0
      %v8120 = vadd.f32 0.0, %v8119
      %8121 = vmatmul.bf16.gmra.mxu0 %v5854
      %v8122 = vpop.f32.mrf.mxu0
      %v8123 = vadd.f32 0.0, %v8122
      %v8124 = vpop.f32.mrf.mxu0
      %v8125 = vadd.f32 0.0, %v8124
      %8126 = vmatmul.bf16.gmra.mxu0 %v5857
      %v8127 = vpop.f32.mrf.mxu0
      %v8128 = vadd.f32 0.0, %v8127
      %v8129 = vpop.f32.mrf.mxu0
      %v8130 = vadd.f32 0.0, %v8129
      %8131 = vmatmul.bf16.gmra.mxu0 %v5860
      %v8132 = vpop.f32.mrf.mxu0
      %v8133 = vadd.f32 0.0, %v8132
      %v8134 = vpop.f32.mrf.mxu0
      %v8135 = vadd.f32 0.0, %v8134
      %8136 = vmatmul.bf16.gmra.mxu0 %v5863
      %v8137 = vpop.f32.mrf.mxu0
      %v8138 = vadd.f32 0.0, %v8137
      %v8139 = vpop.f32.mrf.mxu0
      %8140 = vdwg.mxu0
      %v8141 = vpack.c.bf16 %v7013, %v5875
      %v8142 = vpack.c.bf16 %v7015, %v5877
      %v8143 = vpack.c.bf16 %v7018, %v5880
      %v8144 = vpack.c.bf16 %v7020, %v5882
      %v8145 = vpack.c.bf16 %v7023, %v5885
      %v8146 = vpack.c.bf16 %v7025, %v5887
      %v8147 = vpack.c.bf16 %v7028, %v5890
      %v8148 = vpack.c.bf16 %v7030, %v5892
      %v8149 = vpack.c.bf16 %v7033, %v5895
      %v8150 = vpack.c.bf16 %v7035, %v5897
      %v8151 = vpack.c.bf16 %v7038, %v5900
      %v8152 = vpack.c.bf16 %v7040, %v5902
      %v8153 = vpack.c.bf16 %v7043, %v5905
      %v8154 = vpack.c.bf16 %v7045, %v5907
      %v8155 = vpack.c.bf16 %v7048, %v5910
      %v8156 = vpack.c.bf16 %v7050, %v5912
      %v8157 = vpack.c.bf16 %v7053, %v5915
      %v8158 = vpack.c.bf16 %v7055, %v5917
      %v8159 = vpack.c.bf16 %v7058, %v5920
      %v8160 = vpack.c.bf16 %v7060, %v5922
      %v8161 = vpack.c.bf16 %v7063, %v5925
      %v8162 = vpack.c.bf16 %v7065, %v5927
      %v8163 = vpack.c.bf16 %v7068, %v5930
      %v8164 = vpack.c.bf16 %v7070, %v5932
      %v8165 = vpack.c.bf16 %v7073, %v5935
      %v8166 = vpack.c.bf16 %v7075, %v5937
      %v8167 = vpack.c.bf16 %v7078, %v5940
      %v8168 = vpack.c.bf16 %v7080, %v5942
      %v8169 = vpack.c.bf16 %v7083, %v5945
      %v8170 = vpack.c.bf16 %v7085, %v5947
      %v8171 = vpack.c.bf16 %v7088, %v5950
      %v8172 = vpack.c.bf16 %v7090, %v5952
      %v8173 = vpack.c.bf16 %v7093, %v5955
      %v8174 = vpack.c.bf16 %v7095, %v5957
      %v8175 = vpack.c.bf16 %v7098, %v5960
      %v8176 = vpack.c.bf16 %v7100, %v5962
      %v8177 = vpack.c.bf16 %v7103, %v5965
      %v8178 = vpack.c.bf16 %v7105, %v5967
      %v8179 = vpack.c.bf16 %v7108, %v5970
      %v8180 = vpack.c.bf16 %v7110, %v5972
      %v8181 = vpack.c.bf16 %v7113, %v5975
      %v8182 = vpack.c.bf16 %v7115, %v5977
      %v8183 = vpack.c.bf16 %v7118, %v5980
      %v8184 = vpack.c.bf16 %v7120, %v5982
      %v8185 = vpack.c.bf16 %v7123, %v5985
      %v8186 = vpack.c.bf16 %v7125, %v5987
      %v8187 = vpack.c.bf16 %v7128, %v5990
      %v8188 = vpack.c.bf16 %v7130, %v5992
      %v8189 = vpack.c.bf16 %v7133, %v5995
      %v8190 = vpack.c.bf16 %v7135, %v5997
      %v8191 = vpack.c.bf16 %v7138, %v6000
      %v8192 = vpack.c.bf16 %v7140, %v6002
      %v8193 = vpack.c.bf16 %v7143, %v6005
      %v8194 = vpack.c.bf16 %v7145, %v6007
      %v8195 = vpack.c.bf16 %v7148, %v6010
      %v8196 = vpack.c.bf16 %v7150, %v6012
      %v8197 = vpack.c.bf16 %v7153, %v6015
      %v8198 = vpack.c.bf16 %v7155, %v6017
      %v8199 = vpack.c.bf16 %v7158, %v6020
      %v8200 = vpack.c.bf16 %v7160, %v6022
      %v8201 = vpack.c.bf16 %v7163, %v6025
      %v8202 = vpack.c.bf16 %v7165, %v6027
      %v8203 = vpack.c.bf16 %v7168, %v6030
      %v8204 = vpack.c.bf16 %v7170, %v6032
      %v8205 = vpack.c.bf16 %v7173, %v6035
      %v8206 = vpack.c.bf16 %v7175, %v6037
      %v8207 = vpack.c.bf16 %v7178, %v6040
      %v8208 = vpack.c.bf16 %v7180, %v6042
      %v8209 = vpack.c.bf16 %v7183, %v6045
      %v8210 = vpack.c.bf16 %v7185, %v6047
      %v8211 = vpack.c.bf16 %v7188, %v6050
      %v8212 = vpack.c.bf16 %v7190, %v6052
      %v8213 = vpack.c.bf16 %v7193, %v6055
      %v8214 = vpack.c.bf16 %v7195, %v6057
      %v8215 = vpack.c.bf16 %v7198, %v6060
      %v8216 = vpack.c.bf16 %v7200, %v6062
      %v8217 = vpack.c.bf16 %v7203, %v6065
      %v8218 = vpack.c.bf16 %v7205, %v6067
      %v8219 = vpack.c.bf16 %v7208, %v6070
      %v8220 = vpack.c.bf16 %v7210, %v6072
      %v8221 = vpack.c.bf16 %v7213, %v6075
      %v8222 = vpack.c.bf16 %v7215, %v6077
      %v8223 = vpack.c.bf16 %v7218, %v6080
      %v8224 = vpack.c.bf16 %v7220, %v6082
      %v8225 = vpack.c.bf16 %v7223, %v6085
      %v8226 = vpack.c.bf16 %v7225, %v6087
      %v8227 = vpack.c.bf16 %v7228, %v6090
      %v8228 = vpack.c.bf16 %v7230, %v6092
      %v8229 = vpack.c.bf16 %v7233, %v6095
      %v8230 = vpack.c.bf16 %v7235, %v6097
      %v8231 = vpack.c.bf16 %v7238, %v6100
      %v8232 = vpack.c.bf16 %v7240, %v6102
      %v8233 = vpack.c.bf16 %v7243, %v6105
      %v8234 = vpack.c.bf16 %v7245, %v6107
      %v8235 = vpack.c.bf16 %v7248, %v6110
      %v8236 = vpack.c.bf16 %v7250, %v6112
      %v8237 = vpack.c.bf16 %v7253, %v6115
      %v8238 = vpack.c.bf16 %v7255, %v6117
      %v8239 = vpack.c.bf16 %v7258, %v6120
      %v8240 = vpack.c.bf16 %v7260, %v6122
      %v8241 = vpack.c.bf16 %v7263, %v6125
      %v8242 = vpack.c.bf16 %v7265, %v6127
      %v8243 = vpack.c.bf16 %v7268, %v6130
      %v8244 = vpack.c.bf16 %v7270, %v6132
      %v8245 = vpack.c.bf16 %v7273, %v6135
      %v8246 = vpack.c.bf16 %v7275, %v6137
      %v8247 = vpack.c.bf16 %v7278, %v6140
      %v8248 = vpack.c.bf16 %v7280, %v6142
      %v8249 = vpack.c.bf16 %v7283, %v6145
      %v8250 = vpack.c.bf16 %v7285, %v6147
      %v8251 = vpack.c.bf16 %v7288, %v6150
      %v8252 = vpack.c.bf16 %v7290, %v6152
      %v8253 = vpack.c.bf16 %v7293, %v6155
      %v8254 = vpack.c.bf16 %v7295, %v6157
      %v8255 = vpack.c.bf16 %v7298, %v6160
      %v8256 = vpack.c.bf16 %v7300, %v6162
      %v8257 = vpack.c.bf16 %v7303, %v6165
      %v8258 = vpack.c.bf16 %v7305, %v6167
      %v8259 = vpack.c.bf16 %v7308, %v6170
      %v8260 = vpack.c.bf16 %v7310, %v6172
      %v8261 = vpack.c.bf16 %v7313, %v6175
      %v8262 = vpack.c.bf16 %v7315, %v6177
      %v8263 = vpack.c.bf16 %v7318, %v6180
      %v8264 = vpack.c.bf16 %v7320, %v6182
      %v8265 = vpack.c.bf16 %v7323, %v6185
      %v8266 = vpack.c.bf16 %v7325, %v6187
      %v8267 = vpack.c.bf16 %v7328, %v6190
      %v8268 = vpack.c.bf16 %v7330, %v6192
      %v8269 = vpack.c.bf16 %v7333, %v6195
      %v8270 = vpack.c.bf16 %v7335, %v6197
      %v8271 = vpack.c.bf16 %v7338, %v6200
      %v8272 = vpack.c.bf16 %v7340, %v6202
      %v8273 = vpack.c.bf16 %v7343, %v6205
      %v8274 = vpack.c.bf16 %v7345, %v6207
      %v8275 = vpack.c.bf16 %v7348, %v6210
      %v8276 = vpack.c.bf16 %v7350, %v6212
      %v8277 = vpack.c.bf16 %v7353, %v6215
      %v8278 = vpack.c.bf16 %v7355, %v6217
      %v8279 = vpack.c.bf16 %v7358, %v6220
      %v8280 = vpack.c.bf16 %v7360, %v6222
      %v8281 = vpack.c.bf16 %v7363, %v6225
      %v8282 = vpack.c.bf16 %v7365, %v6227
      %v8283 = vpack.c.bf16 %v7368, %v6230
      %v8284 = vpack.c.bf16 %v7370, %v6232
      %v8285 = vpack.c.bf16 %v7373, %v6235
      %v8286 = vpack.c.bf16 %v7375, %v6237
      %v8287 = vpack.c.bf16 %v7378, %v6240
      %v8288 = vpack.c.bf16 %v7380, %v6242
      %v8289 = vpack.c.bf16 %v7383, %v6245
      %v8290 = vpack.c.bf16 %v7385, %v6247
      %v8291 = vpack.c.bf16 %v7388, %v6250
      %v8292 = vpack.c.bf16 %v7390, %v6252
      %v8293 = vpack.c.bf16 %v7393, %v6255
      %v8294 = vpack.c.bf16 %v7395, %v6257
      %v8295 = vpack.c.bf16 %v7398, %v6260
      %v8296 = vpack.c.bf16 %v7400, %v6262
      %v8297 = vpack.c.bf16 %v7403, %v6265
      %v8298 = vpack.c.bf16 %v7405, %v6267
      %v8299 = vpack.c.bf16 %v7408, %v6270
      %v8300 = vpack.c.bf16 %v7410, %v6272
      %v8301 = vpack.c.bf16 %v7413, %v6275
      %v8302 = vpack.c.bf16 %v7415, %v6277
      %v8303 = vpack.c.bf16 %v7418, %v6280
      %v8304 = vpack.c.bf16 %v7420, %v6282
      %v8305 = vpack.c.bf16 %v7423, %v6285
      %v8306 = vpack.c.bf16 %v7425, %v6287
      %v8307 = vpack.c.bf16 %v7428, %v6290
      %v8308 = vpack.c.bf16 %v7430, %v6292
      %v8309 = vpack.c.bf16 %v7433, %v6295
      %v8310 = vpack.c.bf16 %v7435, %v6297
      %v8311 = vpack.c.bf16 %v7438, %v6300
      %v8312 = vpack.c.bf16 %v7440, %v6302
      %v8313 = vpack.c.bf16 %v7443, %v6305
      %v8314 = vpack.c.bf16 %v7445, %v6307
      %v8315 = vpack.c.bf16 %v7448, %v6310
      %v8316 = vpack.c.bf16 %v7450, %v6312
      %v8317 = vpack.c.bf16 %v7453, %v6315
      %v8318 = vpack.c.bf16 %v7455, %v6317
      %v8319 = vpack.c.bf16 %v7458, %v6320
      %v8320 = vpack.c.bf16 %v7460, %v6322
      %v8321 = vpack.c.bf16 %v7463, %v6325
      %v8322 = vpack.c.bf16 %v7465, %v6327
      %v8323 = vpack.c.bf16 %v7468, %v6330
      %v8324 = vpack.c.bf16 %v7470, %v6332
      %v8325 = vpack.c.bf16 %v7473, %v6335
      %v8326 = vpack.c.bf16 %v7475, %v6337
      %v8327 = vpack.c.bf16 %v7478, %v6340
      %v8328 = vpack.c.bf16 %v7480, %v6342
      %v8329 = vpack.c.bf16 %v7483, %v6345
      %v8330 = vpack.c.bf16 %v7485, %v6347
      %v8331 = vpack.c.bf16 %v7488, %v6350
      %v8332 = vpack.c.bf16 %v7490, %v6352
      %v8333 = vpack.c.bf16 %v7493, %v6355
      %v8334 = vpack.c.bf16 %v7495, %v6357
      %v8335 = vpack.c.bf16 %v7498, %v6360
      %v8336 = vpack.c.bf16 %v7500, %v6362
      %v8337 = vpack.c.bf16 %v7503, %v6365
      %v8338 = vpack.c.bf16 %v7505, %v6367
      %v8339 = vpack.c.bf16 %v7508, %v6370
      %v8340 = vpack.c.bf16 %v7510, %v6372
      %v8341 = vpack.c.bf16 %v7513, %v6375
      %v8342 = vpack.c.bf16 %v7515, %v6377
      %v8343 = vpack.c.bf16 %v7518, %v6380
      %v8344 = vpack.c.bf16 %v7520, %v6382
      %v8345 = vpack.c.bf16 %v7523, %v6385
      %v8346 = vpack.c.bf16 %v7525, %v6387
      %v8347 = vpack.c.bf16 %v7528, %v6390
      %v8348 = vpack.c.bf16 %v7530, %v6392
      %v8349 = vpack.c.bf16 %v7533, %v6395
      %v8350 = vpack.c.bf16 %v7535, %v6397
      %v8351 = vpack.c.bf16 %v7538, %v6400
      %v8352 = vpack.c.bf16 %v7540, %v6402
      %v8353 = vpack.c.bf16 %v7543, %v6405
      %v8354 = vpack.c.bf16 %v7545, %v6407
      %v8355 = vpack.c.bf16 %v7548, %v6410
      %v8356 = vpack.c.bf16 %v7550, %v6412
      %v8357 = vpack.c.bf16 %v7553, %v6415
      %v8358 = vpack.c.bf16 %v7555, %v6417
      %v8359 = vpack.c.bf16 %v7558, %v6420
      %v8360 = vpack.c.bf16 %v7560, %v6422
      %v8361 = vpack.c.bf16 %v7563, %v6425
      %v8362 = vpack.c.bf16 %v7565, %v6427
      %v8363 = vpack.c.bf16 %v7568, %v6430
      %v8364 = vpack.c.bf16 %v7570, %v6432
      %v8365 = vpack.c.bf16 %v7573, %v6435
      %v8366 = vpack.c.bf16 %v7575, %v6437
      %v8367 = vpack.c.bf16 %v7578, %v6440
      %v8368 = vpack.c.bf16 %v7580, %v6442
      %v8369 = vpack.c.bf16 %v7583, %v6445
      %v8370 = vpack.c.bf16 %v7585, %v6447
      %v8371 = vpack.c.bf16 %v7588, %v6450
      %v8372 = vpack.c.bf16 %v7590, %v6452
      %v8373 = vpack.c.bf16 %v7593, %v6455
      %v8374 = vpack.c.bf16 %v7595, %v6457
      %v8375 = vpack.c.bf16 %v7598, %v6460
      %v8376 = vpack.c.bf16 %v7600, %v6462
      %v8377 = vpack.c.bf16 %v7603, %v6465
      %v8378 = vpack.c.bf16 %v7605, %v6467
      %v8379 = vpack.c.bf16 %v7608, %v6470
      %v8380 = vpack.c.bf16 %v7610, %v6472
      %v8381 = vpack.c.bf16 %v7613, %v6475
      %v8382 = vpack.c.bf16 %v7615, %v6477
      %v8383 = vpack.c.bf16 %v7618, %v6480
      %v8384 = vpack.c.bf16 %v7620, %v6482
      %v8385 = vpack.c.bf16 %v7623, %v6485
      %v8386 = vpack.c.bf16 %v7625, %v6487
      %v8387 = vpack.c.bf16 %v7628, %v6490
      %v8388 = vpack.c.bf16 %v7630, %v6492
      %v8389 = vpack.c.bf16 %v7633, %v6495
      %v8390 = vpack.c.bf16 %v7635, %v6497
      %v8391 = vpack.c.bf16 %v7638, %v6500
      %v8392 = vpack.c.bf16 %v7640, %v6502
      %v8393 = vpack.c.bf16 %v7643, %v6505
      %v8394 = vpack.c.bf16 %v7645, %v6507
      %v8395 = vpack.c.bf16 %v7648, %v6510
      %v8396 = vpack.c.bf16 %v7650, %v6512
      %v8397 = vpack.c.bf16 %v7653, %v6515
      %v8398 = vpack.c.bf16 %v7655, %v6517
      %v8399 = vpack.c.bf16 %v7658, %v6520
      %v8400 = vpack.c.bf16 %v7660, %v6522
      %v8401 = vpack.c.bf16 %v7663, %v6525
      %v8402 = vpack.c.bf16 %v7665, %v6527
      %v8403 = vpack.c.bf16 %v7668, %v6530
      %v8404 = vpack.c.bf16 %v7670, %v6532
      %v8405 = vpack.c.bf16 %v7673, %v6535
      %v8406 = vpack.c.bf16 %v7675, %v6537
      %v8407 = vpack.c.bf16 %v7678, %v6540
      %v8408 = vpack.c.bf16 %v7680, %v6542
      %v8409 = vpack.c.bf16 %v7683, %v6545
      %v8410 = vpack.c.bf16 %v7685, %v6547
      %v8411 = vpack.c.bf16 %v7688, %v6550
      %v8412 = vpack.c.bf16 %v7690, %v6552
      %v8413 = vpack.c.bf16 %v7693, %v6555
      %v8414 = vpack.c.bf16 %v7695, %v6557
      %v8415 = vpack.c.bf16 %v7698, %v6560
      %v8416 = vpack.c.bf16 %v7700, %v6562
      %v8417 = vpack.c.bf16 %v7703, %v6565
      %v8418 = vpack.c.bf16 %v7705, %v6567
      %v8419 = vpack.c.bf16 %v7708, %v6570
      %v8420 = vpack.c.bf16 %v7710, %v6572
      %v8421 = vpack.c.bf16 %v7713, %v6575
      %v8422 = vpack.c.bf16 %v7715, %v6577
      %v8423 = vpack.c.bf16 %v7718, %v6580
      %v8424 = vpack.c.bf16 %v7720, %v6582
      %v8425 = vpack.c.bf16 %v7723, %v6585
      %v8426 = vpack.c.bf16 %v7725, %v6587
      %v8427 = vpack.c.bf16 %v7728, %v6590
      %v8428 = vpack.c.bf16 %v7730, %v6592
      %v8429 = vpack.c.bf16 %v7733, %v6595
      %v8430 = vpack.c.bf16 %v7735, %v6597
      %v8431 = vpack.c.bf16 %v7738, %v6600
      %v8432 = vpack.c.bf16 %v7740, %v6602
      %v8433 = vpack.c.bf16 %v7743, %v6605
      %v8434 = vpack.c.bf16 %v7745, %v6607
      %v8435 = vpack.c.bf16 %v7748, %v6610
      %v8436 = vpack.c.bf16 %v7750, %v6612
      %v8437 = vpack.c.bf16 %v7753, %v6615
      %v8438 = vpack.c.bf16 %v7755, %v6617
      %v8439 = vpack.c.bf16 %v7758, %v6620
      %v8440 = vpack.c.bf16 %v7760, %v6622
      %v8441 = vpack.c.bf16 %v7763, %v6625
      %v8442 = vpack.c.bf16 %v7765, %v6627
      %v8443 = vpack.c.bf16 %v7768, %v6630
      %v8444 = vpack.c.bf16 %v7770, %v6632
      %v8445 = vpack.c.bf16 %v7773, %v6635
      %v8446 = vpack.c.bf16 %v7775, %v6637
      %v8447 = vpack.c.bf16 %v7778, %v6640
      %v8448 = vpack.c.bf16 %v7780, %v6642
      %v8449 = vpack.c.bf16 %v7783, %v6645
      %v8450 = vpack.c.bf16 %v7785, %v6647
      %v8451 = vpack.c.bf16 %v7788, %v6650
      %v8452 = vpack.c.bf16 %v7790, %v6652
      %v8453 = vpack.c.bf16 %v7793, %v6655
      %v8454 = vpack.c.bf16 %v7795, %v6657
      %v8455 = vpack.c.bf16 %v7798, %v6660
      %v8456 = vpack.c.bf16 %v7800, %v6662
      %v8457 = vpack.c.bf16 %v7803, %v6665
      %v8458 = vpack.c.bf16 %v7805, %v6667
      %v8459 = vpack.c.bf16 %v7808, %v6670
      %v8460 = vpack.c.bf16 %v7810, %v6672
      %v8461 = vpack.c.bf16 %v7813, %v6675
      %v8462 = vpack.c.bf16 %v7815, %v6677
      %v8463 = vpack.c.bf16 %v7818, %v6680
      %v8464 = vpack.c.bf16 %v7820, %v6682
      %v8465 = vpack.c.bf16 %v7823, %v6685
      %v8466 = vpack.c.bf16 %v7825, %v6687
      %v8467 = vpack.c.bf16 %v7828, %v6690
      %v8468 = vpack.c.bf16 %v7830, %v6692
      %v8469 = vpack.c.bf16 %v7833, %v6695
      %v8470 = vpack.c.bf16 %v7835, %v6697
      %v8471 = vpack.c.bf16 %v7838, %v6700
      %v8472 = vpack.c.bf16 %v7840, %v6702
      %v8473 = vpack.c.bf16 %v7843, %v6705
      %v8474 = vpack.c.bf16 %v7845, %v6707
      %v8475 = vpack.c.bf16 %v7848, %v6710
      %v8476 = vpack.c.bf16 %v7850, %v6712
      %v8477 = vpack.c.bf16 %v7853, %v6715
      %v8478 = vpack.c.bf16 %v7855, %v6717
      %v8479 = vpack.c.bf16 %v7858, %v6720
      %v8480 = vpack.c.bf16 %v7860, %v6722
      %v8481 = vpack.c.bf16 %v7863, %v6725
      %v8482 = vpack.c.bf16 %v7865, %v6727
      %v8483 = vpack.c.bf16 %v7868, %v6730
      %v8484 = vpack.c.bf16 %v7870, %v6732
      %v8485 = vpack.c.bf16 %v7873, %v6735
      %v8486 = vpack.c.bf16 %v7875, %v6737
      %v8487 = vpack.c.bf16 %v7878, %v6740
      %v8488 = vpack.c.bf16 %v7880, %v6742
      %v8489 = vpack.c.bf16 %v7883, %v6745
      %v8490 = vpack.c.bf16 %v7885, %v6747
      %v8491 = vpack.c.bf16 %v7888, %v6750
      %v8492 = vpack.c.bf16 %v7890, %v6752
      %v8493 = vpack.c.bf16 %v7893, %v6755
      %v8494 = vpack.c.bf16 %v7895, %v6757
      %v8495 = vpack.c.bf16 %v7898, %v6760
      %v8496 = vpack.c.bf16 %v7900, %v6762
      %v8497 = vpack.c.bf16 %v7903, %v6765
      %v8498 = vpack.c.bf16 %v7905, %v6767
      %v8499 = vpack.c.bf16 %v7908, %v6770
      %v8500 = vpack.c.bf16 %v7910, %v6772
      %v8501 = vpack.c.bf16 %v7913, %v6775
      %v8502 = vpack.c.bf16 %v7915, %v6777
      %v8503 = vpack.c.bf16 %v7918, %v6780
      %v8504 = vpack.c.bf16 %v7920, %v6782
      %v8505 = vpack.c.bf16 %v7923, %v6785
      %v8506 = vpack.c.bf16 %v7925, %v6787
      %v8507 = vpack.c.bf16 %v7928, %v6790
      %v8508 = vpack.c.bf16 %v7930, %v6792
      %v8509 = vpack.c.bf16 %v7933, %v6795
      %v8510 = vpack.c.bf16 %v7935, %v6797
      %v8511 = vpack.c.bf16 %v7938, %v6800
      %v8512 = vpack.c.bf16 %v7940, %v6802
      %v8513 = vpack.c.bf16 %v7943, %v6805
      %v8514 = vpack.c.bf16 %v7945, %v6807
      %v8515 = vpack.c.bf16 %v7948, %v6810
      %v8516 = vpack.c.bf16 %v7950, %v6812
      %v8517 = vpack.c.bf16 %v7953, %v6815
      %v8518 = vpack.c.bf16 %v7955, %v6817
      %v8519 = vpack.c.bf16 %v7958, %v6820
      %v8520 = vpack.c.bf16 %v7960, %v6822
      %v8521 = vpack.c.bf16 %v7963, %v6825
      %v8522 = vpack.c.bf16 %v7965, %v6827
      %v8523 = vpack.c.bf16 %v7968, %v6830
      %v8524 = vpack.c.bf16 %v7970, %v6832
      %v8525 = vpack.c.bf16 %v7973, %v6835
      %v8526 = vpack.c.bf16 %v7975, %v6837
      %v8527 = vpack.c.bf16 %v7978, %v6840
      %v8528 = vpack.c.bf16 %v7980, %v6842
      %v8529 = vpack.c.bf16 %v7983, %v6845
      %v8530 = vpack.c.bf16 %v7985, %v6847
      %v8531 = vpack.c.bf16 %v7988, %v6850
      %v8532 = vpack.c.bf16 %v7990, %v6852
      %v8533 = vpack.c.bf16 %v7993, %v6855
      %v8534 = vpack.c.bf16 %v7995, %v6857
      %v8535 = vpack.c.bf16 %v7998, %v6860
      %v8536 = vpack.c.bf16 %v8000, %v6862
      %v8537 = vpack.c.bf16 %v8003, %v6865
      %v8538 = vpack.c.bf16 %v8005, %v6867
      %v8539 = vpack.c.bf16 %v8008, %v6870
      %v8540 = vpack.c.bf16 %v8010, %v6872
      %v8541 = vpack.c.bf16 %v8013, %v6875
      %v8542 = vpack.c.bf16 %v8015, %v6877
      %v8543 = vpack.c.bf16 %v8018, %v6880
      %v8544 = vpack.c.bf16 %v8020, %v6882
      %v8545 = vpack.c.bf16 %v8023, %v6885
      %v8546 = vpack.c.bf16 %v8025, %v6887
      %v8547 = vpack.c.bf16 %v8028, %v6890
      %v8548 = vpack.c.bf16 %v8030, %v6892
      %v8549 = vpack.c.bf16 %v8033, %v6895
      %v8550 = vpack.c.bf16 %v8035, %v6897
      %v8551 = vpack.c.bf16 %v8038, %v6900
      %v8552 = vpack.c.bf16 %v8040, %v6902
      %v8553 = vpack.c.bf16 %v8043, %v6905
      %v8554 = vpack.c.bf16 %v8045, %v6907
      %v8555 = vpack.c.bf16 %v8048, %v6910
      %v8556 = vpack.c.bf16 %v8050, %v6912
      %v8557 = vpack.c.bf16 %v8053, %v6915
      %v8558 = vpack.c.bf16 %v8055, %v6917
      %v8559 = vpack.c.bf16 %v8058, %v6920
      %v8560 = vpack.c.bf16 %v8060, %v6922
      %v8561 = vpack.c.bf16 %v8063, %v6925
      %v8562 = vpack.c.bf16 %v8065, %v6927
      %v8563 = vpack.c.bf16 %v8068, %v6930
      %v8564 = vpack.c.bf16 %v8070, %v6932
      %v8565 = vpack.c.bf16 %v8073, %v6935
      %v8566 = vpack.c.bf16 %v8075, %v6937
      %v8567 = vpack.c.bf16 %v8078, %v6940
      %v8568 = vpack.c.bf16 %v8080, %v6942
      %v8569 = vpack.c.bf16 %v8083, %v6945
      %v8570 = vpack.c.bf16 %v8085, %v6947
      %v8571 = vpack.c.bf16 %v8088, %v6950
      %v8572 = vpack.c.bf16 %v8090, %v6952
      %v8573 = vpack.c.bf16 %v8093, %v6955
      %v8574 = vpack.c.bf16 %v8095, %v6957
      %v8575 = vpack.c.bf16 %v8098, %v6960
      %v8576 = vpack.c.bf16 %v8100, %v6962
      %v8577 = vpack.c.bf16 %v8103, %v6965
      %v8578 = vpack.c.bf16 %v8105, %v6967
      %v8579 = vpack.c.bf16 %v8108, %v6970
      %v8580 = vpack.c.bf16 %v8110, %v6972
      %v8581 = vpack.c.bf16 %v8113, %v6975
      %v8582 = vpack.c.bf16 %v8115, %v6977
      %v8583 = vpack.c.bf16 %v8118, %v6980
      %v8584 = vpack.c.bf16 %v8120, %v6982
      %v8585 = vpack.c.bf16 %v8123, %v6985
      %v8586 = vpack.c.bf16 %v8125, %v6987
      %v8587 = vpack.c.bf16 %v8128, %v6990
      %v8588 = vpack.c.bf16 %v8130, %v6992
      %v8589 = vpack.c.bf16 %v8133, %v6995
      %v8590 = vpack.c.bf16 %v8135, %v6997
      %v8591 = vpack.c.bf16 %v8138, %v7000
      %8592 = vst [vmem:[%s424] sm:$0xff] %v8141
      %8593 = vst [vmem:[%s424 + $0x8] sm:$0xff] %v8142
      %8594 = vst [vmem:[%s424 + $0x10] sm:$0xff] %v8143
      %8595 = vst [vmem:[%s424 + $0x18] sm:$0xff] %v8144
      %8596 = vst [vmem:[%s424 + $0x20] sm:$0xff] %v8145
      %8597 = vst [vmem:[%s424 + $0x28] sm:$0xff] %v8146
      %8598 = vst [vmem:[%s424 + $0x30] sm:$0xff] %v8147
      %8599 = vst [vmem:[%s424 + $0x38] sm:$0xff] %v8148
      %8600 = vst [vmem:[%s424 + $0x40] sm:$0xff] %v8149
      %8601 = vst [vmem:[%s424 + $0x48] sm:$0xff] %v8150
      %8602 = vst [vmem:[%s424 + $0x50] sm:$0xff] %v8151
      %8603 = vst [vmem:[%s424 + $0x58] sm:$0xff] %v8152
      %8604 = vst [vmem:[%s424 + $0x60] sm:$0xff] %v8153
      %8605 = vst [vmem:[%s424 + $0x68] sm:$0xff] %v8154
      %8606 = vst [vmem:[%s424 + $0x70] sm:$0xff] %v8155
      %8607 = vst [vmem:[%s424 + $0x78] sm:$0xff] %v8156
      %8608 = vst [vmem:[%s424 + $0x80] sm:$0xff] %v8157
      %8609 = vst [vmem:[%s424 + $0x88] sm:$0xff] %v8158
      %8610 = vst [vmem:[%s424 + $0x90] sm:$0xff] %v8159
      %8611 = vst [vmem:[%s424 + $0x98] sm:$0xff] %v8160
      %8612 = vst [vmem:[%s424 + $0xa0] sm:$0xff] %v8161
      %8613 = vst [vmem:[%s424 + $0xa8] sm:$0xff] %v8162
      %8614 = vst [vmem:[%s424 + $0xb0] sm:$0xff] %v8163
      %8615 = vst [vmem:[%s424 + $0xb8] sm:$0xff] %v8164
      %8616 = vst [vmem:[%s424 + $0xc0] sm:$0xff] %v8165
      %8617 = vst [vmem:[%s424 + $0xc8] sm:$0xff] %v8166
      %8618 = vst [vmem:[%s424 + $0xd0] sm:$0xff] %v8167
      %8619 = vst [vmem:[%s424 + $0xd8] sm:$0xff] %v8168
      %8620 = vst [vmem:[%s424 + $0xe0] sm:$0xff] %v8169
      %8621 = vst [vmem:[%s424 + $0xe8] sm:$0xff] %v8170
      %8622 = vst [vmem:[%s424 + $0xf0] sm:$0xff] %v8171
      %8623 = vst [vmem:[%s424 + $0xf8] sm:$0xff] %v8172
      %8624 = vst [vmem:[%s424 + $0x100] sm:$0xff] %v8173
      %8625 = vst [vmem:[%s424 + $0x108] sm:$0xff] %v8174
      %8626 = vst [vmem:[%s424 + $0x110] sm:$0xff] %v8175
      %8627 = vst [vmem:[%s424 + $0x118] sm:$0xff] %v8176
      %8628 = vst [vmem:[%s424 + $0x120] sm:$0xff] %v8177
      %8629 = vst [vmem:[%s424 + $0x128] sm:$0xff] %v8178
      %8630 = vst [vmem:[%s424 + $0x130] sm:$0xff] %v8179
      %8631 = vst [vmem:[%s424 + $0x138] sm:$0xff] %v8180
      %8632 = vst [vmem:[%s424 + $0x140] sm:$0xff] %v8181
      %8633 = vst [vmem:[%s424 + $0x148] sm:$0xff] %v8182
      %8634 = vst [vmem:[%s424 + $0x150] sm:$0xff] %v8183
      %8635 = vst [vmem:[%s424 + $0x158] sm:$0xff] %v8184
      %8636 = vst [vmem:[%s424 + $0x160] sm:$0xff] %v8185
      %8637 = vst [vmem:[%s424 + $0x168] sm:$0xff] %v8186
      %8638 = vst [vmem:[%s424 + $0x170] sm:$0xff] %v8187
      %8639 = vst [vmem:[%s424 + $0x178] sm:$0xff] %v8188
      %8640 = vst [vmem:[%s424 + $0x180] sm:$0xff] %v8189
      %8641 = vst [vmem:[%s424 + $0x188] sm:$0xff] %v8190
      %8642 = vst [vmem:[%s424 + $0x190] sm:$0xff] %v8191
      %8643 = vst [vmem:[%s424 + $0x198] sm:$0xff] %v8192
      %8644 = vst [vmem:[%s424 + $0x1a0] sm:$0xff] %v8193
      %8645 = vst [vmem:[%s424 + $0x1a8] sm:$0xff] %v8194
      %8646 = vst [vmem:[%s424 + $0x1b0] sm:$0xff] %v8195
      %8647 = vst [vmem:[%s424 + $0x1b8] sm:$0xff] %v8196
      %8648 = vst [vmem:[%s424 + $0x1c0] sm:$0xff] %v8197
      %8649 = vst [vmem:[%s424 + $0x1c8] sm:$0xff] %v8198
      %8650 = vst [vmem:[%s424 + $0x1d0] sm:$0xff] %v8199
      %8651 = vst [vmem:[%s424 + $0x1d8] sm:$0xff] %v8200
      %8652 = vst [vmem:[%s424 + $0x1e0] sm:$0xff] %v8201
      %8653 = vst [vmem:[%s424 + $0x1e8] sm:$0xff] %v8202
      %8654 = vst [vmem:[%s424 + $0x1f0] sm:$0xff] %v8203
      %8655 = vst [vmem:[%s424 + $0x1f8] sm:$0xff] %v8204
      %8656 = vst [vmem:[%s424 + $0x200] sm:$0xff] %v8205
      %8657 = vst [vmem:[%s424 + $0x208] sm:$0xff] %v8206
      %8658 = vst [vmem:[%s424 + $0x210] sm:$0xff] %v8207
      %8659 = vst [vmem:[%s424 + $0x218] sm:$0xff] %v8208
      %8660 = vst [vmem:[%s424 + $0x220] sm:$0xff] %v8209
      %8661 = vst [vmem:[%s424 + $0x228] sm:$0xff] %v8210
      %8662 = vst [vmem:[%s424 + $0x230] sm:$0xff] %v8211
      %8663 = vst [vmem:[%s424 + $0x238] sm:$0xff] %v8212
      %8664 = vst [vmem:[%s424 + $0x240] sm:$0xff] %v8213
      %8665 = vst [vmem:[%s424 + $0x248] sm:$0xff] %v8214
      %8666 = vst [vmem:[%s424 + $0x250] sm:$0xff] %v8215
      %8667 = vst [vmem:[%s424 + $0x258] sm:$0xff] %v8216
      %8668 = vst [vmem:[%s424 + $0x260] sm:$0xff] %v8217
      %8669 = vst [vmem:[%s424 + $0x268] sm:$0xff] %v8218
      %8670 = vst [vmem:[%s424 + $0x270] sm:$0xff] %v8219
      %8671 = vst [vmem:[%s424 + $0x278] sm:$0xff] %v8220
      %8672 = vst [vmem:[%s424 + $0x280] sm:$0xff] %v8221
      %8673 = vst [vmem:[%s424 + $0x288] sm:$0xff] %v8222
      %8674 = vst [vmem:[%s424 + $0x290] sm:$0xff] %v8223
      %8675 = vst [vmem:[%s424 + $0x298] sm:$0xff] %v8224
      %8676 = vst [vmem:[%s424 + $0x2a0] sm:$0xff] %v8225
      %8677 = vst [vmem:[%s424 + $0x2a8] sm:$0xff] %v8226
      %8678 = vst [vmem:[%s424 + $0x2b0] sm:$0xff] %v8227
      %8679 = vst [vmem:[%s424 + $0x2b8] sm:$0xff] %v8228
      %8680 = vst [vmem:[%s424 + $0x2c0] sm:$0xff] %v8229
      %8681 = vst [vmem:[%s424 + $0x2c8] sm:$0xff] %v8230
      %8682 = vst [vmem:[%s424 + $0x2d0] sm:$0xff] %v8231
      %8683 = vst [vmem:[%s424 + $0x2d8] sm:$0xff] %v8232
      %8684 = vst [vmem:[%s424 + $0x2e0] sm:$0xff] %v8233
      %8685 = vst [vmem:[%s424 + $0x2e8] sm:$0xff] %v8234
      %8686 = vst [vmem:[%s424 + $0x2f0] sm:$0xff] %v8235
      %8687 = vst [vmem:[%s424 + $0x2f8] sm:$0xff] %v8236
      %8688 = vst [vmem:[%s424 + $0x300] sm:$0xff] %v8237
      %8689 = vst [vmem:[%s424 + $0x308] sm:$0xff] %v8238
      %8690 = vst [vmem:[%s424 + $0x310] sm:$0xff] %v8239
      %8691 = vst [vmem:[%s424 + $0x318] sm:$0xff] %v8240
      %8692 = vst [vmem:[%s424 + $0x320] sm:$0xff] %v8241
      %8693 = vst [vmem:[%s424 + $0x328] sm:$0xff] %v8242
      %8694 = vst [vmem:[%s424 + $0x330] sm:$0xff] %v8243
      %8695 = vst [vmem:[%s424 + $0x338] sm:$0xff] %v8244
      %8696 = vst [vmem:[%s424 + $0x340] sm:$0xff] %v8245
      %8697 = vst [vmem:[%s424 + $0x348] sm:$0xff] %v8246
      %8698 = vst [vmem:[%s424 + $0x350] sm:$0xff] %v8247
      %8699 = vst [vmem:[%s424 + $0x358] sm:$0xff] %v8248
      %8700 = vst [vmem:[%s424 + $0x360] sm:$0xff] %v8249
      %8701 = vst [vmem:[%s424 + $0x368] sm:$0xff] %v8250
      %8702 = vst [vmem:[%s424 + $0x370] sm:$0xff] %v8251
      %8703 = vst [vmem:[%s424 + $0x378] sm:$0xff] %v8252
      %8704 = vst [vmem:[%s424 + $0x380] sm:$0xff] %v8253
      %8705 = vst [vmem:[%s424 + $0x388] sm:$0xff] %v8254
      %8706 = vst [vmem:[%s424 + $0x390] sm:$0xff] %v8255
      %8707 = vst [vmem:[%s424 + $0x398] sm:$0xff] %v8256
      %8708 = vst [vmem:[%s424 + $0x3a0] sm:$0xff] %v8257
      %8709 = vst [vmem:[%s424 + $0x3a8] sm:$0xff] %v8258
      %8710 = vst [vmem:[%s424 + $0x3b0] sm:$0xff] %v8259
      %8711 = vst [vmem:[%s424 + $0x3b8] sm:$0xff] %v8260
      %8712 = vst [vmem:[%s424 + $0x3c0] sm:$0xff] %v8261
      %8713 = vst [vmem:[%s424 + $0x3c8] sm:$0xff] %v8262
      %8714 = vst [vmem:[%s424 + $0x3d0] sm:$0xff] %v8263
      %8715 = vst [vmem:[%s424 + $0x3d8] sm:$0xff] %v8264
      %8716 = vst [vmem:[%s424 + $0x3e0] sm:$0xff] %v8265
      %8717 = vst [vmem:[%s424 + $0x3e8] sm:$0xff] %v8266
      %8718 = vst [vmem:[%s424 + $0x3f0] sm:$0xff] %v8267
      %8719 = vst [vmem:[%s424 + $0x3f8] sm:$0xff] %v8268
      %8720 = vst [vmem:[%s424 + $0x400] sm:$0xff] %v8269
      %8721 = vst [vmem:[%s424 + $0x408] sm:$0xff] %v8270
      %8722 = vst [vmem:[%s424 + $0x410] sm:$0xff] %v8271
      %8723 = vst [vmem:[%s424 + $0x418] sm:$0xff] %v8272
      %8724 = vst [vmem:[%s424 + $0x420] sm:$0xff] %v8273
      %8725 = vst [vmem:[%s424 + $0x428] sm:$0xff] %v8274
      %8726 = vst [vmem:[%s424 + $0x430] sm:$0xff] %v8275
      %8727 = vst [vmem:[%s424 + $0x438] sm:$0xff] %v8276
      %8728 = vst [vmem:[%s424 + $0x440] sm:$0xff] %v8277
      %8729 = vst [vmem:[%s424 + $0x448] sm:$0xff] %v8278
      %8730 = vst [vmem:[%s424 + $0x450] sm:$0xff] %v8279
      %8731 = vst [vmem:[%s424 + $0x458] sm:$0xff] %v8280
      %8732 = vst [vmem:[%s424 + $0x460] sm:$0xff] %v8281
      %8733 = vst [vmem:[%s424 + $0x468] sm:$0xff] %v8282
      %8734 = vst [vmem:[%s424 + $0x470] sm:$0xff] %v8283
      %8735 = vst [vmem:[%s424 + $0x478] sm:$0xff] %v8284
      %8736 = vst [vmem:[%s424 + $0x480] sm:$0xff] %v8285
      %8737 = vst [vmem:[%s424 + $0x488] sm:$0xff] %v8286
      %8738 = vst [vmem:[%s424 + $0x490] sm:$0xff] %v8287
      %8739 = vst [vmem:[%s424 + $0x498] sm:$0xff] %v8288
      %8740 = vst [vmem:[%s424 + $0x4a0] sm:$0xff] %v8289
      %8741 = vst [vmem:[%s424 + $0x4a8] sm:$0xff] %v8290
      %8742 = vst [vmem:[%s424 + $0x4b0] sm:$0xff] %v8291
      %8743 = vst [vmem:[%s424 + $0x4b8] sm:$0xff] %v8292
      %8744 = vst [vmem:[%s424 + $0x4c0] sm:$0xff] %v8293
      %8745 = vst [vmem:[%s424 + $0x4c8] sm:$0xff] %v8294
      %8746 = vst [vmem:[%s424 + $0x4d0] sm:$0xff] %v8295
      %8747 = vst [vmem:[%s424 + $0x4d8] sm:$0xff] %v8296
      %8748 = vst [vmem:[%s424 + $0x4e0] sm:$0xff] %v8297
      %8749 = vst [vmem:[%s424 + $0x4e8] sm:$0xff] %v8298
      %8750 = vst [vmem:[%s424 + $0x4f0] sm:$0xff] %v8299
      %8751 = vst [vmem:[%s424 + $0x4f8] sm:$0xff] %v8300
      %8752 = vst [vmem:[%s424 + $0x500] sm:$0xff] %v8301
      %8753 = vst [vmem:[%s424 + $0x508] sm:$0xff] %v8302
      %8754 = vst [vmem:[%s424 + $0x510] sm:$0xff] %v8303
      %8755 = vst [vmem:[%s424 + $0x518] sm:$0xff] %v8304
      %8756 = vst [vmem:[%s424 + $0x520] sm:$0xff] %v8305
      %8757 = vst [vmem:[%s424 + $0x528] sm:$0xff] %v8306
      %8758 = vst [vmem:[%s424 + $0x530] sm:$0xff] %v8307
      %8759 = vst [vmem:[%s424 + $0x538] sm:$0xff] %v8308
      %8760 = vst [vmem:[%s424 + $0x540] sm:$0xff] %v8309
      %8761 = vst [vmem:[%s424 + $0x548] sm:$0xff] %v8310
      %8762 = vst [vmem:[%s424 + $0x550] sm:$0xff] %v8311
      %8763 = vst [vmem:[%s424 + $0x558] sm:$0xff] %v8312
      %8764 = vst [vmem:[%s424 + $0x560] sm:$0xff] %v8313
      %8765 = vst [vmem:[%s424 + $0x568] sm:$0xff] %v8314
      %8766 = vst [vmem:[%s424 + $0x570] sm:$0xff] %v8315
      %8767 = vst [vmem:[%s424 + $0x578] sm:$0xff] %v8316
      %8768 = vst [vmem:[%s424 + $0x580] sm:$0xff] %v8317
      %8769 = vst [vmem:[%s424 + $0x588] sm:$0xff] %v8318
      %8770 = vst [vmem:[%s424 + $0x590] sm:$0xff] %v8319
      %8771 = vst [vmem:[%s424 + $0x598] sm:$0xff] %v8320
      %8772 = vst [vmem:[%s424 + $0x5a0] sm:$0xff] %v8321
      %8773 = vst [vmem:[%s424 + $0x5a8] sm:$0xff] %v8322
      %8774 = vst [vmem:[%s424 + $0x5b0] sm:$0xff] %v8323
      %8775 = vst [vmem:[%s424 + $0x5b8] sm:$0xff] %v8324
      %8776 = vst [vmem:[%s424 + $0x5c0] sm:$0xff] %v8325
      %8777 = vst [vmem:[%s424 + $0x5c8] sm:$0xff] %v8326
      %8778 = vst [vmem:[%s424 + $0x5d0] sm:$0xff] %v8327
      %8779 = vst [vmem:[%s424 + $0x5d8] sm:$0xff] %v8328
      %8780 = vst [vmem:[%s424 + $0x5e0] sm:$0xff] %v8329
      %8781 = vst [vmem:[%s424 + $0x5e8] sm:$0xff] %v8330
      %8782 = vst [vmem:[%s424 + $0x5f0] sm:$0xff] %v8331
      %8783 = vst [vmem:[%s424 + $0x5f8] sm:$0xff] %v8332
      %8784 = vst [vmem:[%s424 + $0x600] sm:$0xff] %v8333
      %8785 = vst [vmem:[%s424 + $0x608] sm:$0xff] %v8334
      %8786 = vst [vmem:[%s424 + $0x610] sm:$0xff] %v8335
      %8787 = vst [vmem:[%s424 + $0x618] sm:$0xff] %v8336
      %8788 = vst [vmem:[%s424 + $0x620] sm:$0xff] %v8337
      %8789 = vst [vmem:[%s424 + $0x628] sm:$0xff] %v8338
      %8790 = vst [vmem:[%s424 + $0x630] sm:$0xff] %v8339
      %8791 = vst [vmem:[%s424 + $0x638] sm:$0xff] %v8340
      %8792 = vst [vmem:[%s424 + $0x640] sm:$0xff] %v8341
      %8793 = vst [vmem:[%s424 + $0x648] sm:$0xff] %v8342
      %8794 = vst [vmem:[%s424 + $0x650] sm:$0xff] %v8343
      %8795 = vst [vmem:[%s424 + $0x658] sm:$0xff] %v8344
      %8796 = vst [vmem:[%s424 + $0x660] sm:$0xff] %v8345
      %8797 = vst [vmem:[%s424 + $0x668] sm:$0xff] %v8346
      %8798 = vst [vmem:[%s424 + $0x670] sm:$0xff] %v8347
      %8799 = vst [vmem:[%s424 + $0x678] sm:$0xff] %v8348
      %8800 = vst [vmem:[%s424 + $0x680] sm:$0xff] %v8349
      %8801 = vst [vmem:[%s424 + $0x688] sm:$0xff] %v8350
      %8802 = vst [vmem:[%s424 + $0x690] sm:$0xff] %v8351
      %8803 = vst [vmem:[%s424 + $0x698] sm:$0xff] %v8352
      %8804 = vst [vmem:[%s424 + $0x6a0] sm:$0xff] %v8353
      %8805 = vst [vmem:[%s424 + $0x6a8] sm:$0xff] %v8354
      %8806 = vst [vmem:[%s424 + $0x6b0] sm:$0xff] %v8355
      %8807 = vst [vmem:[%s424 + $0x6b8] sm:$0xff] %v8356
      %8808 = vst [vmem:[%s424 + $0x6c0] sm:$0xff] %v8357
      %8809 = vst [vmem:[%s424 + $0x6c8] sm:$0xff] %v8358
      %8810 = vst [vmem:[%s424 + $0x6d0] sm:$0xff] %v8359
      %8811 = vst [vmem:[%s424 + $0x6d8] sm:$0xff] %v8360
      %8812 = vst [vmem:[%s424 + $0x6e0] sm:$0xff] %v8361
      %8813 = vst [vmem:[%s424 + $0x6e8] sm:$0xff] %v8362
      %8814 = vst [vmem:[%s424 + $0x6f0] sm:$0xff] %v8363
      %8815 = vst [vmem:[%s424 + $0x6f8] sm:$0xff] %v8364
      %8816 = vst [vmem:[%s424 + $0x700] sm:$0xff] %v8365
      %8817 = vst [vmem:[%s424 + $0x708] sm:$0xff] %v8366
      %8818 = vst [vmem:[%s424 + $0x710] sm:$0xff] %v8367
      %8819 = vst [vmem:[%s424 + $0x718] sm:$0xff] %v8368
      %8820 = vst [vmem:[%s424 + $0x720] sm:$0xff] %v8369
      %8821 = vst [vmem:[%s424 + $0x728] sm:$0xff] %v8370
      %8822 = vst [vmem:[%s424 + $0x730] sm:$0xff] %v8371
      %8823 = vst [vmem:[%s424 + $0x738] sm:$0xff] %v8372
      %8824 = vst [vmem:[%s424 + $0x740] sm:$0xff] %v8373
      %8825 = vst [vmem:[%s424 + $0x748] sm:$0xff] %v8374
      %8826 = vst [vmem:[%s424 + $0x750] sm:$0xff] %v8375
      %8827 = vst [vmem:[%s424 + $0x758] sm:$0xff] %v8376
      %8828 = vst [vmem:[%s424 + $0x760] sm:$0xff] %v8377
      %8829 = vst [vmem:[%s424 + $0x768] sm:$0xff] %v8378
      %8830 = vst [vmem:[%s424 + $0x770] sm:$0xff] %v8379
      %8831 = vst [vmem:[%s424 + $0x778] sm:$0xff] %v8380
      %8832 = vst [vmem:[%s424 + $0x780] sm:$0xff] %v8381
      %8833 = vst [vmem:[%s424 + $0x788] sm:$0xff] %v8382
      %8834 = vst [vmem:[%s424 + $0x790] sm:$0xff] %v8383
      %8835 = vst [vmem:[%s424 + $0x798] sm:$0xff] %v8384
      %8836 = vst [vmem:[%s424 + $0x7a0] sm:$0xff] %v8385
      %8837 = vst [vmem:[%s424 + $0x7a8] sm:$0xff] %v8386
      %8838 = vst [vmem:[%s424 + $0x7b0] sm:$0xff] %v8387
      %8839 = vst [vmem:[%s424 + $0x7b8] sm:$0xff] %v8388
      %8840 = vst [vmem:[%s424 + $0x7c0] sm:$0xff] %v8389
      %8841 = vst [vmem:[%s424 + $0x7c8] sm:$0xff] %v8390
      %8842 = vst [vmem:[%s424 + $0x7d0] sm:$0xff] %v8391
      %8843 = vst [vmem:[%s424 + $0x7d8] sm:$0xff] %v8392
      %8844 = vst [vmem:[%s424 + $0x7e0] sm:$0xff] %v8393
      %8845 = vst [vmem:[%s424 + $0x7e8] sm:$0xff] %v8394
      %8846 = vst [vmem:[%s424 + $0x7f0] sm:$0xff] %v8395
      %8847 = vst [vmem:[%s424 + $0x7f8] sm:$0xff] %v8396
      %8848 = vst [vmem:[%s424 + $0x800] sm:$0xff] %v8397
      %8849 = vst [vmem:[%s424 + $0x808] sm:$0xff] %v8398
      %8850 = vst [vmem:[%s424 + $0x810] sm:$0xff] %v8399
      %8851 = vst [vmem:[%s424 + $0x818] sm:$0xff] %v8400
      %8852 = vst [vmem:[%s424 + $0x820] sm:$0xff] %v8401
      %8853 = vst [vmem:[%s424 + $0x828] sm:$0xff] %v8402
      %8854 = vst [vmem:[%s424 + $0x830] sm:$0xff] %v8403
      %8855 = vst [vmem:[%s424 + $0x838] sm:$0xff] %v8404
      %8856 = vst [vmem:[%s424 + $0x840] sm:$0xff] %v8405
      %8857 = vst [vmem:[%s424 + $0x848] sm:$0xff] %v8406
      %8858 = vst [vmem:[%s424 + $0x850] sm:$0xff] %v8407
      %8859 = vst [vmem:[%s424 + $0x858] sm:$0xff] %v8408
      %8860 = vst [vmem:[%s424 + $0x860] sm:$0xff] %v8409
      %8861 = vst [vmem:[%s424 + $0x868] sm:$0xff] %v8410
      %8862 = vst [vmem:[%s424 + $0x870] sm:$0xff] %v8411
      %8863 = vst [vmem:[%s424 + $0x878] sm:$0xff] %v8412
      %8864 = vst [vmem:[%s424 + $0x880] sm:$0xff] %v8413
      %8865 = vst [vmem:[%s424 + $0x888] sm:$0xff] %v8414
      %8866 = vst [vmem:[%s424 + $0x890] sm:$0xff] %v8415
      %8867 = vst [vmem:[%s424 + $0x898] sm:$0xff] %v8416
      %8868 = vst [vmem:[%s424 + $0x8a0] sm:$0xff] %v8417
      %8869 = vst [vmem:[%s424 + $0x8a8] sm:$0xff] %v8418
      %8870 = vst [vmem:[%s424 + $0x8b0] sm:$0xff] %v8419
      %8871 = vst [vmem:[%s424 + $0x8b8] sm:$0xff] %v8420
      %8872 = vst [vmem:[%s424 + $0x8c0] sm:$0xff] %v8421
      %8873 = vst [vmem:[%s424 + $0x8c8] sm:$0xff] %v8422
      %8874 = vst [vmem:[%s424 + $0x8d0] sm:$0xff] %v8423
      %8875 = vst [vmem:[%s424 + $0x8d8] sm:$0xff] %v8424
      %8876 = vst [vmem:[%s424 + $0x8e0] sm:$0xff] %v8425
      %8877 = vst [vmem:[%s424 + $0x8e8] sm:$0xff] %v8426
      %8878 = vst [vmem:[%s424 + $0x8f0] sm:$0xff] %v8427
      %8879 = vst [vmem:[%s424 + $0x8f8] sm:$0xff] %v8428
      %8880 = vst [vmem:[%s424 + $0x900] sm:$0xff] %v8429
      %8881 = vst [vmem:[%s424 + $0x908] sm:$0xff] %v8430
      %8882 = vst [vmem:[%s424 + $0x910] sm:$0xff] %v8431
      %8883 = vst [vmem:[%s424 + $0x918] sm:$0xff] %v8432
      %8884 = vst [vmem:[%s424 + $0x920] sm:$0xff] %v8433
      %8885 = vst [vmem:[%s424 + $0x928] sm:$0xff] %v8434
      %8886 = vst [vmem:[%s424 + $0x930] sm:$0xff] %v8435
      %8887 = vst [vmem:[%s424 + $0x938] sm:$0xff] %v8436
      %8888 = vst [vmem:[%s424 + $0x940] sm:$0xff] %v8437
      %8889 = vst [vmem:[%s424 + $0x948] sm:$0xff] %v8438
      %8890 = vst [vmem:[%s424 + $0x950] sm:$0xff] %v8439
      %8891 = vst [vmem:[%s424 + $0x958] sm:$0xff] %v8440
      %8892 = vst [vmem:[%s424 + $0x960] sm:$0xff] %v8441
      %8893 = vst [vmem:[%s424 + $0x968] sm:$0xff] %v8442
      %8894 = vst [vmem:[%s424 + $0x970] sm:$0xff] %v8443
      %8895 = vst [vmem:[%s424 + $0x978] sm:$0xff] %v8444
      %8896 = vst [vmem:[%s424 + $0x980] sm:$0xff] %v8445
      %8897 = vst [vmem:[%s424 + $0x988] sm:$0xff] %v8446
      %8898 = vst [vmem:[%s424 + $0x990] sm:$0xff] %v8447
      %8899 = vst [vmem:[%s424 + $0x998] sm:$0xff] %v8448
      %8900 = vst [vmem:[%s424 + $0x9a0] sm:$0xff] %v8449
      %8901 = vst [vmem:[%s424 + $0x9a8] sm:$0xff] %v8450
      %8902 = vst [vmem:[%s424 + $0x9b0] sm:$0xff] %v8451
      %8903 = vst [vmem:[%s424 + $0x9b8] sm:$0xff] %v8452
      %8904 = vst [vmem:[%s424 + $0x9c0] sm:$0xff] %v8453
      %8905 = vst [vmem:[%s424 + $0x9c8] sm:$0xff] %v8454
      %8906 = vst [vmem:[%s424 + $0x9d0] sm:$0xff] %v8455
      %8907 = vst [vmem:[%s424 + $0x9d8] sm:$0xff] %v8456
      %8908 = vst [vmem:[%s424 + $0x9e0] sm:$0xff] %v8457
      %8909 = vst [vmem:[%s424 + $0x9e8] sm:$0xff] %v8458
      %8910 = vst [vmem:[%s424 + $0x9f0] sm:$0xff] %v8459
      %8911 = vst [vmem:[%s424 + $0x9f8] sm:$0xff] %v8460
      %8912 = vst [vmem:[%s424 + $0xa00] sm:$0xff] %v8461
      %8913 = vst [vmem:[%s424 + $0xa08] sm:$0xff] %v8462
      %8914 = vst [vmem:[%s424 + $0xa10] sm:$0xff] %v8463
      %8915 = vst [vmem:[%s424 + $0xa18] sm:$0xff] %v8464
      %8916 = vst [vmem:[%s424 + $0xa20] sm:$0xff] %v8465
      %8917 = vst [vmem:[%s424 + $0xa28] sm:$0xff] %v8466
      %8918 = vst [vmem:[%s424 + $0xa30] sm:$0xff] %v8467
      %8919 = vst [vmem:[%s424 + $0xa38] sm:$0xff] %v8468
      %8920 = vst [vmem:[%s424 + $0xa40] sm:$0xff] %v8469
      %8921 = vst [vmem:[%s424 + $0xa48] sm:$0xff] %v8470
      %8922 = vst [vmem:[%s424 + $0xa50] sm:$0xff] %v8471
      %8923 = vst [vmem:[%s424 + $0xa58] sm:$0xff] %v8472
      %8924 = vst [vmem:[%s424 + $0xa60] sm:$0xff] %v8473
      %8925 = vst [vmem:[%s424 + $0xa68] sm:$0xff] %v8474
      %8926 = vst [vmem:[%s424 + $0xa70] sm:$0xff] %v8475
      %8927 = vst [vmem:[%s424 + $0xa78] sm:$0xff] %v8476
      %8928 = vst [vmem:[%s424 + $0xa80] sm:$0xff] %v8477
      %8929 = vst [vmem:[%s424 + $0xa88] sm:$0xff] %v8478
      %8930 = vst [vmem:[%s424 + $0xa90] sm:$0xff] %v8479
      %8931 = vst [vmem:[%s424 + $0xa98] sm:$0xff] %v8480
      %8932 = vst [vmem:[%s424 + $0xaa0] sm:$0xff] %v8481
      %8933 = vst [vmem:[%s424 + $0xaa8] sm:$0xff] %v8482
      %8934 = vst [vmem:[%s424 + $0xab0] sm:$0xff] %v8483
      %8935 = vst [vmem:[%s424 + $0xab8] sm:$0xff] %v8484
      %8936 = vst [vmem:[%s424 + $0xac0] sm:$0xff] %v8485
      %8937 = vst [vmem:[%s424 + $0xac8] sm:$0xff] %v8486
      %8938 = vst [vmem:[%s424 + $0xad0] sm:$0xff] %v8487
      %8939 = vst [vmem:[%s424 + $0xad8] sm:$0xff] %v8488
      %8940 = vst [vmem:[%s424 + $0xae0] sm:$0xff] %v8489
      %8941 = vst [vmem:[%s424 + $0xae8] sm:$0xff] %v8490
      %8942 = vst [vmem:[%s424 + $0xaf0] sm:$0xff] %v8491
      %8943 = vst [vmem:[%s424 + $0xaf8] sm:$0xff] %v8492
      %8944 = vst [vmem:[%s424 + $0xb00] sm:$0xff] %v8493
      %8945 = vst [vmem:[%s424 + $0xb08] sm:$0xff] %v8494
      %8946 = vst [vmem:[%s424 + $0xb10] sm:$0xff] %v8495
      %8947 = vst [vmem:[%s424 + $0xb18] sm:$0xff] %v8496
      %8948 = vst [vmem:[%s424 + $0xb20] sm:$0xff] %v8497
      %8949 = vst [vmem:[%s424 + $0xb28] sm:$0xff] %v8498
      %8950 = vst [vmem:[%s424 + $0xb30] sm:$0xff] %v8499
      %8951 = vst [vmem:[%s424 + $0xb38] sm:$0xff] %v8500
      %8952 = vst [vmem:[%s424 + $0xb40] sm:$0xff] %v8501
      %8953 = vst [vmem:[%s424 + $0xb48] sm:$0xff] %v8502
      %8954 = vst [vmem:[%s424 + $0xb50] sm:$0xff] %v8503
      %8955 = vst [vmem:[%s424 + $0xb58] sm:$0xff] %v8504
      %8956 = vst [vmem:[%s424 + $0xb60] sm:$0xff] %v8505
      %8957 = vst [vmem:[%s424 + $0xb68] sm:$0xff] %v8506
      %8958 = vst [vmem:[%s424 + $0xb70] sm:$0xff] %v8507
      %8959 = vst [vmem:[%s424 + $0xb78] sm:$0xff] %v8508
      %8960 = vst [vmem:[%s424 + $0xb80] sm:$0xff] %v8509
      %8961 = vst [vmem:[%s424 + $0xb88] sm:$0xff] %v8510
      %8962 = vst [vmem:[%s424 + $0xb90] sm:$0xff] %v8511
      %8963 = vst [vmem:[%s424 + $0xb98] sm:$0xff] %v8512
      %8964 = vst [vmem:[%s424 + $0xba0] sm:$0xff] %v8513
      %8965 = vst [vmem:[%s424 + $0xba8] sm:$0xff] %v8514
      %8966 = vst [vmem:[%s424 + $0xbb0] sm:$0xff] %v8515
      %8967 = vst [vmem:[%s424 + $0xbb8] sm:$0xff] %v8516
      %8968 = vst [vmem:[%s424 + $0xbc0] sm:$0xff] %v8517
      %8969 = vst [vmem:[%s424 + $0xbc8] sm:$0xff] %v8518
      %8970 = vst [vmem:[%s424 + $0xbd0] sm:$0xff] %v8519
      %8971 = vst [vmem:[%s424 + $0xbd8] sm:$0xff] %v8520
      %8972 = vst [vmem:[%s424 + $0xbe0] sm:$0xff] %v8521
      %8973 = vst [vmem:[%s424 + $0xbe8] sm:$0xff] %v8522
      %8974 = vst [vmem:[%s424 + $0xbf0] sm:$0xff] %v8523
      %8975 = vst [vmem:[%s424 + $0xbf8] sm:$0xff] %v8524
      %8976 = vst [vmem:[%s424 + $0xc00] sm:$0xff] %v8525
      %8977 = vst [vmem:[%s424 + $0xc08] sm:$0xff] %v8526
      %8978 = vst [vmem:[%s424 + $0xc10] sm:$0xff] %v8527
      %8979 = vst [vmem:[%s424 + $0xc18] sm:$0xff] %v8528
      %8980 = vst [vmem:[%s424 + $0xc20] sm:$0xff] %v8529
      %8981 = vst [vmem:[%s424 + $0xc28] sm:$0xff] %v8530
      %8982 = vst [vmem:[%s424 + $0xc30] sm:$0xff] %v8531
      %8983 = vst [vmem:[%s424 + $0xc38] sm:$0xff] %v8532
      %8984 = vst [vmem:[%s424 + $0xc40] sm:$0xff] %v8533
      %8985 = vst [vmem:[%s424 + $0xc48] sm:$0xff] %v8534
      %8986 = vst [vmem:[%s424 + $0xc50] sm:$0xff] %v8535
      %8987 = vst [vmem:[%s424 + $0xc58] sm:$0xff] %v8536
      %8988 = vst [vmem:[%s424 + $0xc60] sm:$0xff] %v8537
      %8989 = vst [vmem:[%s424 + $0xc68] sm:$0xff] %v8538
      %8990 = vst [vmem:[%s424 + $0xc70] sm:$0xff] %v8539
      %8991 = vst [vmem:[%s424 + $0xc78] sm:$0xff] %v8540
      %8992 = vst [vmem:[%s424 + $0xc80] sm:$0xff] %v8541
      %8993 = vst [vmem:[%s424 + $0xc88] sm:$0xff] %v8542
      %8994 = vst [vmem:[%s424 + $0xc90] sm:$0xff] %v8543
      %8995 = vst [vmem:[%s424 + $0xc98] sm:$0xff] %v8544
      %8996 = vst [vmem:[%s424 + $0xca0] sm:$0xff] %v8545
      %8997 = vst [vmem:[%s424 + $0xca8] sm:$0xff] %v8546
      %8998 = vst [vmem:[%s424 + $0xcb0] sm:$0xff] %v8547
      %8999 = vst [vmem:[%s424 + $0xcb8] sm:$0xff] %v8548
      %9000 = vst [vmem:[%s424 + $0xcc0] sm:$0xff] %v8549
      %9001 = vst [vmem:[%s424 + $0xcc8] sm:$0xff] %v8550
      %9002 = vst [vmem:[%s424 + $0xcd0] sm:$0xff] %v8551
      %9003 = vst [vmem:[%s424 + $0xcd8] sm:$0xff] %v8552
      %9004 = vst [vmem:[%s424 + $0xce0] sm:$0xff] %v8553
      %9005 = vst [vmem:[%s424 + $0xce8] sm:$0xff] %v8554
      %9006 = vst [vmem:[%s424 + $0xcf0] sm:$0xff] %v8555
      %9007 = vst [vmem:[%s424 + $0xcf8] sm:$0xff] %v8556
      %9008 = vst [vmem:[%s424 + $0xd00] sm:$0xff] %v8557
      %9009 = vst [vmem:[%s424 + $0xd08] sm:$0xff] %v8558
      %9010 = vst [vmem:[%s424 + $0xd10] sm:$0xff] %v8559
      %9011 = vst [vmem:[%s424 + $0xd18] sm:$0xff] %v8560
      %9012 = vst [vmem:[%s424 + $0xd20] sm:$0xff] %v8561
      %9013 = vst [vmem:[%s424 + $0xd28] sm:$0xff] %v8562
      %9014 = vst [vmem:[%s424 + $0xd30] sm:$0xff] %v8563
      %9015 = vst [vmem:[%s424 + $0xd38] sm:$0xff] %v8564
      %9016 = vst [vmem:[%s424 + $0xd40] sm:$0xff] %v8565
      %9017 = vst [vmem:[%s424 + $0xd48] sm:$0xff] %v8566
      %9018 = vst [vmem:[%s424 + $0xd50] sm:$0xff] %v8567
      %9019 = vst [vmem:[%s424 + $0xd58] sm:$0xff] %v8568
      %9020 = vst [vmem:[%s424 + $0xd60] sm:$0xff] %v8569
      %9021 = vst [vmem:[%s424 + $0xd68] sm:$0xff] %v8570
      %9022 = vst [vmem:[%s424 + $0xd70] sm:$0xff] %v8571
      %9023 = vst [vmem:[%s424 + $0xd78] sm:$0xff] %v8572
      %9024 = vst [vmem:[%s424 + $0xd80] sm:$0xff] %v8573
      %9025 = vst [vmem:[%s424 + $0xd88] sm:$0xff] %v8574
      %9026 = vst [vmem:[%s424 + $0xd90] sm:$0xff] %v8575
      %9027 = vst [vmem:[%s424 + $0xd98] sm:$0xff] %v8576
      %9028 = vst [vmem:[%s424 + $0xda0] sm:$0xff] %v8577
      %9029 = vst [vmem:[%s424 + $0xda8] sm:$0xff] %v8578
      %9030 = vst [vmem:[%s424 + $0xdb0] sm:$0xff] %v8579
      %9031 = vst [vmem:[%s424 + $0xdb8] sm:$0xff] %v8580
      %9032 = vst [vmem:[%s424 + $0xdc0] sm:$0xff] %v8581
      %9033 = vst [vmem:[%s424 + $0xdc8] sm:$0xff] %v8582
      %9034 = vst [vmem:[%s424 + $0xdd0] sm:$0xff] %v8583
      %9035 = vst [vmem:[%s424 + $0xdd8] sm:$0xff] %v8584
      %9036 = vst [vmem:[%s424 + $0xde0] sm:$0xff] %v8585
      %9037 = vst [vmem:[%s424 + $0xde8] sm:$0xff] %v8586
      %9038 = vst [vmem:[%s424 + $0xdf0] sm:$0xff] %v8587
      %9039 = vst [vmem:[%s424 + $0xdf8] sm:$0xff] %v8588
      %9040 = vst [vmem:[%s424 + $0xe00] sm:$0xff] %v8589
      %9041 = vst [vmem:[%s424 + $0xe08] sm:$0xff] %v8590
      %9042 = vst [vmem:[%s424 + $0xe10] sm:$0x77] %v8591
      %s9043 = smul.u32 2, %s27
      %p9044 = scmp.lt.s32.totalorder %s26, 1
      %s9045 = scalar_select %p9044, %s26, 1
      %p9046 = scmp.lt.s32.totalorder %s9043, 1
      %s9047 = scalar_select %p9046, %s9043, 1
      %s9048 = smul.addr %s9045, 902
      %s9049 = sadd.s32 %s9047, %s9048
      %s9050 = smul.addr %s9049, 4
      %s9051 = scalar_lea.vmem %s11, %s9050
      // Predicated region
      $region65: #{ae_forward.1} parent=63 // pred_check
        %p9052 = pneg %p292
      $region66: #{ae_forward.1} parent=63 // pred_check_branch
        %9054 = sbr.rel (%p9052) target = $region68
      $region67: #{ae_forward.1} parent=63 // pred_region
        %s9055 = smul.u32 2, %s27
      $region68: #{ae_forward.1} parent=63 // pred_fallthru
        _
    $region64: #{ae_forward.1} parent=5 // pred_fallthru
      _
    %p9056 = scmp.le.s32.totalorder 2, %s17
    // Predicated region
    $region69: #{ae_forward.1} parent=5 // pred_check
      %p9057 = pneg %p9056
    $region70: #{ae_forward.1} parent=5 // pred_check_branch
      %9059 = sbr.rel (%p9057) target = $region72
    $region71: #{ae_forward.1} parent=5 // pred_region
      %s9060 = ssub.s32 %s17, 2
      // Predicated region
      $region73: #{ae_forward.1} parent=71 // pred_check
        %p9061 = pneg %p298
      $region74: #{ae_forward.1} parent=71 // pred_check_branch
        %9063 = sbr.rel (%p9061) target = $region76
      $region75: #{ae_forward.1} parent=71 // pred_region
        %s9064 = smul.u32 2, %s29
        %p9065 = scmp.lt.s32.totalorder %s28, 1
        %s9066 = scalar_select %p9065, %s28, 1
        %p9067 = scmp.lt.s32.totalorder %s9064, 1
        %s9068 = scalar_select %p9067, %s9064, 1
        %s9069 = smul.addr %s9066, 902
        %s9070 = sadd.s32 %s9068, %s9069
        %s9071 = smul.addr %s9070, 4
        %s9072 = scalar_lea.vmem %s11, %s9071
      $region76: #{ae_forward.1} parent=71 // pred_fallthru
        _
    $region72: #{ae_forward.1} parent=5 // pred_fallthru
      _
  $region6: #{ae_forward.1} parent=0 // loop_footer
    %s21 = sadd.s32 1, %s17
  $region7: #{ae_forward.1} parent=0 // loop_footer_branch
    %16 = sbr.rel target = $region3
  $region8: #{ae_forward.1} parent=0 // loop_exit
    _

</llo_original>
